<compile_context>
chip_gen: v6e
topology: v6e:2x2x1
jax: 0.10.0
libtpu: 0.0.40
codegen_flags: <defaults>
</compile_context>

<pallas_src>
import jax
import jax.numpy as jnp
import numpy as np
from jax import lax
from jax.experimental import pallas as pl
from jax.experimental.pallas import tpu as pltpu


# ----------------------------- Pallas kernels ------------------------------

def _conv_lrelu_kernel(p_ref, w_ref, b_ref, o_ref):
    """conv-as-GEMM (bf16 x bf16 -> f32 acc) + bias + LeakyReLU(0.2)."""
    acc = jnp.dot(p_ref[...], w_ref[...], preferred_element_type=jnp.float32)
    acc = acc + b_ref[...]
    o_ref[...] = jnp.where(acc > 0, acc, 0.2 * acc).astype(o_ref.dtype)


def _conv_bn_lrelu_kernel(p_ref, w_ref, b_ref, g_ref, be_ref, o_ref):
    """conv-as-GEMM + bias + train-mode BatchNorm2d + LeakyReLU(0.2), fused."""
    acc = jnp.dot(p_ref[...], w_ref[...], preferred_element_type=jnp.float32)
    acc = acc + b_ref[...]
    mean = jnp.mean(acc, axis=0, keepdims=True)
    # biased variance + eps=1e-5, matching PyTorch train-mode BN
    var = jnp.mean(jnp.square(acc - mean), axis=0, keepdims=True)
    z = (acc - mean) * lax.rsqrt(var + 1e-5) * g_ref[...] + be_ref[...]
    o_ref[...] = jnp.where(z > 0, z, 0.2 * z).astype(o_ref.dtype)


def _conv_bn_lrelu_last_kernel(p_ref, w_ref, b_ref, g_ref, be_ref,
                               wl_ref, gsum_ref, bl_ref, o_ref):
    """layer3 (conv + BN + LeakyReLU) fused with the final 4x4 valid conv + sigmoid.

    The final conv sees exactly one 4x4 window per batch element (layer3's whole
    spatial output), so it reduces to: elementwise multiply by the (batch-tiled)
    last-layer weight, a [N, M] 0/1 group-sum matmul, and a lane reduction.
    """
    acc = jnp.dot(p_ref[...], w_ref[...], preferred_element_type=jnp.float32)
    acc = acc + b_ref[...]
    mean = jnp.mean(acc, axis=0, keepdims=True)
    var = jnp.mean(jnp.square(acc - mean), axis=0, keepdims=True)
    z = (acc - mean) * lax.rsqrt(var + 1e-5) * g_ref[...] + be_ref[...]
    z = jnp.where(z > 0, z, 0.2 * z)                                    # [M, C]
    e = z * wl_ref[...]                                                 # [M, C]
    s = jnp.dot(gsum_ref[...], e, preferred_element_type=jnp.float32)   # [N, C]
    logit = jnp.sum(s, axis=1, keepdims=True) + bl_ref[...]             # [N, 1]
    o_ref[...] = jax.nn.sigmoid(logit)


# ----------------------------- kernel wrappers ------------------------------

def conv_lrelu(patches, w2d, bias):
    """patches [M,K] bf16, w2d [K,Cout] bf16, bias [Cout] f32 -> [M,Cout] bf16."""
    M, K = patches.shape
    Cout = w2d.shape[1]
    # 2-way row split (when it divides evenly) so v7x's 2 TensorCores each get a
    # block; on single-TC v5e/v6e it just adds one cheap grid step.
    tm = 256 if (M > 256 and M % 256 == 0) else M
    grid = (M // tm,)
    return pl.pallas_call(
        _conv_lrelu_kernel,
        out_shape=jax.ShapeDtypeStruct((M, Cout), jnp.bfloat16),
        grid=grid,
        in_specs=[
            pl.BlockSpec((tm, K), lambda i: (i, 0)),
            pl.BlockSpec((K, Cout), lambda i: (0, 0)),
            pl.BlockSpec((1, Cout), lambda i: (0, 0)),
        ],
        out_specs=pl.BlockSpec((tm, Cout), lambda i: (i, 0)),
        compiler_params=pltpu.CompilerParams(dimension_semantics=("parallel",)),
    )(patches, w2d, bias.reshape(1, Cout))


def conv_bn_lrelu(patches, w2d, bias, gamma, beta):
    """Fused conv + BN (batch stats over all M rows) + LeakyReLU.  grid=(1,)
    because BN statistics need the whole M = N*Ho*Wo axis in one block."""
    M, K = patches.shape
    Cout = w2d.shape[1]
    return pl.pallas_call(
        _conv_bn_lrelu_kernel,
        out_shape=jax.ShapeDtypeStruct((M, Cout), jnp.bfloat16),
        grid=(1,),
        in_specs=[
            pl.BlockSpec((M, K), lambda i: (0, 0)),
            pl.BlockSpec((K, Cout), lambda i: (0, 0)),
            pl.BlockSpec((1, Cout), lambda i: (0, 0)),
            pl.BlockSpec((1, Cout), lambda i: (0, 0)),
            pl.BlockSpec((1, Cout), lambda i: (0, 0)),
        ],
        out_specs=pl.BlockSpec((M, Cout), lambda i: (0, 0)),
        compiler_params=pltpu.CompilerParams(dimension_semantics=("arbitrary",)),
    )(patches, w2d, bias.reshape(1, Cout),
      gamma.reshape(1, Cout), beta.reshape(1, Cout))


def conv_bn_lrelu_last(patches, w2d, bias, gamma, beta, wl_tiled, gsum, bl):
    """layer3 + final conv + sigmoid fused; returns [N, 1] f32."""
    M, K = patches.shape
    Cout = w2d.shape[1]
    N = gsum.shape[0]
    return pl.pallas_call(
        _conv_bn_lrelu_last_kernel,
        out_shape=jax.ShapeDtypeStruct((N, 1), jnp.float32),
        grid=(1,),
        in_specs=[
            pl.BlockSpec((M, K), lambda i: (0, 0)),
            pl.BlockSpec((K, Cout), lambda i: (0, 0)),
            pl.BlockSpec((1, Cout), lambda i: (0, 0)),
            pl.BlockSpec((1, Cout), lambda i: (0, 0)),
            pl.BlockSpec((1, Cout), lambda i: (0, 0)),
            pl.BlockSpec((M, Cout), lambda i: (0, 0)),
            pl.BlockSpec((N, M), lambda i: (0, 0)),
            pl.BlockSpec((1, 1), lambda i: (0, 0)),
        ],
        out_specs=pl.BlockSpec((N, 1), lambda i: (0, 0)),
        compiler_params=pltpu.CompilerParams(dimension_semantics=("arbitrary",)),
    )(patches, w2d, bias.reshape(1, Cout), gamma.reshape(1, Cout),
      beta.reshape(1, Cout), wl_tiled, gsum, bl.reshape(1, 1))


# ----------------------------- host-side glue ------------------------------

def im2col_nhwc(x, k, s, p):
    """x: [N, H, W, C] -> patches [N*Ho*Wo, k*k*C]; K-order = (kh, kw, c), c fastest."""
    N, H, W, C = x.shape
    xp = jnp.pad(x, ((0, 0), (p, p), (p, p), (0, 0)))
    Ho = (H + 2 * p - k) // s + 1
    Wo = (W + 2 * p - k) // s + 1
    cols = []
    for dh in range(k):
        for dw in range(k):
            cols.append(xp[:, dh:dh + s * (Ho - 1) + 1:s, dw:dw + s * (Wo - 1) + 1:s, :])
    patches = jnp.concatenate(cols, axis=-1)          # [N, Ho, Wo, k*k*C]
    return patches.reshape(N * Ho * Wo, k * k * C), Ho, Wo


def _prep_w(w, k):
    """OIHW weight -> [k*k*Cin, Cout] bf16 with (kh, kw, cin) K-ordering."""
    cout, cin = w.shape[0], w.shape[1]
    return w.transpose(2, 3, 1, 0).reshape(k * k * cin, cout).astype(jnp.bfloat16)


def discriminator_forward(params, x):
    """x: [N, C, H, W] f32 (NCHW, like the PyTorch module) -> [N, 1, 1, 1]."""
    N = x.shape[0]
    y = x.transpose(0, 2, 3, 1).astype(jnp.bfloat16)        # NCHW -> NHWC, bf16 activations

    # layer0: conv(3->64, k4 s2 p1) + LeakyReLU
    p0, Ho, Wo = im2col_nhwc(y, 4, 2, 1)
    prm = params["layer0"]
    y = conv_lrelu(p0, _prep_w(prm["w"], 4), prm["b"]).reshape(N, Ho, Wo, -1)

    # layer1 / layer2: conv + BN + LeakyReLU, fully fused per layer
    for name in ("layer1", "layer2"):
        pm, Ho, Wo = im2col_nhwc(y, 4, 2, 1)
        prm = params[name]
        y = conv_bn_lrelu(pm, _prep_w(prm["w"], 4), prm["b"],
                          prm["gamma"], prm["beta"]).reshape(N, Ho, Wo, -1)

    # layer3 (conv k3 s1 p1 + BN + LReLU) fused with last conv (k4 valid) + sigmoid
    p3, Ho, Wo = im2col_nhwc(y, 3, 1, 1)
    prm3, prml = params["layer3"], params["last"]
    kh, kw = prml["w"].shape[2], prml["w"].shape[3]
    # The fold requires the last conv's window to cover layer3's whole output.
    assert (Ho, Wo) == (kh, kw), (Ho, Wo, kh, kw)
    wl = prml["w"][0].transpose(1, 2, 0).reshape(Ho * Wo, -1)        # [Ho*Wo, C3]
    wl_tiled = jnp.tile(wl, (N, 1)).astype(jnp.float32)              # [N*Ho*Wo, C3]
    m3 = N * Ho * Wo
    gsum = (jnp.arange(N)[:, None] ==
            (jnp.arange(m3)[None, :] // (Ho * Wo))).astype(jnp.float32)  # [N, M3]
    out = conv_bn_lrelu_last(p3, _prep_w(prm3["w"], 3), prm3["b"],
                             prm3["gamma"], prm3["beta"],
                             wl_tiled, gsum, prml["b"])
    return out.reshape(N, 1, 1, 1)


# ------------------------------ parameters ---------------------------------

def init_params(key):
    def conv_init(k, cout, cin, ksz):
        kw_, kb = jax.random.split(k)
        bound = 1.0 / np.sqrt(cin * ksz * ksz)
        w = jax.random.uniform(kw_, (cout, cin, ksz, ksz), jnp.float32, -bound, bound)
        b = jax.random.uniform(kb, (cout,), jnp.float32, -bound, bound)
        return w, b

    specs = [("layer0", 3, 64, 4, False),
             ("layer1", 64, 128, 4, True),
             ("layer2", 128, 256, 4, True),
             ("layer3", 256, 512, 3, True),
             ("last", 512, 1, 4, False)]
    keys = jax.random.split(key, len(specs))
    params = {}
    for kk, (name, cin, cout, ksz, norm) in zip(keys, specs):
        w, b = conv_init(kk, cout, cin, ksz)
        p = {"w": w, "b": b}
        if norm:
            p["gamma"] = jnp.ones((cout,), jnp.float32)
            p["beta"] = jnp.zeros((cout,), jnp.float32)
        params[name] = p
    return params


# --------------------------- pure-JAX reference -----------------------------

def ref_forward(params, x):
    def conv(x, w, b, s, p):
        y = lax.conv_general_dilated(
            x, w, (s, s), [(p, p), (p, p)],
            dimension_numbers=("NCHW", "OIHW", "NCHW"),
            precision=lax.Precision.HIGHEST)
        return y + b[None, :, None, None]

    def lrelu(z):
        return jnp.where(z > 0, z, 0.2 * z)

    def bn_lrelu(y, g, be):
        mean = y.mean(axis=(0, 2, 3), keepdims=True)
        var = ((y - mean) ** 2).mean(axis=(0, 2, 3), keepdims=True)
        z = (y - mean) / jnp.sqrt(var + 1e-5) * g[None, :, None, None] + be[None, :, None, None]
        return lrelu(z)

    y = lrelu(conv(x, params["layer0"]["w"], params["layer0"]["b"], 2, 1))
    for name, s, p in [("layer1", 2, 1), ("layer2", 2, 1), ("layer3", 1, 1)]:
        y = conv(y, params[name]["w"], params[name]["b"], s, p)
        y = bn_lrelu(y, params[name]["gamma"], params[name]["beta"])
    y = conv(y, params["last"]["w"], params["last"]["b"], 1, 0)
    return jax.nn.sigmoid(y)


# --------------------------------- main -------------------------------------

if __name__ == "__main__":
    key = jax.random.PRNGKey(0)
    kp, kx = jax.random.split(key)
    params = init_params(kp)
    x = jax.random.normal(kx, (2, 3, 32, 32), jnp.float32)   # NCHW input

    fwd = jax.jit(discriminator_forward)
    out = jax.block_until_ready(fwd(params, x))
    assert out.shape == (2, 1, 1, 1), out.shape

    ref = jax.block_until_ready(jax.jit(ref_forward)(params, x))
    # Tolerance accommodates bf16 MXU inputs / bf16 inter-layer activations vs
    # the full-f32 reference; semantic bugs give errors orders of magnitude larger.
    np.testing.assert_allclose(np.asarray(out), np.asarray(ref), atol=1e-2, rtol=1e-2)

    print("KERNEL_OK")
</pallas_src>

<mosaic_0001>
module attributes {stable_mosaic.version = 11 : i64} {
  func.func @_conv_lrelu_kernel(%arg0: i32, %arg1: memref<256x48xbf16, #tpu.memory_space<vmem>>, %arg2: memref<48x64xbf16, #tpu.memory_space<vmem>>, %arg3: memref<1x64xf32, #tpu.memory_space<vmem>>, %arg4: memref<256x64xbf16, #tpu.memory_space<vmem>>) attributes {dimension_semantics = [#tpu.dimension_semantics<parallel>], iteration_bounds = array<i64: 2>, scalar_prefetch = 0 : i64, scratch_operands = 0 : i64, tpu.core_type = #tpu.core_type<tc>, window_params = [{transform_indices = @transform_0, window_bounds = array<i64: 256, 48>}, {pipeline_mode = #tpu.pipeline_mode<synchronous>, transform_indices = @transform_1, window_bounds = array<i64: 48, 64>}, {pipeline_mode = #tpu.pipeline_mode<synchronous>, transform_indices = @transform_2, window_bounds = array<i64: 1, 64>}, {transform_indices = @transform_3, window_bounds = array<i64: 256, 64>}]} {
    %c0 = arith.constant 0 : index
    %c0_0 = arith.constant 0 : index
    %0 = vector.load %arg1[%c0, %c0_0] : memref<256x48xbf16, #tpu.memory_space<vmem>>, vector<256x48xbf16>
    %c0_1 = arith.constant 0 : index
    %c0_2 = arith.constant 0 : index
    %1 = vector.load %arg2[%c0_1, %c0_2] : memref<48x64xbf16, #tpu.memory_space<vmem>>, vector<48x64xbf16>
    %cst = arith.constant dense<0.000000e+00> : vector<256x64xf32>
    %2 = tpu.matmul %0, %1, %cst {dimension_numbers = #tpu.dot_dimension_numbers<[1], [0], [0], [1], [0, 0, 1, 1], [], []>} : vector<256x48xbf16>, vector<48x64xbf16>, vector<256x64xf32> -> vector<256x64xf32>
    %c0_3 = arith.constant 0 : index
    %c0_4 = arith.constant 0 : index
    %3 = vector.load %arg3[%c0_3, %c0_4] : memref<1x64xf32, #tpu.memory_space<vmem>>, vector<1x64xf32>
    %4 = vector.broadcast %3 : vector<1x64xf32> to vector<256x64xf32>
    %5 = arith.addf %2, %4 : vector<256x64xf32>
    %cst_5 = arith.constant 0.000000e+00 : f32
    %6 = vector.broadcast %cst_5 : f32 to vector<256x64xf32>
    %7 = arith.cmpf ogt, %5, %6 : vector<256x64xf32>
    %cst_6 = arith.constant 2.000000e-01 : f32
    %8 = vector.broadcast %cst_6 : f32 to vector<256x64xf32>
    %9 = arith.mulf %8, %5 : vector<256x64xf32>
    %10 = arith.select %7, %5, %9 : vector<256x64xi1>, vector<256x64xf32>
    %11 = arith.truncf %10 : vector<256x64xf32> to vector<256x64xbf16>
    %c0_7 = arith.constant 0 : index
    %c0_8 = arith.constant 0 : index
    %12 = vector.load %arg4[%c0_7, %c0_8] : memref<256x64xbf16, #tpu.memory_space<vmem>>, vector<256x64xbf16>
    tpu.vector_store %arg4[%c0_7, %c0_8], %11 {strides = array<i32>} : memref<256x64xbf16, #tpu.memory_space<vmem>>, vector<256x64xbf16>,
    return
  }
  func.func @transform_0(%arg0: i32) -> (i32, i32) {
    %c0_i32 = arith.constant 0 : i32
    %c0_i32_0 = arith.constant 0 : i32
    return %arg0, %c0_i32 : i32, i32
  }
  func.func @transform_1(%arg0: i32) -> (i32, i32) {
    %c0_i32 = arith.constant 0 : i32
    %c0_i32_0 = arith.constant 0 : i32
    %c0_i32_1 = arith.constant 0 : i32
    return %c0_i32, %c0_i32_0 : i32, i32
  }
  func.func @transform_2(%arg0: i32) -> (i32, i32) {
    %c0_i32 = arith.constant 0 : i32
    %c0_i32_0 = arith.constant 0 : i32
    %c0_i32_1 = arith.constant 0 : i32
    return %c0_i32, %c0_i32_0 : i32, i32
  }
  func.func @transform_3(%arg0: i32) -> (i32, i32) {
    %c0_i32 = arith.constant 0 : i32
    %c0_i32_0 = arith.constant 0 : i32
    return %arg0, %c0_i32 : i32, i32
  }
}

module attributes {stable_mosaic.version = 11 : i64} {
  func.func @_conv_bn_lrelu_kernel(%arg0: i32, %arg1: memref<128x1024xbf16, #tpu.memory_space<vmem>>, %arg2: memref<1024x128xbf16, #tpu.memory_space<vmem>>, %arg3: memref<1x128xf32, #tpu.memory_space<vmem>>, %arg4: memref<1x128xf32, #tpu.memory_space<vmem>>, %arg5: memref<1x128xf32, #tpu.memory_space<vmem>>, %arg6: memref<128x128xbf16, #tpu.memory_space<vmem>>) attributes {dimension_semantics = [#tpu.dimension_semantics<arbitrary>], iteration_bounds = array<i64: 1>, scalar_prefetch = 0 : i64, scratch_operands = 0 : i64, tpu.core_type = #tpu.core_type<tc>, window_params = [{pipeline_mode = #tpu.pipeline_mode<synchronous>, transform_indices = @transform_0, window_bounds = array<i64: 128, 1024>}, {pipeline_mode = #tpu.pipeline_mode<synchronous>, transform_indices = @transform_1, window_bounds = array<i64: 1024, 128>}, {pipeline_mode = #tpu.pipeline_mode<synchronous>, transform_indices = @transform_2, window_bounds = array<i64: 1, 128>}, {pipeline_mode = #tpu.pipeline_mode<synchronous>, transform_indices = @transform_3, window_bounds = array<i64: 1, 128>}, {pipeline_mode = #tpu.pipeline_mode<synchronous>, transform_indices = @transform_4, window_bounds = array<i64: 1, 128>}, {pipeline_mode = #tpu.pipeline_mode<synchronous>, transform_indices = @transform_5, window_bounds = array<i64: 128, 128>}]} {
    %c0 = arith.constant 0 : index
    %c0_0 = arith.constant 0 : index
    %0 = vector.load %arg1[%c0, %c0_0] : memref<128x1024xbf16, #tpu.memory_space<vmem>>, vector<128x1024xbf16>
    %c0_1 = arith.constant 0 : index
    %c0_2 = arith.constant 0 : index
    %1 = vector.load %arg2[%c0_1, %c0_2] : memref<1024x128xbf16, #tpu.memory_space<vmem>>, vector<1024x128xbf16>
    %cst = arith.constant dense<0.000000e+00> : vector<128x128xf32>
    %2 = tpu.matmul %0, %1, %cst {dimension_numbers = #tpu.dot_dimension_numbers<[1], [0], [0], [1], [0, 0, 1, 1], [], []>} : vector<128x1024xbf16>, vector<1024x128xbf16>, vector<128x128xf32> -> vector<128x128xf32>
    %c0_3 = arith.constant 0 : index
    %c0_4 = arith.constant 0 : index
    %3 = vector.load %arg3[%c0_3, %c0_4] : memref<1x128xf32, #tpu.memory_space<vmem>>, vector<1x128xf32>
    %4 = vector.broadcast %3 : vector<1x128xf32> to vector<128x128xf32>
    %5 = arith.addf %2, %4 : vector<128x128xf32>
    %cst_5 = arith.constant dense<0.000000e+00> : vector<128xf32>
    %6 = vector.multi_reduction <add>, %5, %cst_5 [0] : vector<128x128xf32> to vector<128xf32>
    %7 = vector.shape_cast %6 : vector<128xf32> to vector<1x128xf32>
    %cst_6 = arith.constant 1.280000e+02 : f32
    %8 = vector.broadcast %cst_6 : f32 to vector<1x128xf32>
    %9 = arith.divf %7, %8 : vector<1x128xf32>
    %10 = vector.broadcast %9 : vector<1x128xf32> to vector<128x128xf32>
    %11 = arith.subf %5, %10 : vector<128x128xf32>
    %12 = arith.mulf %11, %11 : vector<128x128xf32>
    %cst_7 = arith.constant dense<0.000000e+00> : vector<128xf32>
    %13 = vector.multi_reduction <add>, %12, %cst_7 [0] : vector<128x128xf32> to vector<128xf32>
    %14 = vector.shape_cast %13 : vector<128xf32> to vector<1x128xf32>
    %cst_8 = arith.constant 1.280000e+02 : f32
    %15 = vector.broadcast %cst_8 : f32 to vector<1x128xf32>
    %16 = arith.divf %14, %15 : vector<1x128xf32>
    %17 = vector.broadcast %9 : vector<1x128xf32> to vector<128x128xf32>
    %18 = arith.subf %5, %17 : vector<128x128xf32>
    %cst_9 = arith.constant 9.99999974E-6 : f32
    %19 = vector.broadcast %cst_9 : f32 to vector<1x128xf32>
    %20 = arith.addf %16, %19 : vector<1x128xf32>
    %21 = math.rsqrt %20 : vector<1x128xf32>
    %22 = vector.broadcast %21 : vector<1x128xf32> to vector<128x128xf32>
    %23 = arith.mulf %18, %22 : vector<128x128xf32>
    %c0_10 = arith.constant 0 : index
    %c0_11 = arith.constant 0 : index
    %24 = vector.load %arg4[%c0_10, %c0_11] : memref<1x128xf32, #tpu.memory_space<vmem>>, vector<1x128xf32>
    %25 = vector.broadcast %24 : vector<1x128xf32> to vector<128x128xf32>
    %26 = arith.mulf %23, %25 : vector<128x128xf32>
    %c0_12 = arith.constant 0 : index
    %c0_13 = arith.constant 0 : index
    %27 = vector.load %arg5[%c0_12, %c0_13] : memref<1x128xf32, #tpu.memory_space<vmem>>, vector<1x128xf32>
    %28 = vector.broadcast %27 : vector<1x128xf32> to vector<128x128xf32>
    %29 = arith.addf %26, %28 : vector<128x128xf32>
    %cst_14 = arith.constant 0.000000e+00 : f32
    %30 = vector.broadcast %cst_14 : f32 to vector<128x128xf32>
    %31 = arith.cmpf ogt, %29, %30 : vector<128x128xf32>
    %cst_15 = arith.constant 2.000000e-01 : f32
    %32 = vector.broadcast %cst_15 : f32 to vector<128x128xf32>
    %33 = arith.mulf %32, %29 : vector<128x128xf32>
    %34 = arith.select %31, %29, %33 : vector<128x128xi1>, vector<128x128xf32>
    %35 = arith.truncf %34 : vector<128x128xf32> to vector<128x128xbf16>
    %c0_16 = arith.constant 0 : index
    %c0_17 = arith.constant 0 : index
    %36 = vector.load %arg6[%c0_16, %c0_17] : memref<128x128xbf16, #tpu.memory_space<vmem>>, vector<128x128xbf16>
    tpu.vector_store %arg6[%c0_16, %c0_17], %35 {strides = array<i32>} : memref<128x128xbf16, #tpu.memory_space<vmem>>, vector<128x128xbf16>,
    return
  }
  func.func @transform_0(%arg0: i32) -> (i32, i32) {
    %c0_i32 = arith.constant 0 : i32
    %c0_i32_0 = arith.constant 0 : i32
    %c0_i32_1 = arith.constant 0 : i32
    return %c0_i32, %c0_i32_0 : i32, i32
  }
  func.func @transform_1(%arg0: i32) -> (i32, i32) {
    %c0_i32 = arith.constant 0 : i32
    %c0_i32_0 = arith.constant 0 : i32
    %c0_i32_1 = arith.constant 0 : i32
    return %c0_i32, %c0_i32_0 : i32, i32
  }
  func.func @transform_2(%arg0: i32) -> (i32, i32) {
    %c0_i32 = arith.constant 0 : i32
    %c0_i32_0 = arith.constant 0 : i32
    %c0_i32_1 = arith.constant 0 : i32
    return %c0_i32, %c0_i32_0 : i32, i32
  }
  func.func @transform_3(%arg0: i32) -> (i32, i32) {
    %c0_i32 = arith.constant 0 : i32
    %c0_i32_0 = arith.constant 0 : i32
    %c0_i32_1 = arith.constant 0 : i32
    return %c0_i32, %c0_i32_0 : i32, i32
  }
  func.func @transform_4(%arg0: i32) -> (i32, i32) {
    %c0_i32 = arith.constant 0 : i32
    %c0_i32_0 = arith.constant 0 : i32
    %c0_i32_1 = arith.constant 0 : i32
    return %c0_i32, %c0_i32_0 : i32, i32
  }
  func.func @transform_5(%arg0: i32) -> (i32, i32) {
    %c0_i32 = arith.constant 0 : i32
    %c0_i32_0 = arith.constant 0 : i32
    %c0_i32_1 = arith.constant 0 : i32
    return %c0_i32, %c0_i32_0 : i32, i32
  }
}

module attributes {stable_mosaic.version = 11 : i64} {
  func.func @_conv_bn_lrelu_kernel(%arg0: i32, %arg1: memref<32x2048xbf16, #tpu.memory_space<vmem>>, %arg2: memref<2048x256xbf16, #tpu.memory_space<vmem>>, %arg3: memref<1x256xf32, #tpu.memory_space<vmem>>, %arg4: memref<1x256xf32, #tpu.memory_space<vmem>>, %arg5: memref<1x256xf32, #tpu.memory_space<vmem>>, %arg6: memref<32x256xbf16, #tpu.memory_space<vmem>>) attributes {dimension_semantics = [#tpu.dimension_semantics<arbitrary>], iteration_bounds = array<i64: 1>, scalar_prefetch = 0 : i64, scratch_operands = 0 : i64, tpu.core_type = #tpu.core_type<tc>, window_params = [{pipeline_mode = #tpu.pipeline_mode<synchronous>, transform_indices = @transform_0, window_bounds = array<i64: 32, 2048>}, {pipeline_mode = #tpu.pipeline_mode<synchronous>, transform_indices = @transform_1, window_bounds = array<i64: 2048, 256>}, {pipeline_mode = #tpu.pipeline_mode<synchronous>, transform_indices = @transform_2, window_bounds = array<i64: 1, 256>}, {pipeline_mode = #tpu.pipeline_mode<synchronous>, transform_indices = @transform_3, window_bounds = array<i64: 1, 256>}, {pipeline_mode = #tpu.pipeline_mode<synchronous>, transform_indices = @transform_4, window_bounds = array<i64: 1, 256>}, {pipeline_mode = #tpu.pipeline_mode<synchronous>, transform_indices = @transform_5, window_bounds = array<i64: 32, 256>}]} {
    %c0 = arith.constant 0 : index
    %c0_0 = arith.constant 0 : index
    %0 = vector.load %arg1[%c0, %c0_0] : memref<32x2048xbf16, #tpu.memory_space<vmem>>, vector<32x2048xbf16>
    %c0_1 = arith.constant 0 : index
    %c0_2 = arith.constant 0 : index
    %1 = vector.load %arg2[%c0_1, %c0_2] : memref<2048x256xbf16, #tpu.memory_space<vmem>>, vector<2048x256xbf16>
    %cst = arith.constant dense<0.000000e+00> : vector<32x256xf32>
    %2 = tpu.matmul %0, %1, %cst {dimension_numbers = #tpu.dot_dimension_numbers<[1], [0], [0], [1], [0, 0, 1, 1], [], []>} : vector<32x2048xbf16>, vector<2048x256xbf16>, vector<32x256xf32> -> vector<32x256xf32>
    %c0_3 = arith.constant 0 : index
    %c0_4 = arith.constant 0 : index
    %3 = vector.load %arg3[%c0_3, %c0_4] : memref<1x256xf32, #tpu.memory_space<vmem>>, vector<1x256xf32>
    %4 = vector.broadcast %3 : vector<1x256xf32> to vector<32x256xf32>
    %5 = arith.addf %2, %4 : vector<32x256xf32>
    %cst_5 = arith.constant dense<0.000000e+00> : vector<256xf32>
    %6 = vector.multi_reduction <add>, %5, %cst_5 [0] : vector<32x256xf32> to vector<256xf32>
    %7 = vector.shape_cast %6 : vector<256xf32> to vector<1x256xf32>
    %cst_6 = arith.constant 3.200000e+01 : f32
    %8 = vector.broadcast %cst_6 : f32 to vector<1x256xf32>
    %9 = arith.divf %7, %8 : vector<1x256xf32>
    %10 = vector.broadcast %9 : vector<1x256xf32> to vector<32x256xf32>
    %11 = arith.subf %5, %10 : vector<32x256xf32>
    %12 = arith.mulf %11, %11 : vector<32x256xf32>
    %cst_7 = arith.constant dense<0.000000e+00> : vector<256xf32>
    %13 = vector.multi_reduction <add>, %12, %cst_7 [0] : vector<32x256xf32> to vector<256xf32>
    %14 = vector.shape_cast %13 : vector<256xf32> to vector<1x256xf32>
    %cst_8 = arith.constant 3.200000e+01 : f32
    %15 = vector.broadcast %cst_8 : f32 to vector<1x256xf32>
    %16 = arith.divf %14, %15 : vector<1x256xf32>
    %17 = vector.broadcast %9 : vector<1x256xf32> to vector<32x256xf32>
    %18 = arith.subf %5, %17 : vector<32x256xf32>
    %cst_9 = arith.constant 9.99999974E-6 : f32
    %19 = vector.broadcast %cst_9 : f32 to vector<1x256xf32>
    %20 = arith.addf %16, %19 : vector<1x256xf32>
    %21 = math.rsqrt %20 : vector<1x256xf32>
    %22 = vector.broadcast %21 : vector<1x256xf32> to vector<32x256xf32>
    %23 = arith.mulf %18, %22 : vector<32x256xf32>
    %c0_10 = arith.constant 0 : index
    %c0_11 = arith.constant 0 : index
    %24 = vector.load %arg4[%c0_10, %c0_11] : memref<1x256xf32, #tpu.memory_space<vmem>>, vector<1x256xf32>
    %25 = vector.broadcast %24 : vector<1x256xf32> to vector<32x256xf32>
    %26 = arith.mulf %23, %25 : vector<32x256xf32>
    %c0_12 = arith.constant 0 : index
    %c0_13 = arith.constant 0 : index
    %27 = vector.load %arg5[%c0_12, %c0_13] : memref<1x256xf32, #tpu.memory_space<vmem>>, vector<1x256xf32>
    %28 = vector.broadcast %27 : vector<1x256xf32> to vector<32x256xf32>
    %29 = arith.addf %26, %28 : vector<32x256xf32>
    %cst_14 = arith.constant 0.000000e+00 : f32
    %30 = vector.broadcast %cst_14 : f32 to vector<32x256xf32>
    %31 = arith.cmpf ogt, %29, %30 : vector<32x256xf32>
    %cst_15 = arith.constant 2.000000e-01 : f32
    %32 = vector.broadcast %cst_15 : f32 to vector<32x256xf32>
    %33 = arith.mulf %32, %29 : vector<32x256xf32>
    %34 = arith.select %31, %29, %33 : vector<32x256xi1>, vector<32x256xf32>
    %35 = arith.truncf %34 : vector<32x256xf32> to vector<32x256xbf16>
    %c0_16 = arith.constant 0 : index
    %c0_17 = arith.constant 0 : index
    %36 = vector.load %arg6[%c0_16, %c0_17] : memref<32x256xbf16, #tpu.memory_space<vmem>>, vector<32x256xbf16>
    tpu.vector_store %arg6[%c0_16, %c0_17], %35 {strides = array<i32>} : memref<32x256xbf16, #tpu.memory_space<vmem>>, vector<32x256xbf16>,
    return
  }
  func.func @transform_0(%arg0: i32) -> (i32, i32) {
    %c0_i32 = arith.constant 0 : i32
    %c0_i32_0 = arith.constant 0 : i32
    %c0_i32_1 = arith.constant 0 : i32
    return %c0_i32, %c0_i32_0 : i32, i32
  }
  func.func @transform_1(%arg0: i32) -> (i32, i32) {
    %c0_i32 = arith.constant 0 : i32
    %c0_i32_0 = arith.constant 0 : i32
    %c0_i32_1 = arith.constant 0 : i32
    return %c0_i32, %c0_i32_0 : i32, i32
  }
  func.func @transform_2(%arg0: i32) -> (i32, i32) {
    %c0_i32 = arith.constant 0 : i32
    %c0_i32_0 = arith.constant 0 : i32
    %c0_i32_1 = arith.constant 0 : i32
    return %c0_i32, %c0_i32_0 : i32, i32
  }
  func.func @transform_3(%arg0: i32) -> (i32, i32) {
    %c0_i32 = arith.constant 0 : i32
    %c0_i32_0 = arith.constant 0 : i32
    %c0_i32_1 = arith.constant 0 : i32
    return %c0_i32, %c0_i32_0 : i32, i32
  }
  func.func @transform_4(%arg0: i32) -> (i32, i32) {
    %c0_i32 = arith.constant 0 : i32
    %c0_i32_0 = arith.constant 0 : i32
    %c0_i32_1 = arith.constant 0 : i32
    return %c0_i32, %c0_i32_0 : i32, i32
  }
  func.func @transform_5(%arg0: i32) -> (i32, i32) {
    %c0_i32 = arith.constant 0 : i32
    %c0_i32_0 = arith.constant 0 : i32
    %c0_i32_1 = arith.constant 0 : i32
    return %c0_i32, %c0_i32_0 : i32, i32
  }
}

module attributes {stable_mosaic.version = 11 : i64} {
  func.func @_conv_bn_lrelu_last_kernel(%arg0: i32, %arg1: memref<32x2304xbf16, #tpu.memory_space<vmem>>, %arg2: memref<2304x512xbf16, #tpu.memory_space<vmem>>, %arg3: memref<1x512xf32, #tpu.memory_space<vmem>>, %arg4: memref<1x512xf32, #tpu.memory_space<vmem>>, %arg5: memref<1x512xf32, #tpu.memory_space<vmem>>, %arg6: memref<32x512xf32, #tpu.memory_space<vmem>>, %arg7: memref<2x32xf32, #tpu.memory_space<vmem>>, %arg8: memref<1x1xf32, #tpu.memory_space<vmem>>, %arg9: memref<2x1xf32, #tpu.memory_space<vmem>>) attributes {dimension_semantics = [#tpu.dimension_semantics<arbitrary>], iteration_bounds = array<i64: 1>, scalar_prefetch = 0 : i64, scratch_operands = 0 : i64, tpu.core_type = #tpu.core_type<tc>, window_params = [{pipeline_mode = #tpu.pipeline_mode<synchronous>, transform_indices = @transform_0, window_bounds = array<i64: 32, 2304>}, {pipeline_mode = #tpu.pipeline_mode<synchronous>, transform_indices = @transform_1, window_bounds = array<i64: 2304, 512>}, {pipeline_mode = #tpu.pipeline_mode<synchronous>, transform_indices = @transform_2, window_bounds = array<i64: 1, 512>}, {pipeline_mode = #tpu.pipeline_mode<synchronous>, transform_indices = @transform_3, window_bounds = array<i64: 1, 512>}, {pipeline_mode = #tpu.pipeline_mode<synchronous>, transform_indices = @transform_4, window_bounds = array<i64: 1, 512>}, {pipeline_mode = #tpu.pipeline_mode<synchronous>, transform_indices = @transform_5, window_bounds = array<i64: 32, 512>}, {pipeline_mode = #tpu.pipeline_mode<synchronous>, transform_indices = @transform_6, window_bounds = array<i64: 2, 32>}, {pipeline_mode = #tpu.pipeline_mode<synchronous>, transform_indices = @transform_7, window_bounds = array<i64: 1, 1>}, {pipeline_mode = #tpu.pipeline_mode<synchronous>, transform_indices = @transform_8, window_bounds = array<i64: 2, 1>}]} {
    %c0 = arith.constant 0 : index
    %c0_0 = arith.constant 0 : index
    %0 = vector.load %arg1[%c0, %c0_0] : memref<32x2304xbf16, #tpu.memory_space<vmem>>, vector<32x2304xbf16>
    %c0_1 = arith.constant 0 : index
    %c0_2 = arith.constant 0 : index
    %1 = vector.load %arg2[%c0_1, %c0_2] : memref<2304x512xbf16, #tpu.memory_space<vmem>>, vector<2304x512xbf16>
    %cst = arith.constant dense<0.000000e+00> : vector<32x512xf32>
    %2 = tpu.matmul %0, %1, %cst {dimension_numbers = #tpu.dot_dimension_numbers<[1], [0], [0], [1], [0, 0, 1, 1], [], []>} : vector<32x2304xbf16>, vector<2304x512xbf16>, vector<32x512xf32> -> vector<32x512xf32>
    %c0_3 = arith.constant 0 : index
    %c0_4 = arith.constant 0 : index
    %3 = vector.load %arg3[%c0_3, %c0_4] : memref<1x512xf32, #tpu.memory_space<vmem>>, vector<1x512xf32>
    %4 = vector.broadcast %3 : vector<1x512xf32> to vector<32x512xf32>
    %5 = arith.addf %2, %4 : vector<32x512xf32>
    %cst_5 = arith.constant dense<0.000000e+00> : vector<512xf32>
    %6 = vector.multi_reduction <add>, %5, %cst_5 [0] : vector<32x512xf32> to vector<512xf32>
    %7 = vector.shape_cast %6 : vector<512xf32> to vector<1x512xf32>
    %cst_6 = arith.constant 3.200000e+01 : f32
    %8 = vector.broadcast %cst_6 : f32 to vector<1x512xf32>
    %9 = arith.divf %7, %8 : vector<1x512xf32>
    %10 = vector.broadcast %9 : vector<1x512xf32> to vector<32x512xf32>
    %11 = arith.subf %5, %10 : vector<32x512xf32>
    %12 = arith.mulf %11, %11 : vector<32x512xf32>
    %cst_7 = arith.constant dense<0.000000e+00> : vector<512xf32>
    %13 = vector.multi_reduction <add>, %12, %cst_7 [0] : vector<32x512xf32> to vector<512xf32>
    %14 = vector.shape_cast %13 : vector<512xf32> to vector<1x512xf32>
    %cst_8 = arith.constant 3.200000e+01 : f32
    %15 = vector.broadcast %cst_8 : f32 to vector<1x512xf32>
    %16 = arith.divf %14, %15 : vector<1x512xf32>
    %17 = vector.broadcast %9 : vector<1x512xf32> to vector<32x512xf32>
    %18 = arith.subf %5, %17 : vector<32x512xf32>
    %cst_9 = arith.constant 9.99999974E-6 : f32
    %19 = vector.broadcast %cst_9 : f32 to vector<1x512xf32>
    %20 = arith.addf %16, %19 : vector<1x512xf32>
    %21 = math.rsqrt %20 : vector<1x512xf32>
    %22 = vector.broadcast %21 : vector<1x512xf32> to vector<32x512xf32>
    %23 = arith.mulf %18, %22 : vector<32x512xf32>
    %c0_10 = arith.constant 0 : index
    %c0_11 = arith.constant 0 : index
    %24 = vector.load %arg4[%c0_10, %c0_11] : memref<1x512xf32, #tpu.memory_space<vmem>>, vector<1x512xf32>
    %25 = vector.broadcast %24 : vector<1x512xf32> to vector<32x512xf32>
    %26 = arith.mulf %23, %25 : vector<32x512xf32>
    %c0_12 = arith.constant 0 : index
    %c0_13 = arith.constant 0 : index
    %27 = vector.load %arg5[%c0_12, %c0_13] : memref<1x512xf32, #tpu.memory_space<vmem>>, vector<1x512xf32>
    %28 = vector.broadcast %27 : vector<1x512xf32> to vector<32x512xf32>
    %29 = arith.addf %26, %28 : vector<32x512xf32>
    %cst_14 = arith.constant 0.000000e+00 : f32
    %30 = vector.broadcast %cst_14 : f32 to vector<32x512xf32>
    %31 = arith.cmpf ogt, %29, %30 : vector<32x512xf32>
    %cst_15 = arith.constant 2.000000e-01 : f32
    %32 = vector.broadcast %cst_15 : f32 to vector<32x512xf32>
    %33 = arith.mulf %32, %29 : vector<32x512xf32>
    %34 = arith.select %31, %29, %33 : vector<32x512xi1>, vector<32x512xf32>
    %c0_16 = arith.constant 0 : index
    %c0_17 = arith.constant 0 : index
    %35 = vector.load %arg6[%c0_16, %c0_17] : memref<32x512xf32, #tpu.memory_space<vmem>>, vector<32x512xf32>
    %36 = arith.mulf %34, %35 : vector<32x512xf32>
    %c0_18 = arith.constant 0 : index
    %c0_19 = arith.constant 0 : index
    %37 = vector.load %arg7[%c0_18, %c0_19] : memref<2x32xf32, #tpu.memory_space<vmem>>, vector<2x32xf32>
    %cst_20 = arith.constant dense<0.000000e+00> : vector<2x512xf32>
    %38 = tpu.matmul %37, %36, %cst_20 {dimension_numbers = #tpu.dot_dimension_numbers<[1], [0], [0], [1], [0, 0, 1, 1], [], []>} : vector<2x32xf32>, vector<32x512xf32>, vector<2x512xf32> -> vector<2x512xf32>
    %cst_21 = arith.constant dense<0.000000e+00> : vector<2xf32>
    %39 = vector.multi_reduction <add>, %38, %cst_21 [1] : vector<2x512xf32> to vector<2xf32>
    %40 = vector.shape_cast %39 : vector<2xf32> to vector<2x1xf32>
    %c0_22 = arith.constant 0 : index
    %c0_23 = arith.constant 0 : index
    %41 = vector.load %arg8[%c0_22, %c0_23] : memref<1x1xf32, #tpu.memory_space<vmem>>, vector<1x1xf32>
    %42 = vector.broadcast %41 : vector<1x1xf32> to vector<2x1xf32>
    %43 = arith.addf %40, %42 : vector<2x1xf32>
    %44 = arith.negf %43 : vector<2x1xf32>
    %45 = math.exp %44 : vector<2x1xf32>
    %cst_24 = arith.constant 1.000000e+00 : f32
    %46 = vector.broadcast %cst_24 : f32 to vector<2x1xf32>
    %47 = arith.addf %46, %45 : vector<2x1xf32>
    %48 = arith.divf %46, %47 : vector<2x1xf32>
    %c0_25 = arith.constant 0 : index
    %c0_26 = arith.constant 0 : index
    %49 = vector.load %arg9[%c0_25, %c0_26] : memref<2x1xf32, #tpu.memory_space<vmem>>, vector<2x1xf32>
    tpu.vector_store %arg9[%c0_25, %c0_26], %48 {strides = array<i32>} : memref<2x1xf32, #tpu.memory_space<vmem>>, vector<2x1xf32>,
    return
  }
  func.func @transform_0(%arg0: i32) -> (i32, i32) {
    %c0_i32 = arith.constant 0 : i32
    %c0_i32_0 = arith.constant 0 : i32
    %c0_i32_1 = arith.constant 0 : i32
    return %c0_i32, %c0_i32_0 : i32, i32
  }
  func.func @transform_1(%arg0: i32) -> (i32, i32) {
    %c0_i32 = arith.constant 0 : i32
    %c0_i32_0 = arith.constant 0 : i32
    %c0_i32_1 = arith.constant 0 : i32
    return %c0_i32, %c0_i32_0 : i32, i32
  }
  func.func @transform_2(%arg0: i32) -> (i32, i32) {
    %c0_i32 = arith.constant 0 : i32
    %c0_i32_0 = arith.constant 0 : i32
    %c0_i32_1 = arith.constant 0 : i32
    return %c0_i32, %c0_i32_0 : i32, i32
  }
  func.func @transform_3(%arg0: i32) -> (i32, i32) {
    %c0_i32 = arith.constant 0 : i32
    %c0_i32_0 = arith.constant 0 : i32
    %c0_i32_1 = arith.constant 0 : i32
    return %c0_i32, %c0_i32_0 : i32, i32
  }
  func.func @transform_4(%arg0: i32) -> (i32, i32) {
    %c0_i32 = arith.constant 0 : i32
    %c0_i32_0 = arith.constant 0 : i32
    %c0_i32_1 = arith.constant 0 : i32
    return %c0_i32, %c0_i32_0 : i32, i32
  }
  func.func @transform_5(%arg0: i32) -> (i32, i32) {
    %c0_i32 = arith.constant 0 : i32
    %c0_i32_0 = arith.constant 0 : i32
    %c0_i32_1 = arith.constant 0 : i32
    return %c0_i32, %c0_i32_0 : i32, i32
  }
  func.func @transform_6(%arg0: i32) -> (i32, i32) {
    %c0_i32 = arith.constant 0 : i32
    %c0_i32_0 = arith.constant 0 : i32
    %c0_i32_1 = arith.constant 0 : i32
    return %c0_i32, %c0_i32_0 : i32, i32
  }
  func.func @transform_7(%arg0: i32) -> (i32, i32) {
    %c0_i32 = arith.constant 0 : i32
    %c0_i32_0 = arith.constant 0 : i32
    %c0_i32_1 = arith.constant 0 : i32
    return %c0_i32, %c0_i32_0 : i32, i32
  }
  func.func @transform_8(%arg0: i32) -> (i32, i32) {
    %c0_i32 = arith.constant 0 : i32
    %c0_i32_0 = arith.constant 0 : i32
    %c0_i32_1 = arith.constant 0 : i32
    return %c0_i32, %c0_i32_0 : i32, i32
  }
}

</mosaic_0001>

<llo_original>
// kernel: discriminator_forward.4
$region0: #{discriminator_forward.4}
  #allocation0 [shape = 'u32[]', space=smem, size = 0x4, offset = 0x4, fixed_abs, tag = 'smem constant byte address 0x4 - core index']
  #allocation1 [shape = 'u32[144,128]{1,0:T(1,128)}', space=vmem, size = 0x12000, scoped, tag = 'internal scratch']
  %s0 = inlined_call_operand.vmem [shape: bf16[512,48], index: 0, kind: input, shape index: {}]
  %s1 = inlined_call_operand.vmem [shape: bf16[48,64], index: 1, kind: input, shape index: {}]
  %s2 = inlined_call_operand.vmem [shape: f32[1,64], index: 2, kind: input, shape index: {}]
  %s3 = inlined_call_operand.vmem [shape: bf16[512,64], index: 3, kind: output, shape index: {}]
  %s4 = sld [smem:[#allocation0]]
  $region45: #{discriminator_forward.4} parent=0
    _
  %s6 = ssub.s32 1, %s4
  %s7 = scalar_select 0, %s6, %s4
  loop: start=0, step=1, limit=4
  $region2: #{discriminator_forward.4} parent=0 // loop_pre_header
    _
  $region3: #{discriminator_forward.4} parent=0 // loop_header
    %s9 = sphi 0, %s13
    %p10 = scmp.ge.s32.totalorder %s9, 4
    %s19 = sphi 0, %s21
    %s22 = sphi 0, %s19
    %s23 = sphi 0, %s22
    %s39 = sphi 0, %s23
    %s43 = sphi 0, %s43
    %s45 = sphi 0, %s43
    %s46 = sphi 0, %s45
    %s60 = sphi 0, %s46
    %s64 = sphi 0, %s64
    %s66 = sphi 0, %s64
    %s67 = sphi 0, %s66
    %s81 = sphi 0, %s67
    %s87 = sphi 0, %s89
    %s90 = sphi 0, %s87
    %s91 = sphi 0, %s90
    %s107 = sphi 0, %s91
  $region4: #{discriminator_forward.4} parent=0 // loop_header_branch
    %12 = sbr.rel (%p10) target = $region8
  $region5: #{discriminator_forward.4} parent=0 // loop_body
    %s14 = ssub.s32 %s9, 1
    %s15 = ssub.s32 %s9, 2
    %s16 = sadd.s32 %s9, 1
    %s17 = ssub.s32 %s9, %s16
    %p18 = scmp.eq.s32.totalorder %s17, 0
    %s20 = sadd.s32 %s19, 1
    %s21 = scalar_select %p18, %s19, %s20
    %p24 = pneg %p18
    %p25 = scmp.eq.s32.totalorder %s9, 1
    %p26 = por %p24, %p25
    %p27 = scmp.ne.s32.totalorder %s19, %s22
    %p28 = scmp.eq.s32.totalorder %s9, 0
    %p29 = por %p27, %p28
    %p30 = scmp.ne.s32.totalorder %s19, %s22
    %p31 = scmp.eq.s32.totalorder %s14, 1
    %p32 = por %p30, %p31
    %p33 = scmp.ne.s32.totalorder %s22, %s23
    %p34 = scmp.eq.s32.totalorder %s14, 0
    %p35 = por %p33, %p34
    %p36 = scmp.ne.s32.totalorder %s22, %s23
    %p37 = scmp.eq.s32.totalorder %s15, 1
    %p38 = por %p36, %p37
    %p40 = scmp.ne.s32.totalorder %s23, %s39
    %p41 = scmp.eq.s32.totalorder %s15, 0
    %p42 = por %p40, %p41
    %s44 = sadd.s32 %s43, 1
    %p47 = scmp.eq.s32.totalorder %s9, 1
    %p48 = scmp.ne.s32.totalorder %s43, %s45
    %p49 = scmp.eq.s32.totalorder %s9, 0
    %p50 = por %p48, %p49
    %p51 = scmp.ne.s32.totalorder %s43, %s45
    %p52 = scmp.eq.s32.totalorder %s14, 1
    %p53 = por %p51, %p52
    %p54 = scmp.ne.s32.totalorder %s45, %s46
    %p55 = scmp.eq.s32.totalorder %s14, 0
    %p56 = por %p54, %p55
    %p57 = scmp.ne.s32.totalorder %s45, %s46
    %p58 = scmp.eq.s32.totalorder %s15, 1
    %p59 = por %p57, %p58
    %p61 = scmp.ne.s32.totalorder %s46, %s60
    %p62 = scmp.eq.s32.totalorder %s15, 0
    %p63 = por %p61, %p62
    %s65 = sadd.s32 %s64, 1
    %p68 = scmp.eq.s32.totalorder %s9, 1
    %p69 = scmp.ne.s32.totalorder %s64, %s66
    %p70 = scmp.eq.s32.totalorder %s9, 0
    %p71 = por %p69, %p70
    %p72 = scmp.ne.s32.totalorder %s64, %s66
    %p73 = scmp.eq.s32.totalorder %s14, 1
    %p74 = por %p72, %p73
    %p75 = scmp.ne.s32.totalorder %s66, %s67
    %p76 = scmp.eq.s32.totalorder %s14, 0
    %p77 = por %p75, %p76
    %p78 = scmp.ne.s32.totalorder %s66, %s67
    %p79 = scmp.eq.s32.totalorder %s15, 1
    %p80 = por %p78, %p79
    %p82 = scmp.ne.s32.totalorder %s67, %s81
    %p83 = scmp.eq.s32.totalorder %s15, 0
    %p84 = por %p82, %p83
    %s85 = ssub.s32 %s9, %s16
    %p86 = scmp.eq.s32.totalorder %s85, 0
    %s88 = sadd.s32 %s87, 1
    %s89 = scalar_select %p86, %s87, %s88
    %p92 = pneg %p86
    %p93 = scmp.eq.s32.totalorder %s9, 1
    %p94 = por %p92, %p93
    %p95 = scmp.ne.s32.totalorder %s87, %s90
    %p96 = scmp.eq.s32.totalorder %s9, 0
    %p97 = por %p95, %p96
    %p98 = scmp.ne.s32.totalorder %s87, %s90
    %p99 = scmp.eq.s32.totalorder %s14, 1
    %p100 = por %p98, %p99
    %p101 = scmp.ne.s32.totalorder %s90, %s91
    %p102 = scmp.eq.s32.totalorder %s14, 0
    %p103 = por %p101, %p102
    %p104 = scmp.ne.s32.totalorder %s90, %s91
    %p105 = scmp.eq.s32.totalorder %s15, 1
    %p106 = por %p104, %p105
    %p108 = scmp.ne.s32.totalorder %s91, %s107
    %p109 = scmp.eq.s32.totalorder %s15, 0
    %p110 = por %p108, %p109
    %p111 = scmp.le.s32.totalorder 1, %s9
    %p112 = scmp.lt.s32.totalorder %s9, 3
    %p113 = pnand %p111, %p112
    %p114 = pneg %p113
    // Predicated region
    $region9: #{discriminator_forward.4} parent=5 // pred_check
      _
    $region10: #{discriminator_forward.4} parent=5 // pred_check_branch
      %116 = sbr.rel (%p113) target = $region12
    $region11: #{discriminator_forward.4} parent=5 // pred_region
      %s117 = ssub.s32 %s9, 1
      // Predicated region
      $region13: #{discriminator_forward.4} parent=11 // pred_check
        %p118 = pneg %p56
      $region14: #{discriminator_forward.4} parent=11 // pred_check_branch
        %120 = sbr.rel (%p118) target = $region16
      $region15: #{discriminator_forward.4} parent=11 // pred_region
        _
      $region16: #{discriminator_forward.4} parent=11 // pred_fallthru
        _
      // Predicated region
      $region17: #{discriminator_forward.4} parent=11 // pred_check
        %p121 = pneg %p77
      $region18: #{discriminator_forward.4} parent=11 // pred_check_branch
        %123 = sbr.rel (%p121) target = $region20
      $region19: #{discriminator_forward.4} parent=11 // pred_region
        _
      $region20: #{discriminator_forward.4} parent=11 // pred_fallthru
        _
    $region12: #{discriminator_forward.4} parent=5 // pred_fallthru
      _
    %p124 = scmp.lt.s32.totalorder %s9, 2
    // Predicated region
    $region21: #{discriminator_forward.4} parent=5 // pred_check
      %p125 = pneg %p124
    $region22: #{discriminator_forward.4} parent=5 // pred_check_branch
      %127 = sbr.rel (%p125) target = $region24
    $region23: #{discriminator_forward.4} parent=5 // pred_region
      // Predicated region
      $region25: #{discriminator_forward.4} parent=23 // pred_check
        %p128 = pneg %p29
      $region26: #{discriminator_forward.4} parent=23 // pred_check_branch
        %130 = sbr.rel (%p128) target = $region28
      $region27: #{discriminator_forward.4} parent=23 // pred_region
        %s131 = smul.u32 32, %s9
        %p132 = scmp.lt.s32.totalorder %s131, 63
        %s133 = scalar_select %p132, %s131, 63
        %s134 = smul.addr %s133, 4
        %s135 = scalar_lea.vmem %s0, %s134
        %s136 = smul.u32 32, %s9
      $region28: #{discriminator_forward.4} parent=23 // pred_fallthru
        _
    $region24: #{discriminator_forward.4} parent=5 // pred_fallthru
      _
    %p137 = scmp.le.s32.totalorder 1, %s9
    %p138 = scmp.lt.s32.totalorder %s9, 3
    %p139 = pnand %p137, %p138
    %p140 = pneg %p139
    // Predicated region
    $region29: #{discriminator_forward.4} parent=5 // pred_check
      _
    $region30: #{discriminator_forward.4} parent=5 // pred_check_branch
      %142 = sbr.rel (%p139) target = $region32
    $region31: #{discriminator_forward.4} parent=5 // pred_region
      %s143 = ssub.s32 %s9, 1
      %s144 = smul.u32 32, %s14
      %p145 = scmp.lt.s32.totalorder %s144, 63
      %s146 = scalar_select %p145, %s144, 63
      %s147 = smul.addr %s146, 4
      %s148 = scalar_lea.vmem %s0, %s147
      %p149 = pneg %p35
      %p150 = pneg %p32
      %p151 = pneg %p56
      %p152 = pneg %p53
      %p153 = pneg %p77
      %p154 = pneg %p74
      %p155 = pneg %p103
      %p156 = pneg %p100
      %s157 = smul.u32 32, %s14
      %p158 = scmp.lt.s32.totalorder %s157, 63
      %s159 = scalar_select %p158, %s157, 63
      %s160 = smul.addr %s159, 4
      %s161 = scalar_lea.vmem %s3, %s160
      %s162 = smul.u32 32, %s14
      %p163 = scmp.lt.s32.totalorder %s162, 63
      %s164 = scalar_select %p163, %s162, 63
      %s165 = smul.addr %s164, 4
      %s166 = scalar_lea.vmem %s0, %s165
      %s167 = smul.u32 32, %s14
      %s168 = smul.u32 32, %s14
      %p169 = scmp.lt.s32.totalorder %s168, 63
      %s170 = scalar_select %p169, %s168, 63
      %s171 = smul.addr %s170, 4
      %s172 = scalar_lea.vmem %s3, %s171
      %s173 = smul.u32 32, %s14
      %v175 = vld [vmem:[%s166] sm:$0xf]
      %v176 = vld [vmem:[%s166 + $0x4] sm:$0xf]
      %v177 = vld [vmem:[%s166 + $0x8] sm:$0xf]
      %v178 = vld [vmem:[%s166 + $0xc] sm:$0xf]
      %v179 = vld [vmem:[%s166 + $0x10] sm:$0xf]
      %v180 = vld [vmem:[%s166 + $0x14] sm:$0xf]
      %v181 = vld [vmem:[%s166 + $0x18] sm:$0xf]
      %v182 = vld [vmem:[%s166 + $0x1c] sm:$0xf]
      %v183 = vld [vmem:[%s166 + $0x20] sm:$0xf]
      %v184 = vld [vmem:[%s166 + $0x24] sm:$0xf]
      %v185 = vld [vmem:[%s166 + $0x28] sm:$0xf]
      %v186 = vld [vmem:[%s166 + $0x2c] sm:$0xf]
      %v187 = vld [vmem:[%s166 + $0x30] sm:$0xf]
      %v188 = vld [vmem:[%s166 + $0x34] sm:$0xf]
      %v189 = vld [vmem:[%s166 + $0x38] sm:$0xf]
      %v190 = vld [vmem:[%s166 + $0x3c] sm:$0xf]
      %v191 = vld [vmem:[%s166 + $0x40] sm:$0xf]
      %v192 = vld [vmem:[%s166 + $0x44] sm:$0xf]
      %v193 = vld [vmem:[%s166 + $0x48] sm:$0xf]
      %v194 = vld [vmem:[%s166 + $0x4c] sm:$0xf]
      %v195 = vld [vmem:[%s166 + $0x50] sm:$0xf]
      %v196 = vld [vmem:[%s166 + $0x54] sm:$0xf]
      %v197 = vld [vmem:[%s166 + $0x58] sm:$0xf]
      %v198 = vld [vmem:[%s166 + $0x5c] sm:$0xf]
      %v199 = vld [vmem:[%s166 + $0x60] sm:$0xf]
      %v200 = vld [vmem:[%s166 + $0x64] sm:$0xf]
      %v201 = vld [vmem:[%s166 + $0x68] sm:$0xf]
      %v202 = vld [vmem:[%s166 + $0x6c] sm:$0xf]
      %v203 = vld [vmem:[%s166 + $0x70] sm:$0xf]
      %v204 = vld [vmem:[%s166 + $0x74] sm:$0xf]
      %v205 = vld [vmem:[%s166 + $0x78] sm:$0xf]
      %v206 = vld [vmem:[%s166 + $0x7c] sm:$0xf]
      %v207 = vld [vmem:[%s1] sm:$0xf]
      %v208 = vld [vmem:[%s1 + $0x4] sm:$0xf]
      %v209 = vld [vmem:[%s1 + $0x8] sm:$0xf]
      %v210 = vld [vmem:[%s1 + $0xc] sm:$0xf]
      %v211 = vld [vmem:[%s1 + $0x10] sm:$0xf]
      %v212 = vld [vmem:[%s1 + $0x14] sm:$0xf]
      %v213 = vld [vmem:[%s2] sm:$0x1]
      %v215 = vlaneseq
      %v216 = vshrl.u32 %v215, 7
      %v217 = vsub.s32 0, %v216
      %v218 = vrot.slane %v213, %v217
      %v252 = vunpack.c.l.b16 %v175
      %v253 = vunpack.c.l.b16 %v176
      %v254 = vunpack.c.l.b16 %v177
      %v255 = vunpack.c.l.b16 %v178
      %v256 = vunpack.c.l.b16 %v179
      %v257 = vunpack.c.l.b16 %v180
      %v258 = vunpack.c.l.b16 %v181
      %v259 = vunpack.c.l.b16 %v182
      %v260 = vunpack.c.l.b16 %v183
      %v261 = vunpack.c.l.b16 %v184
      %v262 = vunpack.c.l.b16 %v185
      %v263 = vunpack.c.l.b16 %v186
      %v264 = vunpack.c.l.b16 %v187
      %v265 = vunpack.c.l.b16 %v188
      %v266 = vunpack.c.l.b16 %v189
      %v267 = vunpack.c.l.b16 %v190
      %v268 = vunpack.c.l.b16 %v191
      %v269 = vunpack.c.l.b16 %v192
      %v270 = vunpack.c.l.b16 %v193
      %v271 = vunpack.c.l.b16 %v194
      %v272 = vunpack.c.l.b16 %v195
      %v273 = vunpack.c.l.b16 %v196
      %v274 = vunpack.c.l.b16 %v197
      %v275 = vunpack.c.l.b16 %v198
      %v276 = vunpack.c.l.b16 %v199
      %v277 = vunpack.c.l.b16 %v200
      %v278 = vunpack.c.l.b16 %v201
      %v279 = vunpack.c.l.b16 %v202
      %v280 = vunpack.c.l.b16 %v203
      %v281 = vunpack.c.l.b16 %v204
      %v282 = vunpack.c.l.b16 %v205
      %v283 = vunpack.c.l.b16 %v206
      %v284 = vpack.c.b16 %v253, %v252
      %v285 = vpack.c.b16 %v255, %v254
      %v286 = vpack.c.b16 %v257, %v256
      %v287 = vpack.c.b16 %v259, %v258
      %v288 = vpack.c.b16 %v261, %v260
      %v289 = vpack.c.b16 %v263, %v262
      %v290 = vpack.c.b16 %v265, %v264
      %v291 = vpack.c.b16 %v267, %v266
      %v292 = vpack.c.b16 %v269, %v268
      %v293 = vpack.c.b16 %v271, %v270
      %v294 = vpack.c.b16 %v273, %v272
      %v295 = vpack.c.b16 %v275, %v274
      %v296 = vpack.c.b16 %v277, %v276
      %v297 = vpack.c.b16 %v279, %v278
      %v298 = vpack.c.b16 %v281, %v280
      %v299 = vpack.c.b16 %v283, %v282
      %v306 = vunpack.c.l.b16 %v207
      %v307 = vunpack.c.l.b16 %v208
      %v308 = vunpack.c.l.b16 %v209
      %v309 = vunpack.c.l.b16 %v210
      %v310 = vunpack.c.l.b16 %v211
      %v311 = vunpack.c.l.b16 %v212
      %v312 = vpack.c.b16 %v307, %v306
      %v313 = vpack.c.b16 %v309, %v308
      %v314 = vpack.c.b16 %v311, %v310
      %vm318 = vcmask 392192
      %v320 = vsel %vm318, %v284, 0
      %v323 = vsel %vm318, %v285, 0
      %v326 = vsel %vm318, %v286, 0
      %v329 = vsel %vm318, %v287, 0
      %v332 = vsel %vm318, %v288, 0
      %v335 = vsel %vm318, %v289, 0
      %v338 = vsel %vm318, %v290, 0
      %v341 = vsel %vm318, %v291, 0
      %v344 = vsel %vm318, %v292, 0
      %v347 = vsel %vm318, %v293, 0
      %v350 = vsel %vm318, %v294, 0
      %v353 = vsel %vm318, %v295, 0
      %v356 = vsel %vm318, %v296, 0
      %v359 = vsel %vm318, %v297, 0
      %v362 = vsel %vm318, %v298, 0
      %v365 = vsel %vm318, %v299, 0
      %367 = vmatprep.subr.bf16.mxu0 0
      %368 = vmatpush1.bf16.msra.mxu0 0
      %369 = vmatprep.subr.bf16.mxu0 0
      %370 = vmatpush1.bf16.msra.mxu0 0
      %371 = vmatprep.subr.bf16.mxu0 0
      %372 = vmatpush1.bf16.msra.mxu0 0
      %373 = vmatprep.subr.bf16.mxu0 0
      %374 = vmatpush1.bf16.msra.mxu0 0
      %375 = vmatprep.subr.bf16.mxu0 0
      %376 = vmatpush1.bf16.msra.mxu0 0
      %377 = vmatprep.subr.bf16.mxu0 0
      %378 = vmatpush1.bf16.msra.mxu0 %v314
      %379 = vmatprep.subr.bf16.mxu0 0
      %380 = vmatpush1.bf16.msra.mxu0 %v313
      %381 = vmatprep.subr.bf16.mxu0 0
      %382 = vmatpush1.bf16.msra.mxu0 %v312
      %383 = vmatprep.subr.bf16.mxu0 0
      %384 = vmatpush2.bf16.msra.mxu0 0
      %385 = vmatprep.subr.bf16.mxu0 0
      %386 = vmatpush2.bf16.msra.mxu0 0
      %387 = vmatprep.subr.bf16.mxu0 0
      %388 = vmatpush2.bf16.msra.mxu0 0
      %389 = vmatprep.subr.bf16.mxu0 0
      %390 = vmatpush2.bf16.msra.mxu0 0
      %391 = vmatprep.subr.bf16.mxu0 0
      %392 = vmatpush2.bf16.msra.mxu0 0
      %393 = vmatprep.subr.bf16.mxu0 0
      %394 = vmatpush2.bf16.msra.mxu0 0
      %395 = vmatprep.subr.bf16.mxu0 0
      %396 = vmatpush2.bf16.msra.mxu0 0
      %397 = vmatprep.subr.bf16.mxu0 0
      %398 = vmatpush2.bf16.msra.mxu0 0
      %399 = vmatprep.mubr.bf16.mxu0 0
      %400 = vmatmul.mubr.bf16.gmra.mxu0 %v320
      %v401 = vpop.f32.mrf.mxu0
      %v402 = vadd.f32 %v218, %v401
      %v403 = vpop.f32.mrf.mxu0
      %v404 = vpop.f32.mrf.mxu0
      %v405 = vadd.f32 %v218, %v404
      %v406 = vpop.f32.mrf.mxu0
      %407 = vmatprep.mubr.bf16.mxu0 0
      %408 = vmatmul.mubr.bf16.gmra.mxu0 %v323
      %v409 = vpop.f32.mrf.mxu0
      %v410 = vadd.f32 %v218, %v409
      %v411 = vpop.f32.mrf.mxu0
      %v412 = vpop.f32.mrf.mxu0
      %v413 = vadd.f32 %v218, %v412
      %v414 = vpop.f32.mrf.mxu0
      %415 = vmatprep.mubr.bf16.mxu0 0
      %416 = vmatmul.mubr.bf16.gmra.mxu0 %v326
      %v417 = vpop.f32.mrf.mxu0
      %v418 = vadd.f32 %v218, %v417
      %v419 = vpop.f32.mrf.mxu0
      %v420 = vpop.f32.mrf.mxu0
      %v421 = vadd.f32 %v218, %v420
      %v422 = vpop.f32.mrf.mxu0
      %423 = vmatprep.mubr.bf16.mxu0 0
      %424 = vmatmul.mubr.bf16.gmra.mxu0 %v329
      %v425 = vpop.f32.mrf.mxu0
      %v426 = vadd.f32 %v218, %v425
      %v427 = vpop.f32.mrf.mxu0
      %v428 = vpop.f32.mrf.mxu0
      %v429 = vadd.f32 %v218, %v428
      %v430 = vpop.f32.mrf.mxu0
      %431 = vmatprep.mubr.bf16.mxu0 0
      %432 = vmatmul.mubr.bf16.gmra.mxu0 %v332
      %v433 = vpop.f32.mrf.mxu0
      %v434 = vadd.f32 %v218, %v433
      %v435 = vpop.f32.mrf.mxu0
      %v436 = vpop.f32.mrf.mxu0
      %v437 = vadd.f32 %v218, %v436
      %v438 = vpop.f32.mrf.mxu0
      %439 = vmatprep.mubr.bf16.mxu0 0
      %440 = vmatmul.mubr.bf16.gmra.mxu0 %v335
      %v441 = vpop.f32.mrf.mxu0
      %v442 = vadd.f32 %v218, %v441
      %v443 = vpop.f32.mrf.mxu0
      %v444 = vpop.f32.mrf.mxu0
      %v445 = vadd.f32 %v218, %v444
      %v446 = vpop.f32.mrf.mxu0
      %447 = vmatprep.mubr.bf16.mxu0 0
      %448 = vmatmul.mubr.bf16.gmra.mxu0 %v338
      %v449 = vpop.f32.mrf.mxu0
      %v450 = vadd.f32 %v218, %v449
      %v451 = vpop.f32.mrf.mxu0
      %v452 = vpop.f32.mrf.mxu0
      %v453 = vadd.f32 %v218, %v452
      %v454 = vpop.f32.mrf.mxu0
      %455 = vmatprep.mubr.bf16.mxu0 0
      %456 = vmatmul.mubr.bf16.gmra.mxu0 %v341
      %v457 = vpop.f32.mrf.mxu0
      %v458 = vadd.f32 %v218, %v457
      %v459 = vpop.f32.mrf.mxu0
      %v460 = vpop.f32.mrf.mxu0
      %v461 = vadd.f32 %v218, %v460
      %v462 = vpop.f32.mrf.mxu0
      %463 = vmatprep.mubr.bf16.mxu0 0
      %464 = vmatmul.mubr.bf16.gmra.mxu0 %v344
      %v465 = vpop.f32.mrf.mxu0
      %v466 = vadd.f32 %v218, %v465
      %v467 = vpop.f32.mrf.mxu0
      %v468 = vpop.f32.mrf.mxu0
      %v469 = vadd.f32 %v218, %v468
      %v470 = vpop.f32.mrf.mxu0
      %471 = vmatprep.mubr.bf16.mxu0 0
      %472 = vmatmul.mubr.bf16.gmra.mxu0 %v347
      %v473 = vpop.f32.mrf.mxu0
      %v474 = vadd.f32 %v218, %v473
      %v475 = vpop.f32.mrf.mxu0
      %v476 = vpop.f32.mrf.mxu0
      %v477 = vadd.f32 %v218, %v476
      %v478 = vpop.f32.mrf.mxu0
      %479 = vmatprep.mubr.bf16.mxu0 0
      %480 = vmatmul.mubr.bf16.gmra.mxu0 %v350
      %v481 = vpop.f32.mrf.mxu0
      %v482 = vadd.f32 %v218, %v481
      %v483 = vpop.f32.mrf.mxu0
      %v484 = vpop.f32.mrf.mxu0
      %v485 = vadd.f32 %v218, %v484
      %v486 = vpop.f32.mrf.mxu0
      %487 = vmatprep.mubr.bf16.mxu0 0
      %488 = vmatmul.mubr.bf16.gmra.mxu0 %v353
      %v489 = vpop.f32.mrf.mxu0
      %v490 = vadd.f32 %v218, %v489
      %v491 = vpop.f32.mrf.mxu0
      %v492 = vpop.f32.mrf.mxu0
      %v493 = vadd.f32 %v218, %v492
      %v494 = vpop.f32.mrf.mxu0
      %495 = vmatprep.mubr.bf16.mxu0 0
      %496 = vmatmul.mubr.bf16.gmra.mxu0 %v356
      %v497 = vpop.f32.mrf.mxu0
      %v498 = vadd.f32 %v218, %v497
      %v499 = vpop.f32.mrf.mxu0
      %v500 = vpop.f32.mrf.mxu0
      %v501 = vadd.f32 %v218, %v500
      %v502 = vpop.f32.mrf.mxu0
      %503 = vmatprep.mubr.bf16.mxu0 0
      %504 = vmatmul.mubr.bf16.gmra.mxu0 %v359
      %v505 = vpop.f32.mrf.mxu0
      %v506 = vadd.f32 %v218, %v505
      %v507 = vpop.f32.mrf.mxu0
      %v508 = vpop.f32.mrf.mxu0
      %v509 = vadd.f32 %v218, %v508
      %v510 = vpop.f32.mrf.mxu0
      %511 = vmatprep.mubr.bf16.mxu0 0
      %512 = vmatmul.mubr.bf16.gmra.mxu0 %v362
      %v513 = vpop.f32.mrf.mxu0
      %v514 = vadd.f32 %v218, %v513
      %v515 = vpop.f32.mrf.mxu0
      %v516 = vpop.f32.mrf.mxu0
      %v517 = vadd.f32 %v218, %v516
      %v518 = vpop.f32.mrf.mxu0
      %519 = vmatprep.mubr.bf16.mxu0 0
      %520 = vmatmul.mubr.bf16.gmra.mxu0 %v365
      %v521 = vpop.f32.mrf.mxu0
      %v522 = vadd.f32 %v218, %v521
      %v523 = vpop.f32.mrf.mxu0
      %v524 = vpop.f32.mrf.mxu0
      %v525 = vadd.f32 %v218, %v524
      %v526 = vpop.f32.mrf.mxu0
      %527 = vdwg.mxu0
      %vm528 = vcmp.gt.f32.partialorder %v402, 0.0
      %vm529 = vcmp.gt.f32.partialorder %v405, 0.0
      %vm530 = vcmp.gt.f32.partialorder %v410, 0.0
      %vm531 = vcmp.gt.f32.partialorder %v413, 0.0
      %vm532 = vcmp.gt.f32.partialorder %v418, 0.0
      %vm533 = vcmp.gt.f32.partialorder %v421, 0.0
      %vm534 = vcmp.gt.f32.partialorder %v426, 0.0
      %vm535 = vcmp.gt.f32.partialorder %v429, 0.0
      %vm536 = vcmp.gt.f32.partialorder %v434, 0.0
      %vm537 = vcmp.gt.f32.partialorder %v437, 0.0
      %vm538 = vcmp.gt.f32.partialorder %v442, 0.0
      %vm539 = vcmp.gt.f32.partialorder %v445, 0.0
      %vm540 = vcmp.gt.f32.partialorder %v450, 0.0
      %vm541 = vcmp.gt.f32.partialorder %v453, 0.0
      %vm542 = vcmp.gt.f32.partialorder %v458, 0.0
      %vm543 = vcmp.gt.f32.partialorder %v461, 0.0
      %vm544 = vcmp.gt.f32.partialorder %v466, 0.0
      %vm545 = vcmp.gt.f32.partialorder %v469, 0.0
      %vm546 = vcmp.gt.f32.partialorder %v474, 0.0
      %vm547 = vcmp.gt.f32.partialorder %v477, 0.0
      %vm548 = vcmp.gt.f32.partialorder %v482, 0.0
      %vm549 = vcmp.gt.f32.partialorder %v485, 0.0
      %vm550 = vcmp.gt.f32.partialorder %v490, 0.0
      %vm551 = vcmp.gt.f32.partialorder %v493, 0.0
      %vm552 = vcmp.gt.f32.partialorder %v498, 0.0
      %vm553 = vcmp.gt.f32.partialorder %v501, 0.0
      %vm554 = vcmp.gt.f32.partialorder %v506, 0.0
      %vm555 = vcmp.gt.f32.partialorder %v509, 0.0
      %vm556 = vcmp.gt.f32.partialorder %v514, 0.0
      %vm557 = vcmp.gt.f32.partialorder %v517, 0.0
      %vm558 = vcmp.gt.f32.partialorder %v522, 0.0
      %vm559 = vcmp.gt.f32.partialorder %v525, 0.0
      %v560 = vmul.f32 %v402, 0.2
      %v561 = vmul.f32 %v405, 0.2
      %v562 = vmul.f32 %v410, 0.2
      %v563 = vmul.f32 %v413, 0.2
      %v564 = vmul.f32 %v418, 0.2
      %v565 = vmul.f32 %v421, 0.2
      %v566 = vmul.f32 %v426, 0.2
      %v567 = vmul.f32 %v429, 0.2
      %v568 = vmul.f32 %v434, 0.2
      %v569 = vmul.f32 %v437, 0.2
      %v570 = vmul.f32 %v442, 0.2
      %v571 = vmul.f32 %v445, 0.2
      %v572 = vmul.f32 %v450, 0.2
      %v573 = vmul.f32 %v453, 0.2
      %v574 = vmul.f32 %v458, 0.2
      %v575 = vmul.f32 %v461, 0.2
      %v576 = vmul.f32 %v466, 0.2
      %v577 = vmul.f32 %v469, 0.2
      %v578 = vmul.f32 %v474, 0.2
      %v579 = vmul.f32 %v477, 0.2
      %v580 = vmul.f32 %v482, 0.2
      %v581 = vmul.f32 %v485, 0.2
      %v582 = vmul.f32 %v490, 0.2
      %v583 = vmul.f32 %v493, 0.2
      %v584 = vmul.f32 %v498, 0.2
      %v585 = vmul.f32 %v501, 0.2
      %v586 = vmul.f32 %v506, 0.2
      %v587 = vmul.f32 %v509, 0.2
      %v588 = vmul.f32 %v514, 0.2
      %v589 = vmul.f32 %v517, 0.2
      %v590 = vmul.f32 %v522, 0.2
      %v591 = vmul.f32 %v525, 0.2
      %v592 = vsel %vm528, %v402, %v560
      %v593 = vsel %vm529, %v405, %v561
      %v594 = vsel %vm530, %v410, %v562
      %v595 = vsel %vm531, %v413, %v563
      %v596 = vsel %vm532, %v418, %v564
      %v597 = vsel %vm533, %v421, %v565
      %v598 = vsel %vm534, %v426, %v566
      %v599 = vsel %vm535, %v429, %v567
      %v600 = vsel %vm536, %v434, %v568
      %v601 = vsel %vm537, %v437, %v569
      %v602 = vsel %vm538, %v442, %v570
      %v603 = vsel %vm539, %v445, %v571
      %v604 = vsel %vm540, %v450, %v572
      %v605 = vsel %vm541, %v453, %v573
      %v606 = vsel %vm542, %v458, %v574
      %v607 = vsel %vm543, %v461, %v575
      %v608 = vsel %vm544, %v466, %v576
      %v609 = vsel %vm545, %v469, %v577
      %v610 = vsel %vm546, %v474, %v578
      %v611 = vsel %vm547, %v477, %v579
      %v612 = vsel %vm548, %v482, %v580
      %v613 = vsel %vm549, %v485, %v581
      %v614 = vsel %vm550, %v490, %v582
      %v615 = vsel %vm551, %v493, %v583
      %v616 = vsel %vm552, %v498, %v584
      %v617 = vsel %vm553, %v501, %v585
      %v618 = vsel %vm554, %v506, %v586
      %v619 = vsel %vm555, %v509, %v587
      %v620 = vsel %vm556, %v514, %v588
      %v621 = vsel %vm557, %v517, %v589
      %v622 = vsel %vm558, %v522, %v590
      %v623 = vsel %vm559, %v525, %v591
      %v624 = vpack.c.bf16 %v593, %v592
      %v625 = vpack.c.bf16 %v595, %v594
      %v626 = vpack.c.bf16 %v597, %v596
      %v627 = vpack.c.bf16 %v599, %v598
      %v628 = vpack.c.bf16 %v601, %v600
      %v629 = vpack.c.bf16 %v603, %v602
      %v630 = vpack.c.bf16 %v605, %v604
      %v631 = vpack.c.bf16 %v607, %v606
      %v632 = vpack.c.bf16 %v609, %v608
      %v633 = vpack.c.bf16 %v611, %v610
      %v634 = vpack.c.bf16 %v613, %v612
      %v635 = vpack.c.bf16 %v615, %v614
      %v636 = vpack.c.bf16 %v617, %v616
      %v637 = vpack.c.bf16 %v619, %v618
      %v638 = vpack.c.bf16 %v621, %v620
      %v639 = vpack.c.bf16 %v623, %v622
      %v656 = vunpack.c.l.b16 %v624
      %v657 = vunpack.c.h.b16 %v624
      %v658 = vunpack.c.l.b16 %v625
      %v659 = vunpack.c.h.b16 %v625
      %v660 = vunpack.c.l.b16 %v626
      %v661 = vunpack.c.h.b16 %v626
      %v662 = vunpack.c.l.b16 %v627
      %v663 = vunpack.c.h.b16 %v627
      %v664 = vunpack.c.l.b16 %v628
      %v665 = vunpack.c.h.b16 %v628
      %v666 = vunpack.c.l.b16 %v629
      %v667 = vunpack.c.h.b16 %v629
      %v668 = vunpack.c.l.b16 %v630
      %v669 = vunpack.c.h.b16 %v630
      %v670 = vunpack.c.l.b16 %v631
      %v671 = vunpack.c.h.b16 %v631
      %v672 = vunpack.c.l.b16 %v632
      %v673 = vunpack.c.h.b16 %v632
      %v674 = vunpack.c.l.b16 %v633
      %v675 = vunpack.c.h.b16 %v633
      %v676 = vunpack.c.l.b16 %v634
      %v677 = vunpack.c.h.b16 %v634
      %v678 = vunpack.c.l.b16 %v635
      %v679 = vunpack.c.h.b16 %v635
      %v680 = vunpack.c.l.b16 %v636
      %v681 = vunpack.c.h.b16 %v636
      %v682 = vunpack.c.l.b16 %v637
      %v683 = vunpack.c.h.b16 %v637
      %v684 = vunpack.c.l.b16 %v638
      %v685 = vunpack.c.h.b16 %v638
      %v686 = vunpack.c.l.b16 %v639
      %v687 = vunpack.c.h.b16 %v639
      %v688 = vpack.c.b16 %v656, %v656
      %v689 = vpack.c.b16 %v657, %v657
      %v690 = vpack.c.b16 %v658, %v658
      %v691 = vpack.c.b16 %v659, %v659
      %v692 = vpack.c.b16 %v660, %v660
      %v693 = vpack.c.b16 %v661, %v661
      %v694 = vpack.c.b16 %v662, %v662
      %v695 = vpack.c.b16 %v663, %v663
      %v696 = vpack.c.b16 %v664, %v664
      %v697 = vpack.c.b16 %v665, %v665
      %v698 = vpack.c.b16 %v666, %v666
      %v699 = vpack.c.b16 %v667, %v667
      %v700 = vpack.c.b16 %v668, %v668
      %v701 = vpack.c.b16 %v669, %v669
      %v702 = vpack.c.b16 %v670, %v670
      %v703 = vpack.c.b16 %v671, %v671
      %v704 = vpack.c.b16 %v672, %v672
      %v705 = vpack.c.b16 %v673, %v673
      %v706 = vpack.c.b16 %v674, %v674
      %v707 = vpack.c.b16 %v675, %v675
      %v708 = vpack.c.b16 %v676, %v676
      %v709 = vpack.c.b16 %v677, %v677
      %v710 = vpack.c.b16 %v678, %v678
      %v711 = vpack.c.b16 %v679, %v679
      %v712 = vpack.c.b16 %v680, %v680
      %v713 = vpack.c.b16 %v681, %v681
      %v714 = vpack.c.b16 %v682, %v682
      %v715 = vpack.c.b16 %v683, %v683
      %v716 = vpack.c.b16 %v684, %v684
      %v717 = vpack.c.b16 %v685, %v685
      %v718 = vpack.c.b16 %v686, %v686
      %v719 = vpack.c.b16 %v687, %v687
      %vm752 = vcmask 519168
      %753 = vst.msk [vmem:[%s172] sm:$0xf] %vm752, %v688
      %754 = vst.msk [vmem:[%s172 + $0x4] sm:$0xf] %vm752, %v689
      %755 = vst.msk [vmem:[%s172 + $0x8] sm:$0xf] %vm752, %v690
      %756 = vst.msk [vmem:[%s172 + $0xc] sm:$0xf] %vm752, %v691
      %757 = vst.msk [vmem:[%s172 + $0x10] sm:$0xf] %vm752, %v692
      %758 = vst.msk [vmem:[%s172 + $0x14] sm:$0xf] %vm752, %v693
      %759 = vst.msk [vmem:[%s172 + $0x18] sm:$0xf] %vm752, %v694
      %760 = vst.msk [vmem:[%s172 + $0x1c] sm:$0xf] %vm752, %v695
      %761 = vst.msk [vmem:[%s172 + $0x20] sm:$0xf] %vm752, %v696
      %762 = vst.msk [vmem:[%s172 + $0x24] sm:$0xf] %vm752, %v697
      %763 = vst.msk [vmem:[%s172 + $0x28] sm:$0xf] %vm752, %v698
      %764 = vst.msk [vmem:[%s172 + $0x2c] sm:$0xf] %vm752, %v699
      %765 = vst.msk [vmem:[%s172 + $0x30] sm:$0xf] %vm752, %v700
      %766 = vst.msk [vmem:[%s172 + $0x34] sm:$0xf] %vm752, %v701
      %767 = vst.msk [vmem:[%s172 + $0x38] sm:$0xf] %vm752, %v702
      %768 = vst.msk [vmem:[%s172 + $0x3c] sm:$0xf] %vm752, %v703
      %769 = vst.msk [vmem:[%s172 + $0x40] sm:$0xf] %vm752, %v704
      %770 = vst.msk [vmem:[%s172 + $0x44] sm:$0xf] %vm752, %v705
      %771 = vst.msk [vmem:[%s172 + $0x48] sm:$0xf] %vm752, %v706
      %772 = vst.msk [vmem:[%s172 + $0x4c] sm:$0xf] %vm752, %v707
      %773 = vst.msk [vmem:[%s172 + $0x50] sm:$0xf] %vm752, %v708
      %774 = vst.msk [vmem:[%s172 + $0x54] sm:$0xf] %vm752, %v709
      %775 = vst.msk [vmem:[%s172 + $0x58] sm:$0xf] %vm752, %v710
      %776 = vst.msk [vmem:[%s172 + $0x5c] sm:$0xf] %vm752, %v711
      %777 = vst.msk [vmem:[%s172 + $0x60] sm:$0xf] %vm752, %v712
      %778 = vst.msk [vmem:[%s172 + $0x64] sm:$0xf] %vm752, %v713
      %779 = vst.msk [vmem:[%s172 + $0x68] sm:$0xf] %vm752, %v714
      %780 = vst.msk [vmem:[%s172 + $0x6c] sm:$0xf] %vm752, %v715
      %781 = vst.msk [vmem:[%s172 + $0x70] sm:$0xf] %vm752, %v716
      %782 = vst.msk [vmem:[%s172 + $0x74] sm:$0xf] %vm752, %v717
      %783 = vst.msk [vmem:[%s172 + $0x78] sm:$0xf] %vm752, %v718
      %784 = vst.msk [vmem:[%s172 + $0x7c] sm:$0xf] %vm752, %v719
      %s785 = smul.u32 32, %s14
      %p786 = scmp.lt.s32.totalorder %s785, 63
      %s787 = scalar_select %p786, %s785, 63
      %s788 = smul.addr %s787, 4
      %s789 = scalar_lea.vmem %s3, %s788
      // Predicated region
      $region33: #{discriminator_forward.4} parent=31 // pred_check
        %p790 = pneg %p100
      $region34: #{discriminator_forward.4} parent=31 // pred_check_branch
        %792 = sbr.rel (%p790) target = $region36
      $region35: #{discriminator_forward.4} parent=31 // pred_region
        %s793 = smul.u32 32, %s14
      $region36: #{discriminator_forward.4} parent=31 // pred_fallthru
        _
    $region32: #{discriminator_forward.4} parent=5 // pred_fallthru
      _
    %p794 = scmp.le.s32.totalorder 2, %s9
    // Predicated region
    $region37: #{discriminator_forward.4} parent=5 // pred_check
      %p795 = pneg %p794
    $region38: #{discriminator_forward.4} parent=5 // pred_check_branch
      %797 = sbr.rel (%p795) target = $region40
    $region39: #{discriminator_forward.4} parent=5 // pred_region
      %s798 = ssub.s32 %s9, 2
      // Predicated region
      $region41: #{discriminator_forward.4} parent=39 // pred_check
        %p799 = pneg %p106
      $region42: #{discriminator_forward.4} parent=39 // pred_check_branch
        %801 = sbr.rel (%p799) target = $region44
      $region43: #{discriminator_forward.4} parent=39 // pred_region
        %s802 = smul.u32 32, %s15
        %p803 = scmp.lt.s32.totalorder %s802, 63
        %s804 = scalar_select %p803, %s802, 63
        %s805 = smul.addr %s804, 4
        %s806 = scalar_lea.vmem %s3, %s805
      $region44: #{discriminator_forward.4} parent=39 // pred_fallthru
        _
    $region40: #{discriminator_forward.4} parent=5 // pred_fallthru
      _
  $region6: #{discriminator_forward.4} parent=0 // loop_footer
    %s13 = sadd.s32 1, %s9
  $region7: #{discriminator_forward.4} parent=0 // loop_footer_branch
    %8 = sbr.rel target = $region3
  $region8: #{discriminator_forward.4} parent=0 // loop_exit
    _

// kernel: discriminator_forward.5
$region0: #{discriminator_forward.5}
  #allocation0 [shape = 'u32[]', space=smem, size = 0x4, offset = 0x4, fixed_abs, tag = 'smem constant byte address 0x4 - core index']
  #allocation1 [shape = 'u32[144,128]{1,0:T(1,128)}', space=vmem, size = 0x12000, scoped, tag = 'internal scratch']
  %s0 = inlined_call_operand.vmem [shape: bf16[128,1024], index: 0, kind: input, shape index: {}]
  %s1 = inlined_call_operand.vmem [shape: bf16[1024,128], index: 1, kind: input, shape index: {}]
  %s2 = inlined_call_operand.vmem [shape: f32[1,128], index: 2, kind: input, shape index: {}]
  %s3 = inlined_call_operand.vmem [shape: f32[1,128], index: 3, kind: input, shape index: {}]
  %s4 = inlined_call_operand.vmem [shape: f32[1,128], index: 4, kind: input, shape index: {}]
  %s5 = inlined_call_operand.vmem [shape: bf16[128,128], index: 5, kind: output, shape index: {}]
  %s6 = sld [smem:[#allocation0]]
  $region30: #{discriminator_forward.5} parent=0
    _
  %s8 = ssub.s32 1, %s6
  %s9 = scalar_select 0, %s8, %s6
  // Predicated region
  $region2: #{discriminator_forward.5} parent=0 // pred_check
    _
  $region3: #{discriminator_forward.5} parent=0 // pred_check_branch
    %11 = sbr.rel (0) target = $region5
  $region4: #{discriminator_forward.5} parent=0 // pred_region
    _
  $region5: #{discriminator_forward.5} parent=0 // pred_fallthru
    _
  // Predicated region
  $region6: #{discriminator_forward.5} parent=0 // pred_check
    _
  $region7: #{discriminator_forward.5} parent=0 // pred_check_branch
    %13 = sbr.rel (0) target = $region9
  $region8: #{discriminator_forward.5} parent=0 // pred_region
    _
  $region9: #{discriminator_forward.5} parent=0 // pred_fallthru
    _
  // Predicated region
  $region10: #{discriminator_forward.5} parent=0 // pred_check
    _
  $region11: #{discriminator_forward.5} parent=0 // pred_check_branch
    %15 = sbr.rel (0) target = $region13
  $region12: #{discriminator_forward.5} parent=0 // pred_region
    _
  $region13: #{discriminator_forward.5} parent=0 // pred_fallthru
    _
  // Predicated region
  $region14: #{discriminator_forward.5} parent=0 // pred_check
    _
  $region15: #{discriminator_forward.5} parent=0 // pred_check_branch
    %17 = sbr.rel (0) target = $region17
  $region16: #{discriminator_forward.5} parent=0 // pred_region
    _
  $region17: #{discriminator_forward.5} parent=0 // pred_fallthru
    _
  // Predicated region
  $region18: #{discriminator_forward.5} parent=0 // pred_check
    _
  $region19: #{discriminator_forward.5} parent=0 // pred_check_branch
    %19 = sbr.rel (0) target = $region21
  $region20: #{discriminator_forward.5} parent=0 // pred_region
    _
  $region21: #{discriminator_forward.5} parent=0 // pred_fallthru
    _
  %v21 = vld [vmem:[%s0] sm:$0xff]
  %v22 = vld [vmem:[%s0 + $0x8] sm:$0xff]
  %v23 = vld [vmem:[%s0 + $0x10] sm:$0xff]
  %v24 = vld [vmem:[%s0 + $0x18] sm:$0xff]
  %v25 = vld [vmem:[%s0 + $0x20] sm:$0xff]
  %v26 = vld [vmem:[%s0 + $0x28] sm:$0xff]
  %v27 = vld [vmem:[%s0 + $0x30] sm:$0xff]
  %v28 = vld [vmem:[%s0 + $0x38] sm:$0xff]
  %v29 = vld [vmem:[%s0 + $0x40] sm:$0xff]
  %v30 = vld [vmem:[%s0 + $0x48] sm:$0xff]
  %v31 = vld [vmem:[%s0 + $0x50] sm:$0xff]
  %v32 = vld [vmem:[%s0 + $0x58] sm:$0xff]
  %v33 = vld [vmem:[%s0 + $0x60] sm:$0xff]
  %v34 = vld [vmem:[%s0 + $0x68] sm:$0xff]
  %v35 = vld [vmem:[%s0 + $0x70] sm:$0xff]
  %v36 = vld [vmem:[%s0 + $0x78] sm:$0xff]
  %v37 = vld [vmem:[%s0 + $0x80] sm:$0xff]
  %v38 = vld [vmem:[%s0 + $0x88] sm:$0xff]
  %v39 = vld [vmem:[%s0 + $0x90] sm:$0xff]
  %v40 = vld [vmem:[%s0 + $0x98] sm:$0xff]
  %v41 = vld [vmem:[%s0 + $0xa0] sm:$0xff]
  %v42 = vld [vmem:[%s0 + $0xa8] sm:$0xff]
  %v43 = vld [vmem:[%s0 + $0xb0] sm:$0xff]
  %v44 = vld [vmem:[%s0 + $0xb8] sm:$0xff]
  %v45 = vld [vmem:[%s0 + $0xc0] sm:$0xff]
  %v46 = vld [vmem:[%s0 + $0xc8] sm:$0xff]
  %v47 = vld [vmem:[%s0 + $0xd0] sm:$0xff]
  %v48 = vld [vmem:[%s0 + $0xd8] sm:$0xff]
  %v49 = vld [vmem:[%s0 + $0xe0] sm:$0xff]
  %v50 = vld [vmem:[%s0 + $0xe8] sm:$0xff]
  %v51 = vld [vmem:[%s0 + $0xf0] sm:$0xff]
  %v52 = vld [vmem:[%s0 + $0xf8] sm:$0xff]
  %v53 = vld [vmem:[%s0 + $0x100] sm:$0xff]
  %v54 = vld [vmem:[%s0 + $0x108] sm:$0xff]
  %v55 = vld [vmem:[%s0 + $0x110] sm:$0xff]
  %v56 = vld [vmem:[%s0 + $0x118] sm:$0xff]
  %v57 = vld [vmem:[%s0 + $0x120] sm:$0xff]
  %v58 = vld [vmem:[%s0 + $0x128] sm:$0xff]
  %v59 = vld [vmem:[%s0 + $0x130] sm:$0xff]
  %v60 = vld [vmem:[%s0 + $0x138] sm:$0xff]
  %v61 = vld [vmem:[%s0 + $0x140] sm:$0xff]
  %v62 = vld [vmem:[%s0 + $0x148] sm:$0xff]
  %v63 = vld [vmem:[%s0 + $0x150] sm:$0xff]
  %v64 = vld [vmem:[%s0 + $0x158] sm:$0xff]
  %v65 = vld [vmem:[%s0 + $0x160] sm:$0xff]
  %v66 = vld [vmem:[%s0 + $0x168] sm:$0xff]
  %v67 = vld [vmem:[%s0 + $0x170] sm:$0xff]
  %v68 = vld [vmem:[%s0 + $0x178] sm:$0xff]
  %v69 = vld [vmem:[%s0 + $0x180] sm:$0xff]
  %v70 = vld [vmem:[%s0 + $0x188] sm:$0xff]
  %v71 = vld [vmem:[%s0 + $0x190] sm:$0xff]
  %v72 = vld [vmem:[%s0 + $0x198] sm:$0xff]
  %v73 = vld [vmem:[%s0 + $0x1a0] sm:$0xff]
  %v74 = vld [vmem:[%s0 + $0x1a8] sm:$0xff]
  %v75 = vld [vmem:[%s0 + $0x1b0] sm:$0xff]
  %v76 = vld [vmem:[%s0 + $0x1b8] sm:$0xff]
  %v77 = vld [vmem:[%s0 + $0x1c0] sm:$0xff]
  %v78 = vld [vmem:[%s0 + $0x1c8] sm:$0xff]
  %v79 = vld [vmem:[%s0 + $0x1d0] sm:$0xff]
  %v80 = vld [vmem:[%s0 + $0x1d8] sm:$0xff]
  %v81 = vld [vmem:[%s0 + $0x1e0] sm:$0xff]
  %v82 = vld [vmem:[%s0 + $0x1e8] sm:$0xff]
  %v83 = vld [vmem:[%s0 + $0x1f0] sm:$0xff]
  %v84 = vld [vmem:[%s0 + $0x1f8] sm:$0xff]
  %v85 = vld [vmem:[%s1] sm:$0xf]
  %v86 = vld [vmem:[%s1 + $0x4] sm:$0xf]
  %v87 = vld [vmem:[%s1 + $0x8] sm:$0xf]
  %v88 = vld [vmem:[%s1 + $0xc] sm:$0xf]
  %v89 = vld [vmem:[%s1 + $0x10] sm:$0xf]
  %v90 = vld [vmem:[%s1 + $0x14] sm:$0xf]
  %v91 = vld [vmem:[%s1 + $0x18] sm:$0xf]
  %v92 = vld [vmem:[%s1 + $0x1c] sm:$0xf]
  %v93 = vld [vmem:[%s1 + $0x20] sm:$0xf]
  %v94 = vld [vmem:[%s1 + $0x24] sm:$0xf]
  %v95 = vld [vmem:[%s1 + $0x28] sm:$0xf]
  %v96 = vld [vmem:[%s1 + $0x2c] sm:$0xf]
  %v97 = vld [vmem:[%s1 + $0x30] sm:$0xf]
  %v98 = vld [vmem:[%s1 + $0x34] sm:$0xf]
  %v99 = vld [vmem:[%s1 + $0x38] sm:$0xf]
  %v100 = vld [vmem:[%s1 + $0x3c] sm:$0xf]
  %v101 = vld [vmem:[%s1 + $0x40] sm:$0xf]
  %v102 = vld [vmem:[%s1 + $0x44] sm:$0xf]
  %v103 = vld [vmem:[%s1 + $0x48] sm:$0xf]
  %v104 = vld [vmem:[%s1 + $0x4c] sm:$0xf]
  %v105 = vld [vmem:[%s1 + $0x50] sm:$0xf]
  %v106 = vld [vmem:[%s1 + $0x54] sm:$0xf]
  %v107 = vld [vmem:[%s1 + $0x58] sm:$0xf]
  %v108 = vld [vmem:[%s1 + $0x5c] sm:$0xf]
  %v109 = vld [vmem:[%s1 + $0x60] sm:$0xf]
  %v110 = vld [vmem:[%s1 + $0x64] sm:$0xf]
  %v111 = vld [vmem:[%s1 + $0x68] sm:$0xf]
  %v112 = vld [vmem:[%s1 + $0x6c] sm:$0xf]
  %v113 = vld [vmem:[%s1 + $0x70] sm:$0xf]
  %v114 = vld [vmem:[%s1 + $0x74] sm:$0xf]
  %v115 = vld [vmem:[%s1 + $0x78] sm:$0xf]
  %v116 = vld [vmem:[%s1 + $0x7c] sm:$0xf]
  %v117 = vld [vmem:[%s1 + $0x80] sm:$0xf]
  %v118 = vld [vmem:[%s1 + $0x84] sm:$0xf]
  %v119 = vld [vmem:[%s1 + $0x88] sm:$0xf]
  %v120 = vld [vmem:[%s1 + $0x8c] sm:$0xf]
  %v121 = vld [vmem:[%s1 + $0x90] sm:$0xf]
  %v122 = vld [vmem:[%s1 + $0x94] sm:$0xf]
  %v123 = vld [vmem:[%s1 + $0x98] sm:$0xf]
  %v124 = vld [vmem:[%s1 + $0x9c] sm:$0xf]
  %v125 = vld [vmem:[%s1 + $0xa0] sm:$0xf]
  %v126 = vld [vmem:[%s1 + $0xa4] sm:$0xf]
  %v127 = vld [vmem:[%s1 + $0xa8] sm:$0xf]
  %v128 = vld [vmem:[%s1 + $0xac] sm:$0xf]
  %v129 = vld [vmem:[%s1 + $0xb0] sm:$0xf]
  %v130 = vld [vmem:[%s1 + $0xb4] sm:$0xf]
  %v131 = vld [vmem:[%s1 + $0xb8] sm:$0xf]
  %v132 = vld [vmem:[%s1 + $0xbc] sm:$0xf]
  %v133 = vld [vmem:[%s1 + $0xc0] sm:$0xf]
  %v134 = vld [vmem:[%s1 + $0xc4] sm:$0xf]
  %v135 = vld [vmem:[%s1 + $0xc8] sm:$0xf]
  %v136 = vld [vmem:[%s1 + $0xcc] sm:$0xf]
  %v137 = vld [vmem:[%s1 + $0xd0] sm:$0xf]
  %v138 = vld [vmem:[%s1 + $0xd4] sm:$0xf]
  %v139 = vld [vmem:[%s1 + $0xd8] sm:$0xf]
  %v140 = vld [vmem:[%s1 + $0xdc] sm:$0xf]
  %v141 = vld [vmem:[%s1 + $0xe0] sm:$0xf]
  %v142 = vld [vmem:[%s1 + $0xe4] sm:$0xf]
  %v143 = vld [vmem:[%s1 + $0xe8] sm:$0xf]
  %v144 = vld [vmem:[%s1 + $0xec] sm:$0xf]
  %v145 = vld [vmem:[%s1 + $0xf0] sm:$0xf]
  %v146 = vld [vmem:[%s1 + $0xf4] sm:$0xf]
  %v147 = vld [vmem:[%s1 + $0xf8] sm:$0xf]
  %v148 = vld [vmem:[%s1 + $0xfc] sm:$0xf]
  %v149 = vld [vmem:[%s1 + $0x100] sm:$0xf]
  %v150 = vld [vmem:[%s1 + $0x104] sm:$0xf]
  %v151 = vld [vmem:[%s1 + $0x108] sm:$0xf]
  %v152 = vld [vmem:[%s1 + $0x10c] sm:$0xf]
  %v153 = vld [vmem:[%s1 + $0x110] sm:$0xf]
  %v154 = vld [vmem:[%s1 + $0x114] sm:$0xf]
  %v155 = vld [vmem:[%s1 + $0x118] sm:$0xf]
  %v156 = vld [vmem:[%s1 + $0x11c] sm:$0xf]
  %v157 = vld [vmem:[%s1 + $0x120] sm:$0xf]
  %v158 = vld [vmem:[%s1 + $0x124] sm:$0xf]
  %v159 = vld [vmem:[%s1 + $0x128] sm:$0xf]
  %v160 = vld [vmem:[%s1 + $0x12c] sm:$0xf]
  %v161 = vld [vmem:[%s1 + $0x130] sm:$0xf]
  %v162 = vld [vmem:[%s1 + $0x134] sm:$0xf]
  %v163 = vld [vmem:[%s1 + $0x138] sm:$0xf]
  %v164 = vld [vmem:[%s1 + $0x13c] sm:$0xf]
  %v165 = vld [vmem:[%s1 + $0x140] sm:$0xf]
  %v166 = vld [vmem:[%s1 + $0x144] sm:$0xf]
  %v167 = vld [vmem:[%s1 + $0x148] sm:$0xf]
  %v168 = vld [vmem:[%s1 + $0x14c] sm:$0xf]
  %v169 = vld [vmem:[%s1 + $0x150] sm:$0xf]
  %v170 = vld [vmem:[%s1 + $0x154] sm:$0xf]
  %v171 = vld [vmem:[%s1 + $0x158] sm:$0xf]
  %v172 = vld [vmem:[%s1 + $0x15c] sm:$0xf]
  %v173 = vld [vmem:[%s1 + $0x160] sm:$0xf]
  %v174 = vld [vmem:[%s1 + $0x164] sm:$0xf]
  %v175 = vld [vmem:[%s1 + $0x168] sm:$0xf]
  %v176 = vld [vmem:[%s1 + $0x16c] sm:$0xf]
  %v177 = vld [vmem:[%s1 + $0x170] sm:$0xf]
  %v178 = vld [vmem:[%s1 + $0x174] sm:$0xf]
  %v179 = vld [vmem:[%s1 + $0x178] sm:$0xf]
  %v180 = vld [vmem:[%s1 + $0x17c] sm:$0xf]
  %v181 = vld [vmem:[%s1 + $0x180] sm:$0xf]
  %v182 = vld [vmem:[%s1 + $0x184] sm:$0xf]
  %v183 = vld [vmem:[%s1 + $0x188] sm:$0xf]
  %v184 = vld [vmem:[%s1 + $0x18c] sm:$0xf]
  %v185 = vld [vmem:[%s1 + $0x190] sm:$0xf]
  %v186 = vld [vmem:[%s1 + $0x194] sm:$0xf]
  %v187 = vld [vmem:[%s1 + $0x198] sm:$0xf]
  %v188 = vld [vmem:[%s1 + $0x19c] sm:$0xf]
  %v189 = vld [vmem:[%s1 + $0x1a0] sm:$0xf]
  %v190 = vld [vmem:[%s1 + $0x1a4] sm:$0xf]
  %v191 = vld [vmem:[%s1 + $0x1a8] sm:$0xf]
  %v192 = vld [vmem:[%s1 + $0x1ac] sm:$0xf]
  %v193 = vld [vmem:[%s1 + $0x1b0] sm:$0xf]
  %v194 = vld [vmem:[%s1 + $0x1b4] sm:$0xf]
  %v195 = vld [vmem:[%s1 + $0x1b8] sm:$0xf]
  %v196 = vld [vmem:[%s1 + $0x1bc] sm:$0xf]
  %v197 = vld [vmem:[%s1 + $0x1c0] sm:$0xf]
  %v198 = vld [vmem:[%s1 + $0x1c4] sm:$0xf]
  %v199 = vld [vmem:[%s1 + $0x1c8] sm:$0xf]
  %v200 = vld [vmem:[%s1 + $0x1cc] sm:$0xf]
  %v201 = vld [vmem:[%s1 + $0x1d0] sm:$0xf]
  %v202 = vld [vmem:[%s1 + $0x1d4] sm:$0xf]
  %v203 = vld [vmem:[%s1 + $0x1d8] sm:$0xf]
  %v204 = vld [vmem:[%s1 + $0x1dc] sm:$0xf]
  %v205 = vld [vmem:[%s1 + $0x1e0] sm:$0xf]
  %v206 = vld [vmem:[%s1 + $0x1e4] sm:$0xf]
  %v207 = vld [vmem:[%s1 + $0x1e8] sm:$0xf]
  %v208 = vld [vmem:[%s1 + $0x1ec] sm:$0xf]
  %v209 = vld [vmem:[%s1 + $0x1f0] sm:$0xf]
  %v210 = vld [vmem:[%s1 + $0x1f4] sm:$0xf]
  %v211 = vld [vmem:[%s1 + $0x1f8] sm:$0xf]
  %v212 = vld [vmem:[%s1 + $0x1fc] sm:$0xf]
  %v213 = vld [vmem:[%s2] sm:$0x1]
  %v215 = vlaneseq
  %v216 = vshrl.u32 %v215, 7
  %v217 = vsub.s32 0, %v216
  %v218 = vrot.slane %v213, %v217
  %v284 = vunpack.c.l.b16 %v21
  %v285 = vunpack.c.h.b16 %v21
  %v286 = vunpack.c.l.b16 %v22
  %v287 = vunpack.c.h.b16 %v22
  %v288 = vunpack.c.l.b16 %v23
  %v289 = vunpack.c.h.b16 %v23
  %v290 = vunpack.c.l.b16 %v24
  %v291 = vunpack.c.h.b16 %v24
  %v292 = vunpack.c.l.b16 %v25
  %v293 = vunpack.c.h.b16 %v25
  %v294 = vunpack.c.l.b16 %v26
  %v295 = vunpack.c.h.b16 %v26
  %v296 = vunpack.c.l.b16 %v27
  %v297 = vunpack.c.h.b16 %v27
  %v298 = vunpack.c.l.b16 %v28
  %v299 = vunpack.c.h.b16 %v28
  %v300 = vunpack.c.l.b16 %v29
  %v301 = vunpack.c.h.b16 %v29
  %v302 = vunpack.c.l.b16 %v30
  %v303 = vunpack.c.h.b16 %v30
  %v304 = vunpack.c.l.b16 %v31
  %v305 = vunpack.c.h.b16 %v31
  %v306 = vunpack.c.l.b16 %v32
  %v307 = vunpack.c.h.b16 %v32
  %v308 = vunpack.c.l.b16 %v33
  %v309 = vunpack.c.h.b16 %v33
  %v310 = vunpack.c.l.b16 %v34
  %v311 = vunpack.c.h.b16 %v34
  %v312 = vunpack.c.l.b16 %v35
  %v313 = vunpack.c.h.b16 %v35
  %v314 = vunpack.c.l.b16 %v36
  %v315 = vunpack.c.h.b16 %v36
  %v316 = vunpack.c.l.b16 %v37
  %v317 = vunpack.c.h.b16 %v37
  %v318 = vunpack.c.l.b16 %v38
  %v319 = vunpack.c.h.b16 %v38
  %v320 = vunpack.c.l.b16 %v39
  %v321 = vunpack.c.h.b16 %v39
  %v322 = vunpack.c.l.b16 %v40
  %v323 = vunpack.c.h.b16 %v40
  %v324 = vunpack.c.l.b16 %v41
  %v325 = vunpack.c.h.b16 %v41
  %v326 = vunpack.c.l.b16 %v42
  %v327 = vunpack.c.h.b16 %v42
  %v328 = vunpack.c.l.b16 %v43
  %v329 = vunpack.c.h.b16 %v43
  %v330 = vunpack.c.l.b16 %v44
  %v331 = vunpack.c.h.b16 %v44
  %v332 = vunpack.c.l.b16 %v45
  %v333 = vunpack.c.h.b16 %v45
  %v334 = vunpack.c.l.b16 %v46
  %v335 = vunpack.c.h.b16 %v46
  %v336 = vunpack.c.l.b16 %v47
  %v337 = vunpack.c.h.b16 %v47
  %v338 = vunpack.c.l.b16 %v48
  %v339 = vunpack.c.h.b16 %v48
  %v340 = vunpack.c.l.b16 %v49
  %v341 = vunpack.c.h.b16 %v49
  %v342 = vunpack.c.l.b16 %v50
  %v343 = vunpack.c.h.b16 %v50
  %v344 = vunpack.c.l.b16 %v51
  %v345 = vunpack.c.h.b16 %v51
  %v346 = vunpack.c.l.b16 %v52
  %v347 = vunpack.c.h.b16 %v52
  %v348 = vunpack.c.l.b16 %v53
  %v349 = vunpack.c.h.b16 %v53
  %v350 = vunpack.c.l.b16 %v54
  %v351 = vunpack.c.h.b16 %v54
  %v352 = vunpack.c.l.b16 %v55
  %v353 = vunpack.c.h.b16 %v55
  %v354 = vunpack.c.l.b16 %v56
  %v355 = vunpack.c.h.b16 %v56
  %v356 = vunpack.c.l.b16 %v57
  %v357 = vunpack.c.h.b16 %v57
  %v358 = vunpack.c.l.b16 %v58
  %v359 = vunpack.c.h.b16 %v58
  %v360 = vunpack.c.l.b16 %v59
  %v361 = vunpack.c.h.b16 %v59
  %v362 = vunpack.c.l.b16 %v60
  %v363 = vunpack.c.h.b16 %v60
  %v364 = vunpack.c.l.b16 %v61
  %v365 = vunpack.c.h.b16 %v61
  %v366 = vunpack.c.l.b16 %v62
  %v367 = vunpack.c.h.b16 %v62
  %v368 = vunpack.c.l.b16 %v63
  %v369 = vunpack.c.h.b16 %v63
  %v370 = vunpack.c.l.b16 %v64
  %v371 = vunpack.c.h.b16 %v64
  %v372 = vunpack.c.l.b16 %v65
  %v373 = vunpack.c.h.b16 %v65
  %v374 = vunpack.c.l.b16 %v66
  %v375 = vunpack.c.h.b16 %v66
  %v376 = vunpack.c.l.b16 %v67
  %v377 = vunpack.c.h.b16 %v67
  %v378 = vunpack.c.l.b16 %v68
  %v379 = vunpack.c.h.b16 %v68
  %v380 = vunpack.c.l.b16 %v69
  %v381 = vunpack.c.h.b16 %v69
  %v382 = vunpack.c.l.b16 %v70
  %v383 = vunpack.c.h.b16 %v70
  %v384 = vunpack.c.l.b16 %v71
  %v385 = vunpack.c.h.b16 %v71
  %v386 = vunpack.c.l.b16 %v72
  %v387 = vunpack.c.h.b16 %v72
  %v388 = vunpack.c.l.b16 %v73
  %v389 = vunpack.c.h.b16 %v73
  %v390 = vunpack.c.l.b16 %v74
  %v391 = vunpack.c.h.b16 %v74
  %v392 = vunpack.c.l.b16 %v75
  %v393 = vunpack.c.h.b16 %v75
  %v394 = vunpack.c.l.b16 %v76
  %v395 = vunpack.c.h.b16 %v76
  %v396 = vunpack.c.l.b16 %v77
  %v397 = vunpack.c.h.b16 %v77
  %v398 = vunpack.c.l.b16 %v78
  %v399 = vunpack.c.h.b16 %v78
  %v400 = vunpack.c.l.b16 %v79
  %v401 = vunpack.c.h.b16 %v79
  %v402 = vunpack.c.l.b16 %v80
  %v403 = vunpack.c.h.b16 %v80
  %v404 = vunpack.c.l.b16 %v81
  %v405 = vunpack.c.h.b16 %v81
  %v406 = vunpack.c.l.b16 %v82
  %v407 = vunpack.c.h.b16 %v82
  %v408 = vunpack.c.l.b16 %v83
  %v409 = vunpack.c.h.b16 %v83
  %v410 = vunpack.c.l.b16 %v84
  %v411 = vunpack.c.h.b16 %v84
  %v412 = vpack.c.b16 %v292, %v284
  %v413 = vpack.c.b16 %v293, %v285
  %v414 = vpack.c.b16 %v294, %v286
  %v415 = vpack.c.b16 %v295, %v287
  %v416 = vpack.c.b16 %v296, %v288
  %v417 = vpack.c.b16 %v297, %v289
  %v418 = vpack.c.b16 %v298, %v290
  %v419 = vpack.c.b16 %v299, %v291
  %v420 = vpack.c.b16 %v308, %v300
  %v421 = vpack.c.b16 %v309, %v301
  %v422 = vpack.c.b16 %v310, %v302
  %v423 = vpack.c.b16 %v311, %v303
  %v424 = vpack.c.b16 %v312, %v304
  %v425 = vpack.c.b16 %v313, %v305
  %v426 = vpack.c.b16 %v314, %v306
  %v427 = vpack.c.b16 %v315, %v307
  %v428 = vpack.c.b16 %v324, %v316
  %v429 = vpack.c.b16 %v325, %v317
  %v430 = vpack.c.b16 %v326, %v318
  %v431 = vpack.c.b16 %v327, %v319
  %v432 = vpack.c.b16 %v328, %v320
  %v433 = vpack.c.b16 %v329, %v321
  %v434 = vpack.c.b16 %v330, %v322
  %v435 = vpack.c.b16 %v331, %v323
  %v436 = vpack.c.b16 %v340, %v332
  %v437 = vpack.c.b16 %v341, %v333
  %v438 = vpack.c.b16 %v342, %v334
  %v439 = vpack.c.b16 %v343, %v335
  %v440 = vpack.c.b16 %v344, %v336
  %v441 = vpack.c.b16 %v345, %v337
  %v442 = vpack.c.b16 %v346, %v338
  %v443 = vpack.c.b16 %v347, %v339
  %v444 = vpack.c.b16 %v356, %v348
  %v445 = vpack.c.b16 %v357, %v349
  %v446 = vpack.c.b16 %v358, %v350
  %v447 = vpack.c.b16 %v359, %v351
  %v448 = vpack.c.b16 %v360, %v352
  %v449 = vpack.c.b16 %v361, %v353
  %v450 = vpack.c.b16 %v362, %v354
  %v451 = vpack.c.b16 %v363, %v355
  %v452 = vpack.c.b16 %v372, %v364
  %v453 = vpack.c.b16 %v373, %v365
  %v454 = vpack.c.b16 %v374, %v366
  %v455 = vpack.c.b16 %v375, %v367
  %v456 = vpack.c.b16 %v376, %v368
  %v457 = vpack.c.b16 %v377, %v369
  %v458 = vpack.c.b16 %v378, %v370
  %v459 = vpack.c.b16 %v379, %v371
  %v460 = vpack.c.b16 %v388, %v380
  %v461 = vpack.c.b16 %v389, %v381
  %v462 = vpack.c.b16 %v390, %v382
  %v463 = vpack.c.b16 %v391, %v383
  %v464 = vpack.c.b16 %v392, %v384
  %v465 = vpack.c.b16 %v393, %v385
  %v466 = vpack.c.b16 %v394, %v386
  %v467 = vpack.c.b16 %v395, %v387
  %v468 = vpack.c.b16 %v404, %v396
  %v469 = vpack.c.b16 %v405, %v397
  %v470 = vpack.c.b16 %v406, %v398
  %v471 = vpack.c.b16 %v407, %v399
  %v472 = vpack.c.b16 %v408, %v400
  %v473 = vpack.c.b16 %v409, %v401
  %v474 = vpack.c.b16 %v410, %v402
  %v475 = vpack.c.b16 %v411, %v403
  %v668 = vunpack.c.l.b16 %v85
  %v669 = vunpack.c.l.b16 %v86
  %v670 = vunpack.c.l.b16 %v87
  %v671 = vunpack.c.l.b16 %v88
  %v672 = vunpack.c.l.b16 %v89
  %v673 = vunpack.c.l.b16 %v90
  %v674 = vunpack.c.l.b16 %v91
  %v675 = vunpack.c.l.b16 %v92
  %v676 = vunpack.c.l.b16 %v93
  %v677 = vunpack.c.l.b16 %v94
  %v678 = vunpack.c.l.b16 %v95
  %v679 = vunpack.c.l.b16 %v96
  %v680 = vunpack.c.l.b16 %v97
  %v681 = vunpack.c.l.b16 %v98
  %v682 = vunpack.c.l.b16 %v99
  %v683 = vunpack.c.l.b16 %v100
  %v684 = vunpack.c.l.b16 %v101
  %v685 = vunpack.c.l.b16 %v102
  %v686 = vunpack.c.l.b16 %v103
  %v687 = vunpack.c.l.b16 %v104
  %v688 = vunpack.c.l.b16 %v105
  %v689 = vunpack.c.l.b16 %v106
  %v690 = vunpack.c.l.b16 %v107
  %v691 = vunpack.c.l.b16 %v108
  %v692 = vunpack.c.l.b16 %v109
  %v693 = vunpack.c.l.b16 %v110
  %v694 = vunpack.c.l.b16 %v111
  %v695 = vunpack.c.l.b16 %v112
  %v696 = vunpack.c.l.b16 %v113
  %v697 = vunpack.c.l.b16 %v114
  %v698 = vunpack.c.l.b16 %v115
  %v699 = vunpack.c.l.b16 %v116
  %v700 = vunpack.c.l.b16 %v117
  %v701 = vunpack.c.l.b16 %v118
  %v702 = vunpack.c.l.b16 %v119
  %v703 = vunpack.c.l.b16 %v120
  %v704 = vunpack.c.l.b16 %v121
  %v705 = vunpack.c.l.b16 %v122
  %v706 = vunpack.c.l.b16 %v123
  %v707 = vunpack.c.l.b16 %v124
  %v708 = vunpack.c.l.b16 %v125
  %v709 = vunpack.c.l.b16 %v126
  %v710 = vunpack.c.l.b16 %v127
  %v711 = vunpack.c.l.b16 %v128
  %v712 = vunpack.c.l.b16 %v129
  %v713 = vunpack.c.l.b16 %v130
  %v714 = vunpack.c.l.b16 %v131
  %v715 = vunpack.c.l.b16 %v132
  %v716 = vunpack.c.l.b16 %v133
  %v717 = vunpack.c.l.b16 %v134
  %v718 = vunpack.c.l.b16 %v135
  %v719 = vunpack.c.l.b16 %v136
  %v720 = vunpack.c.l.b16 %v137
  %v721 = vunpack.c.l.b16 %v138
  %v722 = vunpack.c.l.b16 %v139
  %v723 = vunpack.c.l.b16 %v140
  %v724 = vunpack.c.l.b16 %v141
  %v725 = vunpack.c.l.b16 %v142
  %v726 = vunpack.c.l.b16 %v143
  %v727 = vunpack.c.l.b16 %v144
  %v728 = vunpack.c.l.b16 %v145
  %v729 = vunpack.c.l.b16 %v146
  %v730 = vunpack.c.l.b16 %v147
  %v731 = vunpack.c.l.b16 %v148
  %v732 = vunpack.c.l.b16 %v149
  %v733 = vunpack.c.l.b16 %v150
  %v734 = vunpack.c.l.b16 %v151
  %v735 = vunpack.c.l.b16 %v152
  %v736 = vunpack.c.l.b16 %v153
  %v737 = vunpack.c.l.b16 %v154
  %v738 = vunpack.c.l.b16 %v155
  %v739 = vunpack.c.l.b16 %v156
  %v740 = vunpack.c.l.b16 %v157
  %v741 = vunpack.c.l.b16 %v158
  %v742 = vunpack.c.l.b16 %v159
  %v743 = vunpack.c.l.b16 %v160
  %v744 = vunpack.c.l.b16 %v161
  %v745 = vunpack.c.l.b16 %v162
  %v746 = vunpack.c.l.b16 %v163
  %v747 = vunpack.c.l.b16 %v164
  %v748 = vunpack.c.l.b16 %v165
  %v749 = vunpack.c.l.b16 %v166
  %v750 = vunpack.c.l.b16 %v167
  %v751 = vunpack.c.l.b16 %v168
  %v752 = vunpack.c.l.b16 %v169
  %v753 = vunpack.c.l.b16 %v170
  %v754 = vunpack.c.l.b16 %v171
  %v755 = vunpack.c.l.b16 %v172
  %v756 = vunpack.c.l.b16 %v173
  %v757 = vunpack.c.l.b16 %v174
  %v758 = vunpack.c.l.b16 %v175
  %v759 = vunpack.c.l.b16 %v176
  %v760 = vunpack.c.l.b16 %v177
  %v761 = vunpack.c.l.b16 %v178
  %v762 = vunpack.c.l.b16 %v179
  %v763 = vunpack.c.l.b16 %v180
  %v764 = vunpack.c.l.b16 %v181
  %v765 = vunpack.c.l.b16 %v182
  %v766 = vunpack.c.l.b16 %v183
  %v767 = vunpack.c.l.b16 %v184
  %v768 = vunpack.c.l.b16 %v185
  %v769 = vunpack.c.l.b16 %v186
  %v770 = vunpack.c.l.b16 %v187
  %v771 = vunpack.c.l.b16 %v188
  %v772 = vunpack.c.l.b16 %v189
  %v773 = vunpack.c.l.b16 %v190
  %v774 = vunpack.c.l.b16 %v191
  %v775 = vunpack.c.l.b16 %v192
  %v776 = vunpack.c.l.b16 %v193
  %v777 = vunpack.c.l.b16 %v194
  %v778 = vunpack.c.l.b16 %v195
  %v779 = vunpack.c.l.b16 %v196
  %v780 = vunpack.c.l.b16 %v197
  %v781 = vunpack.c.l.b16 %v198
  %v782 = vunpack.c.l.b16 %v199
  %v783 = vunpack.c.l.b16 %v200
  %v784 = vunpack.c.l.b16 %v201
  %v785 = vunpack.c.l.b16 %v202
  %v786 = vunpack.c.l.b16 %v203
  %v787 = vunpack.c.l.b16 %v204
  %v788 = vunpack.c.l.b16 %v205
  %v789 = vunpack.c.l.b16 %v206
  %v790 = vunpack.c.l.b16 %v207
  %v791 = vunpack.c.l.b16 %v208
  %v792 = vunpack.c.l.b16 %v209
  %v793 = vunpack.c.l.b16 %v210
  %v794 = vunpack.c.l.b16 %v211
  %v795 = vunpack.c.l.b16 %v212
  %v796 = vpack.c.b16 %v669, %v668
  %v797 = vpack.c.b16 %v671, %v670
  %v798 = vpack.c.b16 %v673, %v672
  %v799 = vpack.c.b16 %v675, %v674
  %v800 = vpack.c.b16 %v677, %v676
  %v801 = vpack.c.b16 %v679, %v678
  %v802 = vpack.c.b16 %v681, %v680
  %v803 = vpack.c.b16 %v683, %v682
  %v804 = vpack.c.b16 %v685, %v684
  %v805 = vpack.c.b16 %v687, %v686
  %v806 = vpack.c.b16 %v689, %v688
  %v807 = vpack.c.b16 %v691, %v690
  %v808 = vpack.c.b16 %v693, %v692
  %v809 = vpack.c.b16 %v695, %v694
  %v810 = vpack.c.b16 %v697, %v696
  %v811 = vpack.c.b16 %v699, %v698
  %v812 = vpack.c.b16 %v701, %v700
  %v813 = vpack.c.b16 %v703, %v702
  %v814 = vpack.c.b16 %v705, %v704
  %v815 = vpack.c.b16 %v707, %v706
  %v816 = vpack.c.b16 %v709, %v708
  %v817 = vpack.c.b16 %v711, %v710
  %v818 = vpack.c.b16 %v713, %v712
  %v819 = vpack.c.b16 %v715, %v714
  %v820 = vpack.c.b16 %v717, %v716
  %v821 = vpack.c.b16 %v719, %v718
  %v822 = vpack.c.b16 %v721, %v720
  %v823 = vpack.c.b16 %v723, %v722
  %v824 = vpack.c.b16 %v725, %v724
  %v825 = vpack.c.b16 %v727, %v726
  %v826 = vpack.c.b16 %v729, %v728
  %v827 = vpack.c.b16 %v731, %v730
  %v828 = vpack.c.b16 %v733, %v732
  %v829 = vpack.c.b16 %v735, %v734
  %v830 = vpack.c.b16 %v737, %v736
  %v831 = vpack.c.b16 %v739, %v738
  %v832 = vpack.c.b16 %v741, %v740
  %v833 = vpack.c.b16 %v743, %v742
  %v834 = vpack.c.b16 %v745, %v744
  %v835 = vpack.c.b16 %v747, %v746
  %v836 = vpack.c.b16 %v749, %v748
  %v837 = vpack.c.b16 %v751, %v750
  %v838 = vpack.c.b16 %v753, %v752
  %v839 = vpack.c.b16 %v755, %v754
  %v840 = vpack.c.b16 %v757, %v756
  %v841 = vpack.c.b16 %v759, %v758
  %v842 = vpack.c.b16 %v761, %v760
  %v843 = vpack.c.b16 %v763, %v762
  %v844 = vpack.c.b16 %v765, %v764
  %v845 = vpack.c.b16 %v767, %v766
  %v846 = vpack.c.b16 %v769, %v768
  %v847 = vpack.c.b16 %v771, %v770
  %v848 = vpack.c.b16 %v773, %v772
  %v849 = vpack.c.b16 %v775, %v774
  %v850 = vpack.c.b16 %v777, %v776
  %v851 = vpack.c.b16 %v779, %v778
  %v852 = vpack.c.b16 %v781, %v780
  %v853 = vpack.c.b16 %v783, %v782
  %v854 = vpack.c.b16 %v785, %v784
  %v855 = vpack.c.b16 %v787, %v786
  %v856 = vpack.c.b16 %v789, %v788
  %v857 = vpack.c.b16 %v791, %v790
  %v858 = vpack.c.b16 %v793, %v792
  %v859 = vpack.c.b16 %v795, %v794
  %924 = vmatprep.subr.bf16.mxu0 0
  %925 = vmatpush1.bf16.msra.mxu0 %v803
  %926 = vmatprep.subr.bf16.mxu0 0
  %927 = vmatpush1.bf16.msra.mxu0 %v802
  %928 = vmatprep.subr.bf16.mxu0 0
  %929 = vmatpush1.bf16.msra.mxu0 %v801
  %930 = vmatprep.subr.bf16.mxu0 0
  %931 = vmatpush1.bf16.msra.mxu0 %v800
  %932 = vmatprep.subr.bf16.mxu0 0
  %933 = vmatpush1.bf16.msra.mxu0 %v799
  %934 = vmatprep.subr.bf16.mxu0 0
  %935 = vmatpush1.bf16.msra.mxu0 %v798
  %936 = vmatprep.subr.bf16.mxu0 0
  %937 = vmatpush1.bf16.msra.mxu0 %v797
  %938 = vmatprep.subr.bf16.mxu0 0
  %939 = vmatpush1.bf16.msra.mxu0 %v796
  %940 = vmatprep.subr.bf16.mxu0 0
  %941 = vmatpush2.bf16.msra.mxu0 %v811
  %942 = vmatprep.subr.bf16.mxu0 0
  %943 = vmatpush2.bf16.msra.mxu0 %v810
  %944 = vmatprep.subr.bf16.mxu0 0
  %945 = vmatpush2.bf16.msra.mxu0 %v809
  %946 = vmatprep.subr.bf16.mxu0 0
  %947 = vmatpush2.bf16.msra.mxu0 %v808
  %948 = vmatprep.subr.bf16.mxu0 0
  %949 = vmatpush2.bf16.msra.mxu0 %v807
  %950 = vmatprep.subr.bf16.mxu0 0
  %951 = vmatpush2.bf16.msra.mxu0 %v806
  %952 = vmatprep.subr.bf16.mxu0 0
  %953 = vmatpush2.bf16.msra.mxu0 %v805
  %954 = vmatprep.subr.bf16.mxu0 0
  %955 = vmatpush2.bf16.msra.mxu0 %v804
  %956 = vmatprep.mubr.bf16.mxu0 %v413
  %957 = vmatmul.mubr.bf16.gmra.mxu0 %v412
  %v958 = vpop.f32.mrf.mxu0
  %v959 = vadd.f32 %v218, %v958
  %v960 = vpop.f32.mrf.mxu0
  %v961 = vpop.f32.mrf.mxu0
  %v962 = vadd.f32 %v218, %v961
  %v963 = vpop.f32.mrf.mxu0
  %964 = vmatprep.mubr.bf16.mxu0 %v421
  %965 = vmatmul.mubr.bf16.gmra.mxu0 %v420
  %v966 = vpop.f32.mrf.mxu0
  %v967 = vadd.f32 %v218, %v966
  %v968 = vpop.f32.mrf.mxu0
  %v969 = vpop.f32.mrf.mxu0
  %v970 = vadd.f32 %v218, %v969
  %v971 = vpop.f32.mrf.mxu0
  %972 = vmatprep.mubr.bf16.mxu0 %v429
  %973 = vmatmul.mubr.bf16.gmra.mxu0 %v428
  %v974 = vpop.f32.mrf.mxu0
  %v975 = vadd.f32 %v218, %v974
  %v976 = vpop.f32.mrf.mxu0
  %v977 = vpop.f32.mrf.mxu0
  %v978 = vadd.f32 %v218, %v977
  %v979 = vpop.f32.mrf.mxu0
  %980 = vmatprep.mubr.bf16.mxu0 %v437
  %981 = vmatmul.mubr.bf16.gmra.mxu0 %v436
  %v982 = vpop.f32.mrf.mxu0
  %v983 = vadd.f32 %v218, %v982
  %v984 = vpop.f32.mrf.mxu0
  %v985 = vpop.f32.mrf.mxu0
  %v986 = vadd.f32 %v218, %v985
  %v987 = vpop.f32.mrf.mxu0
  %988 = vmatprep.mubr.bf16.mxu0 %v445
  %989 = vmatmul.mubr.bf16.gmra.mxu0 %v444
  %v990 = vpop.f32.mrf.mxu0
  %v991 = vadd.f32 %v218, %v990
  %v992 = vpop.f32.mrf.mxu0
  %v993 = vpop.f32.mrf.mxu0
  %v994 = vadd.f32 %v218, %v993
  %v995 = vpop.f32.mrf.mxu0
  %996 = vmatprep.mubr.bf16.mxu0 %v453
  %997 = vmatmul.mubr.bf16.gmra.mxu0 %v452
  %v998 = vpop.f32.mrf.mxu0
  %v999 = vadd.f32 %v218, %v998
  %v1000 = vpop.f32.mrf.mxu0
  %v1001 = vpop.f32.mrf.mxu0
  %v1002 = vadd.f32 %v218, %v1001
  %v1003 = vpop.f32.mrf.mxu0
  %1004 = vmatprep.mubr.bf16.mxu0 %v461
  %1005 = vmatmul.mubr.bf16.gmra.mxu0 %v460
  %v1006 = vpop.f32.mrf.mxu0
  %v1007 = vadd.f32 %v218, %v1006
  %v1008 = vpop.f32.mrf.mxu0
  %v1009 = vpop.f32.mrf.mxu0
  %v1010 = vadd.f32 %v218, %v1009
  %v1011 = vpop.f32.mrf.mxu0
  %1012 = vmatprep.mubr.bf16.mxu0 %v469
  %1013 = vmatmul.mubr.bf16.gmra.mxu0 %v468
  %v1014 = vpop.f32.mrf.mxu0
  %v1015 = vadd.f32 %v218, %v1014
  %v1016 = vpop.f32.mrf.mxu0
  %v1017 = vpop.f32.mrf.mxu0
  %v1018 = vadd.f32 %v218, %v1017
  %v1019 = vpop.f32.mrf.mxu0
  %1020 = vdwg.mxu0
  %1021 = vmatprep.subr.bf16.mxu0 0
  %1022 = vmatpush1.bf16.msra.mxu0 %v819
  %1023 = vmatprep.subr.bf16.mxu0 0
  %1024 = vmatpush1.bf16.msra.mxu0 %v818
  %1025 = vmatprep.subr.bf16.mxu0 0
  %1026 = vmatpush1.bf16.msra.mxu0 %v817
  %1027 = vmatprep.subr.bf16.mxu0 0
  %1028 = vmatpush1.bf16.msra.mxu0 %v816
  %1029 = vmatprep.subr.bf16.mxu0 0
  %1030 = vmatpush1.bf16.msra.mxu0 %v815
  %1031 = vmatprep.subr.bf16.mxu0 0
  %1032 = vmatpush1.bf16.msra.mxu0 %v814
  %1033 = vmatprep.subr.bf16.mxu0 0
  %1034 = vmatpush1.bf16.msra.mxu0 %v813
  %1035 = vmatprep.subr.bf16.mxu0 0
  %1036 = vmatpush1.bf16.msra.mxu0 %v812
  %1037 = vmatprep.subr.bf16.mxu0 0
  %1038 = vmatpush2.bf16.msra.mxu0 %v827
  %1039 = vmatprep.subr.bf16.mxu0 0
  %1040 = vmatpush2.bf16.msra.mxu0 %v826
  %1041 = vmatprep.subr.bf16.mxu0 0
  %1042 = vmatpush2.bf16.msra.mxu0 %v825
  %1043 = vmatprep.subr.bf16.mxu0 0
  %1044 = vmatpush2.bf16.msra.mxu0 %v824
  %1045 = vmatprep.subr.bf16.mxu0 0
  %1046 = vmatpush2.bf16.msra.mxu0 %v823
  %1047 = vmatprep.subr.bf16.mxu0 0
  %1048 = vmatpush2.bf16.msra.mxu0 %v822
  %1049 = vmatprep.subr.bf16.mxu0 0
  %1050 = vmatpush2.bf16.msra.mxu0 %v821
  %1051 = vmatprep.subr.bf16.mxu0 0
  %1052 = vmatpush2.bf16.msra.mxu0 %v820
  %1053 = vmatprep.mubr.bf16.mxu0 %v415
  %1054 = vmatmul.mubr.bf16.gmra.mxu0 %v414
  %v1055 = vpop.f32.mrf.mxu0
  %v1056 = vadd.f32 %v959, %v1055
  %v1057 = vpop.f32.mrf.mxu0
  %v1058 = vpop.f32.mrf.mxu0
  %v1059 = vadd.f32 %v962, %v1058
  %v1060 = vpop.f32.mrf.mxu0
  %1061 = vmatprep.mubr.bf16.mxu0 %v423
  %1062 = vmatmul.mubr.bf16.gmra.mxu0 %v422
  %v1063 = vpop.f32.mrf.mxu0
  %v1064 = vadd.f32 %v967, %v1063
  %v1065 = vpop.f32.mrf.mxu0
  %v1066 = vpop.f32.mrf.mxu0
  %v1067 = vadd.f32 %v970, %v1066
  %v1068 = vpop.f32.mrf.mxu0
  %1069 = vmatprep.mubr.bf16.mxu0 %v431
  %1070 = vmatmul.mubr.bf16.gmra.mxu0 %v430
  %v1071 = vpop.f32.mrf.mxu0
  %v1072 = vadd.f32 %v975, %v1071
  %v1073 = vpop.f32.mrf.mxu0
  %v1074 = vpop.f32.mrf.mxu0
  %v1075 = vadd.f32 %v978, %v1074
  %v1076 = vpop.f32.mrf.mxu0
  %1077 = vmatprep.mubr.bf16.mxu0 %v439
  %1078 = vmatmul.mubr.bf16.gmra.mxu0 %v438
  %v1079 = vpop.f32.mrf.mxu0
  %v1080 = vadd.f32 %v983, %v1079
  %v1081 = vpop.f32.mrf.mxu0
  %v1082 = vpop.f32.mrf.mxu0
  %v1083 = vadd.f32 %v986, %v1082
  %v1084 = vpop.f32.mrf.mxu0
  %1085 = vmatprep.mubr.bf16.mxu0 %v447
  %1086 = vmatmul.mubr.bf16.gmra.mxu0 %v446
  %v1087 = vpop.f32.mrf.mxu0
  %v1088 = vadd.f32 %v991, %v1087
  %v1089 = vpop.f32.mrf.mxu0
  %v1090 = vpop.f32.mrf.mxu0
  %v1091 = vadd.f32 %v994, %v1090
  %v1092 = vpop.f32.mrf.mxu0
  %1093 = vmatprep.mubr.bf16.mxu0 %v455
  %1094 = vmatmul.mubr.bf16.gmra.mxu0 %v454
  %v1095 = vpop.f32.mrf.mxu0
  %v1096 = vadd.f32 %v999, %v1095
  %v1097 = vpop.f32.mrf.mxu0
  %v1098 = vpop.f32.mrf.mxu0
  %v1099 = vadd.f32 %v1002, %v1098
  %v1100 = vpop.f32.mrf.mxu0
  %1101 = vmatprep.mubr.bf16.mxu0 %v463
  %1102 = vmatmul.mubr.bf16.gmra.mxu0 %v462
  %v1103 = vpop.f32.mrf.mxu0
  %v1104 = vadd.f32 %v1007, %v1103
  %v1105 = vpop.f32.mrf.mxu0
  %v1106 = vpop.f32.mrf.mxu0
  %v1107 = vadd.f32 %v1010, %v1106
  %v1108 = vpop.f32.mrf.mxu0
  %1109 = vmatprep.mubr.bf16.mxu0 %v471
  %1110 = vmatmul.mubr.bf16.gmra.mxu0 %v470
  %v1111 = vpop.f32.mrf.mxu0
  %v1112 = vadd.f32 %v1015, %v1111
  %v1113 = vpop.f32.mrf.mxu0
  %v1114 = vpop.f32.mrf.mxu0
  %v1115 = vadd.f32 %v1018, %v1114
  %v1116 = vpop.f32.mrf.mxu0
  %1117 = vdwg.mxu0
  %1118 = vmatprep.subr.bf16.mxu0 0
  %1119 = vmatpush1.bf16.msra.mxu0 %v835
  %1120 = vmatprep.subr.bf16.mxu0 0
  %1121 = vmatpush1.bf16.msra.mxu0 %v834
  %1122 = vmatprep.subr.bf16.mxu0 0
  %1123 = vmatpush1.bf16.msra.mxu0 %v833
  %1124 = vmatprep.subr.bf16.mxu0 0
  %1125 = vmatpush1.bf16.msra.mxu0 %v832
  %1126 = vmatprep.subr.bf16.mxu0 0
  %1127 = vmatpush1.bf16.msra.mxu0 %v831
  %1128 = vmatprep.subr.bf16.mxu0 0
  %1129 = vmatpush1.bf16.msra.mxu0 %v830
  %1130 = vmatprep.subr.bf16.mxu0 0
  %1131 = vmatpush1.bf16.msra.mxu0 %v829
  %1132 = vmatprep.subr.bf16.mxu0 0
  %1133 = vmatpush1.bf16.msra.mxu0 %v828
  %1134 = vmatprep.subr.bf16.mxu0 0
  %1135 = vmatpush2.bf16.msra.mxu0 %v843
  %1136 = vmatprep.subr.bf16.mxu0 0
  %1137 = vmatpush2.bf16.msra.mxu0 %v842
  %1138 = vmatprep.subr.bf16.mxu0 0
  %1139 = vmatpush2.bf16.msra.mxu0 %v841
  %1140 = vmatprep.subr.bf16.mxu0 0
  %1141 = vmatpush2.bf16.msra.mxu0 %v840
  %1142 = vmatprep.subr.bf16.mxu0 0
  %1143 = vmatpush2.bf16.msra.mxu0 %v839
  %1144 = vmatprep.subr.bf16.mxu0 0
  %1145 = vmatpush2.bf16.msra.mxu0 %v838
  %1146 = vmatprep.subr.bf16.mxu0 0
  %1147 = vmatpush2.bf16.msra.mxu0 %v837
  %1148 = vmatprep.subr.bf16.mxu0 0
  %1149 = vmatpush2.bf16.msra.mxu0 %v836
  %1150 = vmatprep.mubr.bf16.mxu0 %v417
  %1151 = vmatmul.mubr.bf16.gmra.mxu0 %v416
  %v1152 = vpop.f32.mrf.mxu0
  %v1153 = vadd.f32 %v1056, %v1152
  %v1154 = vpop.f32.mrf.mxu0
  %v1155 = vpop.f32.mrf.mxu0
  %v1156 = vadd.f32 %v1059, %v1155
  %v1157 = vpop.f32.mrf.mxu0
  %1158 = vmatprep.mubr.bf16.mxu0 %v425
  %1159 = vmatmul.mubr.bf16.gmra.mxu0 %v424
  %v1160 = vpop.f32.mrf.mxu0
  %v1161 = vadd.f32 %v1064, %v1160
  %v1162 = vpop.f32.mrf.mxu0
  %v1163 = vpop.f32.mrf.mxu0
  %v1164 = vadd.f32 %v1067, %v1163
  %v1165 = vpop.f32.mrf.mxu0
  %1166 = vmatprep.mubr.bf16.mxu0 %v433
  %1167 = vmatmul.mubr.bf16.gmra.mxu0 %v432
  %v1168 = vpop.f32.mrf.mxu0
  %v1169 = vadd.f32 %v1072, %v1168
  %v1170 = vpop.f32.mrf.mxu0
  %v1171 = vpop.f32.mrf.mxu0
  %v1172 = vadd.f32 %v1075, %v1171
  %v1173 = vpop.f32.mrf.mxu0
  %1174 = vmatprep.mubr.bf16.mxu0 %v441
  %1175 = vmatmul.mubr.bf16.gmra.mxu0 %v440
  %v1176 = vpop.f32.mrf.mxu0
  %v1177 = vadd.f32 %v1080, %v1176
  %v1178 = vpop.f32.mrf.mxu0
  %v1179 = vpop.f32.mrf.mxu0
  %v1180 = vadd.f32 %v1083, %v1179
  %v1181 = vpop.f32.mrf.mxu0
  %1182 = vmatprep.mubr.bf16.mxu0 %v449
  %1183 = vmatmul.mubr.bf16.gmra.mxu0 %v448
  %v1184 = vpop.f32.mrf.mxu0
  %v1185 = vadd.f32 %v1088, %v1184
  %v1186 = vpop.f32.mrf.mxu0
  %v1187 = vpop.f32.mrf.mxu0
  %v1188 = vadd.f32 %v1091, %v1187
  %v1189 = vpop.f32.mrf.mxu0
  %1190 = vmatprep.mubr.bf16.mxu0 %v457
  %1191 = vmatmul.mubr.bf16.gmra.mxu0 %v456
  %v1192 = vpop.f32.mrf.mxu0
  %v1193 = vadd.f32 %v1096, %v1192
  %v1194 = vpop.f32.mrf.mxu0
  %v1195 = vpop.f32.mrf.mxu0
  %v1196 = vadd.f32 %v1099, %v1195
  %v1197 = vpop.f32.mrf.mxu0
  %1198 = vmatprep.mubr.bf16.mxu0 %v465
  %1199 = vmatmul.mubr.bf16.gmra.mxu0 %v464
  %v1200 = vpop.f32.mrf.mxu0
  %v1201 = vadd.f32 %v1104, %v1200
  %v1202 = vpop.f32.mrf.mxu0
  %v1203 = vpop.f32.mrf.mxu0
  %v1204 = vadd.f32 %v1107, %v1203
  %v1205 = vpop.f32.mrf.mxu0
  %1206 = vmatprep.mubr.bf16.mxu0 %v473
  %1207 = vmatmul.mubr.bf16.gmra.mxu0 %v472
  %v1208 = vpop.f32.mrf.mxu0
  %v1209 = vadd.f32 %v1112, %v1208
  %v1210 = vpop.f32.mrf.mxu0
  %v1211 = vpop.f32.mrf.mxu0
  %v1212 = vadd.f32 %v1115, %v1211
  %v1213 = vpop.f32.mrf.mxu0
  %1214 = vdwg.mxu0
  %1215 = vmatprep.subr.bf16.mxu0 0
  %1216 = vmatpush1.bf16.msra.mxu0 %v851
  %1217 = vmatprep.subr.bf16.mxu0 0
  %1218 = vmatpush1.bf16.msra.mxu0 %v850
  %1219 = vmatprep.subr.bf16.mxu0 0
  %1220 = vmatpush1.bf16.msra.mxu0 %v849
  %1221 = vmatprep.subr.bf16.mxu0 0
  %1222 = vmatpush1.bf16.msra.mxu0 %v848
  %1223 = vmatprep.subr.bf16.mxu0 0
  %1224 = vmatpush1.bf16.msra.mxu0 %v847
  %1225 = vmatprep.subr.bf16.mxu0 0
  %1226 = vmatpush1.bf16.msra.mxu0 %v846
  %1227 = vmatprep.subr.bf16.mxu0 0
  %1228 = vmatpush1.bf16.msra.mxu0 %v845
  %1229 = vmatprep.subr.bf16.mxu0 0
  %1230 = vmatpush1.bf16.msra.mxu0 %v844
  %1231 = vmatprep.subr.bf16.mxu0 0
  %1232 = vmatpush2.bf16.msra.mxu0 %v859
  %1233 = vmatprep.subr.bf16.mxu0 0
  %1234 = vmatpush2.bf16.msra.mxu0 %v858
  %1235 = vmatprep.subr.bf16.mxu0 0
  %1236 = vmatpush2.bf16.msra.mxu0 %v857
  %1237 = vmatprep.subr.bf16.mxu0 0
  %1238 = vmatpush2.bf16.msra.mxu0 %v856
  %1239 = vmatprep.subr.bf16.mxu0 0
  %1240 = vmatpush2.bf16.msra.mxu0 %v855
  %1241 = vmatprep.subr.bf16.mxu0 0
  %1242 = vmatpush2.bf16.msra.mxu0 %v854
  %1243 = vmatprep.subr.bf16.mxu0 0
  %1244 = vmatpush2.bf16.msra.mxu0 %v853
  %1245 = vmatprep.subr.bf16.mxu0 0
  %1246 = vmatpush2.bf16.msra.mxu0 %v852
  %1247 = vmatprep.mubr.bf16.mxu0 %v419
  %1248 = vmatmul.mubr.bf16.gmra.mxu0 %v418
  %v1249 = vpop.f32.mrf.mxu0
  %v1250 = vadd.f32 %v1153, %v1249
  %v1251 = vpop.f32.mrf.mxu0
  %v1252 = vpop.f32.mrf.mxu0
  %v1253 = vadd.f32 %v1156, %v1252
  %v1254 = vpop.f32.mrf.mxu0
  %1255 = vmatprep.mubr.bf16.mxu0 %v427
  %1256 = vmatmul.mubr.bf16.gmra.mxu0 %v426
  %v1257 = vpop.f32.mrf.mxu0
  %v1258 = vadd.f32 %v1161, %v1257
  %v1259 = vpop.f32.mrf.mxu0
  %v1260 = vpop.f32.mrf.mxu0
  %v1261 = vadd.f32 %v1164, %v1260
  %v1262 = vpop.f32.mrf.mxu0
  %1263 = vmatprep.mubr.bf16.mxu0 %v435
  %1264 = vmatmul.mubr.bf16.gmra.mxu0 %v434
  %v1265 = vpop.f32.mrf.mxu0
  %v1266 = vadd.f32 %v1169, %v1265
  %v1267 = vpop.f32.mrf.mxu0
  %v1268 = vpop.f32.mrf.mxu0
  %v1269 = vadd.f32 %v1172, %v1268
  %v1270 = vpop.f32.mrf.mxu0
  %1271 = vmatprep.mubr.bf16.mxu0 %v443
  %1272 = vmatmul.mubr.bf16.gmra.mxu0 %v442
  %v1273 = vpop.f32.mrf.mxu0
  %v1274 = vadd.f32 %v1177, %v1273
  %v1275 = vpop.f32.mrf.mxu0
  %v1276 = vpop.f32.mrf.mxu0
  %v1277 = vadd.f32 %v1180, %v1276
  %v1278 = vpop.f32.mrf.mxu0
  %1279 = vmatprep.mubr.bf16.mxu0 %v451
  %1280 = vmatmul.mubr.bf16.gmra.mxu0 %v450
  %v1281 = vpop.f32.mrf.mxu0
  %v1282 = vadd.f32 %v1185, %v1281
  %v1283 = vpop.f32.mrf.mxu0
  %v1284 = vpop.f32.mrf.mxu0
  %v1285 = vadd.f32 %v1188, %v1284
  %v1286 = vpop.f32.mrf.mxu0
  %1287 = vmatprep.mubr.bf16.mxu0 %v459
  %1288 = vmatmul.mubr.bf16.gmra.mxu0 %v458
  %v1289 = vpop.f32.mrf.mxu0
  %v1290 = vadd.f32 %v1193, %v1289
  %v1291 = vpop.f32.mrf.mxu0
  %v1292 = vpop.f32.mrf.mxu0
  %v1293 = vadd.f32 %v1196, %v1292
  %v1294 = vpop.f32.mrf.mxu0
  %1295 = vmatprep.mubr.bf16.mxu0 %v467
  %1296 = vmatmul.mubr.bf16.gmra.mxu0 %v466
  %v1297 = vpop.f32.mrf.mxu0
  %v1298 = vadd.f32 %v1201, %v1297
  %v1299 = vpop.f32.mrf.mxu0
  %v1300 = vpop.f32.mrf.mxu0
  %v1301 = vadd.f32 %v1204, %v1300
  %v1302 = vpop.f32.mrf.mxu0
  %1303 = vmatprep.mubr.bf16.mxu0 %v475
  %1304 = vmatmul.mubr.bf16.gmra.mxu0 %v474
  %v1305 = vpop.f32.mrf.mxu0
  %v1306 = vadd.f32 %v1209, %v1305
  %v1307 = vpop.f32.mrf.mxu0
  %v1308 = vpop.f32.mrf.mxu0
  %v1309 = vadd.f32 %v1212, %v1308
  %v1310 = vpop.f32.mrf.mxu0
  %1311 = vdwg.mxu0
  %v1312 = vadd.f32 %v1250, %v1253
  %v1313 = vadd.f32 %v1312, %v1258
  %v1314 = vadd.f32 %v1313, %v1261
  %v1315 = vadd.f32 %v1314, %v1266
  %v1316 = vadd.f32 %v1315, %v1269
  %v1317 = vadd.f32 %v1316, %v1274
  %v1318 = vadd.f32 %v1317, %v1277
  %v1319 = vadd.f32 %v1318, %v1282
  %v1320 = vadd.f32 %v1319, %v1285
  %v1321 = vadd.f32 %v1320, %v1290
  %v1322 = vadd.f32 %v1321, %v1293
  %v1323 = vadd.f32 %v1322, %v1298
  %v1324 = vadd.f32 %v1323, %v1301
  %v1325 = vadd.f32 %v1324, %v1306
  %v1326 = vadd.f32 %v1325, %v1309
  %v1327 = vrot.slane %v1326, 4
  %v1328 = vadd.f32 %v1326, %v1327
  %v1329 = vrot.slane %v1328, 2
  %v1330 = vadd.f32 %v1328, %v1329
  %v1331 = vrot.slane %v1330, 1
  %v1332 = vadd.f32 %v1330, %v1331
  %v1333 = vrcp.pop 128.0
  %v1334 = vmul.f32 %v1332, %v1333
  %v1335 = vsub.f32 %v1250, %v1334
  %v1336 = vsub.f32 %v1253, %v1334
  %v1337 = vsub.f32 %v1258, %v1334
  %v1338 = vsub.f32 %v1261, %v1334
  %v1339 = vsub.f32 %v1266, %v1334
  %v1340 = vsub.f32 %v1269, %v1334
  %v1341 = vsub.f32 %v1274, %v1334
  %v1342 = vsub.f32 %v1277, %v1334
  %v1343 = vsub.f32 %v1282, %v1334
  %v1344 = vsub.f32 %v1285, %v1334
  %v1345 = vsub.f32 %v1290, %v1334
  %v1346 = vsub.f32 %v1293, %v1334
  %v1347 = vsub.f32 %v1298, %v1334
  %v1348 = vsub.f32 %v1301, %v1334
  %v1349 = vsub.f32 %v1306, %v1334
  %v1350 = vsub.f32 %v1309, %v1334
  %v1351 = vmul.f32 %v1335, %v1335
  %v1352 = vmul.f32 %v1336, %v1336
  %v1353 = vmul.f32 %v1337, %v1337
  %v1354 = vmul.f32 %v1338, %v1338
  %v1355 = vmul.f32 %v1339, %v1339
  %v1356 = vmul.f32 %v1340, %v1340
  %v1357 = vmul.f32 %v1341, %v1341
  %v1358 = vmul.f32 %v1342, %v1342
  %v1359 = vmul.f32 %v1343, %v1343
  %v1360 = vmul.f32 %v1344, %v1344
  %v1361 = vmul.f32 %v1345, %v1345
  %v1362 = vmul.f32 %v1346, %v1346
  %v1363 = vmul.f32 %v1347, %v1347
  %v1364 = vmul.f32 %v1348, %v1348
  %v1365 = vmul.f32 %v1349, %v1349
  %v1366 = vmul.f32 %v1350, %v1350
  %v1367 = vadd.f32 %v1351, %v1352
  %v1368 = vadd.f32 %v1367, %v1353
  %v1369 = vadd.f32 %v1368, %v1354
  %v1370 = vadd.f32 %v1369, %v1355
  %v1371 = vadd.f32 %v1370, %v1356
  %v1372 = vadd.f32 %v1371, %v1357
  %v1373 = vadd.f32 %v1372, %v1358
  %v1374 = vadd.f32 %v1373, %v1359
  %v1375 = vadd.f32 %v1374, %v1360
  %v1376 = vadd.f32 %v1375, %v1361
  %v1377 = vadd.f32 %v1376, %v1362
  %v1378 = vadd.f32 %v1377, %v1363
  %v1379 = vadd.f32 %v1378, %v1364
  %v1380 = vadd.f32 %v1379, %v1365
  %v1381 = vadd.f32 %v1380, %v1366
  %v1382 = vrot.slane %v1381, 4
  %v1383 = vadd.f32 %v1381, %v1382
  %v1384 = vrot.slane %v1383, 2
  %v1385 = vadd.f32 %v1383, %v1384
  %v1386 = vrot.slane %v1385, 1
  %v1387 = vadd.f32 %v1385, %v1386
  %v1388 = vmul.f32 %v1387, %v1333
  %v1389 = vadd.f32 %v1388, 1e-05
  %v1390 = vrsqrt.pop %v1389
  %v1391 = vmul.f32 %v1335, %v1390
  %v1392 = vmul.f32 %v1336, %v1390
  %v1393 = vmul.f32 %v1337, %v1390
  %v1394 = vmul.f32 %v1338, %v1390
  %v1395 = vmul.f32 %v1339, %v1390
  %v1396 = vmul.f32 %v1340, %v1390
  %v1397 = vmul.f32 %v1341, %v1390
  %v1398 = vmul.f32 %v1342, %v1390
  %v1399 = vmul.f32 %v1343, %v1390
  %v1400 = vmul.f32 %v1344, %v1390
  %v1401 = vmul.f32 %v1345, %v1390
  %v1402 = vmul.f32 %v1346, %v1390
  %v1403 = vmul.f32 %v1347, %v1390
  %v1404 = vmul.f32 %v1348, %v1390
  %v1405 = vmul.f32 %v1349, %v1390
  %v1406 = vmul.f32 %v1350, %v1390
  %v1407 = vld [vmem:[%s3] sm:$0x1]
  %v1409 = vlaneseq
  %v1410 = vshrl.u32 %v1409, 7
  %v1411 = vsub.s32 0, %v1410
  %v1412 = vrot.slane %v1407, %v1411
  %v1414 = vmul.f32 %v1391, %v1412
  %v1415 = vmul.f32 %v1392, %v1412
  %v1416 = vmul.f32 %v1393, %v1412
  %v1417 = vmul.f32 %v1394, %v1412
  %v1418 = vmul.f32 %v1395, %v1412
  %v1419 = vmul.f32 %v1396, %v1412
  %v1420 = vmul.f32 %v1397, %v1412
  %v1421 = vmul.f32 %v1398, %v1412
  %v1422 = vmul.f32 %v1399, %v1412
  %v1423 = vmul.f32 %v1400, %v1412
  %v1424 = vmul.f32 %v1401, %v1412
  %v1425 = vmul.f32 %v1402, %v1412
  %v1426 = vmul.f32 %v1403, %v1412
  %v1427 = vmul.f32 %v1404, %v1412
  %v1428 = vmul.f32 %v1405, %v1412
  %v1429 = vmul.f32 %v1406, %v1412
  %v1430 = vld [vmem:[%s4] sm:$0x1]
  %v1432 = vlaneseq
  %v1433 = vshrl.u32 %v1432, 7
  %v1434 = vsub.s32 0, %v1433
  %v1435 = vrot.slane %v1430, %v1434
  %v1437 = vadd.f32 %v1414, %v1435
  %v1438 = vadd.f32 %v1415, %v1435
  %v1439 = vadd.f32 %v1416, %v1435
  %v1440 = vadd.f32 %v1417, %v1435
  %v1441 = vadd.f32 %v1418, %v1435
  %v1442 = vadd.f32 %v1419, %v1435
  %v1443 = vadd.f32 %v1420, %v1435
  %v1444 = vadd.f32 %v1421, %v1435
  %v1445 = vadd.f32 %v1422, %v1435
  %v1446 = vadd.f32 %v1423, %v1435
  %v1447 = vadd.f32 %v1424, %v1435
  %v1448 = vadd.f32 %v1425, %v1435
  %v1449 = vadd.f32 %v1426, %v1435
  %v1450 = vadd.f32 %v1427, %v1435
  %v1451 = vadd.f32 %v1428, %v1435
  %v1452 = vadd.f32 %v1429, %v1435
  %vm1453 = vcmp.gt.f32.partialorder %v1437, 0.0
  %vm1454 = vcmp.gt.f32.partialorder %v1438, 0.0
  %vm1455 = vcmp.gt.f32.partialorder %v1439, 0.0
  %vm1456 = vcmp.gt.f32.partialorder %v1440, 0.0
  %vm1457 = vcmp.gt.f32.partialorder %v1441, 0.0
  %vm1458 = vcmp.gt.f32.partialorder %v1442, 0.0
  %vm1459 = vcmp.gt.f32.partialorder %v1443, 0.0
  %vm1460 = vcmp.gt.f32.partialorder %v1444, 0.0
  %vm1461 = vcmp.gt.f32.partialorder %v1445, 0.0
  %vm1462 = vcmp.gt.f32.partialorder %v1446, 0.0
  %vm1463 = vcmp.gt.f32.partialorder %v1447, 0.0
  %vm1464 = vcmp.gt.f32.partialorder %v1448, 0.0
  %vm1465 = vcmp.gt.f32.partialorder %v1449, 0.0
  %vm1466 = vcmp.gt.f32.partialorder %v1450, 0.0
  %vm1467 = vcmp.gt.f32.partialorder %v1451, 0.0
  %vm1468 = vcmp.gt.f32.partialorder %v1452, 0.0
  %v1469 = vmul.f32 %v1437, 0.2
  %v1470 = vmul.f32 %v1438, 0.2
  %v1471 = vmul.f32 %v1439, 0.2
  %v1472 = vmul.f32 %v1440, 0.2
  %v1473 = vmul.f32 %v1441, 0.2
  %v1474 = vmul.f32 %v1442, 0.2
  %v1475 = vmul.f32 %v1443, 0.2
  %v1476 = vmul.f32 %v1444, 0.2
  %v1477 = vmul.f32 %v1445, 0.2
  %v1478 = vmul.f32 %v1446, 0.2
  %v1479 = vmul.f32 %v1447, 0.2
  %v1480 = vmul.f32 %v1448, 0.2
  %v1481 = vmul.f32 %v1449, 0.2
  %v1482 = vmul.f32 %v1450, 0.2
  %v1483 = vmul.f32 %v1451, 0.2
  %v1484 = vmul.f32 %v1452, 0.2
  %v1485 = vsel %vm1453, %v1437, %v1469
  %v1486 = vsel %vm1454, %v1438, %v1470
  %v1487 = vsel %vm1455, %v1439, %v1471
  %v1488 = vsel %vm1456, %v1440, %v1472
  %v1489 = vsel %vm1457, %v1441, %v1473
  %v1490 = vsel %vm1458, %v1442, %v1474
  %v1491 = vsel %vm1459, %v1443, %v1475
  %v1492 = vsel %vm1460, %v1444, %v1476
  %v1493 = vsel %vm1461, %v1445, %v1477
  %v1494 = vsel %vm1462, %v1446, %v1478
  %v1495 = vsel %vm1463, %v1447, %v1479
  %v1496 = vsel %vm1464, %v1448, %v1480
  %v1497 = vsel %vm1465, %v1449, %v1481
  %v1498 = vsel %vm1466, %v1450, %v1482
  %v1499 = vsel %vm1467, %v1451, %v1483
  %v1500 = vsel %vm1468, %v1452, %v1484
  %v1501 = vpack.c.bf16 %v1486, %v1485
  %v1502 = vpack.c.bf16 %v1488, %v1487
  %v1503 = vpack.c.bf16 %v1490, %v1489
  %v1504 = vpack.c.bf16 %v1492, %v1491
  %v1505 = vpack.c.bf16 %v1494, %v1493
  %v1506 = vpack.c.bf16 %v1496, %v1495
  %v1507 = vpack.c.bf16 %v1498, %v1497
  %v1508 = vpack.c.bf16 %v1500, %v1499
  %v1517 = vunpack.c.l.b16 %v1501
  %v1518 = vunpack.c.h.b16 %v1501
  %v1519 = vunpack.c.l.b16 %v1502
  %v1520 = vunpack.c.h.b16 %v1502
  %v1521 = vunpack.c.l.b16 %v1503
  %v1522 = vunpack.c.h.b16 %v1503
  %v1523 = vunpack.c.l.b16 %v1504
  %v1524 = vunpack.c.h.b16 %v1504
  %v1525 = vunpack.c.l.b16 %v1505
  %v1526 = vunpack.c.h.b16 %v1505
  %v1527 = vunpack.c.l.b16 %v1506
  %v1528 = vunpack.c.h.b16 %v1506
  %v1529 = vunpack.c.l.b16 %v1507
  %v1530 = vunpack.c.h.b16 %v1507
  %v1531 = vunpack.c.l.b16 %v1508
  %v1532 = vunpack.c.h.b16 %v1508
  %v1533 = vpack.c.b16 %v1517, %v1517
  %v1534 = vpack.c.b16 %v1518, %v1518
  %v1535 = vpack.c.b16 %v1519, %v1519
  %v1536 = vpack.c.b16 %v1520, %v1520
  %v1537 = vpack.c.b16 %v1521, %v1521
  %v1538 = vpack.c.b16 %v1522, %v1522
  %v1539 = vpack.c.b16 %v1523, %v1523
  %v1540 = vpack.c.b16 %v1524, %v1524
  %v1541 = vpack.c.b16 %v1525, %v1525
  %v1542 = vpack.c.b16 %v1526, %v1526
  %v1543 = vpack.c.b16 %v1527, %v1527
  %v1544 = vpack.c.b16 %v1528, %v1528
  %v1545 = vpack.c.b16 %v1529, %v1529
  %v1546 = vpack.c.b16 %v1530, %v1530
  %v1547 = vpack.c.b16 %v1531, %v1531
  %v1548 = vpack.c.b16 %v1532, %v1532
  %1565 = vst [vmem:[%s5] sm:$0xf] %v1533
  %1566 = vst [vmem:[%s5 + $0x4] sm:$0xf] %v1534
  %1567 = vst [vmem:[%s5 + $0x8] sm:$0xf] %v1535
  %1568 = vst [vmem:[%s5 + $0xc] sm:$0xf] %v1536
  %1569 = vst [vmem:[%s5 + $0x10] sm:$0xf] %v1537
  %1570 = vst [vmem:[%s5 + $0x14] sm:$0xf] %v1538
  %1571 = vst [vmem:[%s5 + $0x18] sm:$0xf] %v1539
  %1572 = vst [vmem:[%s5 + $0x1c] sm:$0xf] %v1540
  %1573 = vst [vmem:[%s5 + $0x20] sm:$0xf] %v1541
  %1574 = vst [vmem:[%s5 + $0x24] sm:$0xf] %v1542
  %1575 = vst [vmem:[%s5 + $0x28] sm:$0xf] %v1543
  %1576 = vst [vmem:[%s5 + $0x2c] sm:$0xf] %v1544
  %1577 = vst [vmem:[%s5 + $0x30] sm:$0xf] %v1545
  %1578 = vst [vmem:[%s5 + $0x34] sm:$0xf] %v1546
  %1579 = vst [vmem:[%s5 + $0x38] sm:$0xf] %v1547
  %1580 = vst [vmem:[%s5 + $0x3c] sm:$0xf] %v1548
  // Predicated region
  $region22: #{discriminator_forward.5} parent=0 // pred_check
    _
  $region23: #{discriminator_forward.5} parent=0 // pred_check_branch
    %1582 = sbr.rel (0) target = $region25
  $region24: #{discriminator_forward.5} parent=0 // pred_region
    _
  $region25: #{discriminator_forward.5} parent=0 // pred_fallthru
    _
  // Predicated region
  $region26: #{discriminator_forward.5} parent=0 // pred_check
    _
  $region27: #{discriminator_forward.5} parent=0 // pred_check_branch
    %1584 = sbr.rel (0) target = $region29
  $region28: #{discriminator_forward.5} parent=0 // pred_region
    _
  $region29: #{discriminator_forward.5} parent=0 // pred_fallthru
    _

// kernel: discriminator_forward.6
$region0: #{discriminator_forward.6}
  #allocation0 [shape = 'u32[]', space=smem, size = 0x4, offset = 0x4, fixed_abs, tag = 'smem constant byte address 0x4 - core index']
  #allocation1 [shape = 'u32[144,128]{1,0:T(1,128)}', space=vmem, size = 0x12000, scoped, tag = 'internal scratch']
  %s0 = inlined_call_operand.vmem [shape: bf16[32,2048], index: 0, kind: input, shape index: {}]
  %s1 = inlined_call_operand.vmem [shape: bf16[2048,256], index: 1, kind: input, shape index: {}]
  %s2 = inlined_call_operand.vmem [shape: f32[1,256], index: 2, kind: input, shape index: {}]
  %s3 = inlined_call_operand.vmem [shape: f32[1,256], index: 3, kind: input, shape index: {}]
  %s4 = inlined_call_operand.vmem [shape: f32[1,256], index: 4, kind: input, shape index: {}]
  %s5 = inlined_call_operand.vmem [shape: bf16[32,256], index: 5, kind: output, shape index: {}]
  %s6 = sld [smem:[#allocation0]]
  $region30: #{discriminator_forward.6} parent=0
    _
  %s8 = ssub.s32 1, %s6
  %s9 = scalar_select 0, %s8, %s6
  // Predicated region
  $region2: #{discriminator_forward.6} parent=0 // pred_check
    _
  $region3: #{discriminator_forward.6} parent=0 // pred_check_branch
    %11 = sbr.rel (0) target = $region5
  $region4: #{discriminator_forward.6} parent=0 // pred_region
    _
  $region5: #{discriminator_forward.6} parent=0 // pred_fallthru
    _
  // Predicated region
  $region6: #{discriminator_forward.6} parent=0 // pred_check
    _
  $region7: #{discriminator_forward.6} parent=0 // pred_check_branch
    %13 = sbr.rel (0) target = $region9
  $region8: #{discriminator_forward.6} parent=0 // pred_region
    _
  $region9: #{discriminator_forward.6} parent=0 // pred_fallthru
    _
  // Predicated region
  $region10: #{discriminator_forward.6} parent=0 // pred_check
    _
  $region11: #{discriminator_forward.6} parent=0 // pred_check_branch
    %15 = sbr.rel (0) target = $region13
  $region12: #{discriminator_forward.6} parent=0 // pred_region
    _
  $region13: #{discriminator_forward.6} parent=0 // pred_fallthru
    _
  // Predicated region
  $region14: #{discriminator_forward.6} parent=0 // pred_check
    _
  $region15: #{discriminator_forward.6} parent=0 // pred_check_branch
    %17 = sbr.rel (0) target = $region17
  $region16: #{discriminator_forward.6} parent=0 // pred_region
    _
  $region17: #{discriminator_forward.6} parent=0 // pred_fallthru
    _
  // Predicated region
  $region18: #{discriminator_forward.6} parent=0 // pred_check
    _
  $region19: #{discriminator_forward.6} parent=0 // pred_check_branch
    %19 = sbr.rel (0) target = $region21
  $region20: #{discriminator_forward.6} parent=0 // pred_region
    _
  $region21: #{discriminator_forward.6} parent=0 // pred_fallthru
    _
  %v20 = vld [vmem:[%s0] sm:$0xff]
  %v21 = vld [vmem:[%s0 + $0x8] sm:$0xff]
  %v22 = vld [vmem:[%s0 + $0x10] sm:$0xff]
  %v23 = vld [vmem:[%s0 + $0x18] sm:$0xff]
  %v24 = vld [vmem:[%s0 + $0x20] sm:$0xff]
  %v25 = vld [vmem:[%s0 + $0x28] sm:$0xff]
  %v26 = vld [vmem:[%s0 + $0x30] sm:$0xff]
  %v27 = vld [vmem:[%s0 + $0x38] sm:$0xff]
  %v28 = vld [vmem:[%s0 + $0x40] sm:$0xff]
  %v29 = vld [vmem:[%s0 + $0x48] sm:$0xff]
  %v30 = vld [vmem:[%s0 + $0x50] sm:$0xff]
  %v31 = vld [vmem:[%s0 + $0x58] sm:$0xff]
  %v32 = vld [vmem:[%s0 + $0x60] sm:$0xff]
  %v33 = vld [vmem:[%s0 + $0x68] sm:$0xff]
  %v34 = vld [vmem:[%s0 + $0x70] sm:$0xff]
  %v35 = vld [vmem:[%s0 + $0x78] sm:$0xff]
  %v36 = vld [vmem:[%s0 + $0x80] sm:$0xff]
  %v37 = vld [vmem:[%s0 + $0x88] sm:$0xff]
  %v38 = vld [vmem:[%s0 + $0x90] sm:$0xff]
  %v39 = vld [vmem:[%s0 + $0x98] sm:$0xff]
  %v40 = vld [vmem:[%s0 + $0xa0] sm:$0xff]
  %v41 = vld [vmem:[%s0 + $0xa8] sm:$0xff]
  %v42 = vld [vmem:[%s0 + $0xb0] sm:$0xff]
  %v43 = vld [vmem:[%s0 + $0xb8] sm:$0xff]
  %v44 = vld [vmem:[%s0 + $0xc0] sm:$0xff]
  %v45 = vld [vmem:[%s0 + $0xc8] sm:$0xff]
  %v46 = vld [vmem:[%s0 + $0xd0] sm:$0xff]
  %v47 = vld [vmem:[%s0 + $0xd8] sm:$0xff]
  %v48 = vld [vmem:[%s0 + $0xe0] sm:$0xff]
  %v49 = vld [vmem:[%s0 + $0xe8] sm:$0xff]
  %v50 = vld [vmem:[%s0 + $0xf0] sm:$0xff]
  %v51 = vld [vmem:[%s0 + $0xf8] sm:$0xff]
  %v52 = vld [vmem:[%s1] sm:$0xff]
  %v53 = vld [vmem:[%s1 + $0x8] sm:$0xff]
  %v54 = vld [vmem:[%s1 + $0x10] sm:$0xff]
  %v55 = vld [vmem:[%s1 + $0x18] sm:$0xff]
  %v56 = vld [vmem:[%s1 + $0x20] sm:$0xff]
  %v57 = vld [vmem:[%s1 + $0x28] sm:$0xff]
  %v58 = vld [vmem:[%s1 + $0x30] sm:$0xff]
  %v59 = vld [vmem:[%s1 + $0x38] sm:$0xff]
  %v60 = vld [vmem:[%s1 + $0x40] sm:$0xff]
  %v61 = vld [vmem:[%s1 + $0x48] sm:$0xff]
  %v62 = vld [vmem:[%s1 + $0x50] sm:$0xff]
  %v63 = vld [vmem:[%s1 + $0x58] sm:$0xff]
  %v64 = vld [vmem:[%s1 + $0x60] sm:$0xff]
  %v65 = vld [vmem:[%s1 + $0x68] sm:$0xff]
  %v66 = vld [vmem:[%s1 + $0x70] sm:$0xff]
  %v67 = vld [vmem:[%s1 + $0x78] sm:$0xff]
  %v68 = vld [vmem:[%s1 + $0x80] sm:$0xff]
  %v69 = vld [vmem:[%s1 + $0x88] sm:$0xff]
  %v70 = vld [vmem:[%s1 + $0x90] sm:$0xff]
  %v71 = vld [vmem:[%s1 + $0x98] sm:$0xff]
  %v72 = vld [vmem:[%s1 + $0xa0] sm:$0xff]
  %v73 = vld [vmem:[%s1 + $0xa8] sm:$0xff]
  %v74 = vld [vmem:[%s1 + $0xb0] sm:$0xff]
  %v75 = vld [vmem:[%s1 + $0xb8] sm:$0xff]
  %v76 = vld [vmem:[%s1 + $0xc0] sm:$0xff]
  %v77 = vld [vmem:[%s1 + $0xc8] sm:$0xff]
  %v78 = vld [vmem:[%s1 + $0xd0] sm:$0xff]
  %v79 = vld [vmem:[%s1 + $0xd8] sm:$0xff]
  %v80 = vld [vmem:[%s1 + $0xe0] sm:$0xff]
  %v81 = vld [vmem:[%s1 + $0xe8] sm:$0xff]
  %v82 = vld [vmem:[%s1 + $0xf0] sm:$0xff]
  %v83 = vld [vmem:[%s1 + $0xf8] sm:$0xff]
  %v84 = vld [vmem:[%s1 + $0x100] sm:$0xff]
  %v85 = vld [vmem:[%s1 + $0x108] sm:$0xff]
  %v86 = vld [vmem:[%s1 + $0x110] sm:$0xff]
  %v87 = vld [vmem:[%s1 + $0x118] sm:$0xff]
  %v88 = vld [vmem:[%s1 + $0x120] sm:$0xff]
  %v89 = vld [vmem:[%s1 + $0x128] sm:$0xff]
  %v90 = vld [vmem:[%s1 + $0x130] sm:$0xff]
  %v91 = vld [vmem:[%s1 + $0x138] sm:$0xff]
  %v92 = vld [vmem:[%s1 + $0x140] sm:$0xff]
  %v93 = vld [vmem:[%s1 + $0x148] sm:$0xff]
  %v94 = vld [vmem:[%s1 + $0x150] sm:$0xff]
  %v95 = vld [vmem:[%s1 + $0x158] sm:$0xff]
  %v96 = vld [vmem:[%s1 + $0x160] sm:$0xff]
  %v97 = vld [vmem:[%s1 + $0x168] sm:$0xff]
  %v98 = vld [vmem:[%s1 + $0x170] sm:$0xff]
  %v99 = vld [vmem:[%s1 + $0x178] sm:$0xff]
  %v100 = vld [vmem:[%s1 + $0x180] sm:$0xff]
  %v101 = vld [vmem:[%s1 + $0x188] sm:$0xff]
  %v102 = vld [vmem:[%s1 + $0x190] sm:$0xff]
  %v103 = vld [vmem:[%s1 + $0x198] sm:$0xff]
  %v104 = vld [vmem:[%s1 + $0x1a0] sm:$0xff]
  %v105 = vld [vmem:[%s1 + $0x1a8] sm:$0xff]
  %v106 = vld [vmem:[%s1 + $0x1b0] sm:$0xff]
  %v107 = vld [vmem:[%s1 + $0x1b8] sm:$0xff]
  %v108 = vld [vmem:[%s1 + $0x1c0] sm:$0xff]
  %v109 = vld [vmem:[%s1 + $0x1c8] sm:$0xff]
  %v110 = vld [vmem:[%s1 + $0x1d0] sm:$0xff]
  %v111 = vld [vmem:[%s1 + $0x1d8] sm:$0xff]
  %v112 = vld [vmem:[%s1 + $0x1e0] sm:$0xff]
  %v113 = vld [vmem:[%s1 + $0x1e8] sm:$0xff]
  %v114 = vld [vmem:[%s1 + $0x1f0] sm:$0xff]
  %v115 = vld [vmem:[%s1 + $0x1f8] sm:$0xff]
  %v116 = vld [vmem:[%s1 + $0x200] sm:$0xff]
  %v117 = vld [vmem:[%s1 + $0x208] sm:$0xff]
  %v118 = vld [vmem:[%s1 + $0x210] sm:$0xff]
  %v119 = vld [vmem:[%s1 + $0x218] sm:$0xff]
  %v120 = vld [vmem:[%s1 + $0x220] sm:$0xff]
  %v121 = vld [vmem:[%s1 + $0x228] sm:$0xff]
  %v122 = vld [vmem:[%s1 + $0x230] sm:$0xff]
  %v123 = vld [vmem:[%s1 + $0x238] sm:$0xff]
  %v124 = vld [vmem:[%s1 + $0x240] sm:$0xff]
  %v125 = vld [vmem:[%s1 + $0x248] sm:$0xff]
  %v126 = vld [vmem:[%s1 + $0x250] sm:$0xff]
  %v127 = vld [vmem:[%s1 + $0x258] sm:$0xff]
  %v128 = vld [vmem:[%s1 + $0x260] sm:$0xff]
  %v129 = vld [vmem:[%s1 + $0x268] sm:$0xff]
  %v130 = vld [vmem:[%s1 + $0x270] sm:$0xff]
  %v131 = vld [vmem:[%s1 + $0x278] sm:$0xff]
  %v132 = vld [vmem:[%s1 + $0x280] sm:$0xff]
  %v133 = vld [vmem:[%s1 + $0x288] sm:$0xff]
  %v134 = vld [vmem:[%s1 + $0x290] sm:$0xff]
  %v135 = vld [vmem:[%s1 + $0x298] sm:$0xff]
  %v136 = vld [vmem:[%s1 + $0x2a0] sm:$0xff]
  %v137 = vld [vmem:[%s1 + $0x2a8] sm:$0xff]
  %v138 = vld [vmem:[%s1 + $0x2b0] sm:$0xff]
  %v139 = vld [vmem:[%s1 + $0x2b8] sm:$0xff]
  %v140 = vld [vmem:[%s1 + $0x2c0] sm:$0xff]
  %v141 = vld [vmem:[%s1 + $0x2c8] sm:$0xff]
  %v142 = vld [vmem:[%s1 + $0x2d0] sm:$0xff]
  %v143 = vld [vmem:[%s1 + $0x2d8] sm:$0xff]
  %v144 = vld [vmem:[%s1 + $0x2e0] sm:$0xff]
  %v145 = vld [vmem:[%s1 + $0x2e8] sm:$0xff]
  %v146 = vld [vmem:[%s1 + $0x2f0] sm:$0xff]
  %v147 = vld [vmem:[%s1 + $0x2f8] sm:$0xff]
  %v148 = vld [vmem:[%s1 + $0x300] sm:$0xff]
  %v149 = vld [vmem:[%s1 + $0x308] sm:$0xff]
  %v150 = vld [vmem:[%s1 + $0x310] sm:$0xff]
  %v151 = vld [vmem:[%s1 + $0x318] sm:$0xff]
  %v152 = vld [vmem:[%s1 + $0x320] sm:$0xff]
  %v153 = vld [vmem:[%s1 + $0x328] sm:$0xff]
  %v154 = vld [vmem:[%s1 + $0x330] sm:$0xff]
  %v155 = vld [vmem:[%s1 + $0x338] sm:$0xff]
  %v156 = vld [vmem:[%s1 + $0x340] sm:$0xff]
  %v157 = vld [vmem:[%s1 + $0x348] sm:$0xff]
  %v158 = vld [vmem:[%s1 + $0x350] sm:$0xff]
  %v159 = vld [vmem:[%s1 + $0x358] sm:$0xff]
  %v160 = vld [vmem:[%s1 + $0x360] sm:$0xff]
  %v161 = vld [vmem:[%s1 + $0x368] sm:$0xff]
  %v162 = vld [vmem:[%s1 + $0x370] sm:$0xff]
  %v163 = vld [vmem:[%s1 + $0x378] sm:$0xff]
  %v164 = vld [vmem:[%s1 + $0x380] sm:$0xff]
  %v165 = vld [vmem:[%s1 + $0x388] sm:$0xff]
  %v166 = vld [vmem:[%s1 + $0x390] sm:$0xff]
  %v167 = vld [vmem:[%s1 + $0x398] sm:$0xff]
  %v168 = vld [vmem:[%s1 + $0x3a0] sm:$0xff]
  %v169 = vld [vmem:[%s1 + $0x3a8] sm:$0xff]
  %v170 = vld [vmem:[%s1 + $0x3b0] sm:$0xff]
  %v171 = vld [vmem:[%s1 + $0x3b8] sm:$0xff]
  %v172 = vld [vmem:[%s1 + $0x3c0] sm:$0xff]
  %v173 = vld [vmem:[%s1 + $0x3c8] sm:$0xff]
  %v174 = vld [vmem:[%s1 + $0x3d0] sm:$0xff]
  %v175 = vld [vmem:[%s1 + $0x3d8] sm:$0xff]
  %v176 = vld [vmem:[%s1 + $0x3e0] sm:$0xff]
  %v177 = vld [vmem:[%s1 + $0x3e8] sm:$0xff]
  %v178 = vld [vmem:[%s1 + $0x3f0] sm:$0xff]
  %v179 = vld [vmem:[%s1 + $0x3f8] sm:$0xff]
  %v180 = vld [vmem:[%s1 + $0x400] sm:$0xff]
  %v181 = vld [vmem:[%s1 + $0x408] sm:$0xff]
  %v182 = vld [vmem:[%s1 + $0x410] sm:$0xff]
  %v183 = vld [vmem:[%s1 + $0x418] sm:$0xff]
  %v184 = vld [vmem:[%s1 + $0x420] sm:$0xff]
  %v185 = vld [vmem:[%s1 + $0x428] sm:$0xff]
  %v186 = vld [vmem:[%s1 + $0x430] sm:$0xff]
  %v187 = vld [vmem:[%s1 + $0x438] sm:$0xff]
  %v188 = vld [vmem:[%s1 + $0x440] sm:$0xff]
  %v189 = vld [vmem:[%s1 + $0x448] sm:$0xff]
  %v190 = vld [vmem:[%s1 + $0x450] sm:$0xff]
  %v191 = vld [vmem:[%s1 + $0x458] sm:$0xff]
  %v192 = vld [vmem:[%s1 + $0x460] sm:$0xff]
  %v193 = vld [vmem:[%s1 + $0x468] sm:$0xff]
  %v194 = vld [vmem:[%s1 + $0x470] sm:$0xff]
  %v195 = vld [vmem:[%s1 + $0x478] sm:$0xff]
  %v196 = vld [vmem:[%s1 + $0x480] sm:$0xff]
  %v197 = vld [vmem:[%s1 + $0x488] sm:$0xff]
  %v198 = vld [vmem:[%s1 + $0x490] sm:$0xff]
  %v199 = vld [vmem:[%s1 + $0x498] sm:$0xff]
  %v200 = vld [vmem:[%s1 + $0x4a0] sm:$0xff]
  %v201 = vld [vmem:[%s1 + $0x4a8] sm:$0xff]
  %v202 = vld [vmem:[%s1 + $0x4b0] sm:$0xff]
  %v203 = vld [vmem:[%s1 + $0x4b8] sm:$0xff]
  %v204 = vld [vmem:[%s1 + $0x4c0] sm:$0xff]
  %v205 = vld [vmem:[%s1 + $0x4c8] sm:$0xff]
  %v206 = vld [vmem:[%s1 + $0x4d0] sm:$0xff]
  %v207 = vld [vmem:[%s1 + $0x4d8] sm:$0xff]
  %v208 = vld [vmem:[%s1 + $0x4e0] sm:$0xff]
  %v209 = vld [vmem:[%s1 + $0x4e8] sm:$0xff]
  %v210 = vld [vmem:[%s1 + $0x4f0] sm:$0xff]
  %v211 = vld [vmem:[%s1 + $0x4f8] sm:$0xff]
  %v212 = vld [vmem:[%s1 + $0x500] sm:$0xff]
  %v213 = vld [vmem:[%s1 + $0x508] sm:$0xff]
  %v214 = vld [vmem:[%s1 + $0x510] sm:$0xff]
  %v215 = vld [vmem:[%s1 + $0x518] sm:$0xff]
  %v216 = vld [vmem:[%s1 + $0x520] sm:$0xff]
  %v217 = vld [vmem:[%s1 + $0x528] sm:$0xff]
  %v218 = vld [vmem:[%s1 + $0x530] sm:$0xff]
  %v219 = vld [vmem:[%s1 + $0x538] sm:$0xff]
  %v220 = vld [vmem:[%s1 + $0x540] sm:$0xff]
  %v221 = vld [vmem:[%s1 + $0x548] sm:$0xff]
  %v222 = vld [vmem:[%s1 + $0x550] sm:$0xff]
  %v223 = vld [vmem:[%s1 + $0x558] sm:$0xff]
  %v224 = vld [vmem:[%s1 + $0x560] sm:$0xff]
  %v225 = vld [vmem:[%s1 + $0x568] sm:$0xff]
  %v226 = vld [vmem:[%s1 + $0x570] sm:$0xff]
  %v227 = vld [vmem:[%s1 + $0x578] sm:$0xff]
  %v228 = vld [vmem:[%s1 + $0x580] sm:$0xff]
  %v229 = vld [vmem:[%s1 + $0x588] sm:$0xff]
  %v230 = vld [vmem:[%s1 + $0x590] sm:$0xff]
  %v231 = vld [vmem:[%s1 + $0x598] sm:$0xff]
  %v232 = vld [vmem:[%s1 + $0x5a0] sm:$0xff]
  %v233 = vld [vmem:[%s1 + $0x5a8] sm:$0xff]
  %v234 = vld [vmem:[%s1 + $0x5b0] sm:$0xff]
  %v235 = vld [vmem:[%s1 + $0x5b8] sm:$0xff]
  %v236 = vld [vmem:[%s1 + $0x5c0] sm:$0xff]
  %v237 = vld [vmem:[%s1 + $0x5c8] sm:$0xff]
  %v238 = vld [vmem:[%s1 + $0x5d0] sm:$0xff]
  %v239 = vld [vmem:[%s1 + $0x5d8] sm:$0xff]
  %v240 = vld [vmem:[%s1 + $0x5e0] sm:$0xff]
  %v241 = vld [vmem:[%s1 + $0x5e8] sm:$0xff]
  %v242 = vld [vmem:[%s1 + $0x5f0] sm:$0xff]
  %v243 = vld [vmem:[%s1 + $0x5f8] sm:$0xff]
  %v244 = vld [vmem:[%s1 + $0x600] sm:$0xff]
  %v245 = vld [vmem:[%s1 + $0x608] sm:$0xff]
  %v246 = vld [vmem:[%s1 + $0x610] sm:$0xff]
  %v247 = vld [vmem:[%s1 + $0x618] sm:$0xff]
  %v248 = vld [vmem:[%s1 + $0x620] sm:$0xff]
  %v249 = vld [vmem:[%s1 + $0x628] sm:$0xff]
  %v250 = vld [vmem:[%s1 + $0x630] sm:$0xff]
  %v251 = vld [vmem:[%s1 + $0x638] sm:$0xff]
  %v252 = vld [vmem:[%s1 + $0x640] sm:$0xff]
  %v253 = vld [vmem:[%s1 + $0x648] sm:$0xff]
  %v254 = vld [vmem:[%s1 + $0x650] sm:$0xff]
  %v255 = vld [vmem:[%s1 + $0x658] sm:$0xff]
  %v256 = vld [vmem:[%s1 + $0x660] sm:$0xff]
  %v257 = vld [vmem:[%s1 + $0x668] sm:$0xff]
  %v258 = vld [vmem:[%s1 + $0x670] sm:$0xff]
  %v259 = vld [vmem:[%s1 + $0x678] sm:$0xff]
  %v260 = vld [vmem:[%s1 + $0x680] sm:$0xff]
  %v261 = vld [vmem:[%s1 + $0x688] sm:$0xff]
  %v262 = vld [vmem:[%s1 + $0x690] sm:$0xff]
  %v263 = vld [vmem:[%s1 + $0x698] sm:$0xff]
  %v264 = vld [vmem:[%s1 + $0x6a0] sm:$0xff]
  %v265 = vld [vmem:[%s1 + $0x6a8] sm:$0xff]
  %v266 = vld [vmem:[%s1 + $0x6b0] sm:$0xff]
  %v267 = vld [vmem:[%s1 + $0x6b8] sm:$0xff]
  %v268 = vld [vmem:[%s1 + $0x6c0] sm:$0xff]
  %v269 = vld [vmem:[%s1 + $0x6c8] sm:$0xff]
  %v270 = vld [vmem:[%s1 + $0x6d0] sm:$0xff]
  %v271 = vld [vmem:[%s1 + $0x6d8] sm:$0xff]
  %v272 = vld [vmem:[%s1 + $0x6e0] sm:$0xff]
  %v273 = vld [vmem:[%s1 + $0x6e8] sm:$0xff]
  %v274 = vld [vmem:[%s1 + $0x6f0] sm:$0xff]
  %v275 = vld [vmem:[%s1 + $0x6f8] sm:$0xff]
  %v276 = vld [vmem:[%s1 + $0x700] sm:$0xff]
  %v277 = vld [vmem:[%s1 + $0x708] sm:$0xff]
  %v278 = vld [vmem:[%s1 + $0x710] sm:$0xff]
  %v279 = vld [vmem:[%s1 + $0x718] sm:$0xff]
  %v280 = vld [vmem:[%s1 + $0x720] sm:$0xff]
  %v281 = vld [vmem:[%s1 + $0x728] sm:$0xff]
  %v282 = vld [vmem:[%s1 + $0x730] sm:$0xff]
  %v283 = vld [vmem:[%s1 + $0x738] sm:$0xff]
  %v284 = vld [vmem:[%s1 + $0x740] sm:$0xff]
  %v285 = vld [vmem:[%s1 + $0x748] sm:$0xff]
  %v286 = vld [vmem:[%s1 + $0x750] sm:$0xff]
  %v287 = vld [vmem:[%s1 + $0x758] sm:$0xff]
  %v288 = vld [vmem:[%s1 + $0x760] sm:$0xff]
  %v289 = vld [vmem:[%s1 + $0x768] sm:$0xff]
  %v290 = vld [vmem:[%s1 + $0x770] sm:$0xff]
  %v291 = vld [vmem:[%s1 + $0x778] sm:$0xff]
  %v292 = vld [vmem:[%s1 + $0x780] sm:$0xff]
  %v293 = vld [vmem:[%s1 + $0x788] sm:$0xff]
  %v294 = vld [vmem:[%s1 + $0x790] sm:$0xff]
  %v295 = vld [vmem:[%s1 + $0x798] sm:$0xff]
  %v296 = vld [vmem:[%s1 + $0x7a0] sm:$0xff]
  %v297 = vld [vmem:[%s1 + $0x7a8] sm:$0xff]
  %v298 = vld [vmem:[%s1 + $0x7b0] sm:$0xff]
  %v299 = vld [vmem:[%s1 + $0x7b8] sm:$0xff]
  %v300 = vld [vmem:[%s1 + $0x7c0] sm:$0xff]
  %v301 = vld [vmem:[%s1 + $0x7c8] sm:$0xff]
  %v302 = vld [vmem:[%s1 + $0x7d0] sm:$0xff]
  %v303 = vld [vmem:[%s1 + $0x7d8] sm:$0xff]
  %v304 = vld [vmem:[%s1 + $0x7e0] sm:$0xff]
  %v305 = vld [vmem:[%s1 + $0x7e8] sm:$0xff]
  %v306 = vld [vmem:[%s1 + $0x7f0] sm:$0xff]
  %v307 = vld [vmem:[%s1 + $0x7f8] sm:$0xff]
  %v308 = vld [vmem:[%s2] sm:$0x3]
  %v310 = vlaneseq
  %v311 = vshrl.u32 %v310, 7
  %v312 = vsub.s32 0, %v311
  %v313 = vrot.slane %v308, %v312
  %v314 = vlaneseq
  %v315 = vshrl.u32 %v314, 7
  %v316 = vsub.s32 1, %v315
  %v317 = vrot.slane %v308, %v316
  %v352 = vunpack.c.l.b16 %v20
  %v353 = vunpack.c.h.b16 %v20
  %v354 = vunpack.c.l.b16 %v21
  %v355 = vunpack.c.h.b16 %v21
  %v356 = vunpack.c.l.b16 %v22
  %v357 = vunpack.c.h.b16 %v22
  %v358 = vunpack.c.l.b16 %v23
  %v359 = vunpack.c.h.b16 %v23
  %v360 = vunpack.c.l.b16 %v24
  %v361 = vunpack.c.h.b16 %v24
  %v362 = vunpack.c.l.b16 %v25
  %v363 = vunpack.c.h.b16 %v25
  %v364 = vunpack.c.l.b16 %v26
  %v365 = vunpack.c.h.b16 %v26
  %v366 = vunpack.c.l.b16 %v27
  %v367 = vunpack.c.h.b16 %v27
  %v368 = vunpack.c.l.b16 %v28
  %v369 = vunpack.c.h.b16 %v28
  %v370 = vunpack.c.l.b16 %v29
  %v371 = vunpack.c.h.b16 %v29
  %v372 = vunpack.c.l.b16 %v30
  %v373 = vunpack.c.h.b16 %v30
  %v374 = vunpack.c.l.b16 %v31
  %v375 = vunpack.c.h.b16 %v31
  %v376 = vunpack.c.l.b16 %v32
  %v377 = vunpack.c.h.b16 %v32
  %v378 = vunpack.c.l.b16 %v33
  %v379 = vunpack.c.h.b16 %v33
  %v380 = vunpack.c.l.b16 %v34
  %v381 = vunpack.c.h.b16 %v34
  %v382 = vunpack.c.l.b16 %v35
  %v383 = vunpack.c.h.b16 %v35
  %v384 = vunpack.c.l.b16 %v36
  %v385 = vunpack.c.h.b16 %v36
  %v386 = vunpack.c.l.b16 %v37
  %v387 = vunpack.c.h.b16 %v37
  %v388 = vunpack.c.l.b16 %v38
  %v389 = vunpack.c.h.b16 %v38
  %v390 = vunpack.c.l.b16 %v39
  %v391 = vunpack.c.h.b16 %v39
  %v392 = vunpack.c.l.b16 %v40
  %v393 = vunpack.c.h.b16 %v40
  %v394 = vunpack.c.l.b16 %v41
  %v395 = vunpack.c.h.b16 %v41
  %v396 = vunpack.c.l.b16 %v42
  %v397 = vunpack.c.h.b16 %v42
  %v398 = vunpack.c.l.b16 %v43
  %v399 = vunpack.c.h.b16 %v43
  %v400 = vunpack.c.l.b16 %v44
  %v401 = vunpack.c.h.b16 %v44
  %v402 = vunpack.c.l.b16 %v45
  %v403 = vunpack.c.h.b16 %v45
  %v404 = vunpack.c.l.b16 %v46
  %v405 = vunpack.c.h.b16 %v46
  %v406 = vunpack.c.l.b16 %v47
  %v407 = vunpack.c.h.b16 %v47
  %v408 = vunpack.c.l.b16 %v48
  %v409 = vunpack.c.h.b16 %v48
  %v410 = vunpack.c.l.b16 %v49
  %v411 = vunpack.c.h.b16 %v49
  %v412 = vunpack.c.l.b16 %v50
  %v413 = vunpack.c.h.b16 %v50
  %v414 = vunpack.c.l.b16 %v51
  %v415 = vunpack.c.h.b16 %v51
  %v416 = vpack.c.b16 %v368, %v352
  %v417 = vpack.c.b16 %v369, %v353
  %v418 = vpack.c.b16 %v370, %v354
  %v419 = vpack.c.b16 %v371, %v355
  %v420 = vpack.c.b16 %v372, %v356
  %v421 = vpack.c.b16 %v373, %v357
  %v422 = vpack.c.b16 %v374, %v358
  %v423 = vpack.c.b16 %v375, %v359
  %v424 = vpack.c.b16 %v376, %v360
  %v425 = vpack.c.b16 %v377, %v361
  %v426 = vpack.c.b16 %v378, %v362
  %v427 = vpack.c.b16 %v379, %v363
  %v428 = vpack.c.b16 %v380, %v364
  %v429 = vpack.c.b16 %v381, %v365
  %v430 = vpack.c.b16 %v382, %v366
  %v431 = vpack.c.b16 %v383, %v367
  %v432 = vpack.c.b16 %v400, %v384
  %v433 = vpack.c.b16 %v401, %v385
  %v434 = vpack.c.b16 %v402, %v386
  %v435 = vpack.c.b16 %v403, %v387
  %v436 = vpack.c.b16 %v404, %v388
  %v437 = vpack.c.b16 %v405, %v389
  %v438 = vpack.c.b16 %v406, %v390
  %v439 = vpack.c.b16 %v407, %v391
  %v440 = vpack.c.b16 %v408, %v392
  %v441 = vpack.c.b16 %v409, %v393
  %v442 = vpack.c.b16 %v410, %v394
  %v443 = vpack.c.b16 %v411, %v395
  %v444 = vpack.c.b16 %v412, %v396
  %v445 = vpack.c.b16 %v413, %v397
  %v446 = vpack.c.b16 %v414, %v398
  %v447 = vpack.c.b16 %v415, %v399
  %v736 = vunpack.c.l.b16 %v52
  %v737 = vunpack.c.h.b16 %v52
  %v738 = vunpack.c.l.b16 %v53
  %v739 = vunpack.c.h.b16 %v53
  %v740 = vunpack.c.l.b16 %v54
  %v741 = vunpack.c.h.b16 %v54
  %v742 = vunpack.c.l.b16 %v55
  %v743 = vunpack.c.h.b16 %v55
  %v744 = vunpack.c.l.b16 %v56
  %v745 = vunpack.c.h.b16 %v56
  %v746 = vunpack.c.l.b16 %v57
  %v747 = vunpack.c.h.b16 %v57
  %v748 = vunpack.c.l.b16 %v58
  %v749 = vunpack.c.h.b16 %v58
  %v750 = vunpack.c.l.b16 %v59
  %v751 = vunpack.c.h.b16 %v59
  %v752 = vunpack.c.l.b16 %v60
  %v753 = vunpack.c.h.b16 %v60
  %v754 = vunpack.c.l.b16 %v61
  %v755 = vunpack.c.h.b16 %v61
  %v756 = vunpack.c.l.b16 %v62
  %v757 = vunpack.c.h.b16 %v62
  %v758 = vunpack.c.l.b16 %v63
  %v759 = vunpack.c.h.b16 %v63
  %v760 = vunpack.c.l.b16 %v64
  %v761 = vunpack.c.h.b16 %v64
  %v762 = vunpack.c.l.b16 %v65
  %v763 = vunpack.c.h.b16 %v65
  %v764 = vunpack.c.l.b16 %v66
  %v765 = vunpack.c.h.b16 %v66
  %v766 = vunpack.c.l.b16 %v67
  %v767 = vunpack.c.h.b16 %v67
  %v768 = vunpack.c.l.b16 %v68
  %v769 = vunpack.c.h.b16 %v68
  %v770 = vunpack.c.l.b16 %v69
  %v771 = vunpack.c.h.b16 %v69
  %v772 = vunpack.c.l.b16 %v70
  %v773 = vunpack.c.h.b16 %v70
  %v774 = vunpack.c.l.b16 %v71
  %v775 = vunpack.c.h.b16 %v71
  %v776 = vunpack.c.l.b16 %v72
  %v777 = vunpack.c.h.b16 %v72
  %v778 = vunpack.c.l.b16 %v73
  %v779 = vunpack.c.h.b16 %v73
  %v780 = vunpack.c.l.b16 %v74
  %v781 = vunpack.c.h.b16 %v74
  %v782 = vunpack.c.l.b16 %v75
  %v783 = vunpack.c.h.b16 %v75
  %v784 = vunpack.c.l.b16 %v76
  %v785 = vunpack.c.h.b16 %v76
  %v786 = vunpack.c.l.b16 %v77
  %v787 = vunpack.c.h.b16 %v77
  %v788 = vunpack.c.l.b16 %v78
  %v789 = vunpack.c.h.b16 %v78
  %v790 = vunpack.c.l.b16 %v79
  %v791 = vunpack.c.h.b16 %v79
  %v792 = vunpack.c.l.b16 %v80
  %v793 = vunpack.c.h.b16 %v80
  %v794 = vunpack.c.l.b16 %v81
  %v795 = vunpack.c.h.b16 %v81
  %v796 = vunpack.c.l.b16 %v82
  %v797 = vunpack.c.h.b16 %v82
  %v798 = vunpack.c.l.b16 %v83
  %v799 = vunpack.c.h.b16 %v83
  %v800 = vunpack.c.l.b16 %v84
  %v801 = vunpack.c.h.b16 %v84
  %v802 = vunpack.c.l.b16 %v85
  %v803 = vunpack.c.h.b16 %v85
  %v804 = vunpack.c.l.b16 %v86
  %v805 = vunpack.c.h.b16 %v86
  %v806 = vunpack.c.l.b16 %v87
  %v807 = vunpack.c.h.b16 %v87
  %v808 = vunpack.c.l.b16 %v88
  %v809 = vunpack.c.h.b16 %v88
  %v810 = vunpack.c.l.b16 %v89
  %v811 = vunpack.c.h.b16 %v89
  %v812 = vunpack.c.l.b16 %v90
  %v813 = vunpack.c.h.b16 %v90
  %v814 = vunpack.c.l.b16 %v91
  %v815 = vunpack.c.h.b16 %v91
  %v816 = vunpack.c.l.b16 %v92
  %v817 = vunpack.c.h.b16 %v92
  %v818 = vunpack.c.l.b16 %v93
  %v819 = vunpack.c.h.b16 %v93
  %v820 = vunpack.c.l.b16 %v94
  %v821 = vunpack.c.h.b16 %v94
  %v822 = vunpack.c.l.b16 %v95
  %v823 = vunpack.c.h.b16 %v95
  %v824 = vunpack.c.l.b16 %v96
  %v825 = vunpack.c.h.b16 %v96
  %v826 = vunpack.c.l.b16 %v97
  %v827 = vunpack.c.h.b16 %v97
  %v828 = vunpack.c.l.b16 %v98
  %v829 = vunpack.c.h.b16 %v98
  %v830 = vunpack.c.l.b16 %v99
  %v831 = vunpack.c.h.b16 %v99
  %v832 = vunpack.c.l.b16 %v100
  %v833 = vunpack.c.h.b16 %v100
  %v834 = vunpack.c.l.b16 %v101
  %v835 = vunpack.c.h.b16 %v101
  %v836 = vunpack.c.l.b16 %v102
  %v837 = vunpack.c.h.b16 %v102
  %v838 = vunpack.c.l.b16 %v103
  %v839 = vunpack.c.h.b16 %v103
  %v840 = vunpack.c.l.b16 %v104
  %v841 = vunpack.c.h.b16 %v104
  %v842 = vunpack.c.l.b16 %v105
  %v843 = vunpack.c.h.b16 %v105
  %v844 = vunpack.c.l.b16 %v106
  %v845 = vunpack.c.h.b16 %v106
  %v846 = vunpack.c.l.b16 %v107
  %v847 = vunpack.c.h.b16 %v107
  %v848 = vunpack.c.l.b16 %v108
  %v849 = vunpack.c.h.b16 %v108
  %v850 = vunpack.c.l.b16 %v109
  %v851 = vunpack.c.h.b16 %v109
  %v852 = vunpack.c.l.b16 %v110
  %v853 = vunpack.c.h.b16 %v110
  %v854 = vunpack.c.l.b16 %v111
  %v855 = vunpack.c.h.b16 %v111
  %v856 = vunpack.c.l.b16 %v112
  %v857 = vunpack.c.h.b16 %v112
  %v858 = vunpack.c.l.b16 %v113
  %v859 = vunpack.c.h.b16 %v113
  %v860 = vunpack.c.l.b16 %v114
  %v861 = vunpack.c.h.b16 %v114
  %v862 = vunpack.c.l.b16 %v115
  %v863 = vunpack.c.h.b16 %v115
  %v864 = vunpack.c.l.b16 %v116
  %v865 = vunpack.c.h.b16 %v116
  %v866 = vunpack.c.l.b16 %v117
  %v867 = vunpack.c.h.b16 %v117
  %v868 = vunpack.c.l.b16 %v118
  %v869 = vunpack.c.h.b16 %v118
  %v870 = vunpack.c.l.b16 %v119
  %v871 = vunpack.c.h.b16 %v119
  %v872 = vunpack.c.l.b16 %v120
  %v873 = vunpack.c.h.b16 %v120
  %v874 = vunpack.c.l.b16 %v121
  %v875 = vunpack.c.h.b16 %v121
  %v876 = vunpack.c.l.b16 %v122
  %v877 = vunpack.c.h.b16 %v122
  %v878 = vunpack.c.l.b16 %v123
  %v879 = vunpack.c.h.b16 %v123
  %v880 = vunpack.c.l.b16 %v124
  %v881 = vunpack.c.h.b16 %v124
  %v882 = vunpack.c.l.b16 %v125
  %v883 = vunpack.c.h.b16 %v125
  %v884 = vunpack.c.l.b16 %v126
  %v885 = vunpack.c.h.b16 %v126
  %v886 = vunpack.c.l.b16 %v127
  %v887 = vunpack.c.h.b16 %v127
  %v888 = vunpack.c.l.b16 %v128
  %v889 = vunpack.c.h.b16 %v128
  %v890 = vunpack.c.l.b16 %v129
  %v891 = vunpack.c.h.b16 %v129
  %v892 = vunpack.c.l.b16 %v130
  %v893 = vunpack.c.h.b16 %v130
  %v894 = vunpack.c.l.b16 %v131
  %v895 = vunpack.c.h.b16 %v131
  %v896 = vunpack.c.l.b16 %v132
  %v897 = vunpack.c.h.b16 %v132
  %v898 = vunpack.c.l.b16 %v133
  %v899 = vunpack.c.h.b16 %v133
  %v900 = vunpack.c.l.b16 %v134
  %v901 = vunpack.c.h.b16 %v134
  %v902 = vunpack.c.l.b16 %v135
  %v903 = vunpack.c.h.b16 %v135
  %v904 = vunpack.c.l.b16 %v136
  %v905 = vunpack.c.h.b16 %v136
  %v906 = vunpack.c.l.b16 %v137
  %v907 = vunpack.c.h.b16 %v137
  %v908 = vunpack.c.l.b16 %v138
  %v909 = vunpack.c.h.b16 %v138
  %v910 = vunpack.c.l.b16 %v139
  %v911 = vunpack.c.h.b16 %v139
  %v912 = vunpack.c.l.b16 %v140
  %v913 = vunpack.c.h.b16 %v140
  %v914 = vunpack.c.l.b16 %v141
  %v915 = vunpack.c.h.b16 %v141
  %v916 = vunpack.c.l.b16 %v142
  %v917 = vunpack.c.h.b16 %v142
  %v918 = vunpack.c.l.b16 %v143
  %v919 = vunpack.c.h.b16 %v143
  %v920 = vunpack.c.l.b16 %v144
  %v921 = vunpack.c.h.b16 %v144
  %v922 = vunpack.c.l.b16 %v145
  %v923 = vunpack.c.h.b16 %v145
  %v924 = vunpack.c.l.b16 %v146
  %v925 = vunpack.c.h.b16 %v146
  %v926 = vunpack.c.l.b16 %v147
  %v927 = vunpack.c.h.b16 %v147
  %v928 = vunpack.c.l.b16 %v148
  %v929 = vunpack.c.h.b16 %v148
  %v930 = vunpack.c.l.b16 %v149
  %v931 = vunpack.c.h.b16 %v149
  %v932 = vunpack.c.l.b16 %v150
  %v933 = vunpack.c.h.b16 %v150
  %v934 = vunpack.c.l.b16 %v151
  %v935 = vunpack.c.h.b16 %v151
  %v936 = vunpack.c.l.b16 %v152
  %v937 = vunpack.c.h.b16 %v152
  %v938 = vunpack.c.l.b16 %v153
  %v939 = vunpack.c.h.b16 %v153
  %v940 = vunpack.c.l.b16 %v154
  %v941 = vunpack.c.h.b16 %v154
  %v942 = vunpack.c.l.b16 %v155
  %v943 = vunpack.c.h.b16 %v155
  %v944 = vunpack.c.l.b16 %v156
  %v945 = vunpack.c.h.b16 %v156
  %v946 = vunpack.c.l.b16 %v157
  %v947 = vunpack.c.h.b16 %v157
  %v948 = vunpack.c.l.b16 %v158
  %v949 = vunpack.c.h.b16 %v158
  %v950 = vunpack.c.l.b16 %v159
  %v951 = vunpack.c.h.b16 %v159
  %v952 = vunpack.c.l.b16 %v160
  %v953 = vunpack.c.h.b16 %v160
  %v954 = vunpack.c.l.b16 %v161
  %v955 = vunpack.c.h.b16 %v161
  %v956 = vunpack.c.l.b16 %v162
  %v957 = vunpack.c.h.b16 %v162
  %v958 = vunpack.c.l.b16 %v163
  %v959 = vunpack.c.h.b16 %v163
  %v960 = vunpack.c.l.b16 %v164
  %v961 = vunpack.c.h.b16 %v164
  %v962 = vunpack.c.l.b16 %v165
  %v963 = vunpack.c.h.b16 %v165
  %v964 = vunpack.c.l.b16 %v166
  %v965 = vunpack.c.h.b16 %v166
  %v966 = vunpack.c.l.b16 %v167
  %v967 = vunpack.c.h.b16 %v167
  %v968 = vunpack.c.l.b16 %v168
  %v969 = vunpack.c.h.b16 %v168
  %v970 = vunpack.c.l.b16 %v169
  %v971 = vunpack.c.h.b16 %v169
  %v972 = vunpack.c.l.b16 %v170
  %v973 = vunpack.c.h.b16 %v170
  %v974 = vunpack.c.l.b16 %v171
  %v975 = vunpack.c.h.b16 %v171
  %v976 = vunpack.c.l.b16 %v172
  %v977 = vunpack.c.h.b16 %v172
  %v978 = vunpack.c.l.b16 %v173
  %v979 = vunpack.c.h.b16 %v173
  %v980 = vunpack.c.l.b16 %v174
  %v981 = vunpack.c.h.b16 %v174
  %v982 = vunpack.c.l.b16 %v175
  %v983 = vunpack.c.h.b16 %v175
  %v984 = vunpack.c.l.b16 %v176
  %v985 = vunpack.c.h.b16 %v176
  %v986 = vunpack.c.l.b16 %v177
  %v987 = vunpack.c.h.b16 %v177
  %v988 = vunpack.c.l.b16 %v178
  %v989 = vunpack.c.h.b16 %v178
  %v990 = vunpack.c.l.b16 %v179
  %v991 = vunpack.c.h.b16 %v179
  %v992 = vunpack.c.l.b16 %v180
  %v993 = vunpack.c.h.b16 %v180
  %v994 = vunpack.c.l.b16 %v181
  %v995 = vunpack.c.h.b16 %v181
  %v996 = vunpack.c.l.b16 %v182
  %v997 = vunpack.c.h.b16 %v182
  %v998 = vunpack.c.l.b16 %v183
  %v999 = vunpack.c.h.b16 %v183
  %v1000 = vunpack.c.l.b16 %v184
  %v1001 = vunpack.c.h.b16 %v184
  %v1002 = vunpack.c.l.b16 %v185
  %v1003 = vunpack.c.h.b16 %v185
  %v1004 = vunpack.c.l.b16 %v186
  %v1005 = vunpack.c.h.b16 %v186
  %v1006 = vunpack.c.l.b16 %v187
  %v1007 = vunpack.c.h.b16 %v187
  %v1008 = vunpack.c.l.b16 %v188
  %v1009 = vunpack.c.h.b16 %v188
  %v1010 = vunpack.c.l.b16 %v189
  %v1011 = vunpack.c.h.b16 %v189
  %v1012 = vunpack.c.l.b16 %v190
  %v1013 = vunpack.c.h.b16 %v190
  %v1014 = vunpack.c.l.b16 %v191
  %v1015 = vunpack.c.h.b16 %v191
  %v1016 = vunpack.c.l.b16 %v192
  %v1017 = vunpack.c.h.b16 %v192
  %v1018 = vunpack.c.l.b16 %v193
  %v1019 = vunpack.c.h.b16 %v193
  %v1020 = vunpack.c.l.b16 %v194
  %v1021 = vunpack.c.h.b16 %v194
  %v1022 = vunpack.c.l.b16 %v195
  %v1023 = vunpack.c.h.b16 %v195
  %v1024 = vunpack.c.l.b16 %v196
  %v1025 = vunpack.c.h.b16 %v196
  %v1026 = vunpack.c.l.b16 %v197
  %v1027 = vunpack.c.h.b16 %v197
  %v1028 = vunpack.c.l.b16 %v198
  %v1029 = vunpack.c.h.b16 %v198
  %v1030 = vunpack.c.l.b16 %v199
  %v1031 = vunpack.c.h.b16 %v199
  %v1032 = vunpack.c.l.b16 %v200
  %v1033 = vunpack.c.h.b16 %v200
  %v1034 = vunpack.c.l.b16 %v201
  %v1035 = vunpack.c.h.b16 %v201
  %v1036 = vunpack.c.l.b16 %v202
  %v1037 = vunpack.c.h.b16 %v202
  %v1038 = vunpack.c.l.b16 %v203
  %v1039 = vunpack.c.h.b16 %v203
  %v1040 = vunpack.c.l.b16 %v204
  %v1041 = vunpack.c.h.b16 %v204
  %v1042 = vunpack.c.l.b16 %v205
  %v1043 = vunpack.c.h.b16 %v205
  %v1044 = vunpack.c.l.b16 %v206
  %v1045 = vunpack.c.h.b16 %v206
  %v1046 = vunpack.c.l.b16 %v207
  %v1047 = vunpack.c.h.b16 %v207
  %v1048 = vunpack.c.l.b16 %v208
  %v1049 = vunpack.c.h.b16 %v208
  %v1050 = vunpack.c.l.b16 %v209
  %v1051 = vunpack.c.h.b16 %v209
  %v1052 = vunpack.c.l.b16 %v210
  %v1053 = vunpack.c.h.b16 %v210
  %v1054 = vunpack.c.l.b16 %v211
  %v1055 = vunpack.c.h.b16 %v211
  %v1056 = vunpack.c.l.b16 %v212
  %v1057 = vunpack.c.h.b16 %v212
  %v1058 = vunpack.c.l.b16 %v213
  %v1059 = vunpack.c.h.b16 %v213
  %v1060 = vunpack.c.l.b16 %v214
  %v1061 = vunpack.c.h.b16 %v214
  %v1062 = vunpack.c.l.b16 %v215
  %v1063 = vunpack.c.h.b16 %v215
  %v1064 = vunpack.c.l.b16 %v216
  %v1065 = vunpack.c.h.b16 %v216
  %v1066 = vunpack.c.l.b16 %v217
  %v1067 = vunpack.c.h.b16 %v217
  %v1068 = vunpack.c.l.b16 %v218
  %v1069 = vunpack.c.h.b16 %v218
  %v1070 = vunpack.c.l.b16 %v219
  %v1071 = vunpack.c.h.b16 %v219
  %v1072 = vunpack.c.l.b16 %v220
  %v1073 = vunpack.c.h.b16 %v220
  %v1074 = vunpack.c.l.b16 %v221
  %v1075 = vunpack.c.h.b16 %v221
  %v1076 = vunpack.c.l.b16 %v222
  %v1077 = vunpack.c.h.b16 %v222
  %v1078 = vunpack.c.l.b16 %v223
  %v1079 = vunpack.c.h.b16 %v223
  %v1080 = vunpack.c.l.b16 %v224
  %v1081 = vunpack.c.h.b16 %v224
  %v1082 = vunpack.c.l.b16 %v225
  %v1083 = vunpack.c.h.b16 %v225
  %v1084 = vunpack.c.l.b16 %v226
  %v1085 = vunpack.c.h.b16 %v226
  %v1086 = vunpack.c.l.b16 %v227
  %v1087 = vunpack.c.h.b16 %v227
  %v1088 = vunpack.c.l.b16 %v228
  %v1089 = vunpack.c.h.b16 %v228
  %v1090 = vunpack.c.l.b16 %v229
  %v1091 = vunpack.c.h.b16 %v229
  %v1092 = vunpack.c.l.b16 %v230
  %v1093 = vunpack.c.h.b16 %v230
  %v1094 = vunpack.c.l.b16 %v231
  %v1095 = vunpack.c.h.b16 %v231
  %v1096 = vunpack.c.l.b16 %v232
  %v1097 = vunpack.c.h.b16 %v232
  %v1098 = vunpack.c.l.b16 %v233
  %v1099 = vunpack.c.h.b16 %v233
  %v1100 = vunpack.c.l.b16 %v234
  %v1101 = vunpack.c.h.b16 %v234
  %v1102 = vunpack.c.l.b16 %v235
  %v1103 = vunpack.c.h.b16 %v235
  %v1104 = vunpack.c.l.b16 %v236
  %v1105 = vunpack.c.h.b16 %v236
  %v1106 = vunpack.c.l.b16 %v237
  %v1107 = vunpack.c.h.b16 %v237
  %v1108 = vunpack.c.l.b16 %v238
  %v1109 = vunpack.c.h.b16 %v238
  %v1110 = vunpack.c.l.b16 %v239
  %v1111 = vunpack.c.h.b16 %v239
  %v1112 = vunpack.c.l.b16 %v240
  %v1113 = vunpack.c.h.b16 %v240
  %v1114 = vunpack.c.l.b16 %v241
  %v1115 = vunpack.c.h.b16 %v241
  %v1116 = vunpack.c.l.b16 %v242
  %v1117 = vunpack.c.h.b16 %v242
  %v1118 = vunpack.c.l.b16 %v243
  %v1119 = vunpack.c.h.b16 %v243
  %v1120 = vunpack.c.l.b16 %v244
  %v1121 = vunpack.c.h.b16 %v244
  %v1122 = vunpack.c.l.b16 %v245
  %v1123 = vunpack.c.h.b16 %v245
  %v1124 = vunpack.c.l.b16 %v246
  %v1125 = vunpack.c.h.b16 %v246
  %v1126 = vunpack.c.l.b16 %v247
  %v1127 = vunpack.c.h.b16 %v247
  %v1128 = vunpack.c.l.b16 %v248
  %v1129 = vunpack.c.h.b16 %v248
  %v1130 = vunpack.c.l.b16 %v249
  %v1131 = vunpack.c.h.b16 %v249
  %v1132 = vunpack.c.l.b16 %v250
  %v1133 = vunpack.c.h.b16 %v250
  %v1134 = vunpack.c.l.b16 %v251
  %v1135 = vunpack.c.h.b16 %v251
  %v1136 = vunpack.c.l.b16 %v252
  %v1137 = vunpack.c.h.b16 %v252
  %v1138 = vunpack.c.l.b16 %v253
  %v1139 = vunpack.c.h.b16 %v253
  %v1140 = vunpack.c.l.b16 %v254
  %v1141 = vunpack.c.h.b16 %v254
  %v1142 = vunpack.c.l.b16 %v255
  %v1143 = vunpack.c.h.b16 %v255
  %v1144 = vunpack.c.l.b16 %v256
  %v1145 = vunpack.c.h.b16 %v256
  %v1146 = vunpack.c.l.b16 %v257
  %v1147 = vunpack.c.h.b16 %v257
  %v1148 = vunpack.c.l.b16 %v258
  %v1149 = vunpack.c.h.b16 %v258
  %v1150 = vunpack.c.l.b16 %v259
  %v1151 = vunpack.c.h.b16 %v259
  %v1152 = vunpack.c.l.b16 %v260
  %v1153 = vunpack.c.h.b16 %v260
  %v1154 = vunpack.c.l.b16 %v261
  %v1155 = vunpack.c.h.b16 %v261
  %v1156 = vunpack.c.l.b16 %v262
  %v1157 = vunpack.c.h.b16 %v262
  %v1158 = vunpack.c.l.b16 %v263
  %v1159 = vunpack.c.h.b16 %v263
  %v1160 = vunpack.c.l.b16 %v264
  %v1161 = vunpack.c.h.b16 %v264
  %v1162 = vunpack.c.l.b16 %v265
  %v1163 = vunpack.c.h.b16 %v265
  %v1164 = vunpack.c.l.b16 %v266
  %v1165 = vunpack.c.h.b16 %v266
  %v1166 = vunpack.c.l.b16 %v267
  %v1167 = vunpack.c.h.b16 %v267
  %v1168 = vunpack.c.l.b16 %v268
  %v1169 = vunpack.c.h.b16 %v268
  %v1170 = vunpack.c.l.b16 %v269
  %v1171 = vunpack.c.h.b16 %v269
  %v1172 = vunpack.c.l.b16 %v270
  %v1173 = vunpack.c.h.b16 %v270
  %v1174 = vunpack.c.l.b16 %v271
  %v1175 = vunpack.c.h.b16 %v271
  %v1176 = vunpack.c.l.b16 %v272
  %v1177 = vunpack.c.h.b16 %v272
  %v1178 = vunpack.c.l.b16 %v273
  %v1179 = vunpack.c.h.b16 %v273
  %v1180 = vunpack.c.l.b16 %v274
  %v1181 = vunpack.c.h.b16 %v274
  %v1182 = vunpack.c.l.b16 %v275
  %v1183 = vunpack.c.h.b16 %v275
  %v1184 = vunpack.c.l.b16 %v276
  %v1185 = vunpack.c.h.b16 %v276
  %v1186 = vunpack.c.l.b16 %v277
  %v1187 = vunpack.c.h.b16 %v277
  %v1188 = vunpack.c.l.b16 %v278
  %v1189 = vunpack.c.h.b16 %v278
  %v1190 = vunpack.c.l.b16 %v279
  %v1191 = vunpack.c.h.b16 %v279
  %v1192 = vunpack.c.l.b16 %v280
  %v1193 = vunpack.c.h.b16 %v280
  %v1194 = vunpack.c.l.b16 %v281
  %v1195 = vunpack.c.h.b16 %v281
  %v1196 = vunpack.c.l.b16 %v282
  %v1197 = vunpack.c.h.b16 %v282
  %v1198 = vunpack.c.l.b16 %v283
  %v1199 = vunpack.c.h.b16 %v283
  %v1200 = vunpack.c.l.b16 %v284
  %v1201 = vunpack.c.h.b16 %v284
  %v1202 = vunpack.c.l.b16 %v285
  %v1203 = vunpack.c.h.b16 %v285
  %v1204 = vunpack.c.l.b16 %v286
  %v1205 = vunpack.c.h.b16 %v286
  %v1206 = vunpack.c.l.b16 %v287
  %v1207 = vunpack.c.h.b16 %v287
  %v1208 = vunpack.c.l.b16 %v288
  %v1209 = vunpack.c.h.b16 %v288
  %v1210 = vunpack.c.l.b16 %v289
  %v1211 = vunpack.c.h.b16 %v289
  %v1212 = vunpack.c.l.b16 %v290
  %v1213 = vunpack.c.h.b16 %v290
  %v1214 = vunpack.c.l.b16 %v291
  %v1215 = vunpack.c.h.b16 %v291
  %v1216 = vunpack.c.l.b16 %v292
  %v1217 = vunpack.c.h.b16 %v292
  %v1218 = vunpack.c.l.b16 %v293
  %v1219 = vunpack.c.h.b16 %v293
  %v1220 = vunpack.c.l.b16 %v294
  %v1221 = vunpack.c.h.b16 %v294
  %v1222 = vunpack.c.l.b16 %v295
  %v1223 = vunpack.c.h.b16 %v295
  %v1224 = vunpack.c.l.b16 %v296
  %v1225 = vunpack.c.h.b16 %v296
  %v1226 = vunpack.c.l.b16 %v297
  %v1227 = vunpack.c.h.b16 %v297
  %v1228 = vunpack.c.l.b16 %v298
  %v1229 = vunpack.c.h.b16 %v298
  %v1230 = vunpack.c.l.b16 %v299
  %v1231 = vunpack.c.h.b16 %v299
  %v1232 = vunpack.c.l.b16 %v300
  %v1233 = vunpack.c.h.b16 %v300
  %v1234 = vunpack.c.l.b16 %v301
  %v1235 = vunpack.c.h.b16 %v301
  %v1236 = vunpack.c.l.b16 %v302
  %v1237 = vunpack.c.h.b16 %v302
  %v1238 = vunpack.c.l.b16 %v303
  %v1239 = vunpack.c.h.b16 %v303
  %v1240 = vunpack.c.l.b16 %v304
  %v1241 = vunpack.c.h.b16 %v304
  %v1242 = vunpack.c.l.b16 %v305
  %v1243 = vunpack.c.h.b16 %v305
  %v1244 = vunpack.c.l.b16 %v306
  %v1245 = vunpack.c.h.b16 %v306
  %v1246 = vunpack.c.l.b16 %v307
  %v1247 = vunpack.c.h.b16 %v307
  %v1248 = vpack.c.b16 %v738, %v736
  %v1249 = vpack.c.b16 %v739, %v737
  %v1250 = vpack.c.b16 %v742, %v740
  %v1251 = vpack.c.b16 %v743, %v741
  %v1252 = vpack.c.b16 %v746, %v744
  %v1253 = vpack.c.b16 %v747, %v745
  %v1254 = vpack.c.b16 %v750, %v748
  %v1255 = vpack.c.b16 %v751, %v749
  %v1256 = vpack.c.b16 %v754, %v752
  %v1257 = vpack.c.b16 %v755, %v753
  %v1258 = vpack.c.b16 %v758, %v756
  %v1259 = vpack.c.b16 %v759, %v757
  %v1260 = vpack.c.b16 %v762, %v760
  %v1261 = vpack.c.b16 %v763, %v761
  %v1262 = vpack.c.b16 %v766, %v764
  %v1263 = vpack.c.b16 %v767, %v765
  %v1264 = vpack.c.b16 %v770, %v768
  %v1265 = vpack.c.b16 %v771, %v769
  %v1266 = vpack.c.b16 %v774, %v772
  %v1267 = vpack.c.b16 %v775, %v773
  %v1268 = vpack.c.b16 %v778, %v776
  %v1269 = vpack.c.b16 %v779, %v777
  %v1270 = vpack.c.b16 %v782, %v780
  %v1271 = vpack.c.b16 %v783, %v781
  %v1272 = vpack.c.b16 %v786, %v784
  %v1273 = vpack.c.b16 %v787, %v785
  %v1274 = vpack.c.b16 %v790, %v788
  %v1275 = vpack.c.b16 %v791, %v789
  %v1276 = vpack.c.b16 %v794, %v792
  %v1277 = vpack.c.b16 %v795, %v793
  %v1278 = vpack.c.b16 %v798, %v796
  %v1279 = vpack.c.b16 %v799, %v797
  %v1280 = vpack.c.b16 %v802, %v800
  %v1281 = vpack.c.b16 %v803, %v801
  %v1282 = vpack.c.b16 %v806, %v804
  %v1283 = vpack.c.b16 %v807, %v805
  %v1284 = vpack.c.b16 %v810, %v808
  %v1285 = vpack.c.b16 %v811, %v809
  %v1286 = vpack.c.b16 %v814, %v812
  %v1287 = vpack.c.b16 %v815, %v813
  %v1288 = vpack.c.b16 %v818, %v816
  %v1289 = vpack.c.b16 %v819, %v817
  %v1290 = vpack.c.b16 %v822, %v820
  %v1291 = vpack.c.b16 %v823, %v821
  %v1292 = vpack.c.b16 %v826, %v824
  %v1293 = vpack.c.b16 %v827, %v825
  %v1294 = vpack.c.b16 %v830, %v828
  %v1295 = vpack.c.b16 %v831, %v829
  %v1296 = vpack.c.b16 %v834, %v832
  %v1297 = vpack.c.b16 %v835, %v833
  %v1298 = vpack.c.b16 %v838, %v836
  %v1299 = vpack.c.b16 %v839, %v837
  %v1300 = vpack.c.b16 %v842, %v840
  %v1301 = vpack.c.b16 %v843, %v841
  %v1302 = vpack.c.b16 %v846, %v844
  %v1303 = vpack.c.b16 %v847, %v845
  %v1304 = vpack.c.b16 %v850, %v848
  %v1305 = vpack.c.b16 %v851, %v849
  %v1306 = vpack.c.b16 %v854, %v852
  %v1307 = vpack.c.b16 %v855, %v853
  %v1308 = vpack.c.b16 %v858, %v856
  %v1309 = vpack.c.b16 %v859, %v857
  %v1310 = vpack.c.b16 %v862, %v860
  %v1311 = vpack.c.b16 %v863, %v861
  %v1312 = vpack.c.b16 %v866, %v864
  %v1313 = vpack.c.b16 %v867, %v865
  %v1314 = vpack.c.b16 %v870, %v868
  %v1315 = vpack.c.b16 %v871, %v869
  %v1316 = vpack.c.b16 %v874, %v872
  %v1317 = vpack.c.b16 %v875, %v873
  %v1318 = vpack.c.b16 %v878, %v876
  %v1319 = vpack.c.b16 %v879, %v877
  %v1320 = vpack.c.b16 %v882, %v880
  %v1321 = vpack.c.b16 %v883, %v881
  %v1322 = vpack.c.b16 %v886, %v884
  %v1323 = vpack.c.b16 %v887, %v885
  %v1324 = vpack.c.b16 %v890, %v888
  %v1325 = vpack.c.b16 %v891, %v889
  %v1326 = vpack.c.b16 %v894, %v892
  %v1327 = vpack.c.b16 %v895, %v893
  %v1328 = vpack.c.b16 %v898, %v896
  %v1329 = vpack.c.b16 %v899, %v897
  %v1330 = vpack.c.b16 %v902, %v900
  %v1331 = vpack.c.b16 %v903, %v901
  %v1332 = vpack.c.b16 %v906, %v904
  %v1333 = vpack.c.b16 %v907, %v905
  %v1334 = vpack.c.b16 %v910, %v908
  %v1335 = vpack.c.b16 %v911, %v909
  %v1336 = vpack.c.b16 %v914, %v912
  %v1337 = vpack.c.b16 %v915, %v913
  %v1338 = vpack.c.b16 %v918, %v916
  %v1339 = vpack.c.b16 %v919, %v917
  %v1340 = vpack.c.b16 %v922, %v920
  %v1341 = vpack.c.b16 %v923, %v921
  %v1342 = vpack.c.b16 %v926, %v924
  %v1343 = vpack.c.b16 %v927, %v925
  %v1344 = vpack.c.b16 %v930, %v928
  %v1345 = vpack.c.b16 %v931, %v929
  %v1346 = vpack.c.b16 %v934, %v932
  %v1347 = vpack.c.b16 %v935, %v933
  %v1348 = vpack.c.b16 %v938, %v936
  %v1349 = vpack.c.b16 %v939, %v937
  %v1350 = vpack.c.b16 %v942, %v940
  %v1351 = vpack.c.b16 %v943, %v941
  %v1352 = vpack.c.b16 %v946, %v944
  %v1353 = vpack.c.b16 %v947, %v945
  %v1354 = vpack.c.b16 %v950, %v948
  %v1355 = vpack.c.b16 %v951, %v949
  %v1356 = vpack.c.b16 %v954, %v952
  %v1357 = vpack.c.b16 %v955, %v953
  %v1358 = vpack.c.b16 %v958, %v956
  %v1359 = vpack.c.b16 %v959, %v957
  %v1360 = vpack.c.b16 %v962, %v960
  %v1361 = vpack.c.b16 %v963, %v961
  %v1362 = vpack.c.b16 %v966, %v964
  %v1363 = vpack.c.b16 %v967, %v965
  %v1364 = vpack.c.b16 %v970, %v968
  %v1365 = vpack.c.b16 %v971, %v969
  %v1366 = vpack.c.b16 %v974, %v972
  %v1367 = vpack.c.b16 %v975, %v973
  %v1368 = vpack.c.b16 %v978, %v976
  %v1369 = vpack.c.b16 %v979, %v977
  %v1370 = vpack.c.b16 %v982, %v980
  %v1371 = vpack.c.b16 %v983, %v981
  %v1372 = vpack.c.b16 %v986, %v984
  %v1373 = vpack.c.b16 %v987, %v985
  %v1374 = vpack.c.b16 %v990, %v988
  %v1375 = vpack.c.b16 %v991, %v989
  %v1376 = vpack.c.b16 %v994, %v992
  %v1377 = vpack.c.b16 %v995, %v993
  %v1378 = vpack.c.b16 %v998, %v996
  %v1379 = vpack.c.b16 %v999, %v997
  %v1380 = vpack.c.b16 %v1002, %v1000
  %v1381 = vpack.c.b16 %v1003, %v1001
  %v1382 = vpack.c.b16 %v1006, %v1004
  %v1383 = vpack.c.b16 %v1007, %v1005
  %v1384 = vpack.c.b16 %v1010, %v1008
  %v1385 = vpack.c.b16 %v1011, %v1009
  %v1386 = vpack.c.b16 %v1014, %v1012
  %v1387 = vpack.c.b16 %v1015, %v1013
  %v1388 = vpack.c.b16 %v1018, %v1016
  %v1389 = vpack.c.b16 %v1019, %v1017
  %v1390 = vpack.c.b16 %v1022, %v1020
  %v1391 = vpack.c.b16 %v1023, %v1021
  %v1392 = vpack.c.b16 %v1026, %v1024
  %v1393 = vpack.c.b16 %v1027, %v1025
  %v1394 = vpack.c.b16 %v1030, %v1028
  %v1395 = vpack.c.b16 %v1031, %v1029
  %v1396 = vpack.c.b16 %v1034, %v1032
  %v1397 = vpack.c.b16 %v1035, %v1033
  %v1398 = vpack.c.b16 %v1038, %v1036
  %v1399 = vpack.c.b16 %v1039, %v1037
  %v1400 = vpack.c.b16 %v1042, %v1040
  %v1401 = vpack.c.b16 %v1043, %v1041
  %v1402 = vpack.c.b16 %v1046, %v1044
  %v1403 = vpack.c.b16 %v1047, %v1045
  %v1404 = vpack.c.b16 %v1050, %v1048
  %v1405 = vpack.c.b16 %v1051, %v1049
  %v1406 = vpack.c.b16 %v1054, %v1052
  %v1407 = vpack.c.b16 %v1055, %v1053
  %v1408 = vpack.c.b16 %v1058, %v1056
  %v1409 = vpack.c.b16 %v1059, %v1057
  %v1410 = vpack.c.b16 %v1062, %v1060
  %v1411 = vpack.c.b16 %v1063, %v1061
  %v1412 = vpack.c.b16 %v1066, %v1064
  %v1413 = vpack.c.b16 %v1067, %v1065
  %v1414 = vpack.c.b16 %v1070, %v1068
  %v1415 = vpack.c.b16 %v1071, %v1069
  %v1416 = vpack.c.b16 %v1074, %v1072
  %v1417 = vpack.c.b16 %v1075, %v1073
  %v1418 = vpack.c.b16 %v1078, %v1076
  %v1419 = vpack.c.b16 %v1079, %v1077
  %v1420 = vpack.c.b16 %v1082, %v1080
  %v1421 = vpack.c.b16 %v1083, %v1081
  %v1422 = vpack.c.b16 %v1086, %v1084
  %v1423 = vpack.c.b16 %v1087, %v1085
  %v1424 = vpack.c.b16 %v1090, %v1088
  %v1425 = vpack.c.b16 %v1091, %v1089
  %v1426 = vpack.c.b16 %v1094, %v1092
  %v1427 = vpack.c.b16 %v1095, %v1093
  %v1428 = vpack.c.b16 %v1098, %v1096
  %v1429 = vpack.c.b16 %v1099, %v1097
  %v1430 = vpack.c.b16 %v1102, %v1100
  %v1431 = vpack.c.b16 %v1103, %v1101
  %v1432 = vpack.c.b16 %v1106, %v1104
  %v1433 = vpack.c.b16 %v1107, %v1105
  %v1434 = vpack.c.b16 %v1110, %v1108
  %v1435 = vpack.c.b16 %v1111, %v1109
  %v1436 = vpack.c.b16 %v1114, %v1112
  %v1437 = vpack.c.b16 %v1115, %v1113
  %v1438 = vpack.c.b16 %v1118, %v1116
  %v1439 = vpack.c.b16 %v1119, %v1117
  %v1440 = vpack.c.b16 %v1122, %v1120
  %v1441 = vpack.c.b16 %v1123, %v1121
  %v1442 = vpack.c.b16 %v1126, %v1124
  %v1443 = vpack.c.b16 %v1127, %v1125
  %v1444 = vpack.c.b16 %v1130, %v1128
  %v1445 = vpack.c.b16 %v1131, %v1129
  %v1446 = vpack.c.b16 %v1134, %v1132
  %v1447 = vpack.c.b16 %v1135, %v1133
  %v1448 = vpack.c.b16 %v1138, %v1136
  %v1449 = vpack.c.b16 %v1139, %v1137
  %v1450 = vpack.c.b16 %v1142, %v1140
  %v1451 = vpack.c.b16 %v1143, %v1141
  %v1452 = vpack.c.b16 %v1146, %v1144
  %v1453 = vpack.c.b16 %v1147, %v1145
  %v1454 = vpack.c.b16 %v1150, %v1148
  %v1455 = vpack.c.b16 %v1151, %v1149
  %v1456 = vpack.c.b16 %v1154, %v1152
  %v1457 = vpack.c.b16 %v1155, %v1153
  %v1458 = vpack.c.b16 %v1158, %v1156
  %v1459 = vpack.c.b16 %v1159, %v1157
  %v1460 = vpack.c.b16 %v1162, %v1160
  %v1461 = vpack.c.b16 %v1163, %v1161
  %v1462 = vpack.c.b16 %v1166, %v1164
  %v1463 = vpack.c.b16 %v1167, %v1165
  %v1464 = vpack.c.b16 %v1170, %v1168
  %v1465 = vpack.c.b16 %v1171, %v1169
  %v1466 = vpack.c.b16 %v1174, %v1172
  %v1467 = vpack.c.b16 %v1175, %v1173
  %v1468 = vpack.c.b16 %v1178, %v1176
  %v1469 = vpack.c.b16 %v1179, %v1177
  %v1470 = vpack.c.b16 %v1182, %v1180
  %v1471 = vpack.c.b16 %v1183, %v1181
  %v1472 = vpack.c.b16 %v1186, %v1184
  %v1473 = vpack.c.b16 %v1187, %v1185
  %v1474 = vpack.c.b16 %v1190, %v1188
  %v1475 = vpack.c.b16 %v1191, %v1189
  %v1476 = vpack.c.b16 %v1194, %v1192
  %v1477 = vpack.c.b16 %v1195, %v1193
  %v1478 = vpack.c.b16 %v1198, %v1196
  %v1479 = vpack.c.b16 %v1199, %v1197
  %v1480 = vpack.c.b16 %v1202, %v1200
  %v1481 = vpack.c.b16 %v1203, %v1201
  %v1482 = vpack.c.b16 %v1206, %v1204
  %v1483 = vpack.c.b16 %v1207, %v1205
  %v1484 = vpack.c.b16 %v1210, %v1208
  %v1485 = vpack.c.b16 %v1211, %v1209
  %v1486 = vpack.c.b16 %v1214, %v1212
  %v1487 = vpack.c.b16 %v1215, %v1213
  %v1488 = vpack.c.b16 %v1218, %v1216
  %v1489 = vpack.c.b16 %v1219, %v1217
  %v1490 = vpack.c.b16 %v1222, %v1220
  %v1491 = vpack.c.b16 %v1223, %v1221
  %v1492 = vpack.c.b16 %v1226, %v1224
  %v1493 = vpack.c.b16 %v1227, %v1225
  %v1494 = vpack.c.b16 %v1230, %v1228
  %v1495 = vpack.c.b16 %v1231, %v1229
  %v1496 = vpack.c.b16 %v1234, %v1232
  %v1497 = vpack.c.b16 %v1235, %v1233
  %v1498 = vpack.c.b16 %v1238, %v1236
  %v1499 = vpack.c.b16 %v1239, %v1237
  %v1500 = vpack.c.b16 %v1242, %v1240
  %v1501 = vpack.c.b16 %v1243, %v1241
  %v1502 = vpack.c.b16 %v1246, %v1244
  %v1503 = vpack.c.b16 %v1247, %v1245
  %1760 = vmatprep.subr.bf16.mxu0 %v1263
  %1761 = vmatpush1.bf16.msra.mxu0 %v1262
  %1762 = vmatprep.subr.bf16.mxu0 %v1261
  %1763 = vmatpush1.bf16.msra.mxu0 %v1260
  %1764 = vmatprep.subr.bf16.mxu0 %v1259
  %1765 = vmatpush1.bf16.msra.mxu0 %v1258
  %1766 = vmatprep.subr.bf16.mxu0 %v1257
  %1767 = vmatpush1.bf16.msra.mxu0 %v1256
  %1768 = vmatprep.subr.bf16.mxu0 %v1255
  %1769 = vmatpush1.bf16.msra.mxu0 %v1254
  %1770 = vmatprep.subr.bf16.mxu0 %v1253
  %1771 = vmatpush1.bf16.msra.mxu0 %v1252
  %1772 = vmatprep.subr.bf16.mxu0 %v1251
  %1773 = vmatpush1.bf16.msra.mxu0 %v1250
  %1774 = vmatprep.subr.bf16.mxu0 %v1249
  %1775 = vmatpush1.bf16.msra.mxu0 %v1248
  %1776 = vmatprep.subr.bf16.mxu0 %v1279
  %1777 = vmatpush2.bf16.msra.mxu0 %v1278
  %1778 = vmatprep.subr.bf16.mxu0 %v1277
  %1779 = vmatpush2.bf16.msra.mxu0 %v1276
  %1780 = vmatprep.subr.bf16.mxu0 %v1275
  %1781 = vmatpush2.bf16.msra.mxu0 %v1274
  %1782 = vmatprep.subr.bf16.mxu0 %v1273
  %1783 = vmatpush2.bf16.msra.mxu0 %v1272
  %1784 = vmatprep.subr.bf16.mxu0 %v1271
  %1785 = vmatpush2.bf16.msra.mxu0 %v1270
  %1786 = vmatprep.subr.bf16.mxu0 %v1269
  %1787 = vmatpush2.bf16.msra.mxu0 %v1268
  %1788 = vmatprep.subr.bf16.mxu0 %v1267
  %1789 = vmatpush2.bf16.msra.mxu0 %v1266
  %1790 = vmatprep.subr.bf16.mxu0 %v1265
  %1791 = vmatpush2.bf16.msra.mxu0 %v1264
  %1792 = vmatprep.mubr.bf16.mxu0 %v417
  %1793 = vmatmul.mubr.bf16.gmra.mxu0 %v416
  %v1794 = vpop.f32.mrf.mxu0
  %v1795 = vadd.f32 %v313, %v1794
  %v1796 = vpop.f32.mrf.mxu0
  %v1797 = vadd.f32 %v317, %v1796
  %v1798 = vpop.f32.mrf.mxu0
  %v1799 = vadd.f32 %v313, %v1798
  %v1800 = vpop.f32.mrf.mxu0
  %v1801 = vadd.f32 %v317, %v1800
  %1802 = vmatprep.mubr.bf16.mxu0 %v433
  %1803 = vmatmul.mubr.bf16.gmra.mxu0 %v432
  %v1804 = vpop.f32.mrf.mxu0
  %v1805 = vadd.f32 %v313, %v1804
  %v1806 = vpop.f32.mrf.mxu0
  %v1807 = vadd.f32 %v317, %v1806
  %v1808 = vpop.f32.mrf.mxu0
  %v1809 = vadd.f32 %v313, %v1808
  %v1810 = vpop.f32.mrf.mxu0
  %v1811 = vadd.f32 %v317, %v1810
  %1812 = vdwg.mxu0
  %1813 = vmatprep.subr.bf16.mxu0 %v1295
  %1814 = vmatpush1.bf16.msra.mxu0 %v1294
  %1815 = vmatprep.subr.bf16.mxu0 %v1293
  %1816 = vmatpush1.bf16.msra.mxu0 %v1292
  %1817 = vmatprep.subr.bf16.mxu0 %v1291
  %1818 = vmatpush1.bf16.msra.mxu0 %v1290
  %1819 = vmatprep.subr.bf16.mxu0 %v1289
  %1820 = vmatpush1.bf16.msra.mxu0 %v1288
  %1821 = vmatprep.subr.bf16.mxu0 %v1287
  %1822 = vmatpush1.bf16.msra.mxu0 %v1286
  %1823 = vmatprep.subr.bf16.mxu0 %v1285
  %1824 = vmatpush1.bf16.msra.mxu0 %v1284
  %1825 = vmatprep.subr.bf16.mxu0 %v1283
  %1826 = vmatpush1.bf16.msra.mxu0 %v1282
  %1827 = vmatprep.subr.bf16.mxu0 %v1281
  %1828 = vmatpush1.bf16.msra.mxu0 %v1280
  %1829 = vmatprep.subr.bf16.mxu0 %v1311
  %1830 = vmatpush2.bf16.msra.mxu0 %v1310
  %1831 = vmatprep.subr.bf16.mxu0 %v1309
  %1832 = vmatpush2.bf16.msra.mxu0 %v1308
  %1833 = vmatprep.subr.bf16.mxu0 %v1307
  %1834 = vmatpush2.bf16.msra.mxu0 %v1306
  %1835 = vmatprep.subr.bf16.mxu0 %v1305
  %1836 = vmatpush2.bf16.msra.mxu0 %v1304
  %1837 = vmatprep.subr.bf16.mxu0 %v1303
  %1838 = vmatpush2.bf16.msra.mxu0 %v1302
  %1839 = vmatprep.subr.bf16.mxu0 %v1301
  %1840 = vmatpush2.bf16.msra.mxu0 %v1300
  %1841 = vmatprep.subr.bf16.mxu0 %v1299
  %1842 = vmatpush2.bf16.msra.mxu0 %v1298
  %1843 = vmatprep.subr.bf16.mxu0 %v1297
  %1844 = vmatpush2.bf16.msra.mxu0 %v1296
  %1845 = vmatprep.mubr.bf16.mxu0 %v419
  %1846 = vmatmul.mubr.bf16.gmra.mxu0 %v418
  %v1847 = vpop.f32.mrf.mxu0
  %v1848 = vadd.f32 %v1795, %v1847
  %v1849 = vpop.f32.mrf.mxu0
  %v1850 = vadd.f32 %v1797, %v1849
  %v1851 = vpop.f32.mrf.mxu0
  %v1852 = vadd.f32 %v1799, %v1851
  %v1853 = vpop.f32.mrf.mxu0
  %v1854 = vadd.f32 %v1801, %v1853
  %1855 = vmatprep.mubr.bf16.mxu0 %v435
  %1856 = vmatmul.mubr.bf16.gmra.mxu0 %v434
  %v1857 = vpop.f32.mrf.mxu0
  %v1858 = vadd.f32 %v1805, %v1857
  %v1859 = vpop.f32.mrf.mxu0
  %v1860 = vadd.f32 %v1807, %v1859
  %v1861 = vpop.f32.mrf.mxu0
  %v1862 = vadd.f32 %v1809, %v1861
  %v1863 = vpop.f32.mrf.mxu0
  %v1864 = vadd.f32 %v1811, %v1863
  %1865 = vdwg.mxu0
  %1866 = vmatprep.subr.bf16.mxu0 %v1327
  %1867 = vmatpush1.bf16.msra.mxu0 %v1326
  %1868 = vmatprep.subr.bf16.mxu0 %v1325
  %1869 = vmatpush1.bf16.msra.mxu0 %v1324
  %1870 = vmatprep.subr.bf16.mxu0 %v1323
  %1871 = vmatpush1.bf16.msra.mxu0 %v1322
  %1872 = vmatprep.subr.bf16.mxu0 %v1321
  %1873 = vmatpush1.bf16.msra.mxu0 %v1320
  %1874 = vmatprep.subr.bf16.mxu0 %v1319
  %1875 = vmatpush1.bf16.msra.mxu0 %v1318
  %1876 = vmatprep.subr.bf16.mxu0 %v1317
  %1877 = vmatpush1.bf16.msra.mxu0 %v1316
  %1878 = vmatprep.subr.bf16.mxu0 %v1315
  %1879 = vmatpush1.bf16.msra.mxu0 %v1314
  %1880 = vmatprep.subr.bf16.mxu0 %v1313
  %1881 = vmatpush1.bf16.msra.mxu0 %v1312
  %1882 = vmatprep.subr.bf16.mxu0 %v1343
  %1883 = vmatpush2.bf16.msra.mxu0 %v1342
  %1884 = vmatprep.subr.bf16.mxu0 %v1341
  %1885 = vmatpush2.bf16.msra.mxu0 %v1340
  %1886 = vmatprep.subr.bf16.mxu0 %v1339
  %1887 = vmatpush2.bf16.msra.mxu0 %v1338
  %1888 = vmatprep.subr.bf16.mxu0 %v1337
  %1889 = vmatpush2.bf16.msra.mxu0 %v1336
  %1890 = vmatprep.subr.bf16.mxu0 %v1335
  %1891 = vmatpush2.bf16.msra.mxu0 %v1334
  %1892 = vmatprep.subr.bf16.mxu0 %v1333
  %1893 = vmatpush2.bf16.msra.mxu0 %v1332
  %1894 = vmatprep.subr.bf16.mxu0 %v1331
  %1895 = vmatpush2.bf16.msra.mxu0 %v1330
  %1896 = vmatprep.subr.bf16.mxu0 %v1329
  %1897 = vmatpush2.bf16.msra.mxu0 %v1328
  %1898 = vmatprep.mubr.bf16.mxu0 %v421
  %1899 = vmatmul.mubr.bf16.gmra.mxu0 %v420
  %v1900 = vpop.f32.mrf.mxu0
  %v1901 = vadd.f32 %v1848, %v1900
  %v1902 = vpop.f32.mrf.mxu0
  %v1903 = vadd.f32 %v1850, %v1902
  %v1904 = vpop.f32.mrf.mxu0
  %v1905 = vadd.f32 %v1852, %v1904
  %v1906 = vpop.f32.mrf.mxu0
  %v1907 = vadd.f32 %v1854, %v1906
  %1908 = vmatprep.mubr.bf16.mxu0 %v437
  %1909 = vmatmul.mubr.bf16.gmra.mxu0 %v436
  %v1910 = vpop.f32.mrf.mxu0
  %v1911 = vadd.f32 %v1858, %v1910
  %v1912 = vpop.f32.mrf.mxu0
  %v1913 = vadd.f32 %v1860, %v1912
  %v1914 = vpop.f32.mrf.mxu0
  %v1915 = vadd.f32 %v1862, %v1914
  %v1916 = vpop.f32.mrf.mxu0
  %v1917 = vadd.f32 %v1864, %v1916
  %1918 = vdwg.mxu0
  %1919 = vmatprep.subr.bf16.mxu0 %v1359
  %1920 = vmatpush1.bf16.msra.mxu0 %v1358
  %1921 = vmatprep.subr.bf16.mxu0 %v1357
  %1922 = vmatpush1.bf16.msra.mxu0 %v1356
  %1923 = vmatprep.subr.bf16.mxu0 %v1355
  %1924 = vmatpush1.bf16.msra.mxu0 %v1354
  %1925 = vmatprep.subr.bf16.mxu0 %v1353
  %1926 = vmatpush1.bf16.msra.mxu0 %v1352
  %1927 = vmatprep.subr.bf16.mxu0 %v1351
  %1928 = vmatpush1.bf16.msra.mxu0 %v1350
  %1929 = vmatprep.subr.bf16.mxu0 %v1349
  %1930 = vmatpush1.bf16.msra.mxu0 %v1348
  %1931 = vmatprep.subr.bf16.mxu0 %v1347
  %1932 = vmatpush1.bf16.msra.mxu0 %v1346
  %1933 = vmatprep.subr.bf16.mxu0 %v1345
  %1934 = vmatpush1.bf16.msra.mxu0 %v1344
  %1935 = vmatprep.subr.bf16.mxu0 %v1375
  %1936 = vmatpush2.bf16.msra.mxu0 %v1374
  %1937 = vmatprep.subr.bf16.mxu0 %v1373
  %1938 = vmatpush2.bf16.msra.mxu0 %v1372
  %1939 = vmatprep.subr.bf16.mxu0 %v1371
  %1940 = vmatpush2.bf16.msra.mxu0 %v1370
  %1941 = vmatprep.subr.bf16.mxu0 %v1369
  %1942 = vmatpush2.bf16.msra.mxu0 %v1368
  %1943 = vmatprep.subr.bf16.mxu0 %v1367
  %1944 = vmatpush2.bf16.msra.mxu0 %v1366
  %1945 = vmatprep.subr.bf16.mxu0 %v1365
  %1946 = vmatpush2.bf16.msra.mxu0 %v1364
  %1947 = vmatprep.subr.bf16.mxu0 %v1363
  %1948 = vmatpush2.bf16.msra.mxu0 %v1362
  %1949 = vmatprep.subr.bf16.mxu0 %v1361
  %1950 = vmatpush2.bf16.msra.mxu0 %v1360
  %1951 = vmatprep.mubr.bf16.mxu0 %v423
  %1952 = vmatmul.mubr.bf16.gmra.mxu0 %v422
  %v1953 = vpop.f32.mrf.mxu0
  %v1954 = vadd.f32 %v1901, %v1953
  %v1955 = vpop.f32.mrf.mxu0
  %v1956 = vadd.f32 %v1903, %v1955
  %v1957 = vpop.f32.mrf.mxu0
  %v1958 = vadd.f32 %v1905, %v1957
  %v1959 = vpop.f32.mrf.mxu0
  %v1960 = vadd.f32 %v1907, %v1959
  %1961 = vmatprep.mubr.bf16.mxu0 %v439
  %1962 = vmatmul.mubr.bf16.gmra.mxu0 %v438
  %v1963 = vpop.f32.mrf.mxu0
  %v1964 = vadd.f32 %v1911, %v1963
  %v1965 = vpop.f32.mrf.mxu0
  %v1966 = vadd.f32 %v1913, %v1965
  %v1967 = vpop.f32.mrf.mxu0
  %v1968 = vadd.f32 %v1915, %v1967
  %v1969 = vpop.f32.mrf.mxu0
  %v1970 = vadd.f32 %v1917, %v1969
  %1971 = vdwg.mxu0
  %1972 = vmatprep.subr.bf16.mxu0 %v1391
  %1973 = vmatpush1.bf16.msra.mxu0 %v1390
  %1974 = vmatprep.subr.bf16.mxu0 %v1389
  %1975 = vmatpush1.bf16.msra.mxu0 %v1388
  %1976 = vmatprep.subr.bf16.mxu0 %v1387
  %1977 = vmatpush1.bf16.msra.mxu0 %v1386
  %1978 = vmatprep.subr.bf16.mxu0 %v1385
  %1979 = vmatpush1.bf16.msra.mxu0 %v1384
  %1980 = vmatprep.subr.bf16.mxu0 %v1383
  %1981 = vmatpush1.bf16.msra.mxu0 %v1382
  %1982 = vmatprep.subr.bf16.mxu0 %v1381
  %1983 = vmatpush1.bf16.msra.mxu0 %v1380
  %1984 = vmatprep.subr.bf16.mxu0 %v1379
  %1985 = vmatpush1.bf16.msra.mxu0 %v1378
  %1986 = vmatprep.subr.bf16.mxu0 %v1377
  %1987 = vmatpush1.bf16.msra.mxu0 %v1376
  %1988 = vmatprep.subr.bf16.mxu0 %v1407
  %1989 = vmatpush2.bf16.msra.mxu0 %v1406
  %1990 = vmatprep.subr.bf16.mxu0 %v1405
  %1991 = vmatpush2.bf16.msra.mxu0 %v1404
  %1992 = vmatprep.subr.bf16.mxu0 %v1403
  %1993 = vmatpush2.bf16.msra.mxu0 %v1402
  %1994 = vmatprep.subr.bf16.mxu0 %v1401
  %1995 = vmatpush2.bf16.msra.mxu0 %v1400
  %1996 = vmatprep.subr.bf16.mxu0 %v1399
  %1997 = vmatpush2.bf16.msra.mxu0 %v1398
  %1998 = vmatprep.subr.bf16.mxu0 %v1397
  %1999 = vmatpush2.bf16.msra.mxu0 %v1396
  %2000 = vmatprep.subr.bf16.mxu0 %v1395
  %2001 = vmatpush2.bf16.msra.mxu0 %v1394
  %2002 = vmatprep.subr.bf16.mxu0 %v1393
  %2003 = vmatpush2.bf16.msra.mxu0 %v1392
  %2004 = vmatprep.mubr.bf16.mxu0 %v425
  %2005 = vmatmul.mubr.bf16.gmra.mxu0 %v424
  %v2006 = vpop.f32.mrf.mxu0
  %v2007 = vadd.f32 %v1954, %v2006
  %v2008 = vpop.f32.mrf.mxu0
  %v2009 = vadd.f32 %v1956, %v2008
  %v2010 = vpop.f32.mrf.mxu0
  %v2011 = vadd.f32 %v1958, %v2010
  %v2012 = vpop.f32.mrf.mxu0
  %v2013 = vadd.f32 %v1960, %v2012
  %2014 = vmatprep.mubr.bf16.mxu0 %v441
  %2015 = vmatmul.mubr.bf16.gmra.mxu0 %v440
  %v2016 = vpop.f32.mrf.mxu0
  %v2017 = vadd.f32 %v1964, %v2016
  %v2018 = vpop.f32.mrf.mxu0
  %v2019 = vadd.f32 %v1966, %v2018
  %v2020 = vpop.f32.mrf.mxu0
  %v2021 = vadd.f32 %v1968, %v2020
  %v2022 = vpop.f32.mrf.mxu0
  %v2023 = vadd.f32 %v1970, %v2022
  %2024 = vdwg.mxu0
  %2025 = vmatprep.subr.bf16.mxu0 %v1423
  %2026 = vmatpush1.bf16.msra.mxu0 %v1422
  %2027 = vmatprep.subr.bf16.mxu0 %v1421
  %2028 = vmatpush1.bf16.msra.mxu0 %v1420
  %2029 = vmatprep.subr.bf16.mxu0 %v1419
  %2030 = vmatpush1.bf16.msra.mxu0 %v1418
  %2031 = vmatprep.subr.bf16.mxu0 %v1417
  %2032 = vmatpush1.bf16.msra.mxu0 %v1416
  %2033 = vmatprep.subr.bf16.mxu0 %v1415
  %2034 = vmatpush1.bf16.msra.mxu0 %v1414
  %2035 = vmatprep.subr.bf16.mxu0 %v1413
  %2036 = vmatpush1.bf16.msra.mxu0 %v1412
  %2037 = vmatprep.subr.bf16.mxu0 %v1411
  %2038 = vmatpush1.bf16.msra.mxu0 %v1410
  %2039 = vmatprep.subr.bf16.mxu0 %v1409
  %2040 = vmatpush1.bf16.msra.mxu0 %v1408
  %2041 = vmatprep.subr.bf16.mxu0 %v1439
  %2042 = vmatpush2.bf16.msra.mxu0 %v1438
  %2043 = vmatprep.subr.bf16.mxu0 %v1437
  %2044 = vmatpush2.bf16.msra.mxu0 %v1436
  %2045 = vmatprep.subr.bf16.mxu0 %v1435
  %2046 = vmatpush2.bf16.msra.mxu0 %v1434
  %2047 = vmatprep.subr.bf16.mxu0 %v1433
  %2048 = vmatpush2.bf16.msra.mxu0 %v1432
  %2049 = vmatprep.subr.bf16.mxu0 %v1431
  %2050 = vmatpush2.bf16.msra.mxu0 %v1430
  %2051 = vmatprep.subr.bf16.mxu0 %v1429
  %2052 = vmatpush2.bf16.msra.mxu0 %v1428
  %2053 = vmatprep.subr.bf16.mxu0 %v1427
  %2054 = vmatpush2.bf16.msra.mxu0 %v1426
  %2055 = vmatprep.subr.bf16.mxu0 %v1425
  %2056 = vmatpush2.bf16.msra.mxu0 %v1424
  %2057 = vmatprep.mubr.bf16.mxu0 %v427
  %2058 = vmatmul.mubr.bf16.gmra.mxu0 %v426
  %v2059 = vpop.f32.mrf.mxu0
  %v2060 = vadd.f32 %v2007, %v2059
  %v2061 = vpop.f32.mrf.mxu0
  %v2062 = vadd.f32 %v2009, %v2061
  %v2063 = vpop.f32.mrf.mxu0
  %v2064 = vadd.f32 %v2011, %v2063
  %v2065 = vpop.f32.mrf.mxu0
  %v2066 = vadd.f32 %v2013, %v2065
  %2067 = vmatprep.mubr.bf16.mxu0 %v443
  %2068 = vmatmul.mubr.bf16.gmra.mxu0 %v442
  %v2069 = vpop.f32.mrf.mxu0
  %v2070 = vadd.f32 %v2017, %v2069
  %v2071 = vpop.f32.mrf.mxu0
  %v2072 = vadd.f32 %v2019, %v2071
  %v2073 = vpop.f32.mrf.mxu0
  %v2074 = vadd.f32 %v2021, %v2073
  %v2075 = vpop.f32.mrf.mxu0
  %v2076 = vadd.f32 %v2023, %v2075
  %2077 = vdwg.mxu0
  %2078 = vmatprep.subr.bf16.mxu0 %v1455
  %2079 = vmatpush1.bf16.msra.mxu0 %v1454
  %2080 = vmatprep.subr.bf16.mxu0 %v1453
  %2081 = vmatpush1.bf16.msra.mxu0 %v1452
  %2082 = vmatprep.subr.bf16.mxu0 %v1451
  %2083 = vmatpush1.bf16.msra.mxu0 %v1450
  %2084 = vmatprep.subr.bf16.mxu0 %v1449
  %2085 = vmatpush1.bf16.msra.mxu0 %v1448
  %2086 = vmatprep.subr.bf16.mxu0 %v1447
  %2087 = vmatpush1.bf16.msra.mxu0 %v1446
  %2088 = vmatprep.subr.bf16.mxu0 %v1445
  %2089 = vmatpush1.bf16.msra.mxu0 %v1444
  %2090 = vmatprep.subr.bf16.mxu0 %v1443
  %2091 = vmatpush1.bf16.msra.mxu0 %v1442
  %2092 = vmatprep.subr.bf16.mxu0 %v1441
  %2093 = vmatpush1.bf16.msra.mxu0 %v1440
  %2094 = vmatprep.subr.bf16.mxu0 %v1471
  %2095 = vmatpush2.bf16.msra.mxu0 %v1470
  %2096 = vmatprep.subr.bf16.mxu0 %v1469
  %2097 = vmatpush2.bf16.msra.mxu0 %v1468
  %2098 = vmatprep.subr.bf16.mxu0 %v1467
  %2099 = vmatpush2.bf16.msra.mxu0 %v1466
  %2100 = vmatprep.subr.bf16.mxu0 %v1465
  %2101 = vmatpush2.bf16.msra.mxu0 %v1464
  %2102 = vmatprep.subr.bf16.mxu0 %v1463
  %2103 = vmatpush2.bf16.msra.mxu0 %v1462
  %2104 = vmatprep.subr.bf16.mxu0 %v1461
  %2105 = vmatpush2.bf16.msra.mxu0 %v1460
  %2106 = vmatprep.subr.bf16.mxu0 %v1459
  %2107 = vmatpush2.bf16.msra.mxu0 %v1458
  %2108 = vmatprep.subr.bf16.mxu0 %v1457
  %2109 = vmatpush2.bf16.msra.mxu0 %v1456
  %2110 = vmatprep.mubr.bf16.mxu0 %v429
  %2111 = vmatmul.mubr.bf16.gmra.mxu0 %v428
  %v2112 = vpop.f32.mrf.mxu0
  %v2113 = vadd.f32 %v2060, %v2112
  %v2114 = vpop.f32.mrf.mxu0
  %v2115 = vadd.f32 %v2062, %v2114
  %v2116 = vpop.f32.mrf.mxu0
  %v2117 = vadd.f32 %v2064, %v2116
  %v2118 = vpop.f32.mrf.mxu0
  %v2119 = vadd.f32 %v2066, %v2118
  %2120 = vmatprep.mubr.bf16.mxu0 %v445
  %2121 = vmatmul.mubr.bf16.gmra.mxu0 %v444
  %v2122 = vpop.f32.mrf.mxu0
  %v2123 = vadd.f32 %v2070, %v2122
  %v2124 = vpop.f32.mrf.mxu0
  %v2125 = vadd.f32 %v2072, %v2124
  %v2126 = vpop.f32.mrf.mxu0
  %v2127 = vadd.f32 %v2074, %v2126
  %v2128 = vpop.f32.mrf.mxu0
  %v2129 = vadd.f32 %v2076, %v2128
  %2130 = vdwg.mxu0
  %2131 = vmatprep.subr.bf16.mxu0 %v1487
  %2132 = vmatpush1.bf16.msra.mxu0 %v1486
  %2133 = vmatprep.subr.bf16.mxu0 %v1485
  %2134 = vmatpush1.bf16.msra.mxu0 %v1484
  %2135 = vmatprep.subr.bf16.mxu0 %v1483
  %2136 = vmatpush1.bf16.msra.mxu0 %v1482
  %2137 = vmatprep.subr.bf16.mxu0 %v1481
  %2138 = vmatpush1.bf16.msra.mxu0 %v1480
  %2139 = vmatprep.subr.bf16.mxu0 %v1479
  %2140 = vmatpush1.bf16.msra.mxu0 %v1478
  %2141 = vmatprep.subr.bf16.mxu0 %v1477
  %2142 = vmatpush1.bf16.msra.mxu0 %v1476
  %2143 = vmatprep.subr.bf16.mxu0 %v1475
  %2144 = vmatpush1.bf16.msra.mxu0 %v1474
  %2145 = vmatprep.subr.bf16.mxu0 %v1473
  %2146 = vmatpush1.bf16.msra.mxu0 %v1472
  %2147 = vmatprep.subr.bf16.mxu0 %v1503
  %2148 = vmatpush2.bf16.msra.mxu0 %v1502
  %2149 = vmatprep.subr.bf16.mxu0 %v1501
  %2150 = vmatpush2.bf16.msra.mxu0 %v1500
  %2151 = vmatprep.subr.bf16.mxu0 %v1499
  %2152 = vmatpush2.bf16.msra.mxu0 %v1498
  %2153 = vmatprep.subr.bf16.mxu0 %v1497
  %2154 = vmatpush2.bf16.msra.mxu0 %v1496
  %2155 = vmatprep.subr.bf16.mxu0 %v1495
  %2156 = vmatpush2.bf16.msra.mxu0 %v1494
  %2157 = vmatprep.subr.bf16.mxu0 %v1493
  %2158 = vmatpush2.bf16.msra.mxu0 %v1492
  %2159 = vmatprep.subr.bf16.mxu0 %v1491
  %2160 = vmatpush2.bf16.msra.mxu0 %v1490
  %2161 = vmatprep.subr.bf16.mxu0 %v1489
  %2162 = vmatpush2.bf16.msra.mxu0 %v1488
  %2163 = vmatprep.mubr.bf16.mxu0 %v431
  %2164 = vmatmul.mubr.bf16.gmra.mxu0 %v430
  %v2165 = vpop.f32.mrf.mxu0
  %v2166 = vadd.f32 %v2113, %v2165
  %v2167 = vpop.f32.mrf.mxu0
  %v2168 = vadd.f32 %v2115, %v2167
  %v2169 = vpop.f32.mrf.mxu0
  %v2170 = vadd.f32 %v2117, %v2169
  %v2171 = vpop.f32.mrf.mxu0
  %v2172 = vadd.f32 %v2119, %v2171
  %2173 = vmatprep.mubr.bf16.mxu0 %v447
  %2174 = vmatmul.mubr.bf16.gmra.mxu0 %v446
  %v2175 = vpop.f32.mrf.mxu0
  %v2176 = vadd.f32 %v2123, %v2175
  %v2177 = vpop.f32.mrf.mxu0
  %v2178 = vadd.f32 %v2125, %v2177
  %v2179 = vpop.f32.mrf.mxu0
  %v2180 = vadd.f32 %v2127, %v2179
  %v2181 = vpop.f32.mrf.mxu0
  %v2182 = vadd.f32 %v2129, %v2181
  %2183 = vdwg.mxu0
  %v2184 = vadd.f32 %v2166, %v2170
  %v2185 = vadd.f32 %v2184, %v2176
  %v2186 = vadd.f32 %v2185, %v2180
  %v2187 = vrot.slane %v2186, 4
  %v2188 = vadd.f32 %v2186, %v2187
  %v2189 = vrot.slane %v2188, 2
  %v2190 = vadd.f32 %v2188, %v2189
  %v2191 = vrot.slane %v2190, 1
  %v2192 = vadd.f32 %v2190, %v2191
  %v2193 = vadd.f32 %v2168, %v2172
  %v2194 = vadd.f32 %v2193, %v2178
  %v2195 = vadd.f32 %v2194, %v2182
  %v2196 = vrot.slane %v2195, 4
  %v2197 = vadd.f32 %v2195, %v2196
  %v2198 = vrot.slane %v2197, 2
  %v2199 = vadd.f32 %v2197, %v2198
  %v2200 = vrot.slane %v2199, 1
  %v2201 = vadd.f32 %v2199, %v2200
  %v2202 = vrcp.pop 32.0
  %v2203 = vmul.f32 %v2192, %v2202
  %v2204 = vmul.f32 %v2201, %v2202
  %v2205 = vsub.f32 %v2166, %v2203
  %v2206 = vsub.f32 %v2168, %v2204
  %v2207 = vsub.f32 %v2170, %v2203
  %v2208 = vsub.f32 %v2172, %v2204
  %v2209 = vsub.f32 %v2176, %v2203
  %v2210 = vsub.f32 %v2178, %v2204
  %v2211 = vsub.f32 %v2180, %v2203
  %v2212 = vsub.f32 %v2182, %v2204
  %v2213 = vmul.f32 %v2205, %v2205
  %v2214 = vmul.f32 %v2206, %v2206
  %v2215 = vmul.f32 %v2207, %v2207
  %v2216 = vmul.f32 %v2208, %v2208
  %v2217 = vmul.f32 %v2209, %v2209
  %v2218 = vmul.f32 %v2210, %v2210
  %v2219 = vmul.f32 %v2211, %v2211
  %v2220 = vmul.f32 %v2212, %v2212
  %v2221 = vadd.f32 %v2213, %v2215
  %v2222 = vadd.f32 %v2221, %v2217
  %v2223 = vadd.f32 %v2222, %v2219
  %v2224 = vrot.slane %v2223, 4
  %v2225 = vadd.f32 %v2223, %v2224
  %v2226 = vrot.slane %v2225, 2
  %v2227 = vadd.f32 %v2225, %v2226
  %v2228 = vrot.slane %v2227, 1
  %v2229 = vadd.f32 %v2227, %v2228
  %v2230 = vadd.f32 %v2214, %v2216
  %v2231 = vadd.f32 %v2230, %v2218
  %v2232 = vadd.f32 %v2231, %v2220
  %v2233 = vrot.slane %v2232, 4
  %v2234 = vadd.f32 %v2232, %v2233
  %v2235 = vrot.slane %v2234, 2
  %v2236 = vadd.f32 %v2234, %v2235
  %v2237 = vrot.slane %v2236, 1
  %v2238 = vadd.f32 %v2236, %v2237
  %v2239 = vmul.f32 %v2229, %v2202
  %v2240 = vmul.f32 %v2238, %v2202
  %v2241 = vadd.f32 %v2239, 1e-05
  %v2242 = vadd.f32 %v2240, 1e-05
  %v2243 = vrsqrt.pop %v2241
  %v2244 = vrsqrt.pop %v2242
  %v2245 = vmul.f32 %v2205, %v2243
  %v2246 = vmul.f32 %v2206, %v2244
  %v2247 = vmul.f32 %v2207, %v2243
  %v2248 = vmul.f32 %v2208, %v2244
  %v2249 = vmul.f32 %v2209, %v2243
  %v2250 = vmul.f32 %v2210, %v2244
  %v2251 = vmul.f32 %v2211, %v2243
  %v2252 = vmul.f32 %v2212, %v2244
  %v2253 = vld [vmem:[%s3] sm:$0x3]
  %v2255 = vlaneseq
  %v2256 = vshrl.u32 %v2255, 7
  %v2257 = vsub.s32 0, %v2256
  %v2258 = vrot.slane %v2253, %v2257
  %v2259 = vlaneseq
  %v2260 = vshrl.u32 %v2259, 7
  %v2261 = vsub.s32 1, %v2260
  %v2262 = vrot.slane %v2253, %v2261
  %v2265 = vmul.f32 %v2245, %v2258
  %v2266 = vmul.f32 %v2246, %v2262
  %v2267 = vmul.f32 %v2247, %v2258
  %v2268 = vmul.f32 %v2248, %v2262
  %v2269 = vmul.f32 %v2249, %v2258
  %v2270 = vmul.f32 %v2250, %v2262
  %v2271 = vmul.f32 %v2251, %v2258
  %v2272 = vmul.f32 %v2252, %v2262
  %v2273 = vld [vmem:[%s4] sm:$0x3]
  %v2275 = vlaneseq
  %v2276 = vshrl.u32 %v2275, 7
  %v2277 = vsub.s32 0, %v2276
  %v2278 = vrot.slane %v2273, %v2277
  %v2279 = vlaneseq
  %v2280 = vshrl.u32 %v2279, 7
  %v2281 = vsub.s32 1, %v2280
  %v2282 = vrot.slane %v2273, %v2281
  %v2285 = vadd.f32 %v2265, %v2278
  %v2286 = vadd.f32 %v2266, %v2282
  %v2287 = vadd.f32 %v2267, %v2278
  %v2288 = vadd.f32 %v2268, %v2282
  %v2289 = vadd.f32 %v2269, %v2278
  %v2290 = vadd.f32 %v2270, %v2282
  %v2291 = vadd.f32 %v2271, %v2278
  %v2292 = vadd.f32 %v2272, %v2282
  %vm2293 = vcmp.gt.f32.partialorder %v2285, 0.0
  %vm2294 = vcmp.gt.f32.partialorder %v2286, 0.0
  %vm2295 = vcmp.gt.f32.partialorder %v2287, 0.0
  %vm2296 = vcmp.gt.f32.partialorder %v2288, 0.0
  %vm2297 = vcmp.gt.f32.partialorder %v2289, 0.0
  %vm2298 = vcmp.gt.f32.partialorder %v2290, 0.0
  %vm2299 = vcmp.gt.f32.partialorder %v2291, 0.0
  %vm2300 = vcmp.gt.f32.partialorder %v2292, 0.0
  %v2301 = vmul.f32 %v2285, 0.2
  %v2302 = vmul.f32 %v2286, 0.2
  %v2303 = vmul.f32 %v2287, 0.2
  %v2304 = vmul.f32 %v2288, 0.2
  %v2305 = vmul.f32 %v2289, 0.2
  %v2306 = vmul.f32 %v2290, 0.2
  %v2307 = vmul.f32 %v2291, 0.2
  %v2308 = vmul.f32 %v2292, 0.2
  %v2309 = vsel %vm2293, %v2285, %v2301
  %v2310 = vsel %vm2294, %v2286, %v2302
  %v2311 = vsel %vm2295, %v2287, %v2303
  %v2312 = vsel %vm2296, %v2288, %v2304
  %v2313 = vsel %vm2297, %v2289, %v2305
  %v2314 = vsel %vm2298, %v2290, %v2306
  %v2315 = vsel %vm2299, %v2291, %v2307
  %v2316 = vsel %vm2300, %v2292, %v2308
  %v2317 = vpack.c.bf16 %v2311, %v2309
  %v2318 = vpack.c.bf16 %v2312, %v2310
  %v2319 = vpack.c.bf16 %v2315, %v2313
  %v2320 = vpack.c.bf16 %v2316, %v2314
  %v2325 = vunpack.c.l.b16 %v2317
  %v2326 = vunpack.c.l.b16 %v2318
  %v2327 = vunpack.c.h.b16 %v2317
  %v2328 = vunpack.c.h.b16 %v2318
  %v2329 = vunpack.c.l.b16 %v2319
  %v2330 = vunpack.c.l.b16 %v2320
  %v2331 = vunpack.c.h.b16 %v2319
  %v2332 = vunpack.c.h.b16 %v2320
  %v2333 = vpack.c.b16 %v2326, %v2325
  %v2334 = vpack.c.b16 %v2328, %v2327
  %v2335 = vpack.c.b16 %v2330, %v2329
  %v2336 = vpack.c.b16 %v2332, %v2331
  %2341 = vst [vmem:[%s5] sm:$0xff] %v2333
  %2342 = vst [vmem:[%s5 + $0x8] sm:$0xff] %v2334
  %2343 = vst [vmem:[%s5 + $0x10] sm:$0xff] %v2335
  %2344 = vst [vmem:[%s5 + $0x18] sm:$0xff] %v2336
  // Predicated region
  $region22: #{discriminator_forward.6} parent=0 // pred_check
    _
  $region23: #{discriminator_forward.6} parent=0 // pred_check_branch
    %2346 = sbr.rel (0) target = $region25
  $region24: #{discriminator_forward.6} parent=0 // pred_region
    _
  $region25: #{discriminator_forward.6} parent=0 // pred_fallthru
    _
  // Predicated region
  $region26: #{discriminator_forward.6} parent=0 // pred_check
    _
  $region27: #{discriminator_forward.6} parent=0 // pred_check_branch
    %2348 = sbr.rel (0) target = $region29
  $region28: #{discriminator_forward.6} parent=0 // pred_region
    _
  $region29: #{discriminator_forward.6} parent=0 // pred_fallthru
    _

// kernel: discriminator_forward.7
$region0: #{discriminator_forward.7}
  #allocation0 [shape = 'u32[]', space=smem, size = 0x4, offset = 0x4, fixed_abs, tag = 'smem constant byte address 0x4 - core index']
  #allocation1 [shape = 'u32[144,128]{1,0:T(1,128)}', space=vmem, size = 0x12000, scoped, tag = 'internal scratch']
  #allocation2 [shape = 'f32[1,1]{1,0:T(1,128)S(1)}', space=vmem, size = 0x200, scoped, tag = 'scoped memory for discriminator_forward.7']
  %s0 = inlined_call_operand.vmem [shape: bf16[32,2304], index: 0, kind: input, shape index: {}]
  %s1 = inlined_call_operand.vmem [shape: bf16[2304,512], index: 1, kind: input, shape index: {}]
  %s2 = inlined_call_operand.vmem [shape: f32[1,512], index: 2, kind: input, shape index: {}]
  %s3 = inlined_call_operand.vmem [shape: f32[1,512], index: 3, kind: input, shape index: {}]
  %s4 = inlined_call_operand.vmem [shape: f32[1,512], index: 4, kind: input, shape index: {}]
  %s5 = inlined_call_operand.vmem [shape: f32[32,512], index: 5, kind: input, shape index: {}]
  %s6 = inlined_call_operand.vmem [shape: f32[2,32], index: 6, kind: input, shape index: {}]
  %s7 = inlined_call_operand.<no memory space> [shape: f32[1,1], index: 7, kind: input, shape index: {}]
  %s8 = inlined_call_operand.vmem [shape: f32[2,1], index: 8, kind: output, shape index: {}]
  %s9 = sld [smem:[#allocation0]]
  $region42: #{discriminator_forward.7} parent=0
    _
  %s11 = ssub.s32 1, %s9
  %s12 = scalar_select 0, %s11, %s9
  %v13 = vstv %s7
  %14 = vst [vmem:[#allocation2] sm:$0x1] %v13
  // Predicated region
  $region2: #{discriminator_forward.7} parent=0 // pred_check
    _
  $region3: #{discriminator_forward.7} parent=0 // pred_check_branch
    %16 = sbr.rel (0) target = $region5
  $region4: #{discriminator_forward.7} parent=0 // pred_region
    _
  $region5: #{discriminator_forward.7} parent=0 // pred_fallthru
    _
  // Predicated region
  $region6: #{discriminator_forward.7} parent=0 // pred_check
    _
  $region7: #{discriminator_forward.7} parent=0 // pred_check_branch
    %18 = sbr.rel (0) target = $region9
  $region8: #{discriminator_forward.7} parent=0 // pred_region
    _
  $region9: #{discriminator_forward.7} parent=0 // pred_fallthru
    _
  // Predicated region
  $region10: #{discriminator_forward.7} parent=0 // pred_check
    _
  $region11: #{discriminator_forward.7} parent=0 // pred_check_branch
    %20 = sbr.rel (0) target = $region13
  $region12: #{discriminator_forward.7} parent=0 // pred_region
    _
  $region13: #{discriminator_forward.7} parent=0 // pred_fallthru
    _
  // Predicated region
  $region14: #{discriminator_forward.7} parent=0 // pred_check
    _
  $region15: #{discriminator_forward.7} parent=0 // pred_check_branch
    %22 = sbr.rel (0) target = $region17
  $region16: #{discriminator_forward.7} parent=0 // pred_region
    _
  $region17: #{discriminator_forward.7} parent=0 // pred_fallthru
    _
  // Predicated region
  $region18: #{discriminator_forward.7} parent=0 // pred_check
    _
  $region19: #{discriminator_forward.7} parent=0 // pred_check_branch
    %24 = sbr.rel (0) target = $region21
  $region20: #{discriminator_forward.7} parent=0 // pred_region
    _
  $region21: #{discriminator_forward.7} parent=0 // pred_fallthru
    _
  // Predicated region
  $region22: #{discriminator_forward.7} parent=0 // pred_check
    _
  $region23: #{discriminator_forward.7} parent=0 // pred_check_branch
    %26 = sbr.rel (0) target = $region25
  $region24: #{discriminator_forward.7} parent=0 // pred_region
    _
  $region25: #{discriminator_forward.7} parent=0 // pred_fallthru
    _
  // Predicated region
  $region26: #{discriminator_forward.7} parent=0 // pred_check
    _
  $region27: #{discriminator_forward.7} parent=0 // pred_check_branch
    %28 = sbr.rel (0) target = $region29
  $region28: #{discriminator_forward.7} parent=0 // pred_region
    _
  $region29: #{discriminator_forward.7} parent=0 // pred_fallthru
    _
  // Predicated region
  $region30: #{discriminator_forward.7} parent=0 // pred_check
    _
  $region31: #{discriminator_forward.7} parent=0 // pred_check_branch
    %30 = sbr.rel (0) target = $region33
  $region32: #{discriminator_forward.7} parent=0 // pred_region
    _
  $region33: #{discriminator_forward.7} parent=0 // pred_fallthru
    _
  %v31 = vld [vmem:[%s0] sm:$0xff]
  %v32 = vld [vmem:[%s0 + $0x8] sm:$0xff]
  %v33 = vld [vmem:[%s0 + $0x10] sm:$0xff]
  %v34 = vld [vmem:[%s0 + $0x18] sm:$0xff]
  %v35 = vld [vmem:[%s0 + $0x20] sm:$0xff]
  %v36 = vld [vmem:[%s0 + $0x28] sm:$0xff]
  %v37 = vld [vmem:[%s0 + $0x30] sm:$0xff]
  %v38 = vld [vmem:[%s0 + $0x38] sm:$0xff]
  %v39 = vld [vmem:[%s0 + $0x40] sm:$0xff]
  %v40 = vld [vmem:[%s0 + $0x48] sm:$0xff]
  %v41 = vld [vmem:[%s0 + $0x50] sm:$0xff]
  %v42 = vld [vmem:[%s0 + $0x58] sm:$0xff]
  %v43 = vld [vmem:[%s0 + $0x60] sm:$0xff]
  %v44 = vld [vmem:[%s0 + $0x68] sm:$0xff]
  %v45 = vld [vmem:[%s0 + $0x70] sm:$0xff]
  %v46 = vld [vmem:[%s0 + $0x78] sm:$0xff]
  %v47 = vld [vmem:[%s0 + $0x80] sm:$0xff]
  %v48 = vld [vmem:[%s0 + $0x88] sm:$0xff]
  %v49 = vld [vmem:[%s0 + $0x90] sm:$0xff]
  %v50 = vld [vmem:[%s0 + $0x98] sm:$0xff]
  %v51 = vld [vmem:[%s0 + $0xa0] sm:$0xff]
  %v52 = vld [vmem:[%s0 + $0xa8] sm:$0xff]
  %v53 = vld [vmem:[%s0 + $0xb0] sm:$0xff]
  %v54 = vld [vmem:[%s0 + $0xb8] sm:$0xff]
  %v55 = vld [vmem:[%s0 + $0xc0] sm:$0xff]
  %v56 = vld [vmem:[%s0 + $0xc8] sm:$0xff]
  %v57 = vld [vmem:[%s0 + $0xd0] sm:$0xff]
  %v58 = vld [vmem:[%s0 + $0xd8] sm:$0xff]
  %v59 = vld [vmem:[%s0 + $0xe0] sm:$0xff]
  %v60 = vld [vmem:[%s0 + $0xe8] sm:$0xff]
  %v61 = vld [vmem:[%s0 + $0xf0] sm:$0xff]
  %v62 = vld [vmem:[%s0 + $0xf8] sm:$0xff]
  %v63 = vld [vmem:[%s0 + $0x100] sm:$0xff]
  %v64 = vld [vmem:[%s0 + $0x108] sm:$0xff]
  %v65 = vld [vmem:[%s0 + $0x110] sm:$0xff]
  %v66 = vld [vmem:[%s0 + $0x118] sm:$0xff]
  %v67 = vld [vmem:[%s1] sm:$0xff]
  %v68 = vld [vmem:[%s1 + $0x8] sm:$0xff]
  %v69 = vld [vmem:[%s1 + $0x10] sm:$0xff]
  %v70 = vld [vmem:[%s1 + $0x18] sm:$0xff]
  %v71 = vld [vmem:[%s1 + $0x20] sm:$0xff]
  %v72 = vld [vmem:[%s1 + $0x28] sm:$0xff]
  %v73 = vld [vmem:[%s1 + $0x30] sm:$0xff]
  %v74 = vld [vmem:[%s1 + $0x38] sm:$0xff]
  %v75 = vld [vmem:[%s1 + $0x40] sm:$0xff]
  %v76 = vld [vmem:[%s1 + $0x48] sm:$0xff]
  %v77 = vld [vmem:[%s1 + $0x50] sm:$0xff]
  %v78 = vld [vmem:[%s1 + $0x58] sm:$0xff]
  %v79 = vld [vmem:[%s1 + $0x60] sm:$0xff]
  %v80 = vld [vmem:[%s1 + $0x68] sm:$0xff]
  %v81 = vld [vmem:[%s1 + $0x70] sm:$0xff]
  %v82 = vld [vmem:[%s1 + $0x78] sm:$0xff]
  %v83 = vld [vmem:[%s1 + $0x80] sm:$0xff]
  %v84 = vld [vmem:[%s1 + $0x88] sm:$0xff]
  %v85 = vld [vmem:[%s1 + $0x90] sm:$0xff]
  %v86 = vld [vmem:[%s1 + $0x98] sm:$0xff]
  %v87 = vld [vmem:[%s1 + $0xa0] sm:$0xff]
  %v88 = vld [vmem:[%s1 + $0xa8] sm:$0xff]
  %v89 = vld [vmem:[%s1 + $0xb0] sm:$0xff]
  %v90 = vld [vmem:[%s1 + $0xb8] sm:$0xff]
  %v91 = vld [vmem:[%s1 + $0xc0] sm:$0xff]
  %v92 = vld [vmem:[%s1 + $0xc8] sm:$0xff]
  %v93 = vld [vmem:[%s1 + $0xd0] sm:$0xff]
  %v94 = vld [vmem:[%s1 + $0xd8] sm:$0xff]
  %v95 = vld [vmem:[%s1 + $0xe0] sm:$0xff]
  %v96 = vld [vmem:[%s1 + $0xe8] sm:$0xff]
  %v97 = vld [vmem:[%s1 + $0xf0] sm:$0xff]
  %v98 = vld [vmem:[%s1 + $0xf8] sm:$0xff]
  %v99 = vld [vmem:[%s1 + $0x100] sm:$0xff]
  %v100 = vld [vmem:[%s1 + $0x108] sm:$0xff]
  %v101 = vld [vmem:[%s1 + $0x110] sm:$0xff]
  %v102 = vld [vmem:[%s1 + $0x118] sm:$0xff]
  %v103 = vld [vmem:[%s1 + $0x120] sm:$0xff]
  %v104 = vld [vmem:[%s1 + $0x128] sm:$0xff]
  %v105 = vld [vmem:[%s1 + $0x130] sm:$0xff]
  %v106 = vld [vmem:[%s1 + $0x138] sm:$0xff]
  %v107 = vld [vmem:[%s1 + $0x140] sm:$0xff]
  %v108 = vld [vmem:[%s1 + $0x148] sm:$0xff]
  %v109 = vld [vmem:[%s1 + $0x150] sm:$0xff]
  %v110 = vld [vmem:[%s1 + $0x158] sm:$0xff]
  %v111 = vld [vmem:[%s1 + $0x160] sm:$0xff]
  %v112 = vld [vmem:[%s1 + $0x168] sm:$0xff]
  %v113 = vld [vmem:[%s1 + $0x170] sm:$0xff]
  %v114 = vld [vmem:[%s1 + $0x178] sm:$0xff]
  %v115 = vld [vmem:[%s1 + $0x180] sm:$0xff]
  %v116 = vld [vmem:[%s1 + $0x188] sm:$0xff]
  %v117 = vld [vmem:[%s1 + $0x190] sm:$0xff]
  %v118 = vld [vmem:[%s1 + $0x198] sm:$0xff]
  %v119 = vld [vmem:[%s1 + $0x1a0] sm:$0xff]
  %v120 = vld [vmem:[%s1 + $0x1a8] sm:$0xff]
  %v121 = vld [vmem:[%s1 + $0x1b0] sm:$0xff]
  %v122 = vld [vmem:[%s1 + $0x1b8] sm:$0xff]
  %v123 = vld [vmem:[%s1 + $0x1c0] sm:$0xff]
  %v124 = vld [vmem:[%s1 + $0x1c8] sm:$0xff]
  %v125 = vld [vmem:[%s1 + $0x1d0] sm:$0xff]
  %v126 = vld [vmem:[%s1 + $0x1d8] sm:$0xff]
  %v127 = vld [vmem:[%s1 + $0x1e0] sm:$0xff]
  %v128 = vld [vmem:[%s1 + $0x1e8] sm:$0xff]
  %v129 = vld [vmem:[%s1 + $0x1f0] sm:$0xff]
  %v130 = vld [vmem:[%s1 + $0x1f8] sm:$0xff]
  %v131 = vld [vmem:[%s1 + $0x200] sm:$0xff]
  %v132 = vld [vmem:[%s1 + $0x208] sm:$0xff]
  %v133 = vld [vmem:[%s1 + $0x210] sm:$0xff]
  %v134 = vld [vmem:[%s1 + $0x218] sm:$0xff]
  %v135 = vld [vmem:[%s1 + $0x220] sm:$0xff]
  %v136 = vld [vmem:[%s1 + $0x228] sm:$0xff]
  %v137 = vld [vmem:[%s1 + $0x230] sm:$0xff]
  %v138 = vld [vmem:[%s1 + $0x238] sm:$0xff]
  %v139 = vld [vmem:[%s1 + $0x240] sm:$0xff]
  %v140 = vld [vmem:[%s1 + $0x248] sm:$0xff]
  %v141 = vld [vmem:[%s1 + $0x250] sm:$0xff]
  %v142 = vld [vmem:[%s1 + $0x258] sm:$0xff]
  %v143 = vld [vmem:[%s1 + $0x260] sm:$0xff]
  %v144 = vld [vmem:[%s1 + $0x268] sm:$0xff]
  %v145 = vld [vmem:[%s1 + $0x270] sm:$0xff]
  %v146 = vld [vmem:[%s1 + $0x278] sm:$0xff]
  %v147 = vld [vmem:[%s1 + $0x280] sm:$0xff]
  %v148 = vld [vmem:[%s1 + $0x288] sm:$0xff]
  %v149 = vld [vmem:[%s1 + $0x290] sm:$0xff]
  %v150 = vld [vmem:[%s1 + $0x298] sm:$0xff]
  %v151 = vld [vmem:[%s1 + $0x2a0] sm:$0xff]
  %v152 = vld [vmem:[%s1 + $0x2a8] sm:$0xff]
  %v153 = vld [vmem:[%s1 + $0x2b0] sm:$0xff]
  %v154 = vld [vmem:[%s1 + $0x2b8] sm:$0xff]
  %v155 = vld [vmem:[%s1 + $0x2c0] sm:$0xff]
  %v156 = vld [vmem:[%s1 + $0x2c8] sm:$0xff]
  %v157 = vld [vmem:[%s1 + $0x2d0] sm:$0xff]
  %v158 = vld [vmem:[%s1 + $0x2d8] sm:$0xff]
  %v159 = vld [vmem:[%s1 + $0x2e0] sm:$0xff]
  %v160 = vld [vmem:[%s1 + $0x2e8] sm:$0xff]
  %v161 = vld [vmem:[%s1 + $0x2f0] sm:$0xff]
  %v162 = vld [vmem:[%s1 + $0x2f8] sm:$0xff]
  %v163 = vld [vmem:[%s1 + $0x300] sm:$0xff]
  %v164 = vld [vmem:[%s1 + $0x308] sm:$0xff]
  %v165 = vld [vmem:[%s1 + $0x310] sm:$0xff]
  %v166 = vld [vmem:[%s1 + $0x318] sm:$0xff]
  %v167 = vld [vmem:[%s1 + $0x320] sm:$0xff]
  %v168 = vld [vmem:[%s1 + $0x328] sm:$0xff]
  %v169 = vld [vmem:[%s1 + $0x330] sm:$0xff]
  %v170 = vld [vmem:[%s1 + $0x338] sm:$0xff]
  %v171 = vld [vmem:[%s1 + $0x340] sm:$0xff]
  %v172 = vld [vmem:[%s1 + $0x348] sm:$0xff]
  %v173 = vld [vmem:[%s1 + $0x350] sm:$0xff]
  %v174 = vld [vmem:[%s1 + $0x358] sm:$0xff]
  %v175 = vld [vmem:[%s1 + $0x360] sm:$0xff]
  %v176 = vld [vmem:[%s1 + $0x368] sm:$0xff]
  %v177 = vld [vmem:[%s1 + $0x370] sm:$0xff]
  %v178 = vld [vmem:[%s1 + $0x378] sm:$0xff]
  %v179 = vld [vmem:[%s1 + $0x380] sm:$0xff]
  %v180 = vld [vmem:[%s1 + $0x388] sm:$0xff]
  %v181 = vld [vmem:[%s1 + $0x390] sm:$0xff]
  %v182 = vld [vmem:[%s1 + $0x398] sm:$0xff]
  %v183 = vld [vmem:[%s1 + $0x3a0] sm:$0xff]
  %v184 = vld [vmem:[%s1 + $0x3a8] sm:$0xff]
  %v185 = vld [vmem:[%s1 + $0x3b0] sm:$0xff]
  %v186 = vld [vmem:[%s1 + $0x3b8] sm:$0xff]
  %v187 = vld [vmem:[%s1 + $0x3c0] sm:$0xff]
  %v188 = vld [vmem:[%s1 + $0x3c8] sm:$0xff]
  %v189 = vld [vmem:[%s1 + $0x3d0] sm:$0xff]
  %v190 = vld [vmem:[%s1 + $0x3d8] sm:$0xff]
  %v191 = vld [vmem:[%s1 + $0x3e0] sm:$0xff]
  %v192 = vld [vmem:[%s1 + $0x3e8] sm:$0xff]
  %v193 = vld [vmem:[%s1 + $0x3f0] sm:$0xff]
  %v194 = vld [vmem:[%s1 + $0x3f8] sm:$0xff]
  %v195 = vld [vmem:[%s1 + $0x400] sm:$0xff]
  %v196 = vld [vmem:[%s1 + $0x408] sm:$0xff]
  %v197 = vld [vmem:[%s1 + $0x410] sm:$0xff]
  %v198 = vld [vmem:[%s1 + $0x418] sm:$0xff]
  %v199 = vld [vmem:[%s1 + $0x420] sm:$0xff]
  %v200 = vld [vmem:[%s1 + $0x428] sm:$0xff]
  %v201 = vld [vmem:[%s1 + $0x430] sm:$0xff]
  %v202 = vld [vmem:[%s1 + $0x438] sm:$0xff]
  %v203 = vld [vmem:[%s1 + $0x440] sm:$0xff]
  %v204 = vld [vmem:[%s1 + $0x448] sm:$0xff]
  %v205 = vld [vmem:[%s1 + $0x450] sm:$0xff]
  %v206 = vld [vmem:[%s1 + $0x458] sm:$0xff]
  %v207 = vld [vmem:[%s1 + $0x460] sm:$0xff]
  %v208 = vld [vmem:[%s1 + $0x468] sm:$0xff]
  %v209 = vld [vmem:[%s1 + $0x470] sm:$0xff]
  %v210 = vld [vmem:[%s1 + $0x478] sm:$0xff]
  %v211 = vld [vmem:[%s1 + $0x480] sm:$0xff]
  %v212 = vld [vmem:[%s1 + $0x488] sm:$0xff]
  %v213 = vld [vmem:[%s1 + $0x490] sm:$0xff]
  %v214 = vld [vmem:[%s1 + $0x498] sm:$0xff]
  %v215 = vld [vmem:[%s1 + $0x4a0] sm:$0xff]
  %v216 = vld [vmem:[%s1 + $0x4a8] sm:$0xff]
  %v217 = vld [vmem:[%s1 + $0x4b0] sm:$0xff]
  %v218 = vld [vmem:[%s1 + $0x4b8] sm:$0xff]
  %v219 = vld [vmem:[%s1 + $0x4c0] sm:$0xff]
  %v220 = vld [vmem:[%s1 + $0x4c8] sm:$0xff]
  %v221 = vld [vmem:[%s1 + $0x4d0] sm:$0xff]
  %v222 = vld [vmem:[%s1 + $0x4d8] sm:$0xff]
  %v223 = vld [vmem:[%s1 + $0x4e0] sm:$0xff]
  %v224 = vld [vmem:[%s1 + $0x4e8] sm:$0xff]
  %v225 = vld [vmem:[%s1 + $0x4f0] sm:$0xff]
  %v226 = vld [vmem:[%s1 + $0x4f8] sm:$0xff]
  %v227 = vld [vmem:[%s1 + $0x500] sm:$0xff]
  %v228 = vld [vmem:[%s1 + $0x508] sm:$0xff]
  %v229 = vld [vmem:[%s1 + $0x510] sm:$0xff]
  %v230 = vld [vmem:[%s1 + $0x518] sm:$0xff]
  %v231 = vld [vmem:[%s1 + $0x520] sm:$0xff]
  %v232 = vld [vmem:[%s1 + $0x528] sm:$0xff]
  %v233 = vld [vmem:[%s1 + $0x530] sm:$0xff]
  %v234 = vld [vmem:[%s1 + $0x538] sm:$0xff]
  %v235 = vld [vmem:[%s1 + $0x540] sm:$0xff]
  %v236 = vld [vmem:[%s1 + $0x548] sm:$0xff]
  %v237 = vld [vmem:[%s1 + $0x550] sm:$0xff]
  %v238 = vld [vmem:[%s1 + $0x558] sm:$0xff]
  %v239 = vld [vmem:[%s1 + $0x560] sm:$0xff]
  %v240 = vld [vmem:[%s1 + $0x568] sm:$0xff]
  %v241 = vld [vmem:[%s1 + $0x570] sm:$0xff]
  %v242 = vld [vmem:[%s1 + $0x578] sm:$0xff]
  %v243 = vld [vmem:[%s1 + $0x580] sm:$0xff]
  %v244 = vld [vmem:[%s1 + $0x588] sm:$0xff]
  %v245 = vld [vmem:[%s1 + $0x590] sm:$0xff]
  %v246 = vld [vmem:[%s1 + $0x598] sm:$0xff]
  %v247 = vld [vmem:[%s1 + $0x5a0] sm:$0xff]
  %v248 = vld [vmem:[%s1 + $0x5a8] sm:$0xff]
  %v249 = vld [vmem:[%s1 + $0x5b0] sm:$0xff]
  %v250 = vld [vmem:[%s1 + $0x5b8] sm:$0xff]
  %v251 = vld [vmem:[%s1 + $0x5c0] sm:$0xff]
  %v252 = vld [vmem:[%s1 + $0x5c8] sm:$0xff]
  %v253 = vld [vmem:[%s1 + $0x5d0] sm:$0xff]
  %v254 = vld [vmem:[%s1 + $0x5d8] sm:$0xff]
  %v255 = vld [vmem:[%s1 + $0x5e0] sm:$0xff]
  %v256 = vld [vmem:[%s1 + $0x5e8] sm:$0xff]
  %v257 = vld [vmem:[%s1 + $0x5f0] sm:$0xff]
  %v258 = vld [vmem:[%s1 + $0x5f8] sm:$0xff]
  %v259 = vld [vmem:[%s1 + $0x600] sm:$0xff]
  %v260 = vld [vmem:[%s1 + $0x608] sm:$0xff]
  %v261 = vld [vmem:[%s1 + $0x610] sm:$0xff]
  %v262 = vld [vmem:[%s1 + $0x618] sm:$0xff]
  %v263 = vld [vmem:[%s1 + $0x620] sm:$0xff]
  %v264 = vld [vmem:[%s1 + $0x628] sm:$0xff]
  %v265 = vld [vmem:[%s1 + $0x630] sm:$0xff]
  %v266 = vld [vmem:[%s1 + $0x638] sm:$0xff]
  %v267 = vld [vmem:[%s1 + $0x640] sm:$0xff]
  %v268 = vld [vmem:[%s1 + $0x648] sm:$0xff]
  %v269 = vld [vmem:[%s1 + $0x650] sm:$0xff]
  %v270 = vld [vmem:[%s1 + $0x658] sm:$0xff]
  %v271 = vld [vmem:[%s1 + $0x660] sm:$0xff]
  %v272 = vld [vmem:[%s1 + $0x668] sm:$0xff]
  %v273 = vld [vmem:[%s1 + $0x670] sm:$0xff]
  %v274 = vld [vmem:[%s1 + $0x678] sm:$0xff]
  %v275 = vld [vmem:[%s1 + $0x680] sm:$0xff]
  %v276 = vld [vmem:[%s1 + $0x688] sm:$0xff]
  %v277 = vld [vmem:[%s1 + $0x690] sm:$0xff]
  %v278 = vld [vmem:[%s1 + $0x698] sm:$0xff]
  %v279 = vld [vmem:[%s1 + $0x6a0] sm:$0xff]
  %v280 = vld [vmem:[%s1 + $0x6a8] sm:$0xff]
  %v281 = vld [vmem:[%s1 + $0x6b0] sm:$0xff]
  %v282 = vld [vmem:[%s1 + $0x6b8] sm:$0xff]
  %v283 = vld [vmem:[%s1 + $0x6c0] sm:$0xff]
  %v284 = vld [vmem:[%s1 + $0x6c8] sm:$0xff]
  %v285 = vld [vmem:[%s1 + $0x6d0] sm:$0xff]
  %v286 = vld [vmem:[%s1 + $0x6d8] sm:$0xff]
  %v287 = vld [vmem:[%s1 + $0x6e0] sm:$0xff]
  %v288 = vld [vmem:[%s1 + $0x6e8] sm:$0xff]
  %v289 = vld [vmem:[%s1 + $0x6f0] sm:$0xff]
  %v290 = vld [vmem:[%s1 + $0x6f8] sm:$0xff]
  %v291 = vld [vmem:[%s1 + $0x700] sm:$0xff]
  %v292 = vld [vmem:[%s1 + $0x708] sm:$0xff]
  %v293 = vld [vmem:[%s1 + $0x710] sm:$0xff]
  %v294 = vld [vmem:[%s1 + $0x718] sm:$0xff]
  %v295 = vld [vmem:[%s1 + $0x720] sm:$0xff]
  %v296 = vld [vmem:[%s1 + $0x728] sm:$0xff]
  %v297 = vld [vmem:[%s1 + $0x730] sm:$0xff]
  %v298 = vld [vmem:[%s1 + $0x738] sm:$0xff]
  %v299 = vld [vmem:[%s1 + $0x740] sm:$0xff]
  %v300 = vld [vmem:[%s1 + $0x748] sm:$0xff]
  %v301 = vld [vmem:[%s1 + $0x750] sm:$0xff]
  %v302 = vld [vmem:[%s1 + $0x758] sm:$0xff]
  %v303 = vld [vmem:[%s1 + $0x760] sm:$0xff]
  %v304 = vld [vmem:[%s1 + $0x768] sm:$0xff]
  %v305 = vld [vmem:[%s1 + $0x770] sm:$0xff]
  %v306 = vld [vmem:[%s1 + $0x778] sm:$0xff]
  %v307 = vld [vmem:[%s1 + $0x780] sm:$0xff]
  %v308 = vld [vmem:[%s1 + $0x788] sm:$0xff]
  %v309 = vld [vmem:[%s1 + $0x790] sm:$0xff]
  %v310 = vld [vmem:[%s1 + $0x798] sm:$0xff]
  %v311 = vld [vmem:[%s1 + $0x7a0] sm:$0xff]
  %v312 = vld [vmem:[%s1 + $0x7a8] sm:$0xff]
  %v313 = vld [vmem:[%s1 + $0x7b0] sm:$0xff]
  %v314 = vld [vmem:[%s1 + $0x7b8] sm:$0xff]
  %v315 = vld [vmem:[%s1 + $0x7c0] sm:$0xff]
  %v316 = vld [vmem:[%s1 + $0x7c8] sm:$0xff]
  %v317 = vld [vmem:[%s1 + $0x7d0] sm:$0xff]
  %v318 = vld [vmem:[%s1 + $0x7d8] sm:$0xff]
  %v319 = vld [vmem:[%s1 + $0x7e0] sm:$0xff]
  %v320 = vld [vmem:[%s1 + $0x7e8] sm:$0xff]
  %v321 = vld [vmem:[%s1 + $0x7f0] sm:$0xff]
  %v322 = vld [vmem:[%s1 + $0x7f8] sm:$0xff]
  %v323 = vld [vmem:[%s1 + $0x800] sm:$0xff]
  %v324 = vld [vmem:[%s1 + $0x808] sm:$0xff]
  %v325 = vld [vmem:[%s1 + $0x810] sm:$0xff]
  %v326 = vld [vmem:[%s1 + $0x818] sm:$0xff]
  %v327 = vld [vmem:[%s1 + $0x820] sm:$0xff]
  %v328 = vld [vmem:[%s1 + $0x828] sm:$0xff]
  %v329 = vld [vmem:[%s1 + $0x830] sm:$0xff]
  %v330 = vld [vmem:[%s1 + $0x838] sm:$0xff]
  %v331 = vld [vmem:[%s1 + $0x840] sm:$0xff]
  %v332 = vld [vmem:[%s1 + $0x848] sm:$0xff]
  %v333 = vld [vmem:[%s1 + $0x850] sm:$0xff]
  %v334 = vld [vmem:[%s1 + $0x858] sm:$0xff]
  %v335 = vld [vmem:[%s1 + $0x860] sm:$0xff]
  %v336 = vld [vmem:[%s1 + $0x868] sm:$0xff]
  %v337 = vld [vmem:[%s1 + $0x870] sm:$0xff]
  %v338 = vld [vmem:[%s1 + $0x878] sm:$0xff]
  %v339 = vld [vmem:[%s1 + $0x880] sm:$0xff]
  %v340 = vld [vmem:[%s1 + $0x888] sm:$0xff]
  %v341 = vld [vmem:[%s1 + $0x890] sm:$0xff]
  %v342 = vld [vmem:[%s1 + $0x898] sm:$0xff]
  %v343 = vld [vmem:[%s1 + $0x8a0] sm:$0xff]
  %v344 = vld [vmem:[%s1 + $0x8a8] sm:$0xff]
  %v345 = vld [vmem:[%s1 + $0x8b0] sm:$0xff]
  %v346 = vld [vmem:[%s1 + $0x8b8] sm:$0xff]
  %v347 = vld [vmem:[%s1 + $0x8c0] sm:$0xff]
  %v348 = vld [vmem:[%s1 + $0x8c8] sm:$0xff]
  %v349 = vld [vmem:[%s1 + $0x8d0] sm:$0xff]
  %v350 = vld [vmem:[%s1 + $0x8d8] sm:$0xff]
  %v351 = vld [vmem:[%s1 + $0x8e0] sm:$0xff]
  %v352 = vld [vmem:[%s1 + $0x8e8] sm:$0xff]
  %v353 = vld [vmem:[%s1 + $0x8f0] sm:$0xff]
  %v354 = vld [vmem:[%s1 + $0x8f8] sm:$0xff]
  %v355 = vld [vmem:[%s1 + $0x900] sm:$0xff]
  %v356 = vld [vmem:[%s1 + $0x908] sm:$0xff]
  %v357 = vld [vmem:[%s1 + $0x910] sm:$0xff]
  %v358 = vld [vmem:[%s1 + $0x918] sm:$0xff]
  %v359 = vld [vmem:[%s1 + $0x920] sm:$0xff]
  %v360 = vld [vmem:[%s1 + $0x928] sm:$0xff]
  %v361 = vld [vmem:[%s1 + $0x930] sm:$0xff]
  %v362 = vld [vmem:[%s1 + $0x938] sm:$0xff]
  %v363 = vld [vmem:[%s1 + $0x940] sm:$0xff]
  %v364 = vld [vmem:[%s1 + $0x948] sm:$0xff]
  %v365 = vld [vmem:[%s1 + $0x950] sm:$0xff]
  %v366 = vld [vmem:[%s1 + $0x958] sm:$0xff]
  %v367 = vld [vmem:[%s1 + $0x960] sm:$0xff]
  %v368 = vld [vmem:[%s1 + $0x968] sm:$0xff]
  %v369 = vld [vmem:[%s1 + $0x970] sm:$0xff]
  %v370 = vld [vmem:[%s1 + $0x978] sm:$0xff]
  %v371 = vld [vmem:[%s1 + $0x980] sm:$0xff]
  %v372 = vld [vmem:[%s1 + $0x988] sm:$0xff]
  %v373 = vld [vmem:[%s1 + $0x990] sm:$0xff]
  %v374 = vld [vmem:[%s1 + $0x998] sm:$0xff]
  %v375 = vld [vmem:[%s1 + $0x9a0] sm:$0xff]
  %v376 = vld [vmem:[%s1 + $0x9a8] sm:$0xff]
  %v377 = vld [vmem:[%s1 + $0x9b0] sm:$0xff]
  %v378 = vld [vmem:[%s1 + $0x9b8] sm:$0xff]
  %v379 = vld [vmem:[%s1 + $0x9c0] sm:$0xff]
  %v380 = vld [vmem:[%s1 + $0x9c8] sm:$0xff]
  %v381 = vld [vmem:[%s1 + $0x9d0] sm:$0xff]
  %v382 = vld [vmem:[%s1 + $0x9d8] sm:$0xff]
  %v383 = vld [vmem:[%s1 + $0x9e0] sm:$0xff]
  %v384 = vld [vmem:[%s1 + $0x9e8] sm:$0xff]
  %v385 = vld [vmem:[%s1 + $0x9f0] sm:$0xff]
  %v386 = vld [vmem:[%s1 + $0x9f8] sm:$0xff]
  %v387 = vld [vmem:[%s1 + $0xa00] sm:$0xff]
  %v388 = vld [vmem:[%s1 + $0xa08] sm:$0xff]
  %v389 = vld [vmem:[%s1 + $0xa10] sm:$0xff]
  %v390 = vld [vmem:[%s1 + $0xa18] sm:$0xff]
  %v391 = vld [vmem:[%s1 + $0xa20] sm:$0xff]
  %v392 = vld [vmem:[%s1 + $0xa28] sm:$0xff]
  %v393 = vld [vmem:[%s1 + $0xa30] sm:$0xff]
  %v394 = vld [vmem:[%s1 + $0xa38] sm:$0xff]
  %v395 = vld [vmem:[%s1 + $0xa40] sm:$0xff]
  %v396 = vld [vmem:[%s1 + $0xa48] sm:$0xff]
  %v397 = vld [vmem:[%s1 + $0xa50] sm:$0xff]
  %v398 = vld [vmem:[%s1 + $0xa58] sm:$0xff]
  %v399 = vld [vmem:[%s1 + $0xa60] sm:$0xff]
  %v400 = vld [vmem:[%s1 + $0xa68] sm:$0xff]
  %v401 = vld [vmem:[%s1 + $0xa70] sm:$0xff]
  %v402 = vld [vmem:[%s1 + $0xa78] sm:$0xff]
  %v403 = vld [vmem:[%s1 + $0xa80] sm:$0xff]
  %v404 = vld [vmem:[%s1 + $0xa88] sm:$0xff]
  %v405 = vld [vmem:[%s1 + $0xa90] sm:$0xff]
  %v406 = vld [vmem:[%s1 + $0xa98] sm:$0xff]
  %v407 = vld [vmem:[%s1 + $0xaa0] sm:$0xff]
  %v408 = vld [vmem:[%s1 + $0xaa8] sm:$0xff]
  %v409 = vld [vmem:[%s1 + $0xab0] sm:$0xff]
  %v410 = vld [vmem:[%s1 + $0xab8] sm:$0xff]
  %v411 = vld [vmem:[%s1 + $0xac0] sm:$0xff]
  %v412 = vld [vmem:[%s1 + $0xac8] sm:$0xff]
  %v413 = vld [vmem:[%s1 + $0xad0] sm:$0xff]
  %v414 = vld [vmem:[%s1 + $0xad8] sm:$0xff]
  %v415 = vld [vmem:[%s1 + $0xae0] sm:$0xff]
  %v416 = vld [vmem:[%s1 + $0xae8] sm:$0xff]
  %v417 = vld [vmem:[%s1 + $0xaf0] sm:$0xff]
  %v418 = vld [vmem:[%s1 + $0xaf8] sm:$0xff]
  %v419 = vld [vmem:[%s1 + $0xb00] sm:$0xff]
  %v420 = vld [vmem:[%s1 + $0xb08] sm:$0xff]
  %v421 = vld [vmem:[%s1 + $0xb10] sm:$0xff]
  %v422 = vld [vmem:[%s1 + $0xb18] sm:$0xff]
  %v423 = vld [vmem:[%s1 + $0xb20] sm:$0xff]
  %v424 = vld [vmem:[%s1 + $0xb28] sm:$0xff]
  %v425 = vld [vmem:[%s1 + $0xb30] sm:$0xff]
  %v426 = vld [vmem:[%s1 + $0xb38] sm:$0xff]
  %v427 = vld [vmem:[%s1 + $0xb40] sm:$0xff]
  %v428 = vld [vmem:[%s1 + $0xb48] sm:$0xff]
  %v429 = vld [vmem:[%s1 + $0xb50] sm:$0xff]
  %v430 = vld [vmem:[%s1 + $0xb58] sm:$0xff]
  %v431 = vld [vmem:[%s1 + $0xb60] sm:$0xff]
  %v432 = vld [vmem:[%s1 + $0xb68] sm:$0xff]
  %v433 = vld [vmem:[%s1 + $0xb70] sm:$0xff]
  %v434 = vld [vmem:[%s1 + $0xb78] sm:$0xff]
  %v435 = vld [vmem:[%s1 + $0xb80] sm:$0xff]
  %v436 = vld [vmem:[%s1 + $0xb88] sm:$0xff]
  %v437 = vld [vmem:[%s1 + $0xb90] sm:$0xff]
  %v438 = vld [vmem:[%s1 + $0xb98] sm:$0xff]
  %v439 = vld [vmem:[%s1 + $0xba0] sm:$0xff]
  %v440 = vld [vmem:[%s1 + $0xba8] sm:$0xff]
  %v441 = vld [vmem:[%s1 + $0xbb0] sm:$0xff]
  %v442 = vld [vmem:[%s1 + $0xbb8] sm:$0xff]
  %v443 = vld [vmem:[%s1 + $0xbc0] sm:$0xff]
  %v444 = vld [vmem:[%s1 + $0xbc8] sm:$0xff]
  %v445 = vld [vmem:[%s1 + $0xbd0] sm:$0xff]
  %v446 = vld [vmem:[%s1 + $0xbd8] sm:$0xff]
  %v447 = vld [vmem:[%s1 + $0xbe0] sm:$0xff]
  %v448 = vld [vmem:[%s1 + $0xbe8] sm:$0xff]
  %v449 = vld [vmem:[%s1 + $0xbf0] sm:$0xff]
  %v450 = vld [vmem:[%s1 + $0xbf8] sm:$0xff]
  %v451 = vld [vmem:[%s1 + $0xc00] sm:$0xff]
  %v452 = vld [vmem:[%s1 + $0xc08] sm:$0xff]
  %v453 = vld [vmem:[%s1 + $0xc10] sm:$0xff]
  %v454 = vld [vmem:[%s1 + $0xc18] sm:$0xff]
  %v455 = vld [vmem:[%s1 + $0xc20] sm:$0xff]
  %v456 = vld [vmem:[%s1 + $0xc28] sm:$0xff]
  %v457 = vld [vmem:[%s1 + $0xc30] sm:$0xff]
  %v458 = vld [vmem:[%s1 + $0xc38] sm:$0xff]
  %v459 = vld [vmem:[%s1 + $0xc40] sm:$0xff]
  %v460 = vld [vmem:[%s1 + $0xc48] sm:$0xff]
  %v461 = vld [vmem:[%s1 + $0xc50] sm:$0xff]
  %v462 = vld [vmem:[%s1 + $0xc58] sm:$0xff]
  %v463 = vld [vmem:[%s1 + $0xc60] sm:$0xff]
  %v464 = vld [vmem:[%s1 + $0xc68] sm:$0xff]
  %v465 = vld [vmem:[%s1 + $0xc70] sm:$0xff]
  %v466 = vld [vmem:[%s1 + $0xc78] sm:$0xff]
  %v467 = vld [vmem:[%s1 + $0xc80] sm:$0xff]
  %v468 = vld [vmem:[%s1 + $0xc88] sm:$0xff]
  %v469 = vld [vmem:[%s1 + $0xc90] sm:$0xff]
  %v470 = vld [vmem:[%s1 + $0xc98] sm:$0xff]
  %v471 = vld [vmem:[%s1 + $0xca0] sm:$0xff]
  %v472 = vld [vmem:[%s1 + $0xca8] sm:$0xff]
  %v473 = vld [vmem:[%s1 + $0xcb0] sm:$0xff]
  %v474 = vld [vmem:[%s1 + $0xcb8] sm:$0xff]
  %v475 = vld [vmem:[%s1 + $0xcc0] sm:$0xff]
  %v476 = vld [vmem:[%s1 + $0xcc8] sm:$0xff]
  %v477 = vld [vmem:[%s1 + $0xcd0] sm:$0xff]
  %v478 = vld [vmem:[%s1 + $0xcd8] sm:$0xff]
  %v479 = vld [vmem:[%s1 + $0xce0] sm:$0xff]
  %v480 = vld [vmem:[%s1 + $0xce8] sm:$0xff]
  %v481 = vld [vmem:[%s1 + $0xcf0] sm:$0xff]
  %v482 = vld [vmem:[%s1 + $0xcf8] sm:$0xff]
  %v483 = vld [vmem:[%s1 + $0xd00] sm:$0xff]
  %v484 = vld [vmem:[%s1 + $0xd08] sm:$0xff]
  %v485 = vld [vmem:[%s1 + $0xd10] sm:$0xff]
  %v486 = vld [vmem:[%s1 + $0xd18] sm:$0xff]
  %v487 = vld [vmem:[%s1 + $0xd20] sm:$0xff]
  %v488 = vld [vmem:[%s1 + $0xd28] sm:$0xff]
  %v489 = vld [vmem:[%s1 + $0xd30] sm:$0xff]
  %v490 = vld [vmem:[%s1 + $0xd38] sm:$0xff]
  %v491 = vld [vmem:[%s1 + $0xd40] sm:$0xff]
  %v492 = vld [vmem:[%s1 + $0xd48] sm:$0xff]
  %v493 = vld [vmem:[%s1 + $0xd50] sm:$0xff]
  %v494 = vld [vmem:[%s1 + $0xd58] sm:$0xff]
  %v495 = vld [vmem:[%s1 + $0xd60] sm:$0xff]
  %v496 = vld [vmem:[%s1 + $0xd68] sm:$0xff]
  %v497 = vld [vmem:[%s1 + $0xd70] sm:$0xff]
  %v498 = vld [vmem:[%s1 + $0xd78] sm:$0xff]
  %v499 = vld [vmem:[%s1 + $0xd80] sm:$0xff]
  %v500 = vld [vmem:[%s1 + $0xd88] sm:$0xff]
  %v501 = vld [vmem:[%s1 + $0xd90] sm:$0xff]
  %v502 = vld [vmem:[%s1 + $0xd98] sm:$0xff]
  %v503 = vld [vmem:[%s1 + $0xda0] sm:$0xff]
  %v504 = vld [vmem:[%s1 + $0xda8] sm:$0xff]
  %v505 = vld [vmem:[%s1 + $0xdb0] sm:$0xff]
  %v506 = vld [vmem:[%s1 + $0xdb8] sm:$0xff]
  %v507 = vld [vmem:[%s1 + $0xdc0] sm:$0xff]
  %v508 = vld [vmem:[%s1 + $0xdc8] sm:$0xff]
  %v509 = vld [vmem:[%s1 + $0xdd0] sm:$0xff]
  %v510 = vld [vmem:[%s1 + $0xdd8] sm:$0xff]
  %v511 = vld [vmem:[%s1 + $0xde0] sm:$0xff]
  %v512 = vld [vmem:[%s1 + $0xde8] sm:$0xff]
  %v513 = vld [vmem:[%s1 + $0xdf0] sm:$0xff]
  %v514 = vld [vmem:[%s1 + $0xdf8] sm:$0xff]
  %v515 = vld [vmem:[%s1 + $0xe00] sm:$0xff]
  %v516 = vld [vmem:[%s1 + $0xe08] sm:$0xff]
  %v517 = vld [vmem:[%s1 + $0xe10] sm:$0xff]
  %v518 = vld [vmem:[%s1 + $0xe18] sm:$0xff]
  %v519 = vld [vmem:[%s1 + $0xe20] sm:$0xff]
  %v520 = vld [vmem:[%s1 + $0xe28] sm:$0xff]
  %v521 = vld [vmem:[%s1 + $0xe30] sm:$0xff]
  %v522 = vld [vmem:[%s1 + $0xe38] sm:$0xff]
  %v523 = vld [vmem:[%s1 + $0xe40] sm:$0xff]
  %v524 = vld [vmem:[%s1 + $0xe48] sm:$0xff]
  %v525 = vld [vmem:[%s1 + $0xe50] sm:$0xff]
  %v526 = vld [vmem:[%s1 + $0xe58] sm:$0xff]
  %v527 = vld [vmem:[%s1 + $0xe60] sm:$0xff]
  %v528 = vld [vmem:[%s1 + $0xe68] sm:$0xff]
  %v529 = vld [vmem:[%s1 + $0xe70] sm:$0xff]
  %v530 = vld [vmem:[%s1 + $0xe78] sm:$0xff]
  %v531 = vld [vmem:[%s1 + $0xe80] sm:$0xff]
  %v532 = vld [vmem:[%s1 + $0xe88] sm:$0xff]
  %v533 = vld [vmem:[%s1 + $0xe90] sm:$0xff]
  %v534 = vld [vmem:[%s1 + $0xe98] sm:$0xff]
  %v535 = vld [vmem:[%s1 + $0xea0] sm:$0xff]
  %v536 = vld [vmem:[%s1 + $0xea8] sm:$0xff]
  %v537 = vld [vmem:[%s1 + $0xeb0] sm:$0xff]
  %v538 = vld [vmem:[%s1 + $0xeb8] sm:$0xff]
  %v539 = vld [vmem:[%s1 + $0xec0] sm:$0xff]
  %v540 = vld [vmem:[%s1 + $0xec8] sm:$0xff]
  %v541 = vld [vmem:[%s1 + $0xed0] sm:$0xff]
  %v542 = vld [vmem:[%s1 + $0xed8] sm:$0xff]
  %v543 = vld [vmem:[%s1 + $0xee0] sm:$0xff]
  %v544 = vld [vmem:[%s1 + $0xee8] sm:$0xff]
  %v545 = vld [vmem:[%s1 + $0xef0] sm:$0xff]
  %v546 = vld [vmem:[%s1 + $0xef8] sm:$0xff]
  %v547 = vld [vmem:[%s1 + $0xf00] sm:$0xff]
  %v548 = vld [vmem:[%s1 + $0xf08] sm:$0xff]
  %v549 = vld [vmem:[%s1 + $0xf10] sm:$0xff]
  %v550 = vld [vmem:[%s1 + $0xf18] sm:$0xff]
  %v551 = vld [vmem:[%s1 + $0xf20] sm:$0xff]
  %v552 = vld [vmem:[%s1 + $0xf28] sm:$0xff]
  %v553 = vld [vmem:[%s1 + $0xf30] sm:$0xff]
  %v554 = vld [vmem:[%s1 + $0xf38] sm:$0xff]
  %v555 = vld [vmem:[%s1 + $0xf40] sm:$0xff]
  %v556 = vld [vmem:[%s1 + $0xf48] sm:$0xff]
  %v557 = vld [vmem:[%s1 + $0xf50] sm:$0xff]
  %v558 = vld [vmem:[%s1 + $0xf58] sm:$0xff]
  %v559 = vld [vmem:[%s1 + $0xf60] sm:$0xff]
  %v560 = vld [vmem:[%s1 + $0xf68] sm:$0xff]
  %v561 = vld [vmem:[%s1 + $0xf70] sm:$0xff]
  %v562 = vld [vmem:[%s1 + $0xf78] sm:$0xff]
  %v563 = vld [vmem:[%s1 + $0xf80] sm:$0xff]
  %v564 = vld [vmem:[%s1 + $0xf88] sm:$0xff]
  %v565 = vld [vmem:[%s1 + $0xf90] sm:$0xff]
  %v566 = vld [vmem:[%s1 + $0xf98] sm:$0xff]
  %v567 = vld [vmem:[%s1 + $0xfa0] sm:$0xff]
  %v568 = vld [vmem:[%s1 + $0xfa8] sm:$0xff]
  %v569 = vld [vmem:[%s1 + $0xfb0] sm:$0xff]
  %v570 = vld [vmem:[%s1 + $0xfb8] sm:$0xff]
  %v571 = vld [vmem:[%s1 + $0xfc0] sm:$0xff]
  %v572 = vld [vmem:[%s1 + $0xfc8] sm:$0xff]
  %v573 = vld [vmem:[%s1 + $0xfd0] sm:$0xff]
  %v574 = vld [vmem:[%s1 + $0xfd8] sm:$0xff]
  %v575 = vld [vmem:[%s1 + $0xfe0] sm:$0xff]
  %v576 = vld [vmem:[%s1 + $0xfe8] sm:$0xff]
  %v577 = vld [vmem:[%s1 + $0xff0] sm:$0xff]
  %v578 = vld [vmem:[%s1 + $0xff8] sm:$0xff]
  %v579 = vld [vmem:[%s1 + $0x1000] sm:$0xff]
  %v580 = vld [vmem:[%s1 + $0x1008] sm:$0xff]
  %v581 = vld [vmem:[%s1 + $0x1010] sm:$0xff]
  %v582 = vld [vmem:[%s1 + $0x1018] sm:$0xff]
  %v583 = vld [vmem:[%s1 + $0x1020] sm:$0xff]
  %v584 = vld [vmem:[%s1 + $0x1028] sm:$0xff]
  %v585 = vld [vmem:[%s1 + $0x1030] sm:$0xff]
  %v586 = vld [vmem:[%s1 + $0x1038] sm:$0xff]
  %v587 = vld [vmem:[%s1 + $0x1040] sm:$0xff]
  %v588 = vld [vmem:[%s1 + $0x1048] sm:$0xff]
  %v589 = vld [vmem:[%s1 + $0x1050] sm:$0xff]
  %v590 = vld [vmem:[%s1 + $0x1058] sm:$0xff]
  %v591 = vld [vmem:[%s1 + $0x1060] sm:$0xff]
  %v592 = vld [vmem:[%s1 + $0x1068] sm:$0xff]
  %v593 = vld [vmem:[%s1 + $0x1070] sm:$0xff]
  %v594 = vld [vmem:[%s1 + $0x1078] sm:$0xff]
  %v595 = vld [vmem:[%s1 + $0x1080] sm:$0xff]
  %v596 = vld [vmem:[%s1 + $0x1088] sm:$0xff]
  %v597 = vld [vmem:[%s1 + $0x1090] sm:$0xff]
  %v598 = vld [vmem:[%s1 + $0x1098] sm:$0xff]
  %v599 = vld [vmem:[%s1 + $0x10a0] sm:$0xff]
  %v600 = vld [vmem:[%s1 + $0x10a8] sm:$0xff]
  %v601 = vld [vmem:[%s1 + $0x10b0] sm:$0xff]
  %v602 = vld [vmem:[%s1 + $0x10b8] sm:$0xff]
  %v603 = vld [vmem:[%s1 + $0x10c0] sm:$0xff]
  %v604 = vld [vmem:[%s1 + $0x10c8] sm:$0xff]
  %v605 = vld [vmem:[%s1 + $0x10d0] sm:$0xff]
  %v606 = vld [vmem:[%s1 + $0x10d8] sm:$0xff]
  %v607 = vld [vmem:[%s1 + $0x10e0] sm:$0xff]
  %v608 = vld [vmem:[%s1 + $0x10e8] sm:$0xff]
  %v609 = vld [vmem:[%s1 + $0x10f0] sm:$0xff]
  %v610 = vld [vmem:[%s1 + $0x10f8] sm:$0xff]
  %v611 = vld [vmem:[%s1 + $0x1100] sm:$0xff]
  %v612 = vld [vmem:[%s1 + $0x1108] sm:$0xff]
  %v613 = vld [vmem:[%s1 + $0x1110] sm:$0xff]
  %v614 = vld [vmem:[%s1 + $0x1118] sm:$0xff]
  %v615 = vld [vmem:[%s1 + $0x1120] sm:$0xff]
  %v616 = vld [vmem:[%s1 + $0x1128] sm:$0xff]
  %v617 = vld [vmem:[%s1 + $0x1130] sm:$0xff]
  %v618 = vld [vmem:[%s1 + $0x1138] sm:$0xff]
  %v619 = vld [vmem:[%s1 + $0x1140] sm:$0xff]
  %v620 = vld [vmem:[%s1 + $0x1148] sm:$0xff]
  %v621 = vld [vmem:[%s1 + $0x1150] sm:$0xff]
  %v622 = vld [vmem:[%s1 + $0x1158] sm:$0xff]
  %v623 = vld [vmem:[%s1 + $0x1160] sm:$0xff]
  %v624 = vld [vmem:[%s1 + $0x1168] sm:$0xff]
  %v625 = vld [vmem:[%s1 + $0x1170] sm:$0xff]
  %v626 = vld [vmem:[%s1 + $0x1178] sm:$0xff]
  %v627 = vld [vmem:[%s1 + $0x1180] sm:$0xff]
  %v628 = vld [vmem:[%s1 + $0x1188] sm:$0xff]
  %v629 = vld [vmem:[%s1 + $0x1190] sm:$0xff]
  %v630 = vld [vmem:[%s1 + $0x1198] sm:$0xff]
  %v631 = vld [vmem:[%s1 + $0x11a0] sm:$0xff]
  %v632 = vld [vmem:[%s1 + $0x11a8] sm:$0xff]
  %v633 = vld [vmem:[%s1 + $0x11b0] sm:$0xff]
  %v634 = vld [vmem:[%s1 + $0x11b8] sm:$0xff]
  %v635 = vld [vmem:[%s1 + $0x11c0] sm:$0xff]
  %v636 = vld [vmem:[%s1 + $0x11c8] sm:$0xff]
  %v637 = vld [vmem:[%s1 + $0x11d0] sm:$0xff]
  %v638 = vld [vmem:[%s1 + $0x11d8] sm:$0xff]
  %v639 = vld [vmem:[%s1 + $0x11e0] sm:$0xff]
  %v640 = vld [vmem:[%s1 + $0x11e8] sm:$0xff]
  %v641 = vld [vmem:[%s1 + $0x11f0] sm:$0xff]
  %v642 = vld [vmem:[%s1 + $0x11f8] sm:$0xff]
  %v643 = vld [vmem:[%s2] sm:$0xf]
  %v645 = vlaneseq
  %v646 = vshrl.u32 %v645, 7
  %v647 = vsub.s32 0, %v646
  %v648 = vrot.slane %v643, %v647
  %v649 = vlaneseq
  %v650 = vshrl.u32 %v649, 7
  %v651 = vsub.s32 1, %v650
  %v652 = vrot.slane %v643, %v651
  %v653 = vlaneseq
  %v654 = vshrl.u32 %v653, 7
  %v655 = vsub.s32 2, %v654
  %v656 = vrot.slane %v643, %v655
  %v657 = vlaneseq
  %v658 = vshrl.u32 %v657, 7
  %v659 = vsub.s32 3, %v658
  %v660 = vrot.slane %v643, %v659
  %v701 = vunpack.c.l.b16 %v31
  %v702 = vunpack.c.h.b16 %v31
  %v703 = vunpack.c.l.b16 %v32
  %v704 = vunpack.c.h.b16 %v32
  %v705 = vunpack.c.l.b16 %v33
  %v706 = vunpack.c.h.b16 %v33
  %v707 = vunpack.c.l.b16 %v34
  %v708 = vunpack.c.h.b16 %v34
  %v709 = vunpack.c.l.b16 %v35
  %v710 = vunpack.c.h.b16 %v35
  %v711 = vunpack.c.l.b16 %v36
  %v712 = vunpack.c.h.b16 %v36
  %v713 = vunpack.c.l.b16 %v37
  %v714 = vunpack.c.h.b16 %v37
  %v715 = vunpack.c.l.b16 %v38
  %v716 = vunpack.c.h.b16 %v38
  %v717 = vunpack.c.l.b16 %v39
  %v718 = vunpack.c.h.b16 %v39
  %v719 = vunpack.c.l.b16 %v40
  %v720 = vunpack.c.h.b16 %v40
  %v721 = vunpack.c.l.b16 %v41
  %v722 = vunpack.c.h.b16 %v41
  %v723 = vunpack.c.l.b16 %v42
  %v724 = vunpack.c.h.b16 %v42
  %v725 = vunpack.c.l.b16 %v43
  %v726 = vunpack.c.h.b16 %v43
  %v727 = vunpack.c.l.b16 %v44
  %v728 = vunpack.c.h.b16 %v44
  %v729 = vunpack.c.l.b16 %v45
  %v730 = vunpack.c.h.b16 %v45
  %v731 = vunpack.c.l.b16 %v46
  %v732 = vunpack.c.h.b16 %v46
  %v733 = vunpack.c.l.b16 %v47
  %v734 = vunpack.c.h.b16 %v47
  %v735 = vunpack.c.l.b16 %v48
  %v736 = vunpack.c.h.b16 %v48
  %v737 = vunpack.c.l.b16 %v49
  %v738 = vunpack.c.h.b16 %v49
  %v739 = vunpack.c.l.b16 %v50
  %v740 = vunpack.c.h.b16 %v50
  %v741 = vunpack.c.l.b16 %v51
  %v742 = vunpack.c.h.b16 %v51
  %v743 = vunpack.c.l.b16 %v52
  %v744 = vunpack.c.h.b16 %v52
  %v745 = vunpack.c.l.b16 %v53
  %v746 = vunpack.c.h.b16 %v53
  %v747 = vunpack.c.l.b16 %v54
  %v748 = vunpack.c.h.b16 %v54
  %v749 = vunpack.c.l.b16 %v55
  %v750 = vunpack.c.h.b16 %v55
  %v751 = vunpack.c.l.b16 %v56
  %v752 = vunpack.c.h.b16 %v56
  %v753 = vunpack.c.l.b16 %v57
  %v754 = vunpack.c.h.b16 %v57
  %v755 = vunpack.c.l.b16 %v58
  %v756 = vunpack.c.h.b16 %v58
  %v757 = vunpack.c.l.b16 %v59
  %v758 = vunpack.c.h.b16 %v59
  %v759 = vunpack.c.l.b16 %v60
  %v760 = vunpack.c.h.b16 %v60
  %v761 = vunpack.c.l.b16 %v61
  %v762 = vunpack.c.h.b16 %v61
  %v763 = vunpack.c.l.b16 %v62
  %v764 = vunpack.c.h.b16 %v62
  %v765 = vunpack.c.l.b16 %v63
  %v766 = vunpack.c.h.b16 %v63
  %v767 = vunpack.c.l.b16 %v64
  %v768 = vunpack.c.h.b16 %v64
  %v769 = vunpack.c.l.b16 %v65
  %v770 = vunpack.c.h.b16 %v65
  %v771 = vunpack.c.l.b16 %v66
  %v772 = vunpack.c.h.b16 %v66
  %v773 = vpack.c.b16 %v719, %v701
  %v774 = vpack.c.b16 %v720, %v702
  %v775 = vpack.c.b16 %v721, %v703
  %v776 = vpack.c.b16 %v722, %v704
  %v777 = vpack.c.b16 %v723, %v705
  %v778 = vpack.c.b16 %v724, %v706
  %v779 = vpack.c.b16 %v725, %v707
  %v780 = vpack.c.b16 %v726, %v708
  %v781 = vpack.c.b16 %v727, %v709
  %v782 = vpack.c.b16 %v728, %v710
  %v783 = vpack.c.b16 %v729, %v711
  %v784 = vpack.c.b16 %v730, %v712
  %v785 = vpack.c.b16 %v731, %v713
  %v786 = vpack.c.b16 %v732, %v714
  %v787 = vpack.c.b16 %v733, %v715
  %v788 = vpack.c.b16 %v734, %v716
  %v789 = vpack.c.b16 %v735, %v717
  %v790 = vpack.c.b16 %v736, %v718
  %v791 = vpack.c.b16 %v755, %v737
  %v792 = vpack.c.b16 %v756, %v738
  %v793 = vpack.c.b16 %v757, %v739
  %v794 = vpack.c.b16 %v758, %v740
  %v795 = vpack.c.b16 %v759, %v741
  %v796 = vpack.c.b16 %v760, %v742
  %v797 = vpack.c.b16 %v761, %v743
  %v798 = vpack.c.b16 %v762, %v744
  %v799 = vpack.c.b16 %v763, %v745
  %v800 = vpack.c.b16 %v764, %v746
  %v801 = vpack.c.b16 %v765, %v747
  %v802 = vpack.c.b16 %v766, %v748
  %v803 = vpack.c.b16 %v767, %v749
  %v804 = vpack.c.b16 %v768, %v750
  %v805 = vpack.c.b16 %v769, %v751
  %v806 = vpack.c.b16 %v770, %v752
  %v807 = vpack.c.b16 %v771, %v753
  %v808 = vpack.c.b16 %v772, %v754
  %v1421 = vunpack.c.l.b16 %v67
  %v1422 = vunpack.c.h.b16 %v67
  %v1423 = vunpack.c.l.b16 %v68
  %v1424 = vunpack.c.h.b16 %v68
  %v1425 = vunpack.c.l.b16 %v69
  %v1426 = vunpack.c.h.b16 %v69
  %v1427 = vunpack.c.l.b16 %v70
  %v1428 = vunpack.c.h.b16 %v70
  %v1429 = vunpack.c.l.b16 %v71
  %v1430 = vunpack.c.h.b16 %v71
  %v1431 = vunpack.c.l.b16 %v72
  %v1432 = vunpack.c.h.b16 %v72
  %v1433 = vunpack.c.l.b16 %v73
  %v1434 = vunpack.c.h.b16 %v73
  %v1435 = vunpack.c.l.b16 %v74
  %v1436 = vunpack.c.h.b16 %v74
  %v1437 = vunpack.c.l.b16 %v75
  %v1438 = vunpack.c.h.b16 %v75
  %v1439 = vunpack.c.l.b16 %v76
  %v1440 = vunpack.c.h.b16 %v76
  %v1441 = vunpack.c.l.b16 %v77
  %v1442 = vunpack.c.h.b16 %v77
  %v1443 = vunpack.c.l.b16 %v78
  %v1444 = vunpack.c.h.b16 %v78
  %v1445 = vunpack.c.l.b16 %v79
  %v1446 = vunpack.c.h.b16 %v79
  %v1447 = vunpack.c.l.b16 %v80
  %v1448 = vunpack.c.h.b16 %v80
  %v1449 = vunpack.c.l.b16 %v81
  %v1450 = vunpack.c.h.b16 %v81
  %v1451 = vunpack.c.l.b16 %v82
  %v1452 = vunpack.c.h.b16 %v82
  %v1453 = vunpack.c.l.b16 %v83
  %v1454 = vunpack.c.h.b16 %v83
  %v1455 = vunpack.c.l.b16 %v84
  %v1456 = vunpack.c.h.b16 %v84
  %v1457 = vunpack.c.l.b16 %v85
  %v1458 = vunpack.c.h.b16 %v85
  %v1459 = vunpack.c.l.b16 %v86
  %v1460 = vunpack.c.h.b16 %v86
  %v1461 = vunpack.c.l.b16 %v87
  %v1462 = vunpack.c.h.b16 %v87
  %v1463 = vunpack.c.l.b16 %v88
  %v1464 = vunpack.c.h.b16 %v88
  %v1465 = vunpack.c.l.b16 %v89
  %v1466 = vunpack.c.h.b16 %v89
  %v1467 = vunpack.c.l.b16 %v90
  %v1468 = vunpack.c.h.b16 %v90
  %v1469 = vunpack.c.l.b16 %v91
  %v1470 = vunpack.c.h.b16 %v91
  %v1471 = vunpack.c.l.b16 %v92
  %v1472 = vunpack.c.h.b16 %v92
  %v1473 = vunpack.c.l.b16 %v93
  %v1474 = vunpack.c.h.b16 %v93
  %v1475 = vunpack.c.l.b16 %v94
  %v1476 = vunpack.c.h.b16 %v94
  %v1477 = vunpack.c.l.b16 %v95
  %v1478 = vunpack.c.h.b16 %v95
  %v1479 = vunpack.c.l.b16 %v96
  %v1480 = vunpack.c.h.b16 %v96
  %v1481 = vunpack.c.l.b16 %v97
  %v1482 = vunpack.c.h.b16 %v97
  %v1483 = vunpack.c.l.b16 %v98
  %v1484 = vunpack.c.h.b16 %v98
  %v1485 = vunpack.c.l.b16 %v99
  %v1486 = vunpack.c.h.b16 %v99
  %v1487 = vunpack.c.l.b16 %v100
  %v1488 = vunpack.c.h.b16 %v100
  %v1489 = vunpack.c.l.b16 %v101
  %v1490 = vunpack.c.h.b16 %v101
  %v1491 = vunpack.c.l.b16 %v102
  %v1492 = vunpack.c.h.b16 %v102
  %v1493 = vunpack.c.l.b16 %v103
  %v1494 = vunpack.c.h.b16 %v103
  %v1495 = vunpack.c.l.b16 %v104
  %v1496 = vunpack.c.h.b16 %v104
  %v1497 = vunpack.c.l.b16 %v105
  %v1498 = vunpack.c.h.b16 %v105
  %v1499 = vunpack.c.l.b16 %v106
  %v1500 = vunpack.c.h.b16 %v106
  %v1501 = vunpack.c.l.b16 %v107
  %v1502 = vunpack.c.h.b16 %v107
  %v1503 = vunpack.c.l.b16 %v108
  %v1504 = vunpack.c.h.b16 %v108
  %v1505 = vunpack.c.l.b16 %v109
  %v1506 = vunpack.c.h.b16 %v109
  %v1507 = vunpack.c.l.b16 %v110
  %v1508 = vunpack.c.h.b16 %v110
  %v1509 = vunpack.c.l.b16 %v111
  %v1510 = vunpack.c.h.b16 %v111
  %v1511 = vunpack.c.l.b16 %v112
  %v1512 = vunpack.c.h.b16 %v112
  %v1513 = vunpack.c.l.b16 %v113
  %v1514 = vunpack.c.h.b16 %v113
  %v1515 = vunpack.c.l.b16 %v114
  %v1516 = vunpack.c.h.b16 %v114
  %v1517 = vunpack.c.l.b16 %v115
  %v1518 = vunpack.c.h.b16 %v115
  %v1519 = vunpack.c.l.b16 %v116
  %v1520 = vunpack.c.h.b16 %v116
  %v1521 = vunpack.c.l.b16 %v117
  %v1522 = vunpack.c.h.b16 %v117
  %v1523 = vunpack.c.l.b16 %v118
  %v1524 = vunpack.c.h.b16 %v118
  %v1525 = vunpack.c.l.b16 %v119
  %v1526 = vunpack.c.h.b16 %v119
  %v1527 = vunpack.c.l.b16 %v120
  %v1528 = vunpack.c.h.b16 %v120
  %v1529 = vunpack.c.l.b16 %v121
  %v1530 = vunpack.c.h.b16 %v121
  %v1531 = vunpack.c.l.b16 %v122
  %v1532 = vunpack.c.h.b16 %v122
  %v1533 = vunpack.c.l.b16 %v123
  %v1534 = vunpack.c.h.b16 %v123
  %v1535 = vunpack.c.l.b16 %v124
  %v1536 = vunpack.c.h.b16 %v124
  %v1537 = vunpack.c.l.b16 %v125
  %v1538 = vunpack.c.h.b16 %v125
  %v1539 = vunpack.c.l.b16 %v126
  %v1540 = vunpack.c.h.b16 %v126
  %v1541 = vunpack.c.l.b16 %v127
  %v1542 = vunpack.c.h.b16 %v127
  %v1543 = vunpack.c.l.b16 %v128
  %v1544 = vunpack.c.h.b16 %v128
  %v1545 = vunpack.c.l.b16 %v129
  %v1546 = vunpack.c.h.b16 %v129
  %v1547 = vunpack.c.l.b16 %v130
  %v1548 = vunpack.c.h.b16 %v130
  %v1549 = vunpack.c.l.b16 %v131
  %v1550 = vunpack.c.h.b16 %v131
  %v1551 = vunpack.c.l.b16 %v132
  %v1552 = vunpack.c.h.b16 %v132
  %v1553 = vunpack.c.l.b16 %v133
  %v1554 = vunpack.c.h.b16 %v133
  %v1555 = vunpack.c.l.b16 %v134
  %v1556 = vunpack.c.h.b16 %v134
  %v1557 = vunpack.c.l.b16 %v135
  %v1558 = vunpack.c.h.b16 %v135
  %v1559 = vunpack.c.l.b16 %v136
  %v1560 = vunpack.c.h.b16 %v136
  %v1561 = vunpack.c.l.b16 %v137
  %v1562 = vunpack.c.h.b16 %v137
  %v1563 = vunpack.c.l.b16 %v138
  %v1564 = vunpack.c.h.b16 %v138
  %v1565 = vunpack.c.l.b16 %v139
  %v1566 = vunpack.c.h.b16 %v139
  %v1567 = vunpack.c.l.b16 %v140
  %v1568 = vunpack.c.h.b16 %v140
  %v1569 = vunpack.c.l.b16 %v141
  %v1570 = vunpack.c.h.b16 %v141
  %v1571 = vunpack.c.l.b16 %v142
  %v1572 = vunpack.c.h.b16 %v142
  %v1573 = vunpack.c.l.b16 %v143
  %v1574 = vunpack.c.h.b16 %v143
  %v1575 = vunpack.c.l.b16 %v144
  %v1576 = vunpack.c.h.b16 %v144
  %v1577 = vunpack.c.l.b16 %v145
  %v1578 = vunpack.c.h.b16 %v145
  %v1579 = vunpack.c.l.b16 %v146
  %v1580 = vunpack.c.h.b16 %v146
  %v1581 = vunpack.c.l.b16 %v147
  %v1582 = vunpack.c.h.b16 %v147
  %v1583 = vunpack.c.l.b16 %v148
  %v1584 = vunpack.c.h.b16 %v148
  %v1585 = vunpack.c.l.b16 %v149
  %v1586 = vunpack.c.h.b16 %v149
  %v1587 = vunpack.c.l.b16 %v150
  %v1588 = vunpack.c.h.b16 %v150
  %v1589 = vunpack.c.l.b16 %v151
  %v1590 = vunpack.c.h.b16 %v151
  %v1591 = vunpack.c.l.b16 %v152
  %v1592 = vunpack.c.h.b16 %v152
  %v1593 = vunpack.c.l.b16 %v153
  %v1594 = vunpack.c.h.b16 %v153
  %v1595 = vunpack.c.l.b16 %v154
  %v1596 = vunpack.c.h.b16 %v154
  %v1597 = vunpack.c.l.b16 %v155
  %v1598 = vunpack.c.h.b16 %v155
  %v1599 = vunpack.c.l.b16 %v156
  %v1600 = vunpack.c.h.b16 %v156
  %v1601 = vunpack.c.l.b16 %v157
  %v1602 = vunpack.c.h.b16 %v157
  %v1603 = vunpack.c.l.b16 %v158
  %v1604 = vunpack.c.h.b16 %v158
  %v1605 = vunpack.c.l.b16 %v159
  %v1606 = vunpack.c.h.b16 %v159
  %v1607 = vunpack.c.l.b16 %v160
  %v1608 = vunpack.c.h.b16 %v160
  %v1609 = vunpack.c.l.b16 %v161
  %v1610 = vunpack.c.h.b16 %v161
  %v1611 = vunpack.c.l.b16 %v162
  %v1612 = vunpack.c.h.b16 %v162
  %v1613 = vunpack.c.l.b16 %v163
  %v1614 = vunpack.c.h.b16 %v163
  %v1615 = vunpack.c.l.b16 %v164
  %v1616 = vunpack.c.h.b16 %v164
  %v1617 = vunpack.c.l.b16 %v165
  %v1618 = vunpack.c.h.b16 %v165
  %v1619 = vunpack.c.l.b16 %v166
  %v1620 = vunpack.c.h.b16 %v166
  %v1621 = vunpack.c.l.b16 %v167
  %v1622 = vunpack.c.h.b16 %v167
  %v1623 = vunpack.c.l.b16 %v168
  %v1624 = vunpack.c.h.b16 %v168
  %v1625 = vunpack.c.l.b16 %v169
  %v1626 = vunpack.c.h.b16 %v169
  %v1627 = vunpack.c.l.b16 %v170
  %v1628 = vunpack.c.h.b16 %v170
  %v1629 = vunpack.c.l.b16 %v171
  %v1630 = vunpack.c.h.b16 %v171
  %v1631 = vunpack.c.l.b16 %v172
  %v1632 = vunpack.c.h.b16 %v172
  %v1633 = vunpack.c.l.b16 %v173
  %v1634 = vunpack.c.h.b16 %v173
  %v1635 = vunpack.c.l.b16 %v174
  %v1636 = vunpack.c.h.b16 %v174
  %v1637 = vunpack.c.l.b16 %v175
  %v1638 = vunpack.c.h.b16 %v175
  %v1639 = vunpack.c.l.b16 %v176
  %v1640 = vunpack.c.h.b16 %v176
  %v1641 = vunpack.c.l.b16 %v177
  %v1642 = vunpack.c.h.b16 %v177
  %v1643 = vunpack.c.l.b16 %v178
  %v1644 = vunpack.c.h.b16 %v178
  %v1645 = vunpack.c.l.b16 %v179
  %v1646 = vunpack.c.h.b16 %v179
  %v1647 = vunpack.c.l.b16 %v180
  %v1648 = vunpack.c.h.b16 %v180
  %v1649 = vunpack.c.l.b16 %v181
  %v1650 = vunpack.c.h.b16 %v181
  %v1651 = vunpack.c.l.b16 %v182
  %v1652 = vunpack.c.h.b16 %v182
  %v1653 = vunpack.c.l.b16 %v183
  %v1654 = vunpack.c.h.b16 %v183
  %v1655 = vunpack.c.l.b16 %v184
  %v1656 = vunpack.c.h.b16 %v184
  %v1657 = vunpack.c.l.b16 %v185
  %v1658 = vunpack.c.h.b16 %v185
  %v1659 = vunpack.c.l.b16 %v186
  %v1660 = vunpack.c.h.b16 %v186
  %v1661 = vunpack.c.l.b16 %v187
  %v1662 = vunpack.c.h.b16 %v187
  %v1663 = vunpack.c.l.b16 %v188
  %v1664 = vunpack.c.h.b16 %v188
  %v1665 = vunpack.c.l.b16 %v189
  %v1666 = vunpack.c.h.b16 %v189
  %v1667 = vunpack.c.l.b16 %v190
  %v1668 = vunpack.c.h.b16 %v190
  %v1669 = vunpack.c.l.b16 %v191
  %v1670 = vunpack.c.h.b16 %v191
  %v1671 = vunpack.c.l.b16 %v192
  %v1672 = vunpack.c.h.b16 %v192
  %v1673 = vunpack.c.l.b16 %v193
  %v1674 = vunpack.c.h.b16 %v193
  %v1675 = vunpack.c.l.b16 %v194
  %v1676 = vunpack.c.h.b16 %v194
  %v1677 = vunpack.c.l.b16 %v195
  %v1678 = vunpack.c.h.b16 %v195
  %v1679 = vunpack.c.l.b16 %v196
  %v1680 = vunpack.c.h.b16 %v196
  %v1681 = vunpack.c.l.b16 %v197
  %v1682 = vunpack.c.h.b16 %v197
  %v1683 = vunpack.c.l.b16 %v198
  %v1684 = vunpack.c.h.b16 %v198
  %v1685 = vunpack.c.l.b16 %v199
  %v1686 = vunpack.c.h.b16 %v199
  %v1687 = vunpack.c.l.b16 %v200
  %v1688 = vunpack.c.h.b16 %v200
  %v1689 = vunpack.c.l.b16 %v201
  %v1690 = vunpack.c.h.b16 %v201
  %v1691 = vunpack.c.l.b16 %v202
  %v1692 = vunpack.c.h.b16 %v202
  %v1693 = vunpack.c.l.b16 %v203
  %v1694 = vunpack.c.h.b16 %v203
  %v1695 = vunpack.c.l.b16 %v204
  %v1696 = vunpack.c.h.b16 %v204
  %v1697 = vunpack.c.l.b16 %v205
  %v1698 = vunpack.c.h.b16 %v205
  %v1699 = vunpack.c.l.b16 %v206
  %v1700 = vunpack.c.h.b16 %v206
  %v1701 = vunpack.c.l.b16 %v207
  %v1702 = vunpack.c.h.b16 %v207
  %v1703 = vunpack.c.l.b16 %v208
  %v1704 = vunpack.c.h.b16 %v208
  %v1705 = vunpack.c.l.b16 %v209
  %v1706 = vunpack.c.h.b16 %v209
  %v1707 = vunpack.c.l.b16 %v210
  %v1708 = vunpack.c.h.b16 %v210
  %v1709 = vunpack.c.l.b16 %v211
  %v1710 = vunpack.c.h.b16 %v211
  %v1711 = vunpack.c.l.b16 %v212
  %v1712 = vunpack.c.h.b16 %v212
  %v1713 = vunpack.c.l.b16 %v213
  %v1714 = vunpack.c.h.b16 %v213
  %v1715 = vunpack.c.l.b16 %v214
  %v1716 = vunpack.c.h.b16 %v214
  %v1717 = vunpack.c.l.b16 %v215
  %v1718 = vunpack.c.h.b16 %v215
  %v1719 = vunpack.c.l.b16 %v216
  %v1720 = vunpack.c.h.b16 %v216
  %v1721 = vunpack.c.l.b16 %v217
  %v1722 = vunpack.c.h.b16 %v217
  %v1723 = vunpack.c.l.b16 %v218
  %v1724 = vunpack.c.h.b16 %v218
  %v1725 = vunpack.c.l.b16 %v219
  %v1726 = vunpack.c.h.b16 %v219
  %v1727 = vunpack.c.l.b16 %v220
  %v1728 = vunpack.c.h.b16 %v220
  %v1729 = vunpack.c.l.b16 %v221
  %v1730 = vunpack.c.h.b16 %v221
  %v1731 = vunpack.c.l.b16 %v222
  %v1732 = vunpack.c.h.b16 %v222
  %v1733 = vunpack.c.l.b16 %v223
  %v1734 = vunpack.c.h.b16 %v223
  %v1735 = vunpack.c.l.b16 %v224
  %v1736 = vunpack.c.h.b16 %v224
  %v1737 = vunpack.c.l.b16 %v225
  %v1738 = vunpack.c.h.b16 %v225
  %v1739 = vunpack.c.l.b16 %v226
  %v1740 = vunpack.c.h.b16 %v226
  %v1741 = vunpack.c.l.b16 %v227
  %v1742 = vunpack.c.h.b16 %v227
  %v1743 = vunpack.c.l.b16 %v228
  %v1744 = vunpack.c.h.b16 %v228
  %v1745 = vunpack.c.l.b16 %v229
  %v1746 = vunpack.c.h.b16 %v229
  %v1747 = vunpack.c.l.b16 %v230
  %v1748 = vunpack.c.h.b16 %v230
  %v1749 = vunpack.c.l.b16 %v231
  %v1750 = vunpack.c.h.b16 %v231
  %v1751 = vunpack.c.l.b16 %v232
  %v1752 = vunpack.c.h.b16 %v232
  %v1753 = vunpack.c.l.b16 %v233
  %v1754 = vunpack.c.h.b16 %v233
  %v1755 = vunpack.c.l.b16 %v234
  %v1756 = vunpack.c.h.b16 %v234
  %v1757 = vunpack.c.l.b16 %v235
  %v1758 = vunpack.c.h.b16 %v235
  %v1759 = vunpack.c.l.b16 %v236
  %v1760 = vunpack.c.h.b16 %v236
  %v1761 = vunpack.c.l.b16 %v237
  %v1762 = vunpack.c.h.b16 %v237
  %v1763 = vunpack.c.l.b16 %v238
  %v1764 = vunpack.c.h.b16 %v238
  %v1765 = vunpack.c.l.b16 %v239
  %v1766 = vunpack.c.h.b16 %v239
  %v1767 = vunpack.c.l.b16 %v240
  %v1768 = vunpack.c.h.b16 %v240
  %v1769 = vunpack.c.l.b16 %v241
  %v1770 = vunpack.c.h.b16 %v241
  %v1771 = vunpack.c.l.b16 %v242
  %v1772 = vunpack.c.h.b16 %v242
  %v1773 = vunpack.c.l.b16 %v243
  %v1774 = vunpack.c.h.b16 %v243
  %v1775 = vunpack.c.l.b16 %v244
  %v1776 = vunpack.c.h.b16 %v244
  %v1777 = vunpack.c.l.b16 %v245
  %v1778 = vunpack.c.h.b16 %v245
  %v1779 = vunpack.c.l.b16 %v246
  %v1780 = vunpack.c.h.b16 %v246
  %v1781 = vunpack.c.l.b16 %v247
  %v1782 = vunpack.c.h.b16 %v247
  %v1783 = vunpack.c.l.b16 %v248
  %v1784 = vunpack.c.h.b16 %v248
  %v1785 = vunpack.c.l.b16 %v249
  %v1786 = vunpack.c.h.b16 %v249
  %v1787 = vunpack.c.l.b16 %v250
  %v1788 = vunpack.c.h.b16 %v250
  %v1789 = vunpack.c.l.b16 %v251
  %v1790 = vunpack.c.h.b16 %v251
  %v1791 = vunpack.c.l.b16 %v252
  %v1792 = vunpack.c.h.b16 %v252
  %v1793 = vunpack.c.l.b16 %v253
  %v1794 = vunpack.c.h.b16 %v253
  %v1795 = vunpack.c.l.b16 %v254
  %v1796 = vunpack.c.h.b16 %v254
  %v1797 = vunpack.c.l.b16 %v255
  %v1798 = vunpack.c.h.b16 %v255
  %v1799 = vunpack.c.l.b16 %v256
  %v1800 = vunpack.c.h.b16 %v256
  %v1801 = vunpack.c.l.b16 %v257
  %v1802 = vunpack.c.h.b16 %v257
  %v1803 = vunpack.c.l.b16 %v258
  %v1804 = vunpack.c.h.b16 %v258
  %v1805 = vunpack.c.l.b16 %v259
  %v1806 = vunpack.c.h.b16 %v259
  %v1807 = vunpack.c.l.b16 %v260
  %v1808 = vunpack.c.h.b16 %v260
  %v1809 = vunpack.c.l.b16 %v261
  %v1810 = vunpack.c.h.b16 %v261
  %v1811 = vunpack.c.l.b16 %v262
  %v1812 = vunpack.c.h.b16 %v262
  %v1813 = vunpack.c.l.b16 %v263
  %v1814 = vunpack.c.h.b16 %v263
  %v1815 = vunpack.c.l.b16 %v264
  %v1816 = vunpack.c.h.b16 %v264
  %v1817 = vunpack.c.l.b16 %v265
  %v1818 = vunpack.c.h.b16 %v265
  %v1819 = vunpack.c.l.b16 %v266
  %v1820 = vunpack.c.h.b16 %v266
  %v1821 = vunpack.c.l.b16 %v267
  %v1822 = vunpack.c.h.b16 %v267
  %v1823 = vunpack.c.l.b16 %v268
  %v1824 = vunpack.c.h.b16 %v268
  %v1825 = vunpack.c.l.b16 %v269
  %v1826 = vunpack.c.h.b16 %v269
  %v1827 = vunpack.c.l.b16 %v270
  %v1828 = vunpack.c.h.b16 %v270
  %v1829 = vunpack.c.l.b16 %v271
  %v1830 = vunpack.c.h.b16 %v271
  %v1831 = vunpack.c.l.b16 %v272
  %v1832 = vunpack.c.h.b16 %v272
  %v1833 = vunpack.c.l.b16 %v273
  %v1834 = vunpack.c.h.b16 %v273
  %v1835 = vunpack.c.l.b16 %v274
  %v1836 = vunpack.c.h.b16 %v274
  %v1837 = vunpack.c.l.b16 %v275
  %v1838 = vunpack.c.h.b16 %v275
  %v1839 = vunpack.c.l.b16 %v276
  %v1840 = vunpack.c.h.b16 %v276
  %v1841 = vunpack.c.l.b16 %v277
  %v1842 = vunpack.c.h.b16 %v277
  %v1843 = vunpack.c.l.b16 %v278
  %v1844 = vunpack.c.h.b16 %v278
  %v1845 = vunpack.c.l.b16 %v279
  %v1846 = vunpack.c.h.b16 %v279
  %v1847 = vunpack.c.l.b16 %v280
  %v1848 = vunpack.c.h.b16 %v280
  %v1849 = vunpack.c.l.b16 %v281
  %v1850 = vunpack.c.h.b16 %v281
  %v1851 = vunpack.c.l.b16 %v282
  %v1852 = vunpack.c.h.b16 %v282
  %v1853 = vunpack.c.l.b16 %v283
  %v1854 = vunpack.c.h.b16 %v283
  %v1855 = vunpack.c.l.b16 %v284
  %v1856 = vunpack.c.h.b16 %v284
  %v1857 = vunpack.c.l.b16 %v285
  %v1858 = vunpack.c.h.b16 %v285
  %v1859 = vunpack.c.l.b16 %v286
  %v1860 = vunpack.c.h.b16 %v286
  %v1861 = vunpack.c.l.b16 %v287
  %v1862 = vunpack.c.h.b16 %v287
  %v1863 = vunpack.c.l.b16 %v288
  %v1864 = vunpack.c.h.b16 %v288
  %v1865 = vunpack.c.l.b16 %v289
  %v1866 = vunpack.c.h.b16 %v289
  %v1867 = vunpack.c.l.b16 %v290
  %v1868 = vunpack.c.h.b16 %v290
  %v1869 = vunpack.c.l.b16 %v291
  %v1870 = vunpack.c.h.b16 %v291
  %v1871 = vunpack.c.l.b16 %v292
  %v1872 = vunpack.c.h.b16 %v292
  %v1873 = vunpack.c.l.b16 %v293
  %v1874 = vunpack.c.h.b16 %v293
  %v1875 = vunpack.c.l.b16 %v294
  %v1876 = vunpack.c.h.b16 %v294
  %v1877 = vunpack.c.l.b16 %v295
  %v1878 = vunpack.c.h.b16 %v295
  %v1879 = vunpack.c.l.b16 %v296
  %v1880 = vunpack.c.h.b16 %v296
  %v1881 = vunpack.c.l.b16 %v297
  %v1882 = vunpack.c.h.b16 %v297
  %v1883 = vunpack.c.l.b16 %v298
  %v1884 = vunpack.c.h.b16 %v298
  %v1885 = vunpack.c.l.b16 %v299
  %v1886 = vunpack.c.h.b16 %v299
  %v1887 = vunpack.c.l.b16 %v300
  %v1888 = vunpack.c.h.b16 %v300
  %v1889 = vunpack.c.l.b16 %v301
  %v1890 = vunpack.c.h.b16 %v301
  %v1891 = vunpack.c.l.b16 %v302
  %v1892 = vunpack.c.h.b16 %v302
  %v1893 = vunpack.c.l.b16 %v303
  %v1894 = vunpack.c.h.b16 %v303
  %v1895 = vunpack.c.l.b16 %v304
  %v1896 = vunpack.c.h.b16 %v304
  %v1897 = vunpack.c.l.b16 %v305
  %v1898 = vunpack.c.h.b16 %v305
  %v1899 = vunpack.c.l.b16 %v306
  %v1900 = vunpack.c.h.b16 %v306
  %v1901 = vunpack.c.l.b16 %v307
  %v1902 = vunpack.c.h.b16 %v307
  %v1903 = vunpack.c.l.b16 %v308
  %v1904 = vunpack.c.h.b16 %v308
  %v1905 = vunpack.c.l.b16 %v309
  %v1906 = vunpack.c.h.b16 %v309
  %v1907 = vunpack.c.l.b16 %v310
  %v1908 = vunpack.c.h.b16 %v310
  %v1909 = vunpack.c.l.b16 %v311
  %v1910 = vunpack.c.h.b16 %v311
  %v1911 = vunpack.c.l.b16 %v312
  %v1912 = vunpack.c.h.b16 %v312
  %v1913 = vunpack.c.l.b16 %v313
  %v1914 = vunpack.c.h.b16 %v313
  %v1915 = vunpack.c.l.b16 %v314
  %v1916 = vunpack.c.h.b16 %v314
  %v1917 = vunpack.c.l.b16 %v315
  %v1918 = vunpack.c.h.b16 %v315
  %v1919 = vunpack.c.l.b16 %v316
  %v1920 = vunpack.c.h.b16 %v316
  %v1921 = vunpack.c.l.b16 %v317
  %v1922 = vunpack.c.h.b16 %v317
  %v1923 = vunpack.c.l.b16 %v318
  %v1924 = vunpack.c.h.b16 %v318
  %v1925 = vunpack.c.l.b16 %v319
  %v1926 = vunpack.c.h.b16 %v319
  %v1927 = vunpack.c.l.b16 %v320
  %v1928 = vunpack.c.h.b16 %v320
  %v1929 = vunpack.c.l.b16 %v321
  %v1930 = vunpack.c.h.b16 %v321
  %v1931 = vunpack.c.l.b16 %v322
  %v1932 = vunpack.c.h.b16 %v322
  %v1933 = vunpack.c.l.b16 %v323
  %v1934 = vunpack.c.h.b16 %v323
  %v1935 = vunpack.c.l.b16 %v324
  %v1936 = vunpack.c.h.b16 %v324
  %v1937 = vunpack.c.l.b16 %v325
  %v1938 = vunpack.c.h.b16 %v325
  %v1939 = vunpack.c.l.b16 %v326
  %v1940 = vunpack.c.h.b16 %v326
  %v1941 = vunpack.c.l.b16 %v327
  %v1942 = vunpack.c.h.b16 %v327
  %v1943 = vunpack.c.l.b16 %v328
  %v1944 = vunpack.c.h.b16 %v328
  %v1945 = vunpack.c.l.b16 %v329
  %v1946 = vunpack.c.h.b16 %v329
  %v1947 = vunpack.c.l.b16 %v330
  %v1948 = vunpack.c.h.b16 %v330
  %v1949 = vunpack.c.l.b16 %v331
  %v1950 = vunpack.c.h.b16 %v331
  %v1951 = vunpack.c.l.b16 %v332
  %v1952 = vunpack.c.h.b16 %v332
  %v1953 = vunpack.c.l.b16 %v333
  %v1954 = vunpack.c.h.b16 %v333
  %v1955 = vunpack.c.l.b16 %v334
  %v1956 = vunpack.c.h.b16 %v334
  %v1957 = vunpack.c.l.b16 %v335
  %v1958 = vunpack.c.h.b16 %v335
  %v1959 = vunpack.c.l.b16 %v336
  %v1960 = vunpack.c.h.b16 %v336
  %v1961 = vunpack.c.l.b16 %v337
  %v1962 = vunpack.c.h.b16 %v337
  %v1963 = vunpack.c.l.b16 %v338
  %v1964 = vunpack.c.h.b16 %v338
  %v1965 = vunpack.c.l.b16 %v339
  %v1966 = vunpack.c.h.b16 %v339
  %v1967 = vunpack.c.l.b16 %v340
  %v1968 = vunpack.c.h.b16 %v340
  %v1969 = vunpack.c.l.b16 %v341
  %v1970 = vunpack.c.h.b16 %v341
  %v1971 = vunpack.c.l.b16 %v342
  %v1972 = vunpack.c.h.b16 %v342
  %v1973 = vunpack.c.l.b16 %v343
  %v1974 = vunpack.c.h.b16 %v343
  %v1975 = vunpack.c.l.b16 %v344
  %v1976 = vunpack.c.h.b16 %v344
  %v1977 = vunpack.c.l.b16 %v345
  %v1978 = vunpack.c.h.b16 %v345
  %v1979 = vunpack.c.l.b16 %v346
  %v1980 = vunpack.c.h.b16 %v346
  %v1981 = vunpack.c.l.b16 %v347
  %v1982 = vunpack.c.h.b16 %v347
  %v1983 = vunpack.c.l.b16 %v348
  %v1984 = vunpack.c.h.b16 %v348
  %v1985 = vunpack.c.l.b16 %v349
  %v1986 = vunpack.c.h.b16 %v349
  %v1987 = vunpack.c.l.b16 %v350
  %v1988 = vunpack.c.h.b16 %v350
  %v1989 = vunpack.c.l.b16 %v351
  %v1990 = vunpack.c.h.b16 %v351
  %v1991 = vunpack.c.l.b16 %v352
  %v1992 = vunpack.c.h.b16 %v352
  %v1993 = vunpack.c.l.b16 %v353
  %v1994 = vunpack.c.h.b16 %v353
  %v1995 = vunpack.c.l.b16 %v354
  %v1996 = vunpack.c.h.b16 %v354
  %v1997 = vunpack.c.l.b16 %v355
  %v1998 = vunpack.c.h.b16 %v355
  %v1999 = vunpack.c.l.b16 %v356
  %v2000 = vunpack.c.h.b16 %v356
  %v2001 = vunpack.c.l.b16 %v357
  %v2002 = vunpack.c.h.b16 %v357
  %v2003 = vunpack.c.l.b16 %v358
  %v2004 = vunpack.c.h.b16 %v358
  %v2005 = vunpack.c.l.b16 %v359
  %v2006 = vunpack.c.h.b16 %v359
  %v2007 = vunpack.c.l.b16 %v360
  %v2008 = vunpack.c.h.b16 %v360
  %v2009 = vunpack.c.l.b16 %v361
  %v2010 = vunpack.c.h.b16 %v361
  %v2011 = vunpack.c.l.b16 %v362
  %v2012 = vunpack.c.h.b16 %v362
  %v2013 = vunpack.c.l.b16 %v363
  %v2014 = vunpack.c.h.b16 %v363
  %v2015 = vunpack.c.l.b16 %v364
  %v2016 = vunpack.c.h.b16 %v364
  %v2017 = vunpack.c.l.b16 %v365
  %v2018 = vunpack.c.h.b16 %v365
  %v2019 = vunpack.c.l.b16 %v366
  %v2020 = vunpack.c.h.b16 %v366
  %v2021 = vunpack.c.l.b16 %v367
  %v2022 = vunpack.c.h.b16 %v367
  %v2023 = vunpack.c.l.b16 %v368
  %v2024 = vunpack.c.h.b16 %v368
  %v2025 = vunpack.c.l.b16 %v369
  %v2026 = vunpack.c.h.b16 %v369
  %v2027 = vunpack.c.l.b16 %v370
  %v2028 = vunpack.c.h.b16 %v370
  %v2029 = vunpack.c.l.b16 %v371
  %v2030 = vunpack.c.h.b16 %v371
  %v2031 = vunpack.c.l.b16 %v372
  %v2032 = vunpack.c.h.b16 %v372
  %v2033 = vunpack.c.l.b16 %v373
  %v2034 = vunpack.c.h.b16 %v373
  %v2035 = vunpack.c.l.b16 %v374
  %v2036 = vunpack.c.h.b16 %v374
  %v2037 = vunpack.c.l.b16 %v375
  %v2038 = vunpack.c.h.b16 %v375
  %v2039 = vunpack.c.l.b16 %v376
  %v2040 = vunpack.c.h.b16 %v376
  %v2041 = vunpack.c.l.b16 %v377
  %v2042 = vunpack.c.h.b16 %v377
  %v2043 = vunpack.c.l.b16 %v378
  %v2044 = vunpack.c.h.b16 %v378
  %v2045 = vunpack.c.l.b16 %v379
  %v2046 = vunpack.c.h.b16 %v379
  %v2047 = vunpack.c.l.b16 %v380
  %v2048 = vunpack.c.h.b16 %v380
  %v2049 = vunpack.c.l.b16 %v381
  %v2050 = vunpack.c.h.b16 %v381
  %v2051 = vunpack.c.l.b16 %v382
  %v2052 = vunpack.c.h.b16 %v382
  %v2053 = vunpack.c.l.b16 %v383
  %v2054 = vunpack.c.h.b16 %v383
  %v2055 = vunpack.c.l.b16 %v384
  %v2056 = vunpack.c.h.b16 %v384
  %v2057 = vunpack.c.l.b16 %v385
  %v2058 = vunpack.c.h.b16 %v385
  %v2059 = vunpack.c.l.b16 %v386
  %v2060 = vunpack.c.h.b16 %v386
  %v2061 = vunpack.c.l.b16 %v387
  %v2062 = vunpack.c.h.b16 %v387
  %v2063 = vunpack.c.l.b16 %v388
  %v2064 = vunpack.c.h.b16 %v388
  %v2065 = vunpack.c.l.b16 %v389
  %v2066 = vunpack.c.h.b16 %v389
  %v2067 = vunpack.c.l.b16 %v390
  %v2068 = vunpack.c.h.b16 %v390
  %v2069 = vunpack.c.l.b16 %v391
  %v2070 = vunpack.c.h.b16 %v391
  %v2071 = vunpack.c.l.b16 %v392
  %v2072 = vunpack.c.h.b16 %v392
  %v2073 = vunpack.c.l.b16 %v393
  %v2074 = vunpack.c.h.b16 %v393
  %v2075 = vunpack.c.l.b16 %v394
  %v2076 = vunpack.c.h.b16 %v394
  %v2077 = vunpack.c.l.b16 %v395
  %v2078 = vunpack.c.h.b16 %v395
  %v2079 = vunpack.c.l.b16 %v396
  %v2080 = vunpack.c.h.b16 %v396
  %v2081 = vunpack.c.l.b16 %v397
  %v2082 = vunpack.c.h.b16 %v397
  %v2083 = vunpack.c.l.b16 %v398
  %v2084 = vunpack.c.h.b16 %v398
  %v2085 = vunpack.c.l.b16 %v399
  %v2086 = vunpack.c.h.b16 %v399
  %v2087 = vunpack.c.l.b16 %v400
  %v2088 = vunpack.c.h.b16 %v400
  %v2089 = vunpack.c.l.b16 %v401
  %v2090 = vunpack.c.h.b16 %v401
  %v2091 = vunpack.c.l.b16 %v402
  %v2092 = vunpack.c.h.b16 %v402
  %v2093 = vunpack.c.l.b16 %v403
  %v2094 = vunpack.c.h.b16 %v403
  %v2095 = vunpack.c.l.b16 %v404
  %v2096 = vunpack.c.h.b16 %v404
  %v2097 = vunpack.c.l.b16 %v405
  %v2098 = vunpack.c.h.b16 %v405
  %v2099 = vunpack.c.l.b16 %v406
  %v2100 = vunpack.c.h.b16 %v406
  %v2101 = vunpack.c.l.b16 %v407
  %v2102 = vunpack.c.h.b16 %v407
  %v2103 = vunpack.c.l.b16 %v408
  %v2104 = vunpack.c.h.b16 %v408
  %v2105 = vunpack.c.l.b16 %v409
  %v2106 = vunpack.c.h.b16 %v409
  %v2107 = vunpack.c.l.b16 %v410
  %v2108 = vunpack.c.h.b16 %v410
  %v2109 = vunpack.c.l.b16 %v411
  %v2110 = vunpack.c.h.b16 %v411
  %v2111 = vunpack.c.l.b16 %v412
  %v2112 = vunpack.c.h.b16 %v412
  %v2113 = vunpack.c.l.b16 %v413
  %v2114 = vunpack.c.h.b16 %v413
  %v2115 = vunpack.c.l.b16 %v414
  %v2116 = vunpack.c.h.b16 %v414
  %v2117 = vunpack.c.l.b16 %v415
  %v2118 = vunpack.c.h.b16 %v415
  %v2119 = vunpack.c.l.b16 %v416
  %v2120 = vunpack.c.h.b16 %v416
  %v2121 = vunpack.c.l.b16 %v417
  %v2122 = vunpack.c.h.b16 %v417
  %v2123 = vunpack.c.l.b16 %v418
  %v2124 = vunpack.c.h.b16 %v418
  %v2125 = vunpack.c.l.b16 %v419
  %v2126 = vunpack.c.h.b16 %v419
  %v2127 = vunpack.c.l.b16 %v420
  %v2128 = vunpack.c.h.b16 %v420
  %v2129 = vunpack.c.l.b16 %v421
  %v2130 = vunpack.c.h.b16 %v421
  %v2131 = vunpack.c.l.b16 %v422
  %v2132 = vunpack.c.h.b16 %v422
  %v2133 = vunpack.c.l.b16 %v423
  %v2134 = vunpack.c.h.b16 %v423
  %v2135 = vunpack.c.l.b16 %v424
  %v2136 = vunpack.c.h.b16 %v424
  %v2137 = vunpack.c.l.b16 %v425
  %v2138 = vunpack.c.h.b16 %v425
  %v2139 = vunpack.c.l.b16 %v426
  %v2140 = vunpack.c.h.b16 %v426
  %v2141 = vunpack.c.l.b16 %v427
  %v2142 = vunpack.c.h.b16 %v427
  %v2143 = vunpack.c.l.b16 %v428
  %v2144 = vunpack.c.h.b16 %v428
  %v2145 = vunpack.c.l.b16 %v429
  %v2146 = vunpack.c.h.b16 %v429
  %v2147 = vunpack.c.l.b16 %v430
  %v2148 = vunpack.c.h.b16 %v430
  %v2149 = vunpack.c.l.b16 %v431
  %v2150 = vunpack.c.h.b16 %v431
  %v2151 = vunpack.c.l.b16 %v432
  %v2152 = vunpack.c.h.b16 %v432
  %v2153 = vunpack.c.l.b16 %v433
  %v2154 = vunpack.c.h.b16 %v433
  %v2155 = vunpack.c.l.b16 %v434
  %v2156 = vunpack.c.h.b16 %v434
  %v2157 = vunpack.c.l.b16 %v435
  %v2158 = vunpack.c.h.b16 %v435
  %v2159 = vunpack.c.l.b16 %v436
  %v2160 = vunpack.c.h.b16 %v436
  %v2161 = vunpack.c.l.b16 %v437
  %v2162 = vunpack.c.h.b16 %v437
  %v2163 = vunpack.c.l.b16 %v438
  %v2164 = vunpack.c.h.b16 %v438
  %v2165 = vunpack.c.l.b16 %v439
  %v2166 = vunpack.c.h.b16 %v439
  %v2167 = vunpack.c.l.b16 %v440
  %v2168 = vunpack.c.h.b16 %v440
  %v2169 = vunpack.c.l.b16 %v441
  %v2170 = vunpack.c.h.b16 %v441
  %v2171 = vunpack.c.l.b16 %v442
  %v2172 = vunpack.c.h.b16 %v442
  %v2173 = vunpack.c.l.b16 %v443
  %v2174 = vunpack.c.h.b16 %v443
  %v2175 = vunpack.c.l.b16 %v444
  %v2176 = vunpack.c.h.b16 %v444
  %v2177 = vunpack.c.l.b16 %v445
  %v2178 = vunpack.c.h.b16 %v445
  %v2179 = vunpack.c.l.b16 %v446
  %v2180 = vunpack.c.h.b16 %v446
  %v2181 = vunpack.c.l.b16 %v447
  %v2182 = vunpack.c.h.b16 %v447
  %v2183 = vunpack.c.l.b16 %v448
  %v2184 = vunpack.c.h.b16 %v448
  %v2185 = vunpack.c.l.b16 %v449
  %v2186 = vunpack.c.h.b16 %v449
  %v2187 = vunpack.c.l.b16 %v450
  %v2188 = vunpack.c.h.b16 %v450
  %v2189 = vunpack.c.l.b16 %v451
  %v2190 = vunpack.c.h.b16 %v451
  %v2191 = vunpack.c.l.b16 %v452
  %v2192 = vunpack.c.h.b16 %v452
  %v2193 = vunpack.c.l.b16 %v453
  %v2194 = vunpack.c.h.b16 %v453
  %v2195 = vunpack.c.l.b16 %v454
  %v2196 = vunpack.c.h.b16 %v454
  %v2197 = vunpack.c.l.b16 %v455
  %v2198 = vunpack.c.h.b16 %v455
  %v2199 = vunpack.c.l.b16 %v456
  %v2200 = vunpack.c.h.b16 %v456
  %v2201 = vunpack.c.l.b16 %v457
  %v2202 = vunpack.c.h.b16 %v457
  %v2203 = vunpack.c.l.b16 %v458
  %v2204 = vunpack.c.h.b16 %v458
  %v2205 = vunpack.c.l.b16 %v459
  %v2206 = vunpack.c.h.b16 %v459
  %v2207 = vunpack.c.l.b16 %v460
  %v2208 = vunpack.c.h.b16 %v460
  %v2209 = vunpack.c.l.b16 %v461
  %v2210 = vunpack.c.h.b16 %v461
  %v2211 = vunpack.c.l.b16 %v462
  %v2212 = vunpack.c.h.b16 %v462
  %v2213 = vunpack.c.l.b16 %v463
  %v2214 = vunpack.c.h.b16 %v463
  %v2215 = vunpack.c.l.b16 %v464
  %v2216 = vunpack.c.h.b16 %v464
  %v2217 = vunpack.c.l.b16 %v465
  %v2218 = vunpack.c.h.b16 %v465
  %v2219 = vunpack.c.l.b16 %v466
  %v2220 = vunpack.c.h.b16 %v466
  %v2221 = vunpack.c.l.b16 %v467
  %v2222 = vunpack.c.h.b16 %v467
  %v2223 = vunpack.c.l.b16 %v468
  %v2224 = vunpack.c.h.b16 %v468
  %v2225 = vunpack.c.l.b16 %v469
  %v2226 = vunpack.c.h.b16 %v469
  %v2227 = vunpack.c.l.b16 %v470
  %v2228 = vunpack.c.h.b16 %v470
  %v2229 = vunpack.c.l.b16 %v471
  %v2230 = vunpack.c.h.b16 %v471
  %v2231 = vunpack.c.l.b16 %v472
  %v2232 = vunpack.c.h.b16 %v472
  %v2233 = vunpack.c.l.b16 %v473
  %v2234 = vunpack.c.h.b16 %v473
  %v2235 = vunpack.c.l.b16 %v474
  %v2236 = vunpack.c.h.b16 %v474
  %v2237 = vunpack.c.l.b16 %v475
  %v2238 = vunpack.c.h.b16 %v475
  %v2239 = vunpack.c.l.b16 %v476
  %v2240 = vunpack.c.h.b16 %v476
  %v2241 = vunpack.c.l.b16 %v477
  %v2242 = vunpack.c.h.b16 %v477
  %v2243 = vunpack.c.l.b16 %v478
  %v2244 = vunpack.c.h.b16 %v478
  %v2245 = vunpack.c.l.b16 %v479
  %v2246 = vunpack.c.h.b16 %v479
  %v2247 = vunpack.c.l.b16 %v480
  %v2248 = vunpack.c.h.b16 %v480
  %v2249 = vunpack.c.l.b16 %v481
  %v2250 = vunpack.c.h.b16 %v481
  %v2251 = vunpack.c.l.b16 %v482
  %v2252 = vunpack.c.h.b16 %v482
  %v2253 = vunpack.c.l.b16 %v483
  %v2254 = vunpack.c.h.b16 %v483
  %v2255 = vunpack.c.l.b16 %v484
  %v2256 = vunpack.c.h.b16 %v484
  %v2257 = vunpack.c.l.b16 %v485
  %v2258 = vunpack.c.h.b16 %v485
  %v2259 = vunpack.c.l.b16 %v486
  %v2260 = vunpack.c.h.b16 %v486
  %v2261 = vunpack.c.l.b16 %v487
  %v2262 = vunpack.c.h.b16 %v487
  %v2263 = vunpack.c.l.b16 %v488
  %v2264 = vunpack.c.h.b16 %v488
  %v2265 = vunpack.c.l.b16 %v489
  %v2266 = vunpack.c.h.b16 %v489
  %v2267 = vunpack.c.l.b16 %v490
  %v2268 = vunpack.c.h.b16 %v490
  %v2269 = vunpack.c.l.b16 %v491
  %v2270 = vunpack.c.h.b16 %v491
  %v2271 = vunpack.c.l.b16 %v492
  %v2272 = vunpack.c.h.b16 %v492
  %v2273 = vunpack.c.l.b16 %v493
  %v2274 = vunpack.c.h.b16 %v493
  %v2275 = vunpack.c.l.b16 %v494
  %v2276 = vunpack.c.h.b16 %v494
  %v2277 = vunpack.c.l.b16 %v495
  %v2278 = vunpack.c.h.b16 %v495
  %v2279 = vunpack.c.l.b16 %v496
  %v2280 = vunpack.c.h.b16 %v496
  %v2281 = vunpack.c.l.b16 %v497
  %v2282 = vunpack.c.h.b16 %v497
  %v2283 = vunpack.c.l.b16 %v498
  %v2284 = vunpack.c.h.b16 %v498
  %v2285 = vunpack.c.l.b16 %v499
  %v2286 = vunpack.c.h.b16 %v499
  %v2287 = vunpack.c.l.b16 %v500
  %v2288 = vunpack.c.h.b16 %v500
  %v2289 = vunpack.c.l.b16 %v501
  %v2290 = vunpack.c.h.b16 %v501
  %v2291 = vunpack.c.l.b16 %v502
  %v2292 = vunpack.c.h.b16 %v502
  %v2293 = vunpack.c.l.b16 %v503
  %v2294 = vunpack.c.h.b16 %v503
  %v2295 = vunpack.c.l.b16 %v504
  %v2296 = vunpack.c.h.b16 %v504
  %v2297 = vunpack.c.l.b16 %v505
  %v2298 = vunpack.c.h.b16 %v505
  %v2299 = vunpack.c.l.b16 %v506
  %v2300 = vunpack.c.h.b16 %v506
  %v2301 = vunpack.c.l.b16 %v507
  %v2302 = vunpack.c.h.b16 %v507
  %v2303 = vunpack.c.l.b16 %v508
  %v2304 = vunpack.c.h.b16 %v508
  %v2305 = vunpack.c.l.b16 %v509
  %v2306 = vunpack.c.h.b16 %v509
  %v2307 = vunpack.c.l.b16 %v510
  %v2308 = vunpack.c.h.b16 %v510
  %v2309 = vunpack.c.l.b16 %v511
  %v2310 = vunpack.c.h.b16 %v511
  %v2311 = vunpack.c.l.b16 %v512
  %v2312 = vunpack.c.h.b16 %v512
  %v2313 = vunpack.c.l.b16 %v513
  %v2314 = vunpack.c.h.b16 %v513
  %v2315 = vunpack.c.l.b16 %v514
  %v2316 = vunpack.c.h.b16 %v514
  %v2317 = vunpack.c.l.b16 %v515
  %v2318 = vunpack.c.h.b16 %v515
  %v2319 = vunpack.c.l.b16 %v516
  %v2320 = vunpack.c.h.b16 %v516
  %v2321 = vunpack.c.l.b16 %v517
  %v2322 = vunpack.c.h.b16 %v517
  %v2323 = vunpack.c.l.b16 %v518
  %v2324 = vunpack.c.h.b16 %v518
  %v2325 = vunpack.c.l.b16 %v519
  %v2326 = vunpack.c.h.b16 %v519
  %v2327 = vunpack.c.l.b16 %v520
  %v2328 = vunpack.c.h.b16 %v520
  %v2329 = vunpack.c.l.b16 %v521
  %v2330 = vunpack.c.h.b16 %v521
  %v2331 = vunpack.c.l.b16 %v522
  %v2332 = vunpack.c.h.b16 %v522
  %v2333 = vunpack.c.l.b16 %v523
  %v2334 = vunpack.c.h.b16 %v523
  %v2335 = vunpack.c.l.b16 %v524
  %v2336 = vunpack.c.h.b16 %v524
  %v2337 = vunpack.c.l.b16 %v525
  %v2338 = vunpack.c.h.b16 %v525
  %v2339 = vunpack.c.l.b16 %v526
  %v2340 = vunpack.c.h.b16 %v526
  %v2341 = vunpack.c.l.b16 %v527
  %v2342 = vunpack.c.h.b16 %v527
  %v2343 = vunpack.c.l.b16 %v528
  %v2344 = vunpack.c.h.b16 %v528
  %v2345 = vunpack.c.l.b16 %v529
  %v2346 = vunpack.c.h.b16 %v529
  %v2347 = vunpack.c.l.b16 %v530
  %v2348 = vunpack.c.h.b16 %v530
  %v2349 = vunpack.c.l.b16 %v531
  %v2350 = vunpack.c.h.b16 %v531
  %v2351 = vunpack.c.l.b16 %v532
  %v2352 = vunpack.c.h.b16 %v532
  %v2353 = vunpack.c.l.b16 %v533
  %v2354 = vunpack.c.h.b16 %v533
  %v2355 = vunpack.c.l.b16 %v534
  %v2356 = vunpack.c.h.b16 %v534
  %v2357 = vunpack.c.l.b16 %v535
  %v2358 = vunpack.c.h.b16 %v535
  %v2359 = vunpack.c.l.b16 %v536
  %v2360 = vunpack.c.h.b16 %v536
  %v2361 = vunpack.c.l.b16 %v537
  %v2362 = vunpack.c.h.b16 %v537
  %v2363 = vunpack.c.l.b16 %v538
  %v2364 = vunpack.c.h.b16 %v538
  %v2365 = vunpack.c.l.b16 %v539
  %v2366 = vunpack.c.h.b16 %v539
  %v2367 = vunpack.c.l.b16 %v540
  %v2368 = vunpack.c.h.b16 %v540
  %v2369 = vunpack.c.l.b16 %v541
  %v2370 = vunpack.c.h.b16 %v541
  %v2371 = vunpack.c.l.b16 %v542
  %v2372 = vunpack.c.h.b16 %v542
  %v2373 = vunpack.c.l.b16 %v543
  %v2374 = vunpack.c.h.b16 %v543
  %v2375 = vunpack.c.l.b16 %v544
  %v2376 = vunpack.c.h.b16 %v544
  %v2377 = vunpack.c.l.b16 %v545
  %v2378 = vunpack.c.h.b16 %v545
  %v2379 = vunpack.c.l.b16 %v546
  %v2380 = vunpack.c.h.b16 %v546
  %v2381 = vunpack.c.l.b16 %v547
  %v2382 = vunpack.c.h.b16 %v547
  %v2383 = vunpack.c.l.b16 %v548
  %v2384 = vunpack.c.h.b16 %v548
  %v2385 = vunpack.c.l.b16 %v549
  %v2386 = vunpack.c.h.b16 %v549
  %v2387 = vunpack.c.l.b16 %v550
  %v2388 = vunpack.c.h.b16 %v550
  %v2389 = vunpack.c.l.b16 %v551
  %v2390 = vunpack.c.h.b16 %v551
  %v2391 = vunpack.c.l.b16 %v552
  %v2392 = vunpack.c.h.b16 %v552
  %v2393 = vunpack.c.l.b16 %v553
  %v2394 = vunpack.c.h.b16 %v553
  %v2395 = vunpack.c.l.b16 %v554
  %v2396 = vunpack.c.h.b16 %v554
  %v2397 = vunpack.c.l.b16 %v555
  %v2398 = vunpack.c.h.b16 %v555
  %v2399 = vunpack.c.l.b16 %v556
  %v2400 = vunpack.c.h.b16 %v556
  %v2401 = vunpack.c.l.b16 %v557
  %v2402 = vunpack.c.h.b16 %v557
  %v2403 = vunpack.c.l.b16 %v558
  %v2404 = vunpack.c.h.b16 %v558
  %v2405 = vunpack.c.l.b16 %v559
  %v2406 = vunpack.c.h.b16 %v559
  %v2407 = vunpack.c.l.b16 %v560
  %v2408 = vunpack.c.h.b16 %v560
  %v2409 = vunpack.c.l.b16 %v561
  %v2410 = vunpack.c.h.b16 %v561
  %v2411 = vunpack.c.l.b16 %v562
  %v2412 = vunpack.c.h.b16 %v562
  %v2413 = vunpack.c.l.b16 %v563
  %v2414 = vunpack.c.h.b16 %v563
  %v2415 = vunpack.c.l.b16 %v564
  %v2416 = vunpack.c.h.b16 %v564
  %v2417 = vunpack.c.l.b16 %v565
  %v2418 = vunpack.c.h.b16 %v565
  %v2419 = vunpack.c.l.b16 %v566
  %v2420 = vunpack.c.h.b16 %v566
  %v2421 = vunpack.c.l.b16 %v567
  %v2422 = vunpack.c.h.b16 %v567
  %v2423 = vunpack.c.l.b16 %v568
  %v2424 = vunpack.c.h.b16 %v568
  %v2425 = vunpack.c.l.b16 %v569
  %v2426 = vunpack.c.h.b16 %v569
  %v2427 = vunpack.c.l.b16 %v570
  %v2428 = vunpack.c.h.b16 %v570
  %v2429 = vunpack.c.l.b16 %v571
  %v2430 = vunpack.c.h.b16 %v571
  %v2431 = vunpack.c.l.b16 %v572
  %v2432 = vunpack.c.h.b16 %v572
  %v2433 = vunpack.c.l.b16 %v573
  %v2434 = vunpack.c.h.b16 %v573
  %v2435 = vunpack.c.l.b16 %v574
  %v2436 = vunpack.c.h.b16 %v574
  %v2437 = vunpack.c.l.b16 %v575
  %v2438 = vunpack.c.h.b16 %v575
  %v2439 = vunpack.c.l.b16 %v576
  %v2440 = vunpack.c.h.b16 %v576
  %v2441 = vunpack.c.l.b16 %v577
  %v2442 = vunpack.c.h.b16 %v577
  %v2443 = vunpack.c.l.b16 %v578
  %v2444 = vunpack.c.h.b16 %v578
  %v2445 = vunpack.c.l.b16 %v579
  %v2446 = vunpack.c.h.b16 %v579
  %v2447 = vunpack.c.l.b16 %v580
  %v2448 = vunpack.c.h.b16 %v580
  %v2449 = vunpack.c.l.b16 %v581
  %v2450 = vunpack.c.h.b16 %v581
  %v2451 = vunpack.c.l.b16 %v582
  %v2452 = vunpack.c.h.b16 %v582
  %v2453 = vunpack.c.l.b16 %v583
  %v2454 = vunpack.c.h.b16 %v583
  %v2455 = vunpack.c.l.b16 %v584
  %v2456 = vunpack.c.h.b16 %v584
  %v2457 = vunpack.c.l.b16 %v585
  %v2458 = vunpack.c.h.b16 %v585
  %v2459 = vunpack.c.l.b16 %v586
  %v2460 = vunpack.c.h.b16 %v586
  %v2461 = vunpack.c.l.b16 %v587
  %v2462 = vunpack.c.h.b16 %v587
  %v2463 = vunpack.c.l.b16 %v588
  %v2464 = vunpack.c.h.b16 %v588
  %v2465 = vunpack.c.l.b16 %v589
  %v2466 = vunpack.c.h.b16 %v589
  %v2467 = vunpack.c.l.b16 %v590
  %v2468 = vunpack.c.h.b16 %v590
  %v2469 = vunpack.c.l.b16 %v591
  %v2470 = vunpack.c.h.b16 %v591
  %v2471 = vunpack.c.l.b16 %v592
  %v2472 = vunpack.c.h.b16 %v592
  %v2473 = vunpack.c.l.b16 %v593
  %v2474 = vunpack.c.h.b16 %v593
  %v2475 = vunpack.c.l.b16 %v594
  %v2476 = vunpack.c.h.b16 %v594
  %v2477 = vunpack.c.l.b16 %v595
  %v2478 = vunpack.c.h.b16 %v595
  %v2479 = vunpack.c.l.b16 %v596
  %v2480 = vunpack.c.h.b16 %v596
  %v2481 = vunpack.c.l.b16 %v597
  %v2482 = vunpack.c.h.b16 %v597
  %v2483 = vunpack.c.l.b16 %v598
  %v2484 = vunpack.c.h.b16 %v598
  %v2485 = vunpack.c.l.b16 %v599
  %v2486 = vunpack.c.h.b16 %v599
  %v2487 = vunpack.c.l.b16 %v600
  %v2488 = vunpack.c.h.b16 %v600
  %v2489 = vunpack.c.l.b16 %v601
  %v2490 = vunpack.c.h.b16 %v601
  %v2491 = vunpack.c.l.b16 %v602
  %v2492 = vunpack.c.h.b16 %v602
  %v2493 = vunpack.c.l.b16 %v603
  %v2494 = vunpack.c.h.b16 %v603
  %v2495 = vunpack.c.l.b16 %v604
  %v2496 = vunpack.c.h.b16 %v604
  %v2497 = vunpack.c.l.b16 %v605
  %v2498 = vunpack.c.h.b16 %v605
  %v2499 = vunpack.c.l.b16 %v606
  %v2500 = vunpack.c.h.b16 %v606
  %v2501 = vunpack.c.l.b16 %v607
  %v2502 = vunpack.c.h.b16 %v607
  %v2503 = vunpack.c.l.b16 %v608
  %v2504 = vunpack.c.h.b16 %v608
  %v2505 = vunpack.c.l.b16 %v609
  %v2506 = vunpack.c.h.b16 %v609
  %v2507 = vunpack.c.l.b16 %v610
  %v2508 = vunpack.c.h.b16 %v610
  %v2509 = vunpack.c.l.b16 %v611
  %v2510 = vunpack.c.h.b16 %v611
  %v2511 = vunpack.c.l.b16 %v612
  %v2512 = vunpack.c.h.b16 %v612
  %v2513 = vunpack.c.l.b16 %v613
  %v2514 = vunpack.c.h.b16 %v613
  %v2515 = vunpack.c.l.b16 %v614
  %v2516 = vunpack.c.h.b16 %v614
  %v2517 = vunpack.c.l.b16 %v615
  %v2518 = vunpack.c.h.b16 %v615
  %v2519 = vunpack.c.l.b16 %v616
  %v2520 = vunpack.c.h.b16 %v616
  %v2521 = vunpack.c.l.b16 %v617
  %v2522 = vunpack.c.h.b16 %v617
  %v2523 = vunpack.c.l.b16 %v618
  %v2524 = vunpack.c.h.b16 %v618
  %v2525 = vunpack.c.l.b16 %v619
  %v2526 = vunpack.c.h.b16 %v619
  %v2527 = vunpack.c.l.b16 %v620
  %v2528 = vunpack.c.h.b16 %v620
  %v2529 = vunpack.c.l.b16 %v621
  %v2530 = vunpack.c.h.b16 %v621
  %v2531 = vunpack.c.l.b16 %v622
  %v2532 = vunpack.c.h.b16 %v622
  %v2533 = vunpack.c.l.b16 %v623
  %v2534 = vunpack.c.h.b16 %v623
  %v2535 = vunpack.c.l.b16 %v624
  %v2536 = vunpack.c.h.b16 %v624
  %v2537 = vunpack.c.l.b16 %v625
  %v2538 = vunpack.c.h.b16 %v625
  %v2539 = vunpack.c.l.b16 %v626
  %v2540 = vunpack.c.h.b16 %v626
  %v2541 = vunpack.c.l.b16 %v627
  %v2542 = vunpack.c.h.b16 %v627
  %v2543 = vunpack.c.l.b16 %v628
  %v2544 = vunpack.c.h.b16 %v628
  %v2545 = vunpack.c.l.b16 %v629
  %v2546 = vunpack.c.h.b16 %v629
  %v2547 = vunpack.c.l.b16 %v630
  %v2548 = vunpack.c.h.b16 %v630
  %v2549 = vunpack.c.l.b16 %v631
  %v2550 = vunpack.c.h.b16 %v631
  %v2551 = vunpack.c.l.b16 %v632
  %v2552 = vunpack.c.h.b16 %v632
  %v2553 = vunpack.c.l.b16 %v633
  %v2554 = vunpack.c.h.b16 %v633
  %v2555 = vunpack.c.l.b16 %v634
  %v2556 = vunpack.c.h.b16 %v634
  %v2557 = vunpack.c.l.b16 %v635
  %v2558 = vunpack.c.h.b16 %v635
  %v2559 = vunpack.c.l.b16 %v636
  %v2560 = vunpack.c.h.b16 %v636
  %v2561 = vunpack.c.l.b16 %v637
  %v2562 = vunpack.c.h.b16 %v637
  %v2563 = vunpack.c.l.b16 %v638
  %v2564 = vunpack.c.h.b16 %v638
  %v2565 = vunpack.c.l.b16 %v639
  %v2566 = vunpack.c.h.b16 %v639
  %v2567 = vunpack.c.l.b16 %v640
  %v2568 = vunpack.c.h.b16 %v640
  %v2569 = vunpack.c.l.b16 %v641
  %v2570 = vunpack.c.h.b16 %v641
  %v2571 = vunpack.c.l.b16 %v642
  %v2572 = vunpack.c.h.b16 %v642
  %v2573 = vpack.c.b16 %v1425, %v1421
  %v2574 = vpack.c.b16 %v1426, %v1422
  %v2575 = vpack.c.b16 %v1427, %v1423
  %v2576 = vpack.c.b16 %v1428, %v1424
  %v2577 = vpack.c.b16 %v1433, %v1429
  %v2578 = vpack.c.b16 %v1434, %v1430
  %v2579 = vpack.c.b16 %v1435, %v1431
  %v2580 = vpack.c.b16 %v1436, %v1432
  %v2581 = vpack.c.b16 %v1441, %v1437
  %v2582 = vpack.c.b16 %v1442, %v1438
  %v2583 = vpack.c.b16 %v1443, %v1439
  %v2584 = vpack.c.b16 %v1444, %v1440
  %v2585 = vpack.c.b16 %v1449, %v1445
  %v2586 = vpack.c.b16 %v1450, %v1446
  %v2587 = vpack.c.b16 %v1451, %v1447
  %v2588 = vpack.c.b16 %v1452, %v1448
  %v2589 = vpack.c.b16 %v1457, %v1453
  %v2590 = vpack.c.b16 %v1458, %v1454
  %v2591 = vpack.c.b16 %v1459, %v1455
  %v2592 = vpack.c.b16 %v1460, %v1456
  %v2593 = vpack.c.b16 %v1465, %v1461
  %v2594 = vpack.c.b16 %v1466, %v1462
  %v2595 = vpack.c.b16 %v1467, %v1463
  %v2596 = vpack.c.b16 %v1468, %v1464
  %v2597 = vpack.c.b16 %v1473, %v1469
  %v2598 = vpack.c.b16 %v1474, %v1470
  %v2599 = vpack.c.b16 %v1475, %v1471
  %v2600 = vpack.c.b16 %v1476, %v1472
  %v2601 = vpack.c.b16 %v1481, %v1477
  %v2602 = vpack.c.b16 %v1482, %v1478
  %v2603 = vpack.c.b16 %v1483, %v1479
  %v2604 = vpack.c.b16 %v1484, %v1480
  %v2605 = vpack.c.b16 %v1489, %v1485
  %v2606 = vpack.c.b16 %v1490, %v1486
  %v2607 = vpack.c.b16 %v1491, %v1487
  %v2608 = vpack.c.b16 %v1492, %v1488
  %v2609 = vpack.c.b16 %v1497, %v1493
  %v2610 = vpack.c.b16 %v1498, %v1494
  %v2611 = vpack.c.b16 %v1499, %v1495
  %v2612 = vpack.c.b16 %v1500, %v1496
  %v2613 = vpack.c.b16 %v1505, %v1501
  %v2614 = vpack.c.b16 %v1506, %v1502
  %v2615 = vpack.c.b16 %v1507, %v1503
  %v2616 = vpack.c.b16 %v1508, %v1504
  %v2617 = vpack.c.b16 %v1513, %v1509
  %v2618 = vpack.c.b16 %v1514, %v1510
  %v2619 = vpack.c.b16 %v1515, %v1511
  %v2620 = vpack.c.b16 %v1516, %v1512
  %v2621 = vpack.c.b16 %v1521, %v1517
  %v2622 = vpack.c.b16 %v1522, %v1518
  %v2623 = vpack.c.b16 %v1523, %v1519
  %v2624 = vpack.c.b16 %v1524, %v1520
  %v2625 = vpack.c.b16 %v1529, %v1525
  %v2626 = vpack.c.b16 %v1530, %v1526
  %v2627 = vpack.c.b16 %v1531, %v1527
  %v2628 = vpack.c.b16 %v1532, %v1528
  %v2629 = vpack.c.b16 %v1537, %v1533
  %v2630 = vpack.c.b16 %v1538, %v1534
  %v2631 = vpack.c.b16 %v1539, %v1535
  %v2632 = vpack.c.b16 %v1540, %v1536
  %v2633 = vpack.c.b16 %v1545, %v1541
  %v2634 = vpack.c.b16 %v1546, %v1542
  %v2635 = vpack.c.b16 %v1547, %v1543
  %v2636 = vpack.c.b16 %v1548, %v1544
  %v2637 = vpack.c.b16 %v1553, %v1549
  %v2638 = vpack.c.b16 %v1554, %v1550
  %v2639 = vpack.c.b16 %v1555, %v1551
  %v2640 = vpack.c.b16 %v1556, %v1552
  %v2641 = vpack.c.b16 %v1561, %v1557
  %v2642 = vpack.c.b16 %v1562, %v1558
  %v2643 = vpack.c.b16 %v1563, %v1559
  %v2644 = vpack.c.b16 %v1564, %v1560
  %v2645 = vpack.c.b16 %v1569, %v1565
  %v2646 = vpack.c.b16 %v1570, %v1566
  %v2647 = vpack.c.b16 %v1571, %v1567
  %v2648 = vpack.c.b16 %v1572, %v1568
  %v2649 = vpack.c.b16 %v1577, %v1573
  %v2650 = vpack.c.b16 %v1578, %v1574
  %v2651 = vpack.c.b16 %v1579, %v1575
  %v2652 = vpack.c.b16 %v1580, %v1576
  %v2653 = vpack.c.b16 %v1585, %v1581
  %v2654 = vpack.c.b16 %v1586, %v1582
  %v2655 = vpack.c.b16 %v1587, %v1583
  %v2656 = vpack.c.b16 %v1588, %v1584
  %v2657 = vpack.c.b16 %v1593, %v1589
  %v2658 = vpack.c.b16 %v1594, %v1590
  %v2659 = vpack.c.b16 %v1595, %v1591
  %v2660 = vpack.c.b16 %v1596, %v1592
  %v2661 = vpack.c.b16 %v1601, %v1597
  %v2662 = vpack.c.b16 %v1602, %v1598
  %v2663 = vpack.c.b16 %v1603, %v1599
  %v2664 = vpack.c.b16 %v1604, %v1600
  %v2665 = vpack.c.b16 %v1609, %v1605
  %v2666 = vpack.c.b16 %v1610, %v1606
  %v2667 = vpack.c.b16 %v1611, %v1607
  %v2668 = vpack.c.b16 %v1612, %v1608
  %v2669 = vpack.c.b16 %v1617, %v1613
  %v2670 = vpack.c.b16 %v1618, %v1614
  %v2671 = vpack.c.b16 %v1619, %v1615
  %v2672 = vpack.c.b16 %v1620, %v1616
  %v2673 = vpack.c.b16 %v1625, %v1621
  %v2674 = vpack.c.b16 %v1626, %v1622
  %v2675 = vpack.c.b16 %v1627, %v1623
  %v2676 = vpack.c.b16 %v1628, %v1624
  %v2677 = vpack.c.b16 %v1633, %v1629
  %v2678 = vpack.c.b16 %v1634, %v1630
  %v2679 = vpack.c.b16 %v1635, %v1631
  %v2680 = vpack.c.b16 %v1636, %v1632
  %v2681 = vpack.c.b16 %v1641, %v1637
  %v2682 = vpack.c.b16 %v1642, %v1638
  %v2683 = vpack.c.b16 %v1643, %v1639
  %v2684 = vpack.c.b16 %v1644, %v1640
  %v2685 = vpack.c.b16 %v1649, %v1645
  %v2686 = vpack.c.b16 %v1650, %v1646
  %v2687 = vpack.c.b16 %v1651, %v1647
  %v2688 = vpack.c.b16 %v1652, %v1648
  %v2689 = vpack.c.b16 %v1657, %v1653
  %v2690 = vpack.c.b16 %v1658, %v1654
  %v2691 = vpack.c.b16 %v1659, %v1655
  %v2692 = vpack.c.b16 %v1660, %v1656
  %v2693 = vpack.c.b16 %v1665, %v1661
  %v2694 = vpack.c.b16 %v1666, %v1662
  %v2695 = vpack.c.b16 %v1667, %v1663
  %v2696 = vpack.c.b16 %v1668, %v1664
  %v2697 = vpack.c.b16 %v1673, %v1669
  %v2698 = vpack.c.b16 %v1674, %v1670
  %v2699 = vpack.c.b16 %v1675, %v1671
  %v2700 = vpack.c.b16 %v1676, %v1672
  %v2701 = vpack.c.b16 %v1681, %v1677
  %v2702 = vpack.c.b16 %v1682, %v1678
  %v2703 = vpack.c.b16 %v1683, %v1679
  %v2704 = vpack.c.b16 %v1684, %v1680
  %v2705 = vpack.c.b16 %v1689, %v1685
  %v2706 = vpack.c.b16 %v1690, %v1686
  %v2707 = vpack.c.b16 %v1691, %v1687
  %v2708 = vpack.c.b16 %v1692, %v1688
  %v2709 = vpack.c.b16 %v1697, %v1693
  %v2710 = vpack.c.b16 %v1698, %v1694
  %v2711 = vpack.c.b16 %v1699, %v1695
  %v2712 = vpack.c.b16 %v1700, %v1696
  %v2713 = vpack.c.b16 %v1705, %v1701
  %v2714 = vpack.c.b16 %v1706, %v1702
  %v2715 = vpack.c.b16 %v1707, %v1703
  %v2716 = vpack.c.b16 %v1708, %v1704
  %v2717 = vpack.c.b16 %v1713, %v1709
  %v2718 = vpack.c.b16 %v1714, %v1710
  %v2719 = vpack.c.b16 %v1715, %v1711
  %v2720 = vpack.c.b16 %v1716, %v1712
  %v2721 = vpack.c.b16 %v1721, %v1717
  %v2722 = vpack.c.b16 %v1722, %v1718
  %v2723 = vpack.c.b16 %v1723, %v1719
  %v2724 = vpack.c.b16 %v1724, %v1720
  %v2725 = vpack.c.b16 %v1729, %v1725
  %v2726 = vpack.c.b16 %v1730, %v1726
  %v2727 = vpack.c.b16 %v1731, %v1727
  %v2728 = vpack.c.b16 %v1732, %v1728
  %v2729 = vpack.c.b16 %v1737, %v1733
  %v2730 = vpack.c.b16 %v1738, %v1734
  %v2731 = vpack.c.b16 %v1739, %v1735
  %v2732 = vpack.c.b16 %v1740, %v1736
  %v2733 = vpack.c.b16 %v1745, %v1741
  %v2734 = vpack.c.b16 %v1746, %v1742
  %v2735 = vpack.c.b16 %v1747, %v1743
  %v2736 = vpack.c.b16 %v1748, %v1744
  %v2737 = vpack.c.b16 %v1753, %v1749
  %v2738 = vpack.c.b16 %v1754, %v1750
  %v2739 = vpack.c.b16 %v1755, %v1751
  %v2740 = vpack.c.b16 %v1756, %v1752
  %v2741 = vpack.c.b16 %v1761, %v1757
  %v2742 = vpack.c.b16 %v1762, %v1758
  %v2743 = vpack.c.b16 %v1763, %v1759
  %v2744 = vpack.c.b16 %v1764, %v1760
  %v2745 = vpack.c.b16 %v1769, %v1765
  %v2746 = vpack.c.b16 %v1770, %v1766
  %v2747 = vpack.c.b16 %v1771, %v1767
  %v2748 = vpack.c.b16 %v1772, %v1768
  %v2749 = vpack.c.b16 %v1777, %v1773
  %v2750 = vpack.c.b16 %v1778, %v1774
  %v2751 = vpack.c.b16 %v1779, %v1775
  %v2752 = vpack.c.b16 %v1780, %v1776
  %v2753 = vpack.c.b16 %v1785, %v1781
  %v2754 = vpack.c.b16 %v1786, %v1782
  %v2755 = vpack.c.b16 %v1787, %v1783
  %v2756 = vpack.c.b16 %v1788, %v1784
  %v2757 = vpack.c.b16 %v1793, %v1789
  %v2758 = vpack.c.b16 %v1794, %v1790
  %v2759 = vpack.c.b16 %v1795, %v1791
  %v2760 = vpack.c.b16 %v1796, %v1792
  %v2761 = vpack.c.b16 %v1801, %v1797
  %v2762 = vpack.c.b16 %v1802, %v1798
  %v2763 = vpack.c.b16 %v1803, %v1799
  %v2764 = vpack.c.b16 %v1804, %v1800
  %v2765 = vpack.c.b16 %v1809, %v1805
  %v2766 = vpack.c.b16 %v1810, %v1806
  %v2767 = vpack.c.b16 %v1811, %v1807
  %v2768 = vpack.c.b16 %v1812, %v1808
  %v2769 = vpack.c.b16 %v1817, %v1813
  %v2770 = vpack.c.b16 %v1818, %v1814
  %v2771 = vpack.c.b16 %v1819, %v1815
  %v2772 = vpack.c.b16 %v1820, %v1816
  %v2773 = vpack.c.b16 %v1825, %v1821
  %v2774 = vpack.c.b16 %v1826, %v1822
  %v2775 = vpack.c.b16 %v1827, %v1823
  %v2776 = vpack.c.b16 %v1828, %v1824
  %v2777 = vpack.c.b16 %v1833, %v1829
  %v2778 = vpack.c.b16 %v1834, %v1830
  %v2779 = vpack.c.b16 %v1835, %v1831
  %v2780 = vpack.c.b16 %v1836, %v1832
  %v2781 = vpack.c.b16 %v1841, %v1837
  %v2782 = vpack.c.b16 %v1842, %v1838
  %v2783 = vpack.c.b16 %v1843, %v1839
  %v2784 = vpack.c.b16 %v1844, %v1840
  %v2785 = vpack.c.b16 %v1849, %v1845
  %v2786 = vpack.c.b16 %v1850, %v1846
  %v2787 = vpack.c.b16 %v1851, %v1847
  %v2788 = vpack.c.b16 %v1852, %v1848
  %v2789 = vpack.c.b16 %v1857, %v1853
  %v2790 = vpack.c.b16 %v1858, %v1854
  %v2791 = vpack.c.b16 %v1859, %v1855
  %v2792 = vpack.c.b16 %v1860, %v1856
  %v2793 = vpack.c.b16 %v1865, %v1861
  %v2794 = vpack.c.b16 %v1866, %v1862
  %v2795 = vpack.c.b16 %v1867, %v1863
  %v2796 = vpack.c.b16 %v1868, %v1864
  %v2797 = vpack.c.b16 %v1873, %v1869
  %v2798 = vpack.c.b16 %v1874, %v1870
  %v2799 = vpack.c.b16 %v1875, %v1871
  %v2800 = vpack.c.b16 %v1876, %v1872
  %v2801 = vpack.c.b16 %v1881, %v1877
  %v2802 = vpack.c.b16 %v1882, %v1878
  %v2803 = vpack.c.b16 %v1883, %v1879
  %v2804 = vpack.c.b16 %v1884, %v1880
  %v2805 = vpack.c.b16 %v1889, %v1885
  %v2806 = vpack.c.b16 %v1890, %v1886
  %v2807 = vpack.c.b16 %v1891, %v1887
  %v2808 = vpack.c.b16 %v1892, %v1888
  %v2809 = vpack.c.b16 %v1897, %v1893
  %v2810 = vpack.c.b16 %v1898, %v1894
  %v2811 = vpack.c.b16 %v1899, %v1895
  %v2812 = vpack.c.b16 %v1900, %v1896
  %v2813 = vpack.c.b16 %v1905, %v1901
  %v2814 = vpack.c.b16 %v1906, %v1902
  %v2815 = vpack.c.b16 %v1907, %v1903
  %v2816 = vpack.c.b16 %v1908, %v1904
  %v2817 = vpack.c.b16 %v1913, %v1909
  %v2818 = vpack.c.b16 %v1914, %v1910
  %v2819 = vpack.c.b16 %v1915, %v1911
  %v2820 = vpack.c.b16 %v1916, %v1912
  %v2821 = vpack.c.b16 %v1921, %v1917
  %v2822 = vpack.c.b16 %v1922, %v1918
  %v2823 = vpack.c.b16 %v1923, %v1919
  %v2824 = vpack.c.b16 %v1924, %v1920
  %v2825 = vpack.c.b16 %v1929, %v1925
  %v2826 = vpack.c.b16 %v1930, %v1926
  %v2827 = vpack.c.b16 %v1931, %v1927
  %v2828 = vpack.c.b16 %v1932, %v1928
  %v2829 = vpack.c.b16 %v1937, %v1933
  %v2830 = vpack.c.b16 %v1938, %v1934
  %v2831 = vpack.c.b16 %v1939, %v1935
  %v2832 = vpack.c.b16 %v1940, %v1936
  %v2833 = vpack.c.b16 %v1945, %v1941
  %v2834 = vpack.c.b16 %v1946, %v1942
  %v2835 = vpack.c.b16 %v1947, %v1943
  %v2836 = vpack.c.b16 %v1948, %v1944
  %v2837 = vpack.c.b16 %v1953, %v1949
  %v2838 = vpack.c.b16 %v1954, %v1950
  %v2839 = vpack.c.b16 %v1955, %v1951
  %v2840 = vpack.c.b16 %v1956, %v1952
  %v2841 = vpack.c.b16 %v1961, %v1957
  %v2842 = vpack.c.b16 %v1962, %v1958
  %v2843 = vpack.c.b16 %v1963, %v1959
  %v2844 = vpack.c.b16 %v1964, %v1960
  %v2845 = vpack.c.b16 %v1969, %v1965
  %v2846 = vpack.c.b16 %v1970, %v1966
  %v2847 = vpack.c.b16 %v1971, %v1967
  %v2848 = vpack.c.b16 %v1972, %v1968
  %v2849 = vpack.c.b16 %v1977, %v1973
  %v2850 = vpack.c.b16 %v1978, %v1974
  %v2851 = vpack.c.b16 %v1979, %v1975
  %v2852 = vpack.c.b16 %v1980, %v1976
  %v2853 = vpack.c.b16 %v1985, %v1981
  %v2854 = vpack.c.b16 %v1986, %v1982
  %v2855 = vpack.c.b16 %v1987, %v1983
  %v2856 = vpack.c.b16 %v1988, %v1984
  %v2857 = vpack.c.b16 %v1993, %v1989
  %v2858 = vpack.c.b16 %v1994, %v1990
  %v2859 = vpack.c.b16 %v1995, %v1991
  %v2860 = vpack.c.b16 %v1996, %v1992
  %v2861 = vpack.c.b16 %v2001, %v1997
  %v2862 = vpack.c.b16 %v2002, %v1998
  %v2863 = vpack.c.b16 %v2003, %v1999
  %v2864 = vpack.c.b16 %v2004, %v2000
  %v2865 = vpack.c.b16 %v2009, %v2005
  %v2866 = vpack.c.b16 %v2010, %v2006
  %v2867 = vpack.c.b16 %v2011, %v2007
  %v2868 = vpack.c.b16 %v2012, %v2008
  %v2869 = vpack.c.b16 %v2017, %v2013
  %v2870 = vpack.c.b16 %v2018, %v2014
  %v2871 = vpack.c.b16 %v2019, %v2015
  %v2872 = vpack.c.b16 %v2020, %v2016
  %v2873 = vpack.c.b16 %v2025, %v2021
  %v2874 = vpack.c.b16 %v2026, %v2022
  %v2875 = vpack.c.b16 %v2027, %v2023
  %v2876 = vpack.c.b16 %v2028, %v2024
  %v2877 = vpack.c.b16 %v2033, %v2029
  %v2878 = vpack.c.b16 %v2034, %v2030
  %v2879 = vpack.c.b16 %v2035, %v2031
  %v2880 = vpack.c.b16 %v2036, %v2032
  %v2881 = vpack.c.b16 %v2041, %v2037
  %v2882 = vpack.c.b16 %v2042, %v2038
  %v2883 = vpack.c.b16 %v2043, %v2039
  %v2884 = vpack.c.b16 %v2044, %v2040
  %v2885 = vpack.c.b16 %v2049, %v2045
  %v2886 = vpack.c.b16 %v2050, %v2046
  %v2887 = vpack.c.b16 %v2051, %v2047
  %v2888 = vpack.c.b16 %v2052, %v2048
  %v2889 = vpack.c.b16 %v2057, %v2053
  %v2890 = vpack.c.b16 %v2058, %v2054
  %v2891 = vpack.c.b16 %v2059, %v2055
  %v2892 = vpack.c.b16 %v2060, %v2056
  %v2893 = vpack.c.b16 %v2065, %v2061
  %v2894 = vpack.c.b16 %v2066, %v2062
  %v2895 = vpack.c.b16 %v2067, %v2063
  %v2896 = vpack.c.b16 %v2068, %v2064
  %v2897 = vpack.c.b16 %v2073, %v2069
  %v2898 = vpack.c.b16 %v2074, %v2070
  %v2899 = vpack.c.b16 %v2075, %v2071
  %v2900 = vpack.c.b16 %v2076, %v2072
  %v2901 = vpack.c.b16 %v2081, %v2077
  %v2902 = vpack.c.b16 %v2082, %v2078
  %v2903 = vpack.c.b16 %v2083, %v2079
  %v2904 = vpack.c.b16 %v2084, %v2080
  %v2905 = vpack.c.b16 %v2089, %v2085
  %v2906 = vpack.c.b16 %v2090, %v2086
  %v2907 = vpack.c.b16 %v2091, %v2087
  %v2908 = vpack.c.b16 %v2092, %v2088
  %v2909 = vpack.c.b16 %v2097, %v2093
  %v2910 = vpack.c.b16 %v2098, %v2094
  %v2911 = vpack.c.b16 %v2099, %v2095
  %v2912 = vpack.c.b16 %v2100, %v2096
  %v2913 = vpack.c.b16 %v2105, %v2101
  %v2914 = vpack.c.b16 %v2106, %v2102
  %v2915 = vpack.c.b16 %v2107, %v2103
  %v2916 = vpack.c.b16 %v2108, %v2104
  %v2917 = vpack.c.b16 %v2113, %v2109
  %v2918 = vpack.c.b16 %v2114, %v2110
  %v2919 = vpack.c.b16 %v2115, %v2111
  %v2920 = vpack.c.b16 %v2116, %v2112
  %v2921 = vpack.c.b16 %v2121, %v2117
  %v2922 = vpack.c.b16 %v2122, %v2118
  %v2923 = vpack.c.b16 %v2123, %v2119
  %v2924 = vpack.c.b16 %v2124, %v2120
  %v2925 = vpack.c.b16 %v2129, %v2125
  %v2926 = vpack.c.b16 %v2130, %v2126
  %v2927 = vpack.c.b16 %v2131, %v2127
  %v2928 = vpack.c.b16 %v2132, %v2128
  %v2929 = vpack.c.b16 %v2137, %v2133
  %v2930 = vpack.c.b16 %v2138, %v2134
  %v2931 = vpack.c.b16 %v2139, %v2135
  %v2932 = vpack.c.b16 %v2140, %v2136
  %v2933 = vpack.c.b16 %v2145, %v2141
  %v2934 = vpack.c.b16 %v2146, %v2142
  %v2935 = vpack.c.b16 %v2147, %v2143
  %v2936 = vpack.c.b16 %v2148, %v2144
  %v2937 = vpack.c.b16 %v2153, %v2149
  %v2938 = vpack.c.b16 %v2154, %v2150
  %v2939 = vpack.c.b16 %v2155, %v2151
  %v2940 = vpack.c.b16 %v2156, %v2152
  %v2941 = vpack.c.b16 %v2161, %v2157
  %v2942 = vpack.c.b16 %v2162, %v2158
  %v2943 = vpack.c.b16 %v2163, %v2159
  %v2944 = vpack.c.b16 %v2164, %v2160
  %v2945 = vpack.c.b16 %v2169, %v2165
  %v2946 = vpack.c.b16 %v2170, %v2166
  %v2947 = vpack.c.b16 %v2171, %v2167
  %v2948 = vpack.c.b16 %v2172, %v2168
  %v2949 = vpack.c.b16 %v2177, %v2173
  %v2950 = vpack.c.b16 %v2178, %v2174
  %v2951 = vpack.c.b16 %v2179, %v2175
  %v2952 = vpack.c.b16 %v2180, %v2176
  %v2953 = vpack.c.b16 %v2185, %v2181
  %v2954 = vpack.c.b16 %v2186, %v2182
  %v2955 = vpack.c.b16 %v2187, %v2183
  %v2956 = vpack.c.b16 %v2188, %v2184
  %v2957 = vpack.c.b16 %v2193, %v2189
  %v2958 = vpack.c.b16 %v2194, %v2190
  %v2959 = vpack.c.b16 %v2195, %v2191
  %v2960 = vpack.c.b16 %v2196, %v2192
  %v2961 = vpack.c.b16 %v2201, %v2197
  %v2962 = vpack.c.b16 %v2202, %v2198
  %v2963 = vpack.c.b16 %v2203, %v2199
  %v2964 = vpack.c.b16 %v2204, %v2200
  %v2965 = vpack.c.b16 %v2209, %v2205
  %v2966 = vpack.c.b16 %v2210, %v2206
  %v2967 = vpack.c.b16 %v2211, %v2207
  %v2968 = vpack.c.b16 %v2212, %v2208
  %v2969 = vpack.c.b16 %v2217, %v2213
  %v2970 = vpack.c.b16 %v2218, %v2214
  %v2971 = vpack.c.b16 %v2219, %v2215
  %v2972 = vpack.c.b16 %v2220, %v2216
  %v2973 = vpack.c.b16 %v2225, %v2221
  %v2974 = vpack.c.b16 %v2226, %v2222
  %v2975 = vpack.c.b16 %v2227, %v2223
  %v2976 = vpack.c.b16 %v2228, %v2224
  %v2977 = vpack.c.b16 %v2233, %v2229
  %v2978 = vpack.c.b16 %v2234, %v2230
  %v2979 = vpack.c.b16 %v2235, %v2231
  %v2980 = vpack.c.b16 %v2236, %v2232
  %v2981 = vpack.c.b16 %v2241, %v2237
  %v2982 = vpack.c.b16 %v2242, %v2238
  %v2983 = vpack.c.b16 %v2243, %v2239
  %v2984 = vpack.c.b16 %v2244, %v2240
  %v2985 = vpack.c.b16 %v2249, %v2245
  %v2986 = vpack.c.b16 %v2250, %v2246
  %v2987 = vpack.c.b16 %v2251, %v2247
  %v2988 = vpack.c.b16 %v2252, %v2248
  %v2989 = vpack.c.b16 %v2257, %v2253
  %v2990 = vpack.c.b16 %v2258, %v2254
  %v2991 = vpack.c.b16 %v2259, %v2255
  %v2992 = vpack.c.b16 %v2260, %v2256
  %v2993 = vpack.c.b16 %v2265, %v2261
  %v2994 = vpack.c.b16 %v2266, %v2262
  %v2995 = vpack.c.b16 %v2267, %v2263
  %v2996 = vpack.c.b16 %v2268, %v2264
  %v2997 = vpack.c.b16 %v2273, %v2269
  %v2998 = vpack.c.b16 %v2274, %v2270
  %v2999 = vpack.c.b16 %v2275, %v2271
  %v3000 = vpack.c.b16 %v2276, %v2272
  %v3001 = vpack.c.b16 %v2281, %v2277
  %v3002 = vpack.c.b16 %v2282, %v2278
  %v3003 = vpack.c.b16 %v2283, %v2279
  %v3004 = vpack.c.b16 %v2284, %v2280
  %v3005 = vpack.c.b16 %v2289, %v2285
  %v3006 = vpack.c.b16 %v2290, %v2286
  %v3007 = vpack.c.b16 %v2291, %v2287
  %v3008 = vpack.c.b16 %v2292, %v2288
  %v3009 = vpack.c.b16 %v2297, %v2293
  %v3010 = vpack.c.b16 %v2298, %v2294
  %v3011 = vpack.c.b16 %v2299, %v2295
  %v3012 = vpack.c.b16 %v2300, %v2296
  %v3013 = vpack.c.b16 %v2305, %v2301
  %v3014 = vpack.c.b16 %v2306, %v2302
  %v3015 = vpack.c.b16 %v2307, %v2303
  %v3016 = vpack.c.b16 %v2308, %v2304
  %v3017 = vpack.c.b16 %v2313, %v2309
  %v3018 = vpack.c.b16 %v2314, %v2310
  %v3019 = vpack.c.b16 %v2315, %v2311
  %v3020 = vpack.c.b16 %v2316, %v2312
  %v3021 = vpack.c.b16 %v2321, %v2317
  %v3022 = vpack.c.b16 %v2322, %v2318
  %v3023 = vpack.c.b16 %v2323, %v2319
  %v3024 = vpack.c.b16 %v2324, %v2320
  %v3025 = vpack.c.b16 %v2329, %v2325
  %v3026 = vpack.c.b16 %v2330, %v2326
  %v3027 = vpack.c.b16 %v2331, %v2327
  %v3028 = vpack.c.b16 %v2332, %v2328
  %v3029 = vpack.c.b16 %v2337, %v2333
  %v3030 = vpack.c.b16 %v2338, %v2334
  %v3031 = vpack.c.b16 %v2339, %v2335
  %v3032 = vpack.c.b16 %v2340, %v2336
  %v3033 = vpack.c.b16 %v2345, %v2341
  %v3034 = vpack.c.b16 %v2346, %v2342
  %v3035 = vpack.c.b16 %v2347, %v2343
  %v3036 = vpack.c.b16 %v2348, %v2344
  %v3037 = vpack.c.b16 %v2353, %v2349
  %v3038 = vpack.c.b16 %v2354, %v2350
  %v3039 = vpack.c.b16 %v2355, %v2351
  %v3040 = vpack.c.b16 %v2356, %v2352
  %v3041 = vpack.c.b16 %v2361, %v2357
  %v3042 = vpack.c.b16 %v2362, %v2358
  %v3043 = vpack.c.b16 %v2363, %v2359
  %v3044 = vpack.c.b16 %v2364, %v2360
  %v3045 = vpack.c.b16 %v2369, %v2365
  %v3046 = vpack.c.b16 %v2370, %v2366
  %v3047 = vpack.c.b16 %v2371, %v2367
  %v3048 = vpack.c.b16 %v2372, %v2368
  %v3049 = vpack.c.b16 %v2377, %v2373
  %v3050 = vpack.c.b16 %v2378, %v2374
  %v3051 = vpack.c.b16 %v2379, %v2375
  %v3052 = vpack.c.b16 %v2380, %v2376
  %v3053 = vpack.c.b16 %v2385, %v2381
  %v3054 = vpack.c.b16 %v2386, %v2382
  %v3055 = vpack.c.b16 %v2387, %v2383
  %v3056 = vpack.c.b16 %v2388, %v2384
  %v3057 = vpack.c.b16 %v2393, %v2389
  %v3058 = vpack.c.b16 %v2394, %v2390
  %v3059 = vpack.c.b16 %v2395, %v2391
  %v3060 = vpack.c.b16 %v2396, %v2392
  %v3061 = vpack.c.b16 %v2401, %v2397
  %v3062 = vpack.c.b16 %v2402, %v2398
  %v3063 = vpack.c.b16 %v2403, %v2399
  %v3064 = vpack.c.b16 %v2404, %v2400
  %v3065 = vpack.c.b16 %v2409, %v2405
  %v3066 = vpack.c.b16 %v2410, %v2406
  %v3067 = vpack.c.b16 %v2411, %v2407
  %v3068 = vpack.c.b16 %v2412, %v2408
  %v3069 = vpack.c.b16 %v2417, %v2413
  %v3070 = vpack.c.b16 %v2418, %v2414
  %v3071 = vpack.c.b16 %v2419, %v2415
  %v3072 = vpack.c.b16 %v2420, %v2416
  %v3073 = vpack.c.b16 %v2425, %v2421
  %v3074 = vpack.c.b16 %v2426, %v2422
  %v3075 = vpack.c.b16 %v2427, %v2423
  %v3076 = vpack.c.b16 %v2428, %v2424
  %v3077 = vpack.c.b16 %v2433, %v2429
  %v3078 = vpack.c.b16 %v2434, %v2430
  %v3079 = vpack.c.b16 %v2435, %v2431
  %v3080 = vpack.c.b16 %v2436, %v2432
  %v3081 = vpack.c.b16 %v2441, %v2437
  %v3082 = vpack.c.b16 %v2442, %v2438
  %v3083 = vpack.c.b16 %v2443, %v2439
  %v3084 = vpack.c.b16 %v2444, %v2440
  %v3085 = vpack.c.b16 %v2449, %v2445
  %v3086 = vpack.c.b16 %v2450, %v2446
  %v3087 = vpack.c.b16 %v2451, %v2447
  %v3088 = vpack.c.b16 %v2452, %v2448
  %v3089 = vpack.c.b16 %v2457, %v2453
  %v3090 = vpack.c.b16 %v2458, %v2454
  %v3091 = vpack.c.b16 %v2459, %v2455
  %v3092 = vpack.c.b16 %v2460, %v2456
  %v3093 = vpack.c.b16 %v2465, %v2461
  %v3094 = vpack.c.b16 %v2466, %v2462
  %v3095 = vpack.c.b16 %v2467, %v2463
  %v3096 = vpack.c.b16 %v2468, %v2464
  %v3097 = vpack.c.b16 %v2473, %v2469
  %v3098 = vpack.c.b16 %v2474, %v2470
  %v3099 = vpack.c.b16 %v2475, %v2471
  %v3100 = vpack.c.b16 %v2476, %v2472
  %v3101 = vpack.c.b16 %v2481, %v2477
  %v3102 = vpack.c.b16 %v2482, %v2478
  %v3103 = vpack.c.b16 %v2483, %v2479
  %v3104 = vpack.c.b16 %v2484, %v2480
  %v3105 = vpack.c.b16 %v2489, %v2485
  %v3106 = vpack.c.b16 %v2490, %v2486
  %v3107 = vpack.c.b16 %v2491, %v2487
  %v3108 = vpack.c.b16 %v2492, %v2488
  %v3109 = vpack.c.b16 %v2497, %v2493
  %v3110 = vpack.c.b16 %v2498, %v2494
  %v3111 = vpack.c.b16 %v2499, %v2495
  %v3112 = vpack.c.b16 %v2500, %v2496
  %v3113 = vpack.c.b16 %v2505, %v2501
  %v3114 = vpack.c.b16 %v2506, %v2502
  %v3115 = vpack.c.b16 %v2507, %v2503
  %v3116 = vpack.c.b16 %v2508, %v2504
  %v3117 = vpack.c.b16 %v2513, %v2509
  %v3118 = vpack.c.b16 %v2514, %v2510
  %v3119 = vpack.c.b16 %v2515, %v2511
  %v3120 = vpack.c.b16 %v2516, %v2512
  %v3121 = vpack.c.b16 %v2521, %v2517
  %v3122 = vpack.c.b16 %v2522, %v2518
  %v3123 = vpack.c.b16 %v2523, %v2519
  %v3124 = vpack.c.b16 %v2524, %v2520
  %v3125 = vpack.c.b16 %v2529, %v2525
  %v3126 = vpack.c.b16 %v2530, %v2526
  %v3127 = vpack.c.b16 %v2531, %v2527
  %v3128 = vpack.c.b16 %v2532, %v2528
  %v3129 = vpack.c.b16 %v2537, %v2533
  %v3130 = vpack.c.b16 %v2538, %v2534
  %v3131 = vpack.c.b16 %v2539, %v2535
  %v3132 = vpack.c.b16 %v2540, %v2536
  %v3133 = vpack.c.b16 %v2545, %v2541
  %v3134 = vpack.c.b16 %v2546, %v2542
  %v3135 = vpack.c.b16 %v2547, %v2543
  %v3136 = vpack.c.b16 %v2548, %v2544
  %v3137 = vpack.c.b16 %v2553, %v2549
  %v3138 = vpack.c.b16 %v2554, %v2550
  %v3139 = vpack.c.b16 %v2555, %v2551
  %v3140 = vpack.c.b16 %v2556, %v2552
  %v3141 = vpack.c.b16 %v2561, %v2557
  %v3142 = vpack.c.b16 %v2562, %v2558
  %v3143 = vpack.c.b16 %v2563, %v2559
  %v3144 = vpack.c.b16 %v2564, %v2560
  %v3145 = vpack.c.b16 %v2569, %v2565
  %v3146 = vpack.c.b16 %v2570, %v2566
  %v3147 = vpack.c.b16 %v2571, %v2567
  %v3148 = vpack.c.b16 %v2572, %v2568
  %3725 = vmatprep.subr.bf16.mxu0 %v2602
  %3726 = vmatpush1.bf16.msra.mxu0 %v2601
  %3727 = vmatprep.subr.bf16.mxu0 %v2598
  %3728 = vmatpush1.bf16.msra.mxu0 %v2597
  %3729 = vmatprep.subr.bf16.mxu0 %v2594
  %3730 = vmatpush1.bf16.msra.mxu0 %v2593
  %3731 = vmatprep.subr.bf16.mxu0 %v2590
  %3732 = vmatpush1.bf16.msra.mxu0 %v2589
  %3733 = vmatprep.subr.bf16.mxu0 %v2586
  %3734 = vmatpush1.bf16.msra.mxu0 %v2585
  %3735 = vmatprep.subr.bf16.mxu0 %v2582
  %3736 = vmatpush1.bf16.msra.mxu0 %v2581
  %3737 = vmatprep.subr.bf16.mxu0 %v2578
  %3738 = vmatpush1.bf16.msra.mxu0 %v2577
  %3739 = vmatprep.subr.bf16.mxu0 %v2574
  %3740 = vmatpush1.bf16.msra.mxu0 %v2573
  %3741 = vmatprep.subr.bf16.mxu0 %v2634
  %3742 = vmatpush2.bf16.msra.mxu0 %v2633
  %3743 = vmatprep.subr.bf16.mxu0 %v2630
  %3744 = vmatpush2.bf16.msra.mxu0 %v2629
  %3745 = vmatprep.subr.bf16.mxu0 %v2626
  %3746 = vmatpush2.bf16.msra.mxu0 %v2625
  %3747 = vmatprep.subr.bf16.mxu0 %v2622
  %3748 = vmatpush2.bf16.msra.mxu0 %v2621
  %3749 = vmatprep.subr.bf16.mxu0 %v2618
  %3750 = vmatpush2.bf16.msra.mxu0 %v2617
  %3751 = vmatprep.subr.bf16.mxu0 %v2614
  %3752 = vmatpush2.bf16.msra.mxu0 %v2613
  %3753 = vmatprep.subr.bf16.mxu0 %v2610
  %3754 = vmatpush2.bf16.msra.mxu0 %v2609
  %3755 = vmatprep.subr.bf16.mxu0 %v2606
  %3756 = vmatpush2.bf16.msra.mxu0 %v2605
  %3757 = vmatprep.mubr.bf16.mxu0 %v774
  %3758 = vmatmul.mubr.bf16.gmra.mxu0 %v773
  %v3759 = vpop.f32.mrf.mxu0
  %v3760 = vadd.f32 %v648, %v3759
  %v3761 = vpop.f32.mrf.mxu0
  %v3762 = vadd.f32 %v652, %v3761
  %v3763 = vpop.f32.mrf.mxu0
  %v3764 = vadd.f32 %v648, %v3763
  %v3765 = vpop.f32.mrf.mxu0
  %v3766 = vadd.f32 %v652, %v3765
  %3767 = vmatprep.mubr.bf16.mxu0 %v792
  %3768 = vmatmul.mubr.bf16.gmra.mxu0 %v791
  %v3769 = vpop.f32.mrf.mxu0
  %v3770 = vadd.f32 %v648, %v3769
  %v3771 = vpop.f32.mrf.mxu0
  %v3772 = vadd.f32 %v652, %v3771
  %v3773 = vpop.f32.mrf.mxu0
  %v3774 = vadd.f32 %v648, %v3773
  %v3775 = vpop.f32.mrf.mxu0
  %v3776 = vadd.f32 %v652, %v3775
  %3777 = vdwg.mxu0
  %3778 = vmatprep.subr.bf16.mxu0 %v2666
  %3779 = vmatpush1.bf16.msra.mxu0 %v2665
  %3780 = vmatprep.subr.bf16.mxu0 %v2662
  %3781 = vmatpush1.bf16.msra.mxu0 %v2661
  %3782 = vmatprep.subr.bf16.mxu0 %v2658
  %3783 = vmatpush1.bf16.msra.mxu0 %v2657
  %3784 = vmatprep.subr.bf16.mxu0 %v2654
  %3785 = vmatpush1.bf16.msra.mxu0 %v2653
  %3786 = vmatprep.subr.bf16.mxu0 %v2650
  %3787 = vmatpush1.bf16.msra.mxu0 %v2649
  %3788 = vmatprep.subr.bf16.mxu0 %v2646
  %3789 = vmatpush1.bf16.msra.mxu0 %v2645
  %3790 = vmatprep.subr.bf16.mxu0 %v2642
  %3791 = vmatpush1.bf16.msra.mxu0 %v2641
  %3792 = vmatprep.subr.bf16.mxu0 %v2638
  %3793 = vmatpush1.bf16.msra.mxu0 %v2637
  %3794 = vmatprep.subr.bf16.mxu0 %v2698
  %3795 = vmatpush2.bf16.msra.mxu0 %v2697
  %3796 = vmatprep.subr.bf16.mxu0 %v2694
  %3797 = vmatpush2.bf16.msra.mxu0 %v2693
  %3798 = vmatprep.subr.bf16.mxu0 %v2690
  %3799 = vmatpush2.bf16.msra.mxu0 %v2689
  %3800 = vmatprep.subr.bf16.mxu0 %v2686
  %3801 = vmatpush2.bf16.msra.mxu0 %v2685
  %3802 = vmatprep.subr.bf16.mxu0 %v2682
  %3803 = vmatpush2.bf16.msra.mxu0 %v2681
  %3804 = vmatprep.subr.bf16.mxu0 %v2678
  %3805 = vmatpush2.bf16.msra.mxu0 %v2677
  %3806 = vmatprep.subr.bf16.mxu0 %v2674
  %3807 = vmatpush2.bf16.msra.mxu0 %v2673
  %3808 = vmatprep.subr.bf16.mxu0 %v2670
  %3809 = vmatpush2.bf16.msra.mxu0 %v2669
  %3810 = vmatprep.mubr.bf16.mxu0 %v776
  %3811 = vmatmul.mubr.bf16.gmra.mxu0 %v775
  %v3812 = vpop.f32.mrf.mxu0
  %v3813 = vadd.f32 %v3760, %v3812
  %v3814 = vpop.f32.mrf.mxu0
  %v3815 = vadd.f32 %v3762, %v3814
  %v3816 = vpop.f32.mrf.mxu0
  %v3817 = vadd.f32 %v3764, %v3816
  %v3818 = vpop.f32.mrf.mxu0
  %v3819 = vadd.f32 %v3766, %v3818
  %3820 = vmatprep.mubr.bf16.mxu0 %v794
  %3821 = vmatmul.mubr.bf16.gmra.mxu0 %v793
  %v3822 = vpop.f32.mrf.mxu0
  %v3823 = vadd.f32 %v3770, %v3822
  %v3824 = vpop.f32.mrf.mxu0
  %v3825 = vadd.f32 %v3772, %v3824
  %v3826 = vpop.f32.mrf.mxu0
  %v3827 = vadd.f32 %v3774, %v3826
  %v3828 = vpop.f32.mrf.mxu0
  %v3829 = vadd.f32 %v3776, %v3828
  %3830 = vdwg.mxu0
  %3831 = vmatprep.subr.bf16.mxu0 %v2730
  %3832 = vmatpush1.bf16.msra.mxu0 %v2729
  %3833 = vmatprep.subr.bf16.mxu0 %v2726
  %3834 = vmatpush1.bf16.msra.mxu0 %v2725
  %3835 = vmatprep.subr.bf16.mxu0 %v2722
  %3836 = vmatpush1.bf16.msra.mxu0 %v2721
  %3837 = vmatprep.subr.bf16.mxu0 %v2718
  %3838 = vmatpush1.bf16.msra.mxu0 %v2717
  %3839 = vmatprep.subr.bf16.mxu0 %v2714
  %3840 = vmatpush1.bf16.msra.mxu0 %v2713
  %3841 = vmatprep.subr.bf16.mxu0 %v2710
  %3842 = vmatpush1.bf16.msra.mxu0 %v2709
  %3843 = vmatprep.subr.bf16.mxu0 %v2706
  %3844 = vmatpush1.bf16.msra.mxu0 %v2705
  %3845 = vmatprep.subr.bf16.mxu0 %v2702
  %3846 = vmatpush1.bf16.msra.mxu0 %v2701
  %3847 = vmatprep.subr.bf16.mxu0 %v2762
  %3848 = vmatpush2.bf16.msra.mxu0 %v2761
  %3849 = vmatprep.subr.bf16.mxu0 %v2758
  %3850 = vmatpush2.bf16.msra.mxu0 %v2757
  %3851 = vmatprep.subr.bf16.mxu0 %v2754
  %3852 = vmatpush2.bf16.msra.mxu0 %v2753
  %3853 = vmatprep.subr.bf16.mxu0 %v2750
  %3854 = vmatpush2.bf16.msra.mxu0 %v2749
  %3855 = vmatprep.subr.bf16.mxu0 %v2746
  %3856 = vmatpush2.bf16.msra.mxu0 %v2745
  %3857 = vmatprep.subr.bf16.mxu0 %v2742
  %3858 = vmatpush2.bf16.msra.mxu0 %v2741
  %3859 = vmatprep.subr.bf16.mxu0 %v2738
  %3860 = vmatpush2.bf16.msra.mxu0 %v2737
  %3861 = vmatprep.subr.bf16.mxu0 %v2734
  %3862 = vmatpush2.bf16.msra.mxu0 %v2733
  %3863 = vmatprep.mubr.bf16.mxu0 %v778
  %3864 = vmatmul.mubr.bf16.gmra.mxu0 %v777
  %v3865 = vpop.f32.mrf.mxu0
  %v3866 = vadd.f32 %v3813, %v3865
  %v3867 = vpop.f32.mrf.mxu0
  %v3868 = vadd.f32 %v3815, %v3867
  %v3869 = vpop.f32.mrf.mxu0
  %v3870 = vadd.f32 %v3817, %v3869
  %v3871 = vpop.f32.mrf.mxu0
  %v3872 = vadd.f32 %v3819, %v3871
  %3873 = vmatprep.mubr.bf16.mxu0 %v796
  %3874 = vmatmul.mubr.bf16.gmra.mxu0 %v795
  %v3875 = vpop.f32.mrf.mxu0
  %v3876 = vadd.f32 %v3823, %v3875
  %v3877 = vpop.f32.mrf.mxu0
  %v3878 = vadd.f32 %v3825, %v3877
  %v3879 = vpop.f32.mrf.mxu0
  %v3880 = vadd.f32 %v3827, %v3879
  %v3881 = vpop.f32.mrf.mxu0
  %v3882 = vadd.f32 %v3829, %v3881
  %3883 = vdwg.mxu0
  %3884 = vmatprep.subr.bf16.mxu0 %v2794
  %3885 = vmatpush1.bf16.msra.mxu0 %v2793
  %3886 = vmatprep.subr.bf16.mxu0 %v2790
  %3887 = vmatpush1.bf16.msra.mxu0 %v2789
  %3888 = vmatprep.subr.bf16.mxu0 %v2786
  %3889 = vmatpush1.bf16.msra.mxu0 %v2785
  %3890 = vmatprep.subr.bf16.mxu0 %v2782
  %3891 = vmatpush1.bf16.msra.mxu0 %v2781
  %3892 = vmatprep.subr.bf16.mxu0 %v2778
  %3893 = vmatpush1.bf16.msra.mxu0 %v2777
  %3894 = vmatprep.subr.bf16.mxu0 %v2774
  %3895 = vmatpush1.bf16.msra.mxu0 %v2773
  %3896 = vmatprep.subr.bf16.mxu0 %v2770
  %3897 = vmatpush1.bf16.msra.mxu0 %v2769
  %3898 = vmatprep.subr.bf16.mxu0 %v2766
  %3899 = vmatpush1.bf16.msra.mxu0 %v2765
  %3900 = vmatprep.subr.bf16.mxu0 %v2826
  %3901 = vmatpush2.bf16.msra.mxu0 %v2825
  %3902 = vmatprep.subr.bf16.mxu0 %v2822
  %3903 = vmatpush2.bf16.msra.mxu0 %v2821
  %3904 = vmatprep.subr.bf16.mxu0 %v2818
  %3905 = vmatpush2.bf16.msra.mxu0 %v2817
  %3906 = vmatprep.subr.bf16.mxu0 %v2814
  %3907 = vmatpush2.bf16.msra.mxu0 %v2813
  %3908 = vmatprep.subr.bf16.mxu0 %v2810
  %3909 = vmatpush2.bf16.msra.mxu0 %v2809
  %3910 = vmatprep.subr.bf16.mxu0 %v2806
  %3911 = vmatpush2.bf16.msra.mxu0 %v2805
  %3912 = vmatprep.subr.bf16.mxu0 %v2802
  %3913 = vmatpush2.bf16.msra.mxu0 %v2801
  %3914 = vmatprep.subr.bf16.mxu0 %v2798
  %3915 = vmatpush2.bf16.msra.mxu0 %v2797
  %3916 = vmatprep.mubr.bf16.mxu0 %v780
  %3917 = vmatmul.mubr.bf16.gmra.mxu0 %v779
  %v3918 = vpop.f32.mrf.mxu0
  %v3919 = vadd.f32 %v3866, %v3918
  %v3920 = vpop.f32.mrf.mxu0
  %v3921 = vadd.f32 %v3868, %v3920
  %v3922 = vpop.f32.mrf.mxu0
  %v3923 = vadd.f32 %v3870, %v3922
  %v3924 = vpop.f32.mrf.mxu0
  %v3925 = vadd.f32 %v3872, %v3924
  %3926 = vmatprep.mubr.bf16.mxu0 %v798
  %3927 = vmatmul.mubr.bf16.gmra.mxu0 %v797
  %v3928 = vpop.f32.mrf.mxu0
  %v3929 = vadd.f32 %v3876, %v3928
  %v3930 = vpop.f32.mrf.mxu0
  %v3931 = vadd.f32 %v3878, %v3930
  %v3932 = vpop.f32.mrf.mxu0
  %v3933 = vadd.f32 %v3880, %v3932
  %v3934 = vpop.f32.mrf.mxu0
  %v3935 = vadd.f32 %v3882, %v3934
  %3936 = vdwg.mxu0
  %3937 = vmatprep.subr.bf16.mxu0 %v2858
  %3938 = vmatpush1.bf16.msra.mxu0 %v2857
  %3939 = vmatprep.subr.bf16.mxu0 %v2854
  %3940 = vmatpush1.bf16.msra.mxu0 %v2853
  %3941 = vmatprep.subr.bf16.mxu0 %v2850
  %3942 = vmatpush1.bf16.msra.mxu0 %v2849
  %3943 = vmatprep.subr.bf16.mxu0 %v2846
  %3944 = vmatpush1.bf16.msra.mxu0 %v2845
  %3945 = vmatprep.subr.bf16.mxu0 %v2842
  %3946 = vmatpush1.bf16.msra.mxu0 %v2841
  %3947 = vmatprep.subr.bf16.mxu0 %v2838
  %3948 = vmatpush1.bf16.msra.mxu0 %v2837
  %3949 = vmatprep.subr.bf16.mxu0 %v2834
  %3950 = vmatpush1.bf16.msra.mxu0 %v2833
  %3951 = vmatprep.subr.bf16.mxu0 %v2830
  %3952 = vmatpush1.bf16.msra.mxu0 %v2829
  %3953 = vmatprep.subr.bf16.mxu0 %v2890
  %3954 = vmatpush2.bf16.msra.mxu0 %v2889
  %3955 = vmatprep.subr.bf16.mxu0 %v2886
  %3956 = vmatpush2.bf16.msra.mxu0 %v2885
  %3957 = vmatprep.subr.bf16.mxu0 %v2882
  %3958 = vmatpush2.bf16.msra.mxu0 %v2881
  %3959 = vmatprep.subr.bf16.mxu0 %v2878
  %3960 = vmatpush2.bf16.msra.mxu0 %v2877
  %3961 = vmatprep.subr.bf16.mxu0 %v2874
  %3962 = vmatpush2.bf16.msra.mxu0 %v2873
  %3963 = vmatprep.subr.bf16.mxu0 %v2870
  %3964 = vmatpush2.bf16.msra.mxu0 %v2869
  %3965 = vmatprep.subr.bf16.mxu0 %v2866
  %3966 = vmatpush2.bf16.msra.mxu0 %v2865
  %3967 = vmatprep.subr.bf16.mxu0 %v2862
  %3968 = vmatpush2.bf16.msra.mxu0 %v2861
  %3969 = vmatprep.mubr.bf16.mxu0 %v782
  %3970 = vmatmul.mubr.bf16.gmra.mxu0 %v781
  %v3971 = vpop.f32.mrf.mxu0
  %v3972 = vadd.f32 %v3919, %v3971
  %v3973 = vpop.f32.mrf.mxu0
  %v3974 = vadd.f32 %v3921, %v3973
  %v3975 = vpop.f32.mrf.mxu0
  %v3976 = vadd.f32 %v3923, %v3975
  %v3977 = vpop.f32.mrf.mxu0
  %v3978 = vadd.f32 %v3925, %v3977
  %3979 = vmatprep.mubr.bf16.mxu0 %v800
  %3980 = vmatmul.mubr.bf16.gmra.mxu0 %v799
  %v3981 = vpop.f32.mrf.mxu0
  %v3982 = vadd.f32 %v3929, %v3981
  %v3983 = vpop.f32.mrf.mxu0
  %v3984 = vadd.f32 %v3931, %v3983
  %v3985 = vpop.f32.mrf.mxu0
  %v3986 = vadd.f32 %v3933, %v3985
  %v3987 = vpop.f32.mrf.mxu0
  %v3988 = vadd.f32 %v3935, %v3987
  %3989 = vdwg.mxu0
  %3990 = vmatprep.subr.bf16.mxu0 %v2922
  %3991 = vmatpush1.bf16.msra.mxu0 %v2921
  %3992 = vmatprep.subr.bf16.mxu0 %v2918
  %3993 = vmatpush1.bf16.msra.mxu0 %v2917
  %3994 = vmatprep.subr.bf16.mxu0 %v2914
  %3995 = vmatpush1.bf16.msra.mxu0 %v2913
  %3996 = vmatprep.subr.bf16.mxu0 %v2910
  %3997 = vmatpush1.bf16.msra.mxu0 %v2909
  %3998 = vmatprep.subr.bf16.mxu0 %v2906
  %3999 = vmatpush1.bf16.msra.mxu0 %v2905
  %4000 = vmatprep.subr.bf16.mxu0 %v2902
  %4001 = vmatpush1.bf16.msra.mxu0 %v2901
  %4002 = vmatprep.subr.bf16.mxu0 %v2898
  %4003 = vmatpush1.bf16.msra.mxu0 %v2897
  %4004 = vmatprep.subr.bf16.mxu0 %v2894
  %4005 = vmatpush1.bf16.msra.mxu0 %v2893
  %4006 = vmatprep.subr.bf16.mxu0 %v2954
  %4007 = vmatpush2.bf16.msra.mxu0 %v2953
  %4008 = vmatprep.subr.bf16.mxu0 %v2950
  %4009 = vmatpush2.bf16.msra.mxu0 %v2949
  %4010 = vmatprep.subr.bf16.mxu0 %v2946
  %4011 = vmatpush2.bf16.msra.mxu0 %v2945
  %4012 = vmatprep.subr.bf16.mxu0 %v2942
  %4013 = vmatpush2.bf16.msra.mxu0 %v2941
  %4014 = vmatprep.subr.bf16.mxu0 %v2938
  %4015 = vmatpush2.bf16.msra.mxu0 %v2937
  %4016 = vmatprep.subr.bf16.mxu0 %v2934
  %4017 = vmatpush2.bf16.msra.mxu0 %v2933
  %4018 = vmatprep.subr.bf16.mxu0 %v2930
  %4019 = vmatpush2.bf16.msra.mxu0 %v2929
  %4020 = vmatprep.subr.bf16.mxu0 %v2926
  %4021 = vmatpush2.bf16.msra.mxu0 %v2925
  %4022 = vmatprep.mubr.bf16.mxu0 %v784
  %4023 = vmatmul.mubr.bf16.gmra.mxu0 %v783
  %v4024 = vpop.f32.mrf.mxu0
  %v4025 = vadd.f32 %v3972, %v4024
  %v4026 = vpop.f32.mrf.mxu0
  %v4027 = vadd.f32 %v3974, %v4026
  %v4028 = vpop.f32.mrf.mxu0
  %v4029 = vadd.f32 %v3976, %v4028
  %v4030 = vpop.f32.mrf.mxu0
  %v4031 = vadd.f32 %v3978, %v4030
  %4032 = vmatprep.mubr.bf16.mxu0 %v802
  %4033 = vmatmul.mubr.bf16.gmra.mxu0 %v801
  %v4034 = vpop.f32.mrf.mxu0
  %v4035 = vadd.f32 %v3982, %v4034
  %v4036 = vpop.f32.mrf.mxu0
  %v4037 = vadd.f32 %v3984, %v4036
  %v4038 = vpop.f32.mrf.mxu0
  %v4039 = vadd.f32 %v3986, %v4038
  %v4040 = vpop.f32.mrf.mxu0
  %v4041 = vadd.f32 %v3988, %v4040
  %4042 = vdwg.mxu0
  %4043 = vmatprep.subr.bf16.mxu0 %v2986
  %4044 = vmatpush1.bf16.msra.mxu0 %v2985
  %4045 = vmatprep.subr.bf16.mxu0 %v2982
  %4046 = vmatpush1.bf16.msra.mxu0 %v2981
  %4047 = vmatprep.subr.bf16.mxu0 %v2978
  %4048 = vmatpush1.bf16.msra.mxu0 %v2977
  %4049 = vmatprep.subr.bf16.mxu0 %v2974
  %4050 = vmatpush1.bf16.msra.mxu0 %v2973
  %4051 = vmatprep.subr.bf16.mxu0 %v2970
  %4052 = vmatpush1.bf16.msra.mxu0 %v2969
  %4053 = vmatprep.subr.bf16.mxu0 %v2966
  %4054 = vmatpush1.bf16.msra.mxu0 %v2965
  %4055 = vmatprep.subr.bf16.mxu0 %v2962
  %4056 = vmatpush1.bf16.msra.mxu0 %v2961
  %4057 = vmatprep.subr.bf16.mxu0 %v2958
  %4058 = vmatpush1.bf16.msra.mxu0 %v2957
  %4059 = vmatprep.subr.bf16.mxu0 %v3018
  %4060 = vmatpush2.bf16.msra.mxu0 %v3017
  %4061 = vmatprep.subr.bf16.mxu0 %v3014
  %4062 = vmatpush2.bf16.msra.mxu0 %v3013
  %4063 = vmatprep.subr.bf16.mxu0 %v3010
  %4064 = vmatpush2.bf16.msra.mxu0 %v3009
  %4065 = vmatprep.subr.bf16.mxu0 %v3006
  %4066 = vmatpush2.bf16.msra.mxu0 %v3005
  %4067 = vmatprep.subr.bf16.mxu0 %v3002
  %4068 = vmatpush2.bf16.msra.mxu0 %v3001
  %4069 = vmatprep.subr.bf16.mxu0 %v2998
  %4070 = vmatpush2.bf16.msra.mxu0 %v2997
  %4071 = vmatprep.subr.bf16.mxu0 %v2994
  %4072 = vmatpush2.bf16.msra.mxu0 %v2993
  %4073 = vmatprep.subr.bf16.mxu0 %v2990
  %4074 = vmatpush2.bf16.msra.mxu0 %v2989
  %4075 = vmatprep.mubr.bf16.mxu0 %v786
  %4076 = vmatmul.mubr.bf16.gmra.mxu0 %v785
  %v4077 = vpop.f32.mrf.mxu0
  %v4078 = vadd.f32 %v4025, %v4077
  %v4079 = vpop.f32.mrf.mxu0
  %v4080 = vadd.f32 %v4027, %v4079
  %v4081 = vpop.f32.mrf.mxu0
  %v4082 = vadd.f32 %v4029, %v4081
  %v4083 = vpop.f32.mrf.mxu0
  %v4084 = vadd.f32 %v4031, %v4083
  %4085 = vmatprep.mubr.bf16.mxu0 %v804
  %4086 = vmatmul.mubr.bf16.gmra.mxu0 %v803
  %v4087 = vpop.f32.mrf.mxu0
  %v4088 = vadd.f32 %v4035, %v4087
  %v4089 = vpop.f32.mrf.mxu0
  %v4090 = vadd.f32 %v4037, %v4089
  %v4091 = vpop.f32.mrf.mxu0
  %v4092 = vadd.f32 %v4039, %v4091
  %v4093 = vpop.f32.mrf.mxu0
  %v4094 = vadd.f32 %v4041, %v4093
  %4095 = vdwg.mxu0
  %4096 = vmatprep.subr.bf16.mxu0 %v3050
  %4097 = vmatpush1.bf16.msra.mxu0 %v3049
  %4098 = vmatprep.subr.bf16.mxu0 %v3046
  %4099 = vmatpush1.bf16.msra.mxu0 %v3045
  %4100 = vmatprep.subr.bf16.mxu0 %v3042
  %4101 = vmatpush1.bf16.msra.mxu0 %v3041
  %4102 = vmatprep.subr.bf16.mxu0 %v3038
  %4103 = vmatpush1.bf16.msra.mxu0 %v3037
  %4104 = vmatprep.subr.bf16.mxu0 %v3034
  %4105 = vmatpush1.bf16.msra.mxu0 %v3033
  %4106 = vmatprep.subr.bf16.mxu0 %v3030
  %4107 = vmatpush1.bf16.msra.mxu0 %v3029
  %4108 = vmatprep.subr.bf16.mxu0 %v3026
  %4109 = vmatpush1.bf16.msra.mxu0 %v3025
  %4110 = vmatprep.subr.bf16.mxu0 %v3022
  %4111 = vmatpush1.bf16.msra.mxu0 %v3021
  %4112 = vmatprep.subr.bf16.mxu0 %v3082
  %4113 = vmatpush2.bf16.msra.mxu0 %v3081
  %4114 = vmatprep.subr.bf16.mxu0 %v3078
  %4115 = vmatpush2.bf16.msra.mxu0 %v3077
  %4116 = vmatprep.subr.bf16.mxu0 %v3074
  %4117 = vmatpush2.bf16.msra.mxu0 %v3073
  %4118 = vmatprep.subr.bf16.mxu0 %v3070
  %4119 = vmatpush2.bf16.msra.mxu0 %v3069
  %4120 = vmatprep.subr.bf16.mxu0 %v3066
  %4121 = vmatpush2.bf16.msra.mxu0 %v3065
  %4122 = vmatprep.subr.bf16.mxu0 %v3062
  %4123 = vmatpush2.bf16.msra.mxu0 %v3061
  %4124 = vmatprep.subr.bf16.mxu0 %v3058
  %4125 = vmatpush2.bf16.msra.mxu0 %v3057
  %4126 = vmatprep.subr.bf16.mxu0 %v3054
  %4127 = vmatpush2.bf16.msra.mxu0 %v3053
  %4128 = vmatprep.mubr.bf16.mxu0 %v788
  %4129 = vmatmul.mubr.bf16.gmra.mxu0 %v787
  %v4130 = vpop.f32.mrf.mxu0
  %v4131 = vadd.f32 %v4078, %v4130
  %v4132 = vpop.f32.mrf.mxu0
  %v4133 = vadd.f32 %v4080, %v4132
  %v4134 = vpop.f32.mrf.mxu0
  %v4135 = vadd.f32 %v4082, %v4134
  %v4136 = vpop.f32.mrf.mxu0
  %v4137 = vadd.f32 %v4084, %v4136
  %4138 = vmatprep.mubr.bf16.mxu0 %v806
  %4139 = vmatmul.mubr.bf16.gmra.mxu0 %v805
  %v4140 = vpop.f32.mrf.mxu0
  %v4141 = vadd.f32 %v4088, %v4140
  %v4142 = vpop.f32.mrf.mxu0
  %v4143 = vadd.f32 %v4090, %v4142
  %v4144 = vpop.f32.mrf.mxu0
  %v4145 = vadd.f32 %v4092, %v4144
  %v4146 = vpop.f32.mrf.mxu0
  %v4147 = vadd.f32 %v4094, %v4146
  %4148 = vdwg.mxu0
  %4149 = vmatprep.subr.bf16.mxu0 %v3114
  %4150 = vmatpush1.bf16.msra.mxu0 %v3113
  %4151 = vmatprep.subr.bf16.mxu0 %v3110
  %4152 = vmatpush1.bf16.msra.mxu0 %v3109
  %4153 = vmatprep.subr.bf16.mxu0 %v3106
  %4154 = vmatpush1.bf16.msra.mxu0 %v3105
  %4155 = vmatprep.subr.bf16.mxu0 %v3102
  %4156 = vmatpush1.bf16.msra.mxu0 %v3101
  %4157 = vmatprep.subr.bf16.mxu0 %v3098
  %4158 = vmatpush1.bf16.msra.mxu0 %v3097
  %4159 = vmatprep.subr.bf16.mxu0 %v3094
  %4160 = vmatpush1.bf16.msra.mxu0 %v3093
  %4161 = vmatprep.subr.bf16.mxu0 %v3090
  %4162 = vmatpush1.bf16.msra.mxu0 %v3089
  %4163 = vmatprep.subr.bf16.mxu0 %v3086
  %4164 = vmatpush1.bf16.msra.mxu0 %v3085
  %4165 = vmatprep.subr.bf16.mxu0 %v3146
  %4166 = vmatpush2.bf16.msra.mxu0 %v3145
  %4167 = vmatprep.subr.bf16.mxu0 %v3142
  %4168 = vmatpush2.bf16.msra.mxu0 %v3141
  %4169 = vmatprep.subr.bf16.mxu0 %v3138
  %4170 = vmatpush2.bf16.msra.mxu0 %v3137
  %4171 = vmatprep.subr.bf16.mxu0 %v3134
  %4172 = vmatpush2.bf16.msra.mxu0 %v3133
  %4173 = vmatprep.subr.bf16.mxu0 %v3130
  %4174 = vmatpush2.bf16.msra.mxu0 %v3129
  %4175 = vmatprep.subr.bf16.mxu0 %v3126
  %4176 = vmatpush2.bf16.msra.mxu0 %v3125
  %4177 = vmatprep.subr.bf16.mxu0 %v3122
  %4178 = vmatpush2.bf16.msra.mxu0 %v3121
  %4179 = vmatprep.subr.bf16.mxu0 %v3118
  %4180 = vmatpush2.bf16.msra.mxu0 %v3117
  %4181 = vmatprep.mubr.bf16.mxu0 %v790
  %4182 = vmatmul.mubr.bf16.gmra.mxu0 %v789
  %v4183 = vpop.f32.mrf.mxu0
  %v4184 = vadd.f32 %v4131, %v4183
  %v4185 = vpop.f32.mrf.mxu0
  %v4186 = vadd.f32 %v4133, %v4185
  %v4187 = vpop.f32.mrf.mxu0
  %v4188 = vadd.f32 %v4135, %v4187
  %v4189 = vpop.f32.mrf.mxu0
  %v4190 = vadd.f32 %v4137, %v4189
  %4191 = vmatprep.mubr.bf16.mxu0 %v808
  %4192 = vmatmul.mubr.bf16.gmra.mxu0 %v807
  %v4193 = vpop.f32.mrf.mxu0
  %v4194 = vadd.f32 %v4141, %v4193
  %v4195 = vpop.f32.mrf.mxu0
  %v4196 = vadd.f32 %v4143, %v4195
  %v4197 = vpop.f32.mrf.mxu0
  %v4198 = vadd.f32 %v4145, %v4197
  %v4199 = vpop.f32.mrf.mxu0
  %v4200 = vadd.f32 %v4147, %v4199
  %4201 = vdwg.mxu0
  %4202 = vmatprep.subr.bf16.mxu0 %v2604
  %4203 = vmatpush1.bf16.msra.mxu0 %v2603
  %4204 = vmatprep.subr.bf16.mxu0 %v2600
  %4205 = vmatpush1.bf16.msra.mxu0 %v2599
  %4206 = vmatprep.subr.bf16.mxu0 %v2596
  %4207 = vmatpush1.bf16.msra.mxu0 %v2595
  %4208 = vmatprep.subr.bf16.mxu0 %v2592
  %4209 = vmatpush1.bf16.msra.mxu0 %v2591
  %4210 = vmatprep.subr.bf16.mxu0 %v2588
  %4211 = vmatpush1.bf16.msra.mxu0 %v2587
  %4212 = vmatprep.subr.bf16.mxu0 %v2584
  %4213 = vmatpush1.bf16.msra.mxu0 %v2583
  %4214 = vmatprep.subr.bf16.mxu0 %v2580
  %4215 = vmatpush1.bf16.msra.mxu0 %v2579
  %4216 = vmatprep.subr.bf16.mxu0 %v2576
  %4217 = vmatpush1.bf16.msra.mxu0 %v2575
  %4218 = vmatprep.subr.bf16.mxu0 %v2636
  %4219 = vmatpush2.bf16.msra.mxu0 %v2635
  %4220 = vmatprep.subr.bf16.mxu0 %v2632
  %4221 = vmatpush2.bf16.msra.mxu0 %v2631
  %4222 = vmatprep.subr.bf16.mxu0 %v2628
  %4223 = vmatpush2.bf16.msra.mxu0 %v2627
  %4224 = vmatprep.subr.bf16.mxu0 %v2624
  %4225 = vmatpush2.bf16.msra.mxu0 %v2623
  %4226 = vmatprep.subr.bf16.mxu0 %v2620
  %4227 = vmatpush2.bf16.msra.mxu0 %v2619
  %4228 = vmatprep.subr.bf16.mxu0 %v2616
  %4229 = vmatpush2.bf16.msra.mxu0 %v2615
  %4230 = vmatprep.subr.bf16.mxu0 %v2612
  %4231 = vmatpush2.bf16.msra.mxu0 %v2611
  %4232 = vmatprep.subr.bf16.mxu0 %v2608
  %4233 = vmatpush2.bf16.msra.mxu0 %v2607
  %4234 = vmatprep.mubr.bf16.mxu0 %v774
  %4235 = vmatmul.mubr.bf16.gmra.mxu0 %v773
  %v4236 = vpop.f32.mrf.mxu0
  %v4237 = vadd.f32 %v656, %v4236
  %v4238 = vpop.f32.mrf.mxu0
  %v4239 = vadd.f32 %v660, %v4238
  %v4240 = vpop.f32.mrf.mxu0
  %v4241 = vadd.f32 %v656, %v4240
  %v4242 = vpop.f32.mrf.mxu0
  %v4243 = vadd.f32 %v660, %v4242
  %4244 = vmatprep.mubr.bf16.mxu0 %v792
  %4245 = vmatmul.mubr.bf16.gmra.mxu0 %v791
  %v4246 = vpop.f32.mrf.mxu0
  %v4247 = vadd.f32 %v656, %v4246
  %v4248 = vpop.f32.mrf.mxu0
  %v4249 = vadd.f32 %v660, %v4248
  %v4250 = vpop.f32.mrf.mxu0
  %v4251 = vadd.f32 %v656, %v4250
  %v4252 = vpop.f32.mrf.mxu0
  %v4253 = vadd.f32 %v660, %v4252
  %4254 = vdwg.mxu0
  %4255 = vmatprep.subr.bf16.mxu0 %v2668
  %4256 = vmatpush1.bf16.msra.mxu0 %v2667
  %4257 = vmatprep.subr.bf16.mxu0 %v2664
  %4258 = vmatpush1.bf16.msra.mxu0 %v2663
  %4259 = vmatprep.subr.bf16.mxu0 %v2660
  %4260 = vmatpush1.bf16.msra.mxu0 %v2659
  %4261 = vmatprep.subr.bf16.mxu0 %v2656
  %4262 = vmatpush1.bf16.msra.mxu0 %v2655
  %4263 = vmatprep.subr.bf16.mxu0 %v2652
  %4264 = vmatpush1.bf16.msra.mxu0 %v2651
  %4265 = vmatprep.subr.bf16.mxu0 %v2648
  %4266 = vmatpush1.bf16.msra.mxu0 %v2647
  %4267 = vmatprep.subr.bf16.mxu0 %v2644
  %4268 = vmatpush1.bf16.msra.mxu0 %v2643
  %4269 = vmatprep.subr.bf16.mxu0 %v2640
  %4270 = vmatpush1.bf16.msra.mxu0 %v2639
  %4271 = vmatprep.subr.bf16.mxu0 %v2700
  %4272 = vmatpush2.bf16.msra.mxu0 %v2699
  %4273 = vmatprep.subr.bf16.mxu0 %v2696
  %4274 = vmatpush2.bf16.msra.mxu0 %v2695
  %4275 = vmatprep.subr.bf16.mxu0 %v2692
  %4276 = vmatpush2.bf16.msra.mxu0 %v2691
  %4277 = vmatprep.subr.bf16.mxu0 %v2688
  %4278 = vmatpush2.bf16.msra.mxu0 %v2687
  %4279 = vmatprep.subr.bf16.mxu0 %v2684
  %4280 = vmatpush2.bf16.msra.mxu0 %v2683
  %4281 = vmatprep.subr.bf16.mxu0 %v2680
  %4282 = vmatpush2.bf16.msra.mxu0 %v2679
  %4283 = vmatprep.subr.bf16.mxu0 %v2676
  %4284 = vmatpush2.bf16.msra.mxu0 %v2675
  %4285 = vmatprep.subr.bf16.mxu0 %v2672
  %4286 = vmatpush2.bf16.msra.mxu0 %v2671
  %4287 = vmatprep.mubr.bf16.mxu0 %v776
  %4288 = vmatmul.mubr.bf16.gmra.mxu0 %v775
  %v4289 = vpop.f32.mrf.mxu0
  %v4290 = vadd.f32 %v4237, %v4289
  %v4291 = vpop.f32.mrf.mxu0
  %v4292 = vadd.f32 %v4239, %v4291
  %v4293 = vpop.f32.mrf.mxu0
  %v4294 = vadd.f32 %v4241, %v4293
  %v4295 = vpop.f32.mrf.mxu0
  %v4296 = vadd.f32 %v4243, %v4295
  %4297 = vmatprep.mubr.bf16.mxu0 %v794
  %4298 = vmatmul.mubr.bf16.gmra.mxu0 %v793
  %v4299 = vpop.f32.mrf.mxu0
  %v4300 = vadd.f32 %v4247, %v4299
  %v4301 = vpop.f32.mrf.mxu0
  %v4302 = vadd.f32 %v4249, %v4301
  %v4303 = vpop.f32.mrf.mxu0
  %v4304 = vadd.f32 %v4251, %v4303
  %v4305 = vpop.f32.mrf.mxu0
  %v4306 = vadd.f32 %v4253, %v4305
  %4307 = vdwg.mxu0
  %4308 = vmatprep.subr.bf16.mxu0 %v2732
  %4309 = vmatpush1.bf16.msra.mxu0 %v2731
  %4310 = vmatprep.subr.bf16.mxu0 %v2728
  %4311 = vmatpush1.bf16.msra.mxu0 %v2727
  %4312 = vmatprep.subr.bf16.mxu0 %v2724
  %4313 = vmatpush1.bf16.msra.mxu0 %v2723
  %4314 = vmatprep.subr.bf16.mxu0 %v2720
  %4315 = vmatpush1.bf16.msra.mxu0 %v2719
  %4316 = vmatprep.subr.bf16.mxu0 %v2716
  %4317 = vmatpush1.bf16.msra.mxu0 %v2715
  %4318 = vmatprep.subr.bf16.mxu0 %v2712
  %4319 = vmatpush1.bf16.msra.mxu0 %v2711
  %4320 = vmatprep.subr.bf16.mxu0 %v2708
  %4321 = vmatpush1.bf16.msra.mxu0 %v2707
  %4322 = vmatprep.subr.bf16.mxu0 %v2704
  %4323 = vmatpush1.bf16.msra.mxu0 %v2703
  %4324 = vmatprep.subr.bf16.mxu0 %v2764
  %4325 = vmatpush2.bf16.msra.mxu0 %v2763
  %4326 = vmatprep.subr.bf16.mxu0 %v2760
  %4327 = vmatpush2.bf16.msra.mxu0 %v2759
  %4328 = vmatprep.subr.bf16.mxu0 %v2756
  %4329 = vmatpush2.bf16.msra.mxu0 %v2755
  %4330 = vmatprep.subr.bf16.mxu0 %v2752
  %4331 = vmatpush2.bf16.msra.mxu0 %v2751
  %4332 = vmatprep.subr.bf16.mxu0 %v2748
  %4333 = vmatpush2.bf16.msra.mxu0 %v2747
  %4334 = vmatprep.subr.bf16.mxu0 %v2744
  %4335 = vmatpush2.bf16.msra.mxu0 %v2743
  %4336 = vmatprep.subr.bf16.mxu0 %v2740
  %4337 = vmatpush2.bf16.msra.mxu0 %v2739
  %4338 = vmatprep.subr.bf16.mxu0 %v2736
  %4339 = vmatpush2.bf16.msra.mxu0 %v2735
  %4340 = vmatprep.mubr.bf16.mxu0 %v778
  %4341 = vmatmul.mubr.bf16.gmra.mxu0 %v777
  %v4342 = vpop.f32.mrf.mxu0
  %v4343 = vadd.f32 %v4290, %v4342
  %v4344 = vpop.f32.mrf.mxu0
  %v4345 = vadd.f32 %v4292, %v4344
  %v4346 = vpop.f32.mrf.mxu0
  %v4347 = vadd.f32 %v4294, %v4346
  %v4348 = vpop.f32.mrf.mxu0
  %v4349 = vadd.f32 %v4296, %v4348
  %4350 = vmatprep.mubr.bf16.mxu0 %v796
  %4351 = vmatmul.mubr.bf16.gmra.mxu0 %v795
  %v4352 = vpop.f32.mrf.mxu0
  %v4353 = vadd.f32 %v4300, %v4352
  %v4354 = vpop.f32.mrf.mxu0
  %v4355 = vadd.f32 %v4302, %v4354
  %v4356 = vpop.f32.mrf.mxu0
  %v4357 = vadd.f32 %v4304, %v4356
  %v4358 = vpop.f32.mrf.mxu0
  %v4359 = vadd.f32 %v4306, %v4358
  %4360 = vdwg.mxu0
  %4361 = vmatprep.subr.bf16.mxu0 %v2796
  %4362 = vmatpush1.bf16.msra.mxu0 %v2795
  %4363 = vmatprep.subr.bf16.mxu0 %v2792
  %4364 = vmatpush1.bf16.msra.mxu0 %v2791
  %4365 = vmatprep.subr.bf16.mxu0 %v2788
  %4366 = vmatpush1.bf16.msra.mxu0 %v2787
  %4367 = vmatprep.subr.bf16.mxu0 %v2784
  %4368 = vmatpush1.bf16.msra.mxu0 %v2783
  %4369 = vmatprep.subr.bf16.mxu0 %v2780
  %4370 = vmatpush1.bf16.msra.mxu0 %v2779
  %4371 = vmatprep.subr.bf16.mxu0 %v2776
  %4372 = vmatpush1.bf16.msra.mxu0 %v2775
  %4373 = vmatprep.subr.bf16.mxu0 %v2772
  %4374 = vmatpush1.bf16.msra.mxu0 %v2771
  %4375 = vmatprep.subr.bf16.mxu0 %v2768
  %4376 = vmatpush1.bf16.msra.mxu0 %v2767
  %4377 = vmatprep.subr.bf16.mxu0 %v2828
  %4378 = vmatpush2.bf16.msra.mxu0 %v2827
  %4379 = vmatprep.subr.bf16.mxu0 %v2824
  %4380 = vmatpush2.bf16.msra.mxu0 %v2823
  %4381 = vmatprep.subr.bf16.mxu0 %v2820
  %4382 = vmatpush2.bf16.msra.mxu0 %v2819
  %4383 = vmatprep.subr.bf16.mxu0 %v2816
  %4384 = vmatpush2.bf16.msra.mxu0 %v2815
  %4385 = vmatprep.subr.bf16.mxu0 %v2812
  %4386 = vmatpush2.bf16.msra.mxu0 %v2811
  %4387 = vmatprep.subr.bf16.mxu0 %v2808
  %4388 = vmatpush2.bf16.msra.mxu0 %v2807
  %4389 = vmatprep.subr.bf16.mxu0 %v2804
  %4390 = vmatpush2.bf16.msra.mxu0 %v2803
  %4391 = vmatprep.subr.bf16.mxu0 %v2800
  %4392 = vmatpush2.bf16.msra.mxu0 %v2799
  %4393 = vmatprep.mubr.bf16.mxu0 %v780
  %4394 = vmatmul.mubr.bf16.gmra.mxu0 %v779
  %v4395 = vpop.f32.mrf.mxu0
  %v4396 = vadd.f32 %v4343, %v4395
  %v4397 = vpop.f32.mrf.mxu0
  %v4398 = vadd.f32 %v4345, %v4397
  %v4399 = vpop.f32.mrf.mxu0
  %v4400 = vadd.f32 %v4347, %v4399
  %v4401 = vpop.f32.mrf.mxu0
  %v4402 = vadd.f32 %v4349, %v4401
  %4403 = vmatprep.mubr.bf16.mxu0 %v798
  %4404 = vmatmul.mubr.bf16.gmra.mxu0 %v797
  %v4405 = vpop.f32.mrf.mxu0
  %v4406 = vadd.f32 %v4353, %v4405
  %v4407 = vpop.f32.mrf.mxu0
  %v4408 = vadd.f32 %v4355, %v4407
  %v4409 = vpop.f32.mrf.mxu0
  %v4410 = vadd.f32 %v4357, %v4409
  %v4411 = vpop.f32.mrf.mxu0
  %v4412 = vadd.f32 %v4359, %v4411
  %4413 = vdwg.mxu0
  %4414 = vmatprep.subr.bf16.mxu0 %v2860
  %4415 = vmatpush1.bf16.msra.mxu0 %v2859
  %4416 = vmatprep.subr.bf16.mxu0 %v2856
  %4417 = vmatpush1.bf16.msra.mxu0 %v2855
  %4418 = vmatprep.subr.bf16.mxu0 %v2852
  %4419 = vmatpush1.bf16.msra.mxu0 %v2851
  %4420 = vmatprep.subr.bf16.mxu0 %v2848
  %4421 = vmatpush1.bf16.msra.mxu0 %v2847
  %4422 = vmatprep.subr.bf16.mxu0 %v2844
  %4423 = vmatpush1.bf16.msra.mxu0 %v2843
  %4424 = vmatprep.subr.bf16.mxu0 %v2840
  %4425 = vmatpush1.bf16.msra.mxu0 %v2839
  %4426 = vmatprep.subr.bf16.mxu0 %v2836
  %4427 = vmatpush1.bf16.msra.mxu0 %v2835
  %4428 = vmatprep.subr.bf16.mxu0 %v2832
  %4429 = vmatpush1.bf16.msra.mxu0 %v2831
  %4430 = vmatprep.subr.bf16.mxu0 %v2892
  %4431 = vmatpush2.bf16.msra.mxu0 %v2891
  %4432 = vmatprep.subr.bf16.mxu0 %v2888
  %4433 = vmatpush2.bf16.msra.mxu0 %v2887
  %4434 = vmatprep.subr.bf16.mxu0 %v2884
  %4435 = vmatpush2.bf16.msra.mxu0 %v2883
  %4436 = vmatprep.subr.bf16.mxu0 %v2880
  %4437 = vmatpush2.bf16.msra.mxu0 %v2879
  %4438 = vmatprep.subr.bf16.mxu0 %v2876
  %4439 = vmatpush2.bf16.msra.mxu0 %v2875
  %4440 = vmatprep.subr.bf16.mxu0 %v2872
  %4441 = vmatpush2.bf16.msra.mxu0 %v2871
  %4442 = vmatprep.subr.bf16.mxu0 %v2868
  %4443 = vmatpush2.bf16.msra.mxu0 %v2867
  %4444 = vmatprep.subr.bf16.mxu0 %v2864
  %4445 = vmatpush2.bf16.msra.mxu0 %v2863
  %4446 = vmatprep.mubr.bf16.mxu0 %v782
  %4447 = vmatmul.mubr.bf16.gmra.mxu0 %v781
  %v4448 = vpop.f32.mrf.mxu0
  %v4449 = vadd.f32 %v4396, %v4448
  %v4450 = vpop.f32.mrf.mxu0
  %v4451 = vadd.f32 %v4398, %v4450
  %v4452 = vpop.f32.mrf.mxu0
  %v4453 = vadd.f32 %v4400, %v4452
  %v4454 = vpop.f32.mrf.mxu0
  %v4455 = vadd.f32 %v4402, %v4454
  %4456 = vmatprep.mubr.bf16.mxu0 %v800
  %4457 = vmatmul.mubr.bf16.gmra.mxu0 %v799
  %v4458 = vpop.f32.mrf.mxu0
  %v4459 = vadd.f32 %v4406, %v4458
  %v4460 = vpop.f32.mrf.mxu0
  %v4461 = vadd.f32 %v4408, %v4460
  %v4462 = vpop.f32.mrf.mxu0
  %v4463 = vadd.f32 %v4410, %v4462
  %v4464 = vpop.f32.mrf.mxu0
  %v4465 = vadd.f32 %v4412, %v4464
  %4466 = vdwg.mxu0
  %4467 = vmatprep.subr.bf16.mxu0 %v2924
  %4468 = vmatpush1.bf16.msra.mxu0 %v2923
  %4469 = vmatprep.subr.bf16.mxu0 %v2920
  %4470 = vmatpush1.bf16.msra.mxu0 %v2919
  %4471 = vmatprep.subr.bf16.mxu0 %v2916
  %4472 = vmatpush1.bf16.msra.mxu0 %v2915
  %4473 = vmatprep.subr.bf16.mxu0 %v2912
  %4474 = vmatpush1.bf16.msra.mxu0 %v2911
  %4475 = vmatprep.subr.bf16.mxu0 %v2908
  %4476 = vmatpush1.bf16.msra.mxu0 %v2907
  %4477 = vmatprep.subr.bf16.mxu0 %v2904
  %4478 = vmatpush1.bf16.msra.mxu0 %v2903
  %4479 = vmatprep.subr.bf16.mxu0 %v2900
  %4480 = vmatpush1.bf16.msra.mxu0 %v2899
  %4481 = vmatprep.subr.bf16.mxu0 %v2896
  %4482 = vmatpush1.bf16.msra.mxu0 %v2895
  %4483 = vmatprep.subr.bf16.mxu0 %v2956
  %4484 = vmatpush2.bf16.msra.mxu0 %v2955
  %4485 = vmatprep.subr.bf16.mxu0 %v2952
  %4486 = vmatpush2.bf16.msra.mxu0 %v2951
  %4487 = vmatprep.subr.bf16.mxu0 %v2948
  %4488 = vmatpush2.bf16.msra.mxu0 %v2947
  %4489 = vmatprep.subr.bf16.mxu0 %v2944
  %4490 = vmatpush2.bf16.msra.mxu0 %v2943
  %4491 = vmatprep.subr.bf16.mxu0 %v2940
  %4492 = vmatpush2.bf16.msra.mxu0 %v2939
  %4493 = vmatprep.subr.bf16.mxu0 %v2936
  %4494 = vmatpush2.bf16.msra.mxu0 %v2935
  %4495 = vmatprep.subr.bf16.mxu0 %v2932
  %4496 = vmatpush2.bf16.msra.mxu0 %v2931
  %4497 = vmatprep.subr.bf16.mxu0 %v2928
  %4498 = vmatpush2.bf16.msra.mxu0 %v2927
  %4499 = vmatprep.mubr.bf16.mxu0 %v784
  %4500 = vmatmul.mubr.bf16.gmra.mxu0 %v783
  %v4501 = vpop.f32.mrf.mxu0
  %v4502 = vadd.f32 %v4449, %v4501
  %v4503 = vpop.f32.mrf.mxu0
  %v4504 = vadd.f32 %v4451, %v4503
  %v4505 = vpop.f32.mrf.mxu0
  %v4506 = vadd.f32 %v4453, %v4505
  %v4507 = vpop.f32.mrf.mxu0
  %v4508 = vadd.f32 %v4455, %v4507
  %4509 = vmatprep.mubr.bf16.mxu0 %v802
  %4510 = vmatmul.mubr.bf16.gmra.mxu0 %v801
  %v4511 = vpop.f32.mrf.mxu0
  %v4512 = vadd.f32 %v4459, %v4511
  %v4513 = vpop.f32.mrf.mxu0
  %v4514 = vadd.f32 %v4461, %v4513
  %v4515 = vpop.f32.mrf.mxu0
  %v4516 = vadd.f32 %v4463, %v4515
  %v4517 = vpop.f32.mrf.mxu0
  %v4518 = vadd.f32 %v4465, %v4517
  %4519 = vdwg.mxu0
  %4520 = vmatprep.subr.bf16.mxu0 %v2988
  %4521 = vmatpush1.bf16.msra.mxu0 %v2987
  %4522 = vmatprep.subr.bf16.mxu0 %v2984
  %4523 = vmatpush1.bf16.msra.mxu0 %v2983
  %4524 = vmatprep.subr.bf16.mxu0 %v2980
  %4525 = vmatpush1.bf16.msra.mxu0 %v2979
  %4526 = vmatprep.subr.bf16.mxu0 %v2976
  %4527 = vmatpush1.bf16.msra.mxu0 %v2975
  %4528 = vmatprep.subr.bf16.mxu0 %v2972
  %4529 = vmatpush1.bf16.msra.mxu0 %v2971
  %4530 = vmatprep.subr.bf16.mxu0 %v2968
  %4531 = vmatpush1.bf16.msra.mxu0 %v2967
  %4532 = vmatprep.subr.bf16.mxu0 %v2964
  %4533 = vmatpush1.bf16.msra.mxu0 %v2963
  %4534 = vmatprep.subr.bf16.mxu0 %v2960
  %4535 = vmatpush1.bf16.msra.mxu0 %v2959
  %4536 = vmatprep.subr.bf16.mxu0 %v3020
  %4537 = vmatpush2.bf16.msra.mxu0 %v3019
  %4538 = vmatprep.subr.bf16.mxu0 %v3016
  %4539 = vmatpush2.bf16.msra.mxu0 %v3015
  %4540 = vmatprep.subr.bf16.mxu0 %v3012
  %4541 = vmatpush2.bf16.msra.mxu0 %v3011
  %4542 = vmatprep.subr.bf16.mxu0 %v3008
  %4543 = vmatpush2.bf16.msra.mxu0 %v3007
  %4544 = vmatprep.subr.bf16.mxu0 %v3004
  %4545 = vmatpush2.bf16.msra.mxu0 %v3003
  %4546 = vmatprep.subr.bf16.mxu0 %v3000
  %4547 = vmatpush2.bf16.msra.mxu0 %v2999
  %4548 = vmatprep.subr.bf16.mxu0 %v2996
  %4549 = vmatpush2.bf16.msra.mxu0 %v2995
  %4550 = vmatprep.subr.bf16.mxu0 %v2992
  %4551 = vmatpush2.bf16.msra.mxu0 %v2991
  %4552 = vmatprep.mubr.bf16.mxu0 %v786
  %4553 = vmatmul.mubr.bf16.gmra.mxu0 %v785
  %v4554 = vpop.f32.mrf.mxu0
  %v4555 = vadd.f32 %v4502, %v4554
  %v4556 = vpop.f32.mrf.mxu0
  %v4557 = vadd.f32 %v4504, %v4556
  %v4558 = vpop.f32.mrf.mxu0
  %v4559 = vadd.f32 %v4506, %v4558
  %v4560 = vpop.f32.mrf.mxu0
  %v4561 = vadd.f32 %v4508, %v4560
  %4562 = vmatprep.mubr.bf16.mxu0 %v804
  %4563 = vmatmul.mubr.bf16.gmra.mxu0 %v803
  %v4564 = vpop.f32.mrf.mxu0
  %v4565 = vadd.f32 %v4512, %v4564
  %v4566 = vpop.f32.mrf.mxu0
  %v4567 = vadd.f32 %v4514, %v4566
  %v4568 = vpop.f32.mrf.mxu0
  %v4569 = vadd.f32 %v4516, %v4568
  %v4570 = vpop.f32.mrf.mxu0
  %v4571 = vadd.f32 %v4518, %v4570
  %4572 = vdwg.mxu0
  %4573 = vmatprep.subr.bf16.mxu0 %v3052
  %4574 = vmatpush1.bf16.msra.mxu0 %v3051
  %4575 = vmatprep.subr.bf16.mxu0 %v3048
  %4576 = vmatpush1.bf16.msra.mxu0 %v3047
  %4577 = vmatprep.subr.bf16.mxu0 %v3044
  %4578 = vmatpush1.bf16.msra.mxu0 %v3043
  %4579 = vmatprep.subr.bf16.mxu0 %v3040
  %4580 = vmatpush1.bf16.msra.mxu0 %v3039
  %4581 = vmatprep.subr.bf16.mxu0 %v3036
  %4582 = vmatpush1.bf16.msra.mxu0 %v3035
  %4583 = vmatprep.subr.bf16.mxu0 %v3032
  %4584 = vmatpush1.bf16.msra.mxu0 %v3031
  %4585 = vmatprep.subr.bf16.mxu0 %v3028
  %4586 = vmatpush1.bf16.msra.mxu0 %v3027
  %4587 = vmatprep.subr.bf16.mxu0 %v3024
  %4588 = vmatpush1.bf16.msra.mxu0 %v3023
  %4589 = vmatprep.subr.bf16.mxu0 %v3084
  %4590 = vmatpush2.bf16.msra.mxu0 %v3083
  %4591 = vmatprep.subr.bf16.mxu0 %v3080
  %4592 = vmatpush2.bf16.msra.mxu0 %v3079
  %4593 = vmatprep.subr.bf16.mxu0 %v3076
  %4594 = vmatpush2.bf16.msra.mxu0 %v3075
  %4595 = vmatprep.subr.bf16.mxu0 %v3072
  %4596 = vmatpush2.bf16.msra.mxu0 %v3071
  %4597 = vmatprep.subr.bf16.mxu0 %v3068
  %4598 = vmatpush2.bf16.msra.mxu0 %v3067
  %4599 = vmatprep.subr.bf16.mxu0 %v3064
  %4600 = vmatpush2.bf16.msra.mxu0 %v3063
  %4601 = vmatprep.subr.bf16.mxu0 %v3060
  %4602 = vmatpush2.bf16.msra.mxu0 %v3059
  %4603 = vmatprep.subr.bf16.mxu0 %v3056
  %4604 = vmatpush2.bf16.msra.mxu0 %v3055
  %4605 = vmatprep.mubr.bf16.mxu0 %v788
  %4606 = vmatmul.mubr.bf16.gmra.mxu0 %v787
  %v4607 = vpop.f32.mrf.mxu0
  %v4608 = vadd.f32 %v4555, %v4607
  %v4609 = vpop.f32.mrf.mxu0
  %v4610 = vadd.f32 %v4557, %v4609
  %v4611 = vpop.f32.mrf.mxu0
  %v4612 = vadd.f32 %v4559, %v4611
  %v4613 = vpop.f32.mrf.mxu0
  %v4614 = vadd.f32 %v4561, %v4613
  %4615 = vmatprep.mubr.bf16.mxu0 %v806
  %4616 = vmatmul.mubr.bf16.gmra.mxu0 %v805
  %v4617 = vpop.f32.mrf.mxu0
  %v4618 = vadd.f32 %v4565, %v4617
  %v4619 = vpop.f32.mrf.mxu0
  %v4620 = vadd.f32 %v4567, %v4619
  %v4621 = vpop.f32.mrf.mxu0
  %v4622 = vadd.f32 %v4569, %v4621
  %v4623 = vpop.f32.mrf.mxu0
  %v4624 = vadd.f32 %v4571, %v4623
  %4625 = vdwg.mxu0
  %4626 = vmatprep.subr.bf16.mxu0 %v3116
  %4627 = vmatpush1.bf16.msra.mxu0 %v3115
  %4628 = vmatprep.subr.bf16.mxu0 %v3112
  %4629 = vmatpush1.bf16.msra.mxu0 %v3111
  %4630 = vmatprep.subr.bf16.mxu0 %v3108
  %4631 = vmatpush1.bf16.msra.mxu0 %v3107
  %4632 = vmatprep.subr.bf16.mxu0 %v3104
  %4633 = vmatpush1.bf16.msra.mxu0 %v3103
  %4634 = vmatprep.subr.bf16.mxu0 %v3100
  %4635 = vmatpush1.bf16.msra.mxu0 %v3099
  %4636 = vmatprep.subr.bf16.mxu0 %v3096
  %4637 = vmatpush1.bf16.msra.mxu0 %v3095
  %4638 = vmatprep.subr.bf16.mxu0 %v3092
  %4639 = vmatpush1.bf16.msra.mxu0 %v3091
  %4640 = vmatprep.subr.bf16.mxu0 %v3088
  %4641 = vmatpush1.bf16.msra.mxu0 %v3087
  %4642 = vmatprep.subr.bf16.mxu0 %v3148
  %4643 = vmatpush2.bf16.msra.mxu0 %v3147
  %4644 = vmatprep.subr.bf16.mxu0 %v3144
  %4645 = vmatpush2.bf16.msra.mxu0 %v3143
  %4646 = vmatprep.subr.bf16.mxu0 %v3140
  %4647 = vmatpush2.bf16.msra.mxu0 %v3139
  %4648 = vmatprep.subr.bf16.mxu0 %v3136
  %4649 = vmatpush2.bf16.msra.mxu0 %v3135
  %4650 = vmatprep.subr.bf16.mxu0 %v3132
  %4651 = vmatpush2.bf16.msra.mxu0 %v3131
  %4652 = vmatprep.subr.bf16.mxu0 %v3128
  %4653 = vmatpush2.bf16.msra.mxu0 %v3127
  %4654 = vmatprep.subr.bf16.mxu0 %v3124
  %4655 = vmatpush2.bf16.msra.mxu0 %v3123
  %4656 = vmatprep.subr.bf16.mxu0 %v3120
  %4657 = vmatpush2.bf16.msra.mxu0 %v3119
  %4658 = vmatprep.mubr.bf16.mxu0 %v790
  %4659 = vmatmul.mubr.bf16.gmra.mxu0 %v789
  %v4660 = vpop.f32.mrf.mxu0
  %v4661 = vadd.f32 %v4608, %v4660
  %v4662 = vpop.f32.mrf.mxu0
  %v4663 = vadd.f32 %v4610, %v4662
  %v4664 = vpop.f32.mrf.mxu0
  %v4665 = vadd.f32 %v4612, %v4664
  %v4666 = vpop.f32.mrf.mxu0
  %v4667 = vadd.f32 %v4614, %v4666
  %4668 = vmatprep.mubr.bf16.mxu0 %v808
  %4669 = vmatmul.mubr.bf16.gmra.mxu0 %v807
  %v4670 = vpop.f32.mrf.mxu0
  %v4671 = vadd.f32 %v4618, %v4670
  %v4672 = vpop.f32.mrf.mxu0
  %v4673 = vadd.f32 %v4620, %v4672
  %v4674 = vpop.f32.mrf.mxu0
  %v4675 = vadd.f32 %v4622, %v4674
  %v4676 = vpop.f32.mrf.mxu0
  %v4677 = vadd.f32 %v4624, %v4676
  %4678 = vdwg.mxu0
  %v4679 = vadd.f32 %v4184, %v4188
  %v4680 = vadd.f32 %v4679, %v4194
  %v4681 = vadd.f32 %v4680, %v4198
  %v4682 = vrot.slane %v4681, 4
  %v4683 = vadd.f32 %v4681, %v4682
  %v4684 = vrot.slane %v4683, 2
  %v4685 = vadd.f32 %v4683, %v4684
  %v4686 = vrot.slane %v4685, 1
  %v4687 = vadd.f32 %v4685, %v4686
  %v4688 = vadd.f32 %v4186, %v4190
  %v4689 = vadd.f32 %v4688, %v4196
  %v4690 = vadd.f32 %v4689, %v4200
  %v4691 = vrot.slane %v4690, 4
  %v4692 = vadd.f32 %v4690, %v4691
  %v4693 = vrot.slane %v4692, 2
  %v4694 = vadd.f32 %v4692, %v4693
  %v4695 = vrot.slane %v4694, 1
  %v4696 = vadd.f32 %v4694, %v4695
  %v4697 = vadd.f32 %v4661, %v4665
  %v4698 = vadd.f32 %v4697, %v4671
  %v4699 = vadd.f32 %v4698, %v4675
  %v4700 = vrot.slane %v4699, 4
  %v4701 = vadd.f32 %v4699, %v4700
  %v4702 = vrot.slane %v4701, 2
  %v4703 = vadd.f32 %v4701, %v4702
  %v4704 = vrot.slane %v4703, 1
  %v4705 = vadd.f32 %v4703, %v4704
  %v4706 = vadd.f32 %v4663, %v4667
  %v4707 = vadd.f32 %v4706, %v4673
  %v4708 = vadd.f32 %v4707, %v4677
  %v4709 = vrot.slane %v4708, 4
  %v4710 = vadd.f32 %v4708, %v4709
  %v4711 = vrot.slane %v4710, 2
  %v4712 = vadd.f32 %v4710, %v4711
  %v4713 = vrot.slane %v4712, 1
  %v4714 = vadd.f32 %v4712, %v4713
  %v4715 = vrcp.pop 32.0
  %v4716 = vmul.f32 %v4687, %v4715
  %v4717 = vmul.f32 %v4696, %v4715
  %v4718 = vmul.f32 %v4705, %v4715
  %v4719 = vmul.f32 %v4714, %v4715
  %v4720 = vsub.f32 %v4184, %v4716
  %v4721 = vsub.f32 %v4186, %v4717
  %v4722 = vsub.f32 %v4661, %v4718
  %v4723 = vsub.f32 %v4663, %v4719
  %v4724 = vsub.f32 %v4188, %v4716
  %v4725 = vsub.f32 %v4190, %v4717
  %v4726 = vsub.f32 %v4665, %v4718
  %v4727 = vsub.f32 %v4667, %v4719
  %v4728 = vsub.f32 %v4194, %v4716
  %v4729 = vsub.f32 %v4196, %v4717
  %v4730 = vsub.f32 %v4671, %v4718
  %v4731 = vsub.f32 %v4673, %v4719
  %v4732 = vsub.f32 %v4198, %v4716
  %v4733 = vsub.f32 %v4200, %v4717
  %v4734 = vsub.f32 %v4675, %v4718
  %v4735 = vsub.f32 %v4677, %v4719
  %v4736 = vmul.f32 %v4720, %v4720
  %v4737 = vmul.f32 %v4721, %v4721
  %v4738 = vmul.f32 %v4722, %v4722
  %v4739 = vmul.f32 %v4723, %v4723
  %v4740 = vmul.f32 %v4724, %v4724
  %v4741 = vmul.f32 %v4725, %v4725
  %v4742 = vmul.f32 %v4726, %v4726
  %v4743 = vmul.f32 %v4727, %v4727
  %v4744 = vmul.f32 %v4728, %v4728
  %v4745 = vmul.f32 %v4729, %v4729
  %v4746 = vmul.f32 %v4730, %v4730
  %v4747 = vmul.f32 %v4731, %v4731
  %v4748 = vmul.f32 %v4732, %v4732
  %v4749 = vmul.f32 %v4733, %v4733
  %v4750 = vmul.f32 %v4734, %v4734
  %v4751 = vmul.f32 %v4735, %v4735
  %v4752 = vadd.f32 %v4736, %v4740
  %v4753 = vadd.f32 %v4752, %v4744
  %v4754 = vadd.f32 %v4753, %v4748
  %v4755 = vrot.slane %v4754, 4
  %v4756 = vadd.f32 %v4754, %v4755
  %v4757 = vrot.slane %v4756, 2
  %v4758 = vadd.f32 %v4756, %v4757
  %v4759 = vrot.slane %v4758, 1
  %v4760 = vadd.f32 %v4758, %v4759
  %v4761 = vadd.f32 %v4737, %v4741
  %v4762 = vadd.f32 %v4761, %v4745
  %v4763 = vadd.f32 %v4762, %v4749
  %v4764 = vrot.slane %v4763, 4
  %v4765 = vadd.f32 %v4763, %v4764
  %v4766 = vrot.slane %v4765, 2
  %v4767 = vadd.f32 %v4765, %v4766
  %v4768 = vrot.slane %v4767, 1
  %v4769 = vadd.f32 %v4767, %v4768
  %v4770 = vadd.f32 %v4738, %v4742
  %v4771 = vadd.f32 %v4770, %v4746
  %v4772 = vadd.f32 %v4771, %v4750
  %v4773 = vrot.slane %v4772, 4
  %v4774 = vadd.f32 %v4772, %v4773
  %v4775 = vrot.slane %v4774, 2
  %v4776 = vadd.f32 %v4774, %v4775
  %v4777 = vrot.slane %v4776, 1
  %v4778 = vadd.f32 %v4776, %v4777
  %v4779 = vadd.f32 %v4739, %v4743
  %v4780 = vadd.f32 %v4779, %v4747
  %v4781 = vadd.f32 %v4780, %v4751
  %v4782 = vrot.slane %v4781, 4
  %v4783 = vadd.f32 %v4781, %v4782
  %v4784 = vrot.slane %v4783, 2
  %v4785 = vadd.f32 %v4783, %v4784
  %v4786 = vrot.slane %v4785, 1
  %v4787 = vadd.f32 %v4785, %v4786
  %v4788 = vmul.f32 %v4760, %v4715
  %v4789 = vmul.f32 %v4769, %v4715
  %v4790 = vmul.f32 %v4778, %v4715
  %v4791 = vmul.f32 %v4787, %v4715
  %v4792 = vadd.f32 %v4788, 1e-05
  %v4793 = vadd.f32 %v4789, 1e-05
  %v4794 = vadd.f32 %v4790, 1e-05
  %v4795 = vadd.f32 %v4791, 1e-05
  %v4796 = vrsqrt.pop %v4792
  %v4797 = vrsqrt.pop %v4793
  %v4798 = vrsqrt.pop %v4794
  %v4799 = vrsqrt.pop %v4795
  %v4800 = vmul.f32 %v4720, %v4796
  %v4801 = vmul.f32 %v4721, %v4797
  %v4802 = vmul.f32 %v4722, %v4798
  %v4803 = vmul.f32 %v4723, %v4799
  %v4804 = vmul.f32 %v4724, %v4796
  %v4805 = vmul.f32 %v4725, %v4797
  %v4806 = vmul.f32 %v4726, %v4798
  %v4807 = vmul.f32 %v4727, %v4799
  %v4808 = vmul.f32 %v4728, %v4796
  %v4809 = vmul.f32 %v4729, %v4797
  %v4810 = vmul.f32 %v4730, %v4798
  %v4811 = vmul.f32 %v4731, %v4799
  %v4812 = vmul.f32 %v4732, %v4796
  %v4813 = vmul.f32 %v4733, %v4797
  %v4814 = vmul.f32 %v4734, %v4798
  %v4815 = vmul.f32 %v4735, %v4799
  %v4816 = vld [vmem:[%s3] sm:$0xf]
  %v4818 = vlaneseq
  %v4819 = vshrl.u32 %v4818, 7
  %v4820 = vsub.s32 0, %v4819
  %v4821 = vrot.slane %v4816, %v4820
  %v4822 = vlaneseq
  %v4823 = vshrl.u32 %v4822, 7
  %v4824 = vsub.s32 1, %v4823
  %v4825 = vrot.slane %v4816, %v4824
  %v4826 = vlaneseq
  %v4827 = vshrl.u32 %v4826, 7
  %v4828 = vsub.s32 2, %v4827
  %v4829 = vrot.slane %v4816, %v4828
  %v4830 = vlaneseq
  %v4831 = vshrl.u32 %v4830, 7
  %v4832 = vsub.s32 3, %v4831
  %v4833 = vrot.slane %v4816, %v4832
  %v4838 = vmul.f32 %v4800, %v4821
  %v4839 = vmul.f32 %v4801, %v4825
  %v4840 = vmul.f32 %v4802, %v4829
  %v4841 = vmul.f32 %v4803, %v4833
  %v4842 = vmul.f32 %v4804, %v4821
  %v4843 = vmul.f32 %v4805, %v4825
  %v4844 = vmul.f32 %v4806, %v4829
  %v4845 = vmul.f32 %v4807, %v4833
  %v4846 = vmul.f32 %v4808, %v4821
  %v4847 = vmul.f32 %v4809, %v4825
  %v4848 = vmul.f32 %v4810, %v4829
  %v4849 = vmul.f32 %v4811, %v4833
  %v4850 = vmul.f32 %v4812, %v4821
  %v4851 = vmul.f32 %v4813, %v4825
  %v4852 = vmul.f32 %v4814, %v4829
  %v4853 = vmul.f32 %v4815, %v4833
  %v4854 = vld [vmem:[%s4] sm:$0xf]
  %v4856 = vlaneseq
  %v4857 = vshrl.u32 %v4856, 7
  %v4858 = vsub.s32 0, %v4857
  %v4859 = vrot.slane %v4854, %v4858
  %v4860 = vlaneseq
  %v4861 = vshrl.u32 %v4860, 7
  %v4862 = vsub.s32 1, %v4861
  %v4863 = vrot.slane %v4854, %v4862
  %v4864 = vlaneseq
  %v4865 = vshrl.u32 %v4864, 7
  %v4866 = vsub.s32 2, %v4865
  %v4867 = vrot.slane %v4854, %v4866
  %v4868 = vlaneseq
  %v4869 = vshrl.u32 %v4868, 7
  %v4870 = vsub.s32 3, %v4869
  %v4871 = vrot.slane %v4854, %v4870
  %v4876 = vadd.f32 %v4838, %v4859
  %v4877 = vadd.f32 %v4839, %v4863
  %v4878 = vadd.f32 %v4840, %v4867
  %v4879 = vadd.f32 %v4841, %v4871
  %v4880 = vadd.f32 %v4842, %v4859
  %v4881 = vadd.f32 %v4843, %v4863
  %v4882 = vadd.f32 %v4844, %v4867
  %v4883 = vadd.f32 %v4845, %v4871
  %v4884 = vadd.f32 %v4846, %v4859
  %v4885 = vadd.f32 %v4847, %v4863
  %v4886 = vadd.f32 %v4848, %v4867
  %v4887 = vadd.f32 %v4849, %v4871
  %v4888 = vadd.f32 %v4850, %v4859
  %v4889 = vadd.f32 %v4851, %v4863
  %v4890 = vadd.f32 %v4852, %v4867
  %v4891 = vadd.f32 %v4853, %v4871
  %vm4892 = vcmp.gt.f32.partialorder %v4876, 0.0
  %vm4893 = vcmp.gt.f32.partialorder %v4877, 0.0
  %vm4894 = vcmp.gt.f32.partialorder %v4878, 0.0
  %vm4895 = vcmp.gt.f32.partialorder %v4879, 0.0
  %vm4896 = vcmp.gt.f32.partialorder %v4880, 0.0
  %vm4897 = vcmp.gt.f32.partialorder %v4881, 0.0
  %vm4898 = vcmp.gt.f32.partialorder %v4882, 0.0
  %vm4899 = vcmp.gt.f32.partialorder %v4883, 0.0
  %vm4900 = vcmp.gt.f32.partialorder %v4884, 0.0
  %vm4901 = vcmp.gt.f32.partialorder %v4885, 0.0
  %vm4902 = vcmp.gt.f32.partialorder %v4886, 0.0
  %vm4903 = vcmp.gt.f32.partialorder %v4887, 0.0
  %vm4904 = vcmp.gt.f32.partialorder %v4888, 0.0
  %vm4905 = vcmp.gt.f32.partialorder %v4889, 0.0
  %vm4906 = vcmp.gt.f32.partialorder %v4890, 0.0
  %vm4907 = vcmp.gt.f32.partialorder %v4891, 0.0
  %v4908 = vmul.f32 %v4876, 0.2
  %v4909 = vmul.f32 %v4877, 0.2
  %v4910 = vmul.f32 %v4878, 0.2
  %v4911 = vmul.f32 %v4879, 0.2
  %v4912 = vmul.f32 %v4880, 0.2
  %v4913 = vmul.f32 %v4881, 0.2
  %v4914 = vmul.f32 %v4882, 0.2
  %v4915 = vmul.f32 %v4883, 0.2
  %v4916 = vmul.f32 %v4884, 0.2
  %v4917 = vmul.f32 %v4885, 0.2
  %v4918 = vmul.f32 %v4886, 0.2
  %v4919 = vmul.f32 %v4887, 0.2
  %v4920 = vmul.f32 %v4888, 0.2
  %v4921 = vmul.f32 %v4889, 0.2
  %v4922 = vmul.f32 %v4890, 0.2
  %v4923 = vmul.f32 %v4891, 0.2
  %v4924 = vsel %vm4892, %v4876, %v4908
  %v4925 = vsel %vm4893, %v4877, %v4909
  %v4926 = vsel %vm4894, %v4878, %v4910
  %v4927 = vsel %vm4895, %v4879, %v4911
  %v4928 = vsel %vm4896, %v4880, %v4912
  %v4929 = vsel %vm4897, %v4881, %v4913
  %v4930 = vsel %vm4898, %v4882, %v4914
  %v4931 = vsel %vm4899, %v4883, %v4915
  %v4932 = vsel %vm4900, %v4884, %v4916
  %v4933 = vsel %vm4901, %v4885, %v4917
  %v4934 = vsel %vm4902, %v4886, %v4918
  %v4935 = vsel %vm4903, %v4887, %v4919
  %v4936 = vsel %vm4904, %v4888, %v4920
  %v4937 = vsel %vm4905, %v4889, %v4921
  %v4938 = vsel %vm4906, %v4890, %v4922
  %v4939 = vsel %vm4907, %v4891, %v4923
  %v4940 = vld [vmem:[%s5] sm:$0xff]
  %v4941 = vld [vmem:[%s5 + $0x8] sm:$0xff]
  %v4942 = vld [vmem:[%s5 + $0x10] sm:$0xff]
  %v4943 = vld [vmem:[%s5 + $0x18] sm:$0xff]
  %v4944 = vld [vmem:[%s5 + $0x20] sm:$0xff]
  %v4945 = vld [vmem:[%s5 + $0x28] sm:$0xff]
  %v4946 = vld [vmem:[%s5 + $0x30] sm:$0xff]
  %v4947 = vld [vmem:[%s5 + $0x38] sm:$0xff]
  %v4948 = vld [vmem:[%s5 + $0x40] sm:$0xff]
  %v4949 = vld [vmem:[%s5 + $0x48] sm:$0xff]
  %v4950 = vld [vmem:[%s5 + $0x50] sm:$0xff]
  %v4951 = vld [vmem:[%s5 + $0x58] sm:$0xff]
  %v4952 = vld [vmem:[%s5 + $0x60] sm:$0xff]
  %v4953 = vld [vmem:[%s5 + $0x68] sm:$0xff]
  %v4954 = vld [vmem:[%s5 + $0x70] sm:$0xff]
  %v4955 = vld [vmem:[%s5 + $0x78] sm:$0xff]
  %v4956 = vmul.f32 %v4924, %v4940
  %v4957 = vmul.f32 %v4925, %v4941
  %v4958 = vmul.f32 %v4926, %v4942
  %v4959 = vmul.f32 %v4927, %v4943
  %v4960 = vmul.f32 %v4928, %v4944
  %v4961 = vmul.f32 %v4929, %v4945
  %v4962 = vmul.f32 %v4930, %v4946
  %v4963 = vmul.f32 %v4931, %v4947
  %v4964 = vmul.f32 %v4932, %v4948
  %v4965 = vmul.f32 %v4933, %v4949
  %v4966 = vmul.f32 %v4934, %v4950
  %v4967 = vmul.f32 %v4935, %v4951
  %v4968 = vmul.f32 %v4936, %v4952
  %v4969 = vmul.f32 %v4937, %v4953
  %v4970 = vmul.f32 %v4938, %v4954
  %v4971 = vmul.f32 %v4939, %v4955
  %v4972 = vld [vmem:[%s6] sm:$0x3]
  %vm4973 = vcmask 261120
  %v4975 = vsel %vm4973, %v4972, 0
  %4977 = vmatprep.subr.mxu0 0.0
  %4978 = vmatpush1.msra.mxu0 0.0
  %4979 = vmatprep.subr.mxu0 0.0
  %4980 = vmatpush1.msra.mxu0 0.0
  %4981 = vmatprep.subr.mxu0 0.0
  %4982 = vmatpush1.msra.mxu0 0.0
  %4983 = vmatprep.subr.mxu0 0.0
  %4984 = vmatpush1.msra.mxu0 0.0
  %4985 = vmatprep.subr.mxu0 0.0
  %4986 = vmatpush1.msra.mxu0 0.0
  %4987 = vmatprep.subr.mxu0 0.0
  %4988 = vmatpush1.msra.mxu0 0.0
  %4989 = vmatprep.subr.mxu0 0.0
  %4990 = vmatpush1.msra.mxu0 0.0
  %4991 = vmatprep.subr.mxu0 0.0
  %4992 = vmatpush1.msra.mxu0 0.0
  %4993 = vmatprep.subr.mxu0 0.0
  %4994 = vmatpush1.msra.mxu0 0.0
  %4995 = vmatprep.subr.mxu0 0.0
  %4996 = vmatpush1.msra.mxu0 0.0
  %4997 = vmatprep.subr.mxu0 0.0
  %4998 = vmatpush1.msra.mxu0 0.0
  %4999 = vmatprep.subr.mxu0 0.0
  %5000 = vmatpush1.msra.mxu0 0.0
  %5001 = vmatprep.subr.mxu0 %v4969
  %5002 = vmatpush1.msra.mxu0 %v4968
  %5003 = vmatprep.subr.mxu0 %v4965
  %5004 = vmatpush1.msra.mxu0 %v4964
  %5005 = vmatprep.subr.mxu0 %v4961
  %5006 = vmatpush1.msra.mxu0 %v4960
  %5007 = vmatprep.subr.mxu0 %v4957
  %5008 = vmatpush1.msra.mxu0 %v4956
  %5009 = vmatprep.subr.mxu0 0.0
  %5010 = vmatpush2.msra.mxu0 0.0
  %5011 = vmatprep.subr.mxu0 0.0
  %5012 = vmatpush2.msra.mxu0 0.0
  %5013 = vmatprep.subr.mxu0 0.0
  %5014 = vmatpush2.msra.mxu0 0.0
  %5015 = vmatprep.subr.mxu0 0.0
  %5016 = vmatpush2.msra.mxu0 0.0
  %5017 = vmatprep.subr.mxu0 0.0
  %5018 = vmatpush2.msra.mxu0 0.0
  %5019 = vmatprep.subr.mxu0 0.0
  %5020 = vmatpush2.msra.mxu0 0.0
  %5021 = vmatprep.subr.mxu0 0.0
  %5022 = vmatpush2.msra.mxu0 0.0
  %5023 = vmatprep.subr.mxu0 0.0
  %5024 = vmatpush2.msra.mxu0 0.0
  %5025 = vmatprep.subr.mxu0 0.0
  %5026 = vmatpush2.msra.mxu0 0.0
  %5027 = vmatprep.subr.mxu0 0.0
  %5028 = vmatpush2.msra.mxu0 0.0
  %5029 = vmatprep.subr.mxu0 0.0
  %5030 = vmatpush2.msra.mxu0 0.0
  %5031 = vmatprep.subr.mxu0 0.0
  %5032 = vmatpush2.msra.mxu0 0.0
  %5033 = vmatprep.subr.mxu0 0.0
  %5034 = vmatpush2.msra.mxu0 0.0
  %5035 = vmatprep.subr.mxu0 0.0
  %5036 = vmatpush2.msra.mxu0 0.0
  %5037 = vmatprep.subr.mxu0 0.0
  %5038 = vmatpush2.msra.mxu0 0.0
  %5039 = vmatprep.subr.mxu0 0.0
  %5040 = vmatpush2.msra.mxu0 0.0
  %5041 = vmatprep.mubr.f32.mxu0 0.0
  %5042 = vmatmul.mubr.f32.gmra.mxu0 %v4975
  %v5043 = vpop.f32.mrf.mxu0
  %v5044 = vadd.f32 0.0, %v5043
  %v5045 = vpop.f32.mrf.mxu0
  %v5046 = vadd.f32 0.0, %v5045
  %5047 = vdwg.mxu0
  %5048 = vmatprep.subr.mxu0 0.0
  %5049 = vmatpush1.msra.mxu0 0.0
  %5050 = vmatprep.subr.mxu0 0.0
  %5051 = vmatpush1.msra.mxu0 0.0
  %5052 = vmatprep.subr.mxu0 0.0
  %5053 = vmatpush1.msra.mxu0 0.0
  %5054 = vmatprep.subr.mxu0 0.0
  %5055 = vmatpush1.msra.mxu0 0.0
  %5056 = vmatprep.subr.mxu0 0.0
  %5057 = vmatpush1.msra.mxu0 0.0
  %5058 = vmatprep.subr.mxu0 0.0
  %5059 = vmatpush1.msra.mxu0 0.0
  %5060 = vmatprep.subr.mxu0 0.0
  %5061 = vmatpush1.msra.mxu0 0.0
  %5062 = vmatprep.subr.mxu0 0.0
  %5063 = vmatpush1.msra.mxu0 0.0
  %5064 = vmatprep.subr.mxu0 0.0
  %5065 = vmatpush1.msra.mxu0 0.0
  %5066 = vmatprep.subr.mxu0 0.0
  %5067 = vmatpush1.msra.mxu0 0.0
  %5068 = vmatprep.subr.mxu0 0.0
  %5069 = vmatpush1.msra.mxu0 0.0
  %5070 = vmatprep.subr.mxu0 0.0
  %5071 = vmatpush1.msra.mxu0 0.0
  %5072 = vmatprep.subr.mxu0 %v4971
  %5073 = vmatpush1.msra.mxu0 %v4970
  %5074 = vmatprep.subr.mxu0 %v4967
  %5075 = vmatpush1.msra.mxu0 %v4966
  %5076 = vmatprep.subr.mxu0 %v4963
  %5077 = vmatpush1.msra.mxu0 %v4962
  %5078 = vmatprep.subr.mxu0 %v4959
  %5079 = vmatpush1.msra.mxu0 %v4958
  %5080 = vmatprep.subr.mxu0 0.0
  %5081 = vmatpush2.msra.mxu0 0.0
  %5082 = vmatprep.subr.mxu0 0.0
  %5083 = vmatpush2.msra.mxu0 0.0
  %5084 = vmatprep.subr.mxu0 0.0
  %5085 = vmatpush2.msra.mxu0 0.0
  %5086 = vmatprep.subr.mxu0 0.0
  %5087 = vmatpush2.msra.mxu0 0.0
  %5088 = vmatprep.subr.mxu0 0.0
  %5089 = vmatpush2.msra.mxu0 0.0
  %5090 = vmatprep.subr.mxu0 0.0
  %5091 = vmatpush2.msra.mxu0 0.0
  %5092 = vmatprep.subr.mxu0 0.0
  %5093 = vmatpush2.msra.mxu0 0.0
  %5094 = vmatprep.subr.mxu0 0.0
  %5095 = vmatpush2.msra.mxu0 0.0
  %5096 = vmatprep.subr.mxu0 0.0
  %5097 = vmatpush2.msra.mxu0 0.0
  %5098 = vmatprep.subr.mxu0 0.0
  %5099 = vmatpush2.msra.mxu0 0.0
  %5100 = vmatprep.subr.mxu0 0.0
  %5101 = vmatpush2.msra.mxu0 0.0
  %5102 = vmatprep.subr.mxu0 0.0
  %5103 = vmatpush2.msra.mxu0 0.0
  %5104 = vmatprep.subr.mxu0 0.0
  %5105 = vmatpush2.msra.mxu0 0.0
  %5106 = vmatprep.subr.mxu0 0.0
  %5107 = vmatpush2.msra.mxu0 0.0
  %5108 = vmatprep.subr.mxu0 0.0
  %5109 = vmatpush2.msra.mxu0 0.0
  %5110 = vmatprep.subr.mxu0 0.0
  %5111 = vmatpush2.msra.mxu0 0.0
  %5112 = vmatprep.mubr.f32.mxu0 0.0
  %5113 = vmatmul.mubr.f32.gmra.mxu0 %v4975
  %v5114 = vpop.f32.mrf.mxu0
  %v5115 = vadd.f32 0.0, %v5114
  %v5116 = vpop.f32.mrf.mxu0
  %v5117 = vadd.f32 0.0, %v5116
  %5118 = vdwg.mxu0
  %vm5119 = vcmask 1041408
  %v5120 = vsel %vm5119, %v5044, 0.0
  %v5121 = vsel %vm5119, %v5046, 0.0
  %v5122 = vadd.f32 %v5120, %v5121
  %v5123 = vsel %vm5119, %v5115, 0.0
  %v5124 = vadd.f32 %v5122, %v5123
  %v5125 = vsel %vm5119, %v5117, 0.0
  %v5126 = vadd.f32 %v5124, %v5125
  %5127 = vadd.xlane.f32.xlu0 %v5126
  %v5128 = vpop.xlane.xlu0 %5127
  %v5129 = vld [vmem:[#allocation2] sm:$0x1]
  %v5131 = vlaneseq
  %v5132 = vshrl.u32 %v5131, 7
  %v5133 = vsub.s32 0, %v5132
  %v5134 = vrot.slane %v5129, %v5133
  %v5136 = vadd.f32 %v5128, %v5134
  %v5137 = vxor.u32 %v5136, 2147483648
  %v5138 = vmul.f32 %v5137, 1.442695
  %v5139 = vpow.pop %v5138
  %v5140 = vadd.f32 %v5139, 1.0
  %v5141 = vrcp.pop %v5140
  %v5142 = vmul.f32 1.0, %v5141
  %vm5143 = vcmask 1024
  %5144 = vst.msk [vmem:[%s8] sm:$0x3] %vm5143, %v5142
  // Predicated region
  $region34: #{discriminator_forward.7} parent=0 // pred_check
    _
  $region35: #{discriminator_forward.7} parent=0 // pred_check_branch
    %5146 = sbr.rel (0) target = $region37
  $region36: #{discriminator_forward.7} parent=0 // pred_region
    _
  $region37: #{discriminator_forward.7} parent=0 // pred_fallthru
    _
  // Predicated region
  $region38: #{discriminator_forward.7} parent=0 // pred_check
    _
  $region39: #{discriminator_forward.7} parent=0 // pred_check_branch
    %5148 = sbr.rel (0) target = $region41
  $region40: #{discriminator_forward.7} parent=0 // pred_region
    _
  $region41: #{discriminator_forward.7} parent=0 // pred_fallthru
    _

</llo_original>
